<compile_context>
chip_gen: v7x
topology: tpu7x:2x2x1
jax: 0.10.0
libtpu: 0.0.40
codegen_flags: <defaults>
</compile_context>

<pallas_src>
import functools

import jax
import jax.numpy as jnp
import numpy as np
from jax import lax
from jax.experimental import pallas as pl
from jax.experimental.pallas import tpu as pltpu

BOHR_TO_ANSTROM = 0.529177249


# ----------------------------------------------------------------------------
# Fused Pallas kernel: coefficient nets + vdW radius + dispersion energy
# ----------------------------------------------------------------------------
def _dispersion_kernel(w_ref, b_ref, coords_ref, aev_ref, valid_ref, out_ref,
                       *, a0_vdw, a1_vdw, cutoff):
    d_feat, n_atom, tb = aev_ref.shape            # static block shape

    # ---- coefficient nets (linear + softplus), one streaming pass over the AEV --
    acc6 = jnp.zeros((n_atom, tb), jnp.float32)
    acc8 = jnp.zeros((n_atom, tb), jnp.float32)
    acc10 = jnp.zeros((n_atom, tb), jnp.float32)
    for dd in range(d_feat):
        xa = aev_ref[dd]                           # (A, TB), read once
        acc6 = acc6 + xa * w_ref[3 * dd + 0]       # SMEM scalar * vector
        acc8 = acc8 + xa * w_ref[3 * dd + 1]
        acc10 = acc10 + xa * w_ref[3 * dd + 2]

    def softplus(y):                               # numerically stable
        return jnp.maximum(y, 0.0) + jnp.log(1.0 + jnp.exp(-jnp.abs(y)))

    c6 = softplus(acc6 + b_ref[0])                 # (A, TB), strictly positive
    c8 = softplus(acc8 + b_ref[1])
    c10 = softplus(acc10 + b_ref[2])

    # ---- per-atom rank-1 factors: constants + species validity folded in -------
    valid = valid_ref[...]                         # (A, TB), 1.0 = real atom
    f0 = (BOHR_TO_ANSTROM ** 3) * valid * jnp.sqrt(c6)
    f1 = (BOHR_TO_ANSTROM ** 4) * valid * jnp.sqrt(c8)
    f2 = (BOHR_TO_ANSTROM ** 5) * valid * jnp.sqrt(c10)
    inv_c6 = 1.0 / c6                              # exact, O(A*TB) only
    s = float(np.sqrt(a0_vdw * BOHR_TO_ANSTROM / 3.0))
    f3 = s * jnp.sqrt(jnp.sqrt(c8 * inv_c6))                 # (c8/c6)^(1/4)
    f4 = s * jnp.sqrt(jnp.sqrt(jnp.sqrt(c10 * inv_c6)))      # (c10/c6)^(1/8)
    f5 = s * jnp.sqrt(jnp.sqrt(c10 / c8))                    # (c10/c8)^(1/4)

    # ---- pairwise block, layout (A, A, TB): batch dense on the lane axis --------
    def outer(v):                                  # v_i * v_j rank-1 product
        return v[:, None, :] * v[None, :, :]

    px = coords_ref[0]                             # (A, TB)
    py = coords_ref[1]
    pz = coords_ref[2]
    dx = px[:, None, :] - px[None, :, :]           # (A, A, TB)
    dy = py[:, None, :] - py[None, :, :]
    dz = pz[:, None, :] - pz[None, :, :]
    d2 = dx * dx + dy * dy + dz * dz
    d = jnp.sqrt(d2)

    c6p = outer(f0)        # BOHR^6  * sqrt(c6_i c6_j); zero if either atom is padding
    c8p = outer(f1)        # BOHR^8  * sqrt(c8_i c8_j)
    c10p = outer(f2)       # BOHR^10 * sqrt(c10_i c10_j)
    # vanderWaalsLayer(b0=a1_vdw, b1=a0_vdw): a0*BOHR/3 already folded into f3..f5
    rvdw = a1_vdw + (outer(f3) + outer(f4) + outer(f5))

    d6 = d2 * d2 * d2
    d8 = d6 * d2
    d10 = d8 * d2
    rv2 = rvdw * rvdw
    rv6 = rv2 * rv2 * rv2
    rv8 = rv6 * rv2
    rv10 = rv8 * rv2

    # exact divides (denominators strictly positive: rvdw > 0)
    e_pair = (c6p / (d6 + rv6)) + (c8p / (d8 + rv8)) + (c10p / (d10 + rv10))

    # single predicate: upper triangle (i < j) AND inside the cutoff
    # TODO(synk): cutoff_function assumed to be the standard ANI cosine cutoff.
    ii = lax.broadcasted_iota(jnp.int32, (n_atom, n_atom, tb), 0)
    jj = lax.broadcasted_iota(jnp.int32, (n_atom, n_atom, tb), 1)
    pred = jnp.logical_and(jj > ii, d2 < cutoff * cutoff)
    fcut = jnp.where(pred, 0.5 * jnp.cos((jnp.pi / cutoff) * d) + 0.5, 0.0)

    tot = e_pair * fcut
    # reduce pair axes (outer then sublane); lanes (molecules) stay dense
    e = jnp.sum(jnp.sum(tot, axis=0, keepdims=True), axis=1, keepdims=True)
    out_ref[...] = -e                              # (1, 1, TB), unmasked store


def dispersion_energy(w_flat, b_flat, coords_r, aev_r, valid_r,
                      *, tb, a0_vdw, a1_vdw, cutoff):
    d_feat, a_pad, b_pad = aev_r.shape
    assert b_pad % tb == 0 and a_pad % 8 == 0
    n_tiles = b_pad // tb
    kernel = functools.partial(_dispersion_kernel,
                               a0_vdw=a0_vdw, a1_vdw=a1_vdw, cutoff=cutoff)
    out = pl.pallas_call(
        kernel,
        out_shape=jax.ShapeDtypeStruct((n_tiles, 1, tb), jnp.float32),
        grid=(n_tiles,),
        in_specs=[
            pl.BlockSpec(memory_space=pltpu.MemorySpace.SMEM),       # w_flat (3*D,)
            pl.BlockSpec(memory_space=pltpu.MemorySpace.SMEM),       # b_flat (3,)
            pl.BlockSpec((3, a_pad, tb), lambda i: (0, 0, i)),       # coords
            pl.BlockSpec((d_feat, a_pad, tb), lambda i: (0, 0, i)),  # aev
            pl.BlockSpec((a_pad, tb), lambda i: (0, i)),             # valid mask
        ],
        out_specs=pl.BlockSpec((1, 1, tb), lambda i: (i, 0, 0)),
        compiler_params=pltpu.CompilerParams(
            dimension_semantics=("parallel",),
            # <= ~48 MiB keeps v7x (64 MiB VMEM) safe; v6e/v5e could go higher.
            vmem_limit_bytes=48 * 1024 * 1024,
        ),
    )(w_flat, b_flat, coords_r, aev_r, valid_r)
    return out.reshape(b_pad)


# ----------------------------------------------------------------------------
# Plain-JAX glue: synthetic AEV computer (stand-in for TorchANI's aev_computer)
# ----------------------------------------------------------------------------
def compute_aev(coords, valid, cutoff, n_features):
    # TODO(synk): real TorchANI AEV (species-resolved radial + angular terms) is an
    # external module; this is a deterministic radial-symmetry-function stand-in.
    b, a, _ = coords.shape
    diff = coords[:, :, None, :] - coords[:, None, :, :]
    d2 = jnp.sum(diff * diff, axis=-1)
    eye = jnp.eye(a, dtype=coords.dtype)
    d = jnp.sqrt(d2 + eye)
    fc = jnp.where(d < cutoff, 0.5 * jnp.cos(jnp.pi * d / cutoff) + 0.5, 0.0)
    fc = fc * (1.0 - eye) * valid[:, None, :]       # padded atoms do not contribute
    shifts = jnp.linspace(0.8, cutoff, n_features, dtype=coords.dtype)
    eta = 4.0
    feats = jnp.exp(-eta * (d[..., None] - shifts) ** 2) * fc[..., None]
    return feats.sum(axis=2)                        # (B, A, n_features)


# ----------------------------------------------------------------------------
# DispersionLayer.forward (non-periodic branch: cell=None, pbc=None)
# ----------------------------------------------------------------------------
def dispersion_forward(species, coordinates, w_coef, b_coef,
                       *, a0_vdw, a1_vdw, cutoff, aev_dim, batch_tile=128):
    # TODO(synk): c6/c8/c10 nets are external TorchANI-style MLPs; modeled here as a
    # single shared linear layer + softplus (one output column per coefficient).
    b, a, _ = coordinates.shape
    tb = batch_tile
    b_pad = ((b + tb - 1) // tb) * tb               # lane-dense batch tile
    a_pad = ((a + 7) // 8) * 8                      # sublane-aligned atom count

    coords = jnp.pad(coordinates.astype(jnp.float32),
                     ((0, b_pad - b), (0, a_pad - a), (0, 0)))       # (B_pad, A_pad, 3)
    spec_pad = jnp.pad(species, ((0, b_pad - b), (0, a_pad - a)),
                       constant_values=-1)
    valid = (spec_pad != -1).astype(jnp.float32)                     # (B_pad, A_pad)

    aev = compute_aev(coords, valid, cutoff, aev_dim)                # (B_pad, A_pad, D)

    # batch-on-lanes layouts (cheap one-off XLA transposes in the wrapper)
    aev_r = jnp.transpose(aev, (2, 1, 0))                            # (D, A_pad, B_pad)
    coords_r = jnp.transpose(coords, (2, 1, 0))                      # (3, A_pad, B_pad)
    valid_r = jnp.transpose(valid, (1, 0))                           # (A_pad, B_pad)
    w_flat = jnp.reshape(w_coef.astype(jnp.float32), (-1,))          # w[d, k] -> 3*d + k
    b_flat = jnp.reshape(b_coef.astype(jnp.float32), (-1,))          # (3,)

    energy = dispersion_energy(w_flat, b_flat, coords_r, aev_r, valid_r,
                               tb=tb, a0_vdw=a0_vdw, a1_vdw=a1_vdw, cutoff=cutoff)
    return species, energy[:b]                      # SpeciesEnergies analogue


# ----------------------------------------------------------------------------
# Pure-JAX reference (mirrors the PyTorch pair-list formulation) for validation
# ----------------------------------------------------------------------------
def _reference_energy(coords, c6, c8, c10, a0_vdw, a1_vdw, cutoff):
    b, a, _ = coords.shape
    iu = np.triu_indices(a, 1)
    i0, i1 = jnp.asarray(iu[0]), jnp.asarray(iu[1])
    dist = jnp.linalg.norm(coords[:, i1, :] - coords[:, i0, :], axis=-1)
    c6p = jnp.sqrt(c6[:, i0] * c6[:, i1])
    c8p = jnp.sqrt(c8[:, i0] * c8[:, i1])
    c10p = jnp.sqrt(c10[:, i0] * c10[:, i1])
    r_crit = (jnp.sqrt(c8p / c6p) + (c10p / c6p) ** 0.25 + jnp.sqrt(c10p / c8p)) / 3.0
    rvdw = a1_vdw + a0_vdw * r_crit * BOHR_TO_ANSTROM
    fcut = jnp.where(dist < cutoff, 0.5 * jnp.cos(jnp.pi * dist / cutoff) + 0.5, 0.0)

    def elayer(coef, n):
        x = -coef / (dist ** n + rvdw ** n) * fcut
        return x.sum(axis=1) * BOHR_TO_ANSTROM ** n

    return elayer(c6p, 6) + elayer(c8p, 8) + elayer(c10p, 10)


if __name__ == "__main__":
    B, A, D = 2, 16, 64
    a0_vdw, a1_vdw, cutoff = 0.83, 0.35, 8.0

    key = jax.random.PRNGKey(0)
    k_coord, k_w = jax.random.split(key)
    coordinates = jax.random.uniform(k_coord, (B, A, 3), jnp.float32, 0.0, 6.0)
    species = jnp.zeros((B, A), jnp.int32)          # all atoms valid

    w_coef = (jax.random.normal(k_w, (D, 3), jnp.float32) * 0.05).astype(jnp.float32)
    b_coef = jnp.array([[1.0, 2.0, 3.0]], jnp.float32)

    out_species, energy = dispersion_forward(
        species, coordinates, w_coef, b_coef,
        a0_vdw=a0_vdw, a1_vdw=a1_vdw, cutoff=cutoff, aev_dim=D)
    energy = jax.block_until_ready(energy)

    # sanity check against the pure-JAX pair-list reference
    aev = compute_aev(coordinates, jnp.ones((B, A), jnp.float32), cutoff, D)
    coefs = jax.nn.softplus(aev.reshape(B * A, D) @ w_coef + b_coef)
    c6 = coefs[:, 0].reshape(B, A)
    c8 = coefs[:, 1].reshape(B, A)
    c10 = coefs[:, 2].reshape(B, A)
    ref = _reference_energy(coordinates, c6, c8, c10, a0_vdw, a1_vdw, cutoff)
    np.testing.assert_allclose(np.asarray(energy), np.asarray(ref),
                               rtol=2e-3, atol=1e-5)

    print("KERNEL_OK")
</pallas_src>

<mosaic_0001>
module attributes {stable_mosaic.version = 11 : i64} {
  func.func @_dispersion_kernel(%arg0: i32, %arg1: memref<192xf32, #tpu.memory_space<smem>>, %arg2: memref<3xf32, #tpu.memory_space<smem>>, %arg3: memref<3x16x128xf32, #tpu.memory_space<vmem>>, %arg4: memref<64x16x128xf32, #tpu.memory_space<vmem>>, %arg5: memref<16x128xf32, #tpu.memory_space<vmem>>, %arg6: memref<1x1x128xf32, #tpu.memory_space<vmem>>) attributes {dimension_semantics = [#tpu.dimension_semantics<parallel>], iteration_bounds = array<i64: 1>, scalar_prefetch = 0 : i64, scratch_operands = 0 : i64, tpu.core_type = #tpu.core_type<tc>, window_params = [{transform_indices = @transform_0, window_bounds = array<i64: 192>}, {transform_indices = @transform_1, window_bounds = array<i64: 3>}, {transform_indices = @transform_2, window_bounds = array<i64: 3, 16, 128>}, {transform_indices = @transform_3, window_bounds = array<i64: 64, 16, 128>}, {transform_indices = @transform_4, window_bounds = array<i64: 16, 128>}, {transform_indices = @transform_5, window_bounds = array<i64: 1, 1, 128>}]} {
    %cst = arith.constant 0.000000e+00 : f32
    %0 = vector.broadcast %cst : f32 to vector<16x128xf32>
    %cst_0 = arith.constant 0.000000e+00 : f32
    %1 = vector.broadcast %cst_0 : f32 to vector<16x128xf32>
    %cst_1 = arith.constant 0.000000e+00 : f32
    %2 = vector.broadcast %cst_1 : f32 to vector<16x128xf32>
    %c0 = arith.constant 0 : index
    %c0_2 = arith.constant 0 : index
    %c0_3 = arith.constant 0 : index
    %3 = vector.load %arg4[%c0, %c0_2, %c0_3] : memref<64x16x128xf32, #tpu.memory_space<vmem>>, vector<1x16x128xf32>
    %4 = vector.shape_cast %3 : vector<1x16x128xf32> to vector<16x128xf32>
    %c0_4 = arith.constant 0 : index
    %5 = memref.load %arg1[%c0_4] : memref<192xf32, #tpu.memory_space<smem>>
    %6 = vector.broadcast %5 : f32 to vector<16x128xf32>
    %7 = arith.mulf %4, %6 : vector<16x128xf32>
    %8 = arith.addf %0, %7 : vector<16x128xf32>
    %c1 = arith.constant 1 : index
    %9 = memref.load %arg1[%c1] : memref<192xf32, #tpu.memory_space<smem>>
    %10 = vector.broadcast %9 : f32 to vector<16x128xf32>
    %11 = arith.mulf %4, %10 : vector<16x128xf32>
    %12 = arith.addf %1, %11 : vector<16x128xf32>
    %c2 = arith.constant 2 : index
    %13 = memref.load %arg1[%c2] : memref<192xf32, #tpu.memory_space<smem>>
    %14 = vector.broadcast %13 : f32 to vector<16x128xf32>
    %15 = arith.mulf %4, %14 : vector<16x128xf32>
    %16 = arith.addf %2, %15 : vector<16x128xf32>
    %c1_5 = arith.constant 1 : index
    %c0_6 = arith.constant 0 : index
    %c0_7 = arith.constant 0 : index
    %17 = vector.load %arg4[%c1_5, %c0_6, %c0_7] : memref<64x16x128xf32, #tpu.memory_space<vmem>>, vector<1x16x128xf32>
    %18 = vector.shape_cast %17 : vector<1x16x128xf32> to vector<16x128xf32>
    %c3 = arith.constant 3 : index
    %19 = memref.load %arg1[%c3] : memref<192xf32, #tpu.memory_space<smem>>
    %20 = vector.broadcast %19 : f32 to vector<16x128xf32>
    %21 = arith.mulf %18, %20 : vector<16x128xf32>
    %22 = arith.addf %8, %21 : vector<16x128xf32>
    %c4 = arith.constant 4 : index
    %23 = memref.load %arg1[%c4] : memref<192xf32, #tpu.memory_space<smem>>
    %24 = vector.broadcast %23 : f32 to vector<16x128xf32>
    %25 = arith.mulf %18, %24 : vector<16x128xf32>
    %26 = arith.addf %12, %25 : vector<16x128xf32>
    %c5 = arith.constant 5 : index
    %27 = memref.load %arg1[%c5] : memref<192xf32, #tpu.memory_space<smem>>
    %28 = vector.broadcast %27 : f32 to vector<16x128xf32>
    %29 = arith.mulf %18, %28 : vector<16x128xf32>
    %30 = arith.addf %16, %29 : vector<16x128xf32>
    %c2_8 = arith.constant 2 : index
    %c0_9 = arith.constant 0 : index
    %c0_10 = arith.constant 0 : index
    %31 = vector.load %arg4[%c2_8, %c0_9, %c0_10] : memref<64x16x128xf32, #tpu.memory_space<vmem>>, vector<1x16x128xf32>
    %32 = vector.shape_cast %31 : vector<1x16x128xf32> to vector<16x128xf32>
    %c6 = arith.constant 6 : index
    %33 = memref.load %arg1[%c6] : memref<192xf32, #tpu.memory_space<smem>>
    %34 = vector.broadcast %33 : f32 to vector<16x128xf32>
    %35 = arith.mulf %32, %34 : vector<16x128xf32>
    %36 = arith.addf %22, %35 : vector<16x128xf32>
    %c7 = arith.constant 7 : index
    %37 = memref.load %arg1[%c7] : memref<192xf32, #tpu.memory_space<smem>>
    %38 = vector.broadcast %37 : f32 to vector<16x128xf32>
    %39 = arith.mulf %32, %38 : vector<16x128xf32>
    %40 = arith.addf %26, %39 : vector<16x128xf32>
    %c8 = arith.constant 8 : index
    %41 = memref.load %arg1[%c8] : memref<192xf32, #tpu.memory_space<smem>>
    %42 = vector.broadcast %41 : f32 to vector<16x128xf32>
    %43 = arith.mulf %32, %42 : vector<16x128xf32>
    %44 = arith.addf %30, %43 : vector<16x128xf32>
    %c3_11 = arith.constant 3 : index
    %c0_12 = arith.constant 0 : index
    %c0_13 = arith.constant 0 : index
    %45 = vector.load %arg4[%c3_11, %c0_12, %c0_13] : memref<64x16x128xf32, #tpu.memory_space<vmem>>, vector<1x16x128xf32>
    %46 = vector.shape_cast %45 : vector<1x16x128xf32> to vector<16x128xf32>
    %c9 = arith.constant 9 : index
    %47 = memref.load %arg1[%c9] : memref<192xf32, #tpu.memory_space<smem>>
    %48 = vector.broadcast %47 : f32 to vector<16x128xf32>
    %49 = arith.mulf %46, %48 : vector<16x128xf32>
    %50 = arith.addf %36, %49 : vector<16x128xf32>
    %c10 = arith.constant 10 : index
    %51 = memref.load %arg1[%c10] : memref<192xf32, #tpu.memory_space<smem>>
    %52 = vector.broadcast %51 : f32 to vector<16x128xf32>
    %53 = arith.mulf %46, %52 : vector<16x128xf32>
    %54 = arith.addf %40, %53 : vector<16x128xf32>
    %c11 = arith.constant 11 : index
    %55 = memref.load %arg1[%c11] : memref<192xf32, #tpu.memory_space<smem>>
    %56 = vector.broadcast %55 : f32 to vector<16x128xf32>
    %57 = arith.mulf %46, %56 : vector<16x128xf32>
    %58 = arith.addf %44, %57 : vector<16x128xf32>
    %c4_14 = arith.constant 4 : index
    %c0_15 = arith.constant 0 : index
    %c0_16 = arith.constant 0 : index
    %59 = vector.load %arg4[%c4_14, %c0_15, %c0_16] : memref<64x16x128xf32, #tpu.memory_space<vmem>>, vector<1x16x128xf32>
    %60 = vector.shape_cast %59 : vector<1x16x128xf32> to vector<16x128xf32>
    %c12 = arith.constant 12 : index
    %61 = memref.load %arg1[%c12] : memref<192xf32, #tpu.memory_space<smem>>
    %62 = vector.broadcast %61 : f32 to vector<16x128xf32>
    %63 = arith.mulf %60, %62 : vector<16x128xf32>
    %64 = arith.addf %50, %63 : vector<16x128xf32>
    %c13 = arith.constant 13 : index
    %65 = memref.load %arg1[%c13] : memref<192xf32, #tpu.memory_space<smem>>
    %66 = vector.broadcast %65 : f32 to vector<16x128xf32>
    %67 = arith.mulf %60, %66 : vector<16x128xf32>
    %68 = arith.addf %54, %67 : vector<16x128xf32>
    %c14 = arith.constant 14 : index
    %69 = memref.load %arg1[%c14] : memref<192xf32, #tpu.memory_space<smem>>
    %70 = vector.broadcast %69 : f32 to vector<16x128xf32>
    %71 = arith.mulf %60, %70 : vector<16x128xf32>
    %72 = arith.addf %58, %71 : vector<16x128xf32>
    %c5_17 = arith.constant 5 : index
    %c0_18 = arith.constant 0 : index
    %c0_19 = arith.constant 0 : index
    %73 = vector.load %arg4[%c5_17, %c0_18, %c0_19] : memref<64x16x128xf32, #tpu.memory_space<vmem>>, vector<1x16x128xf32>
    %74 = vector.shape_cast %73 : vector<1x16x128xf32> to vector<16x128xf32>
    %c15 = arith.constant 15 : index
    %75 = memref.load %arg1[%c15] : memref<192xf32, #tpu.memory_space<smem>>
    %76 = vector.broadcast %75 : f32 to vector<16x128xf32>
    %77 = arith.mulf %74, %76 : vector<16x128xf32>
    %78 = arith.addf %64, %77 : vector<16x128xf32>
    %c16 = arith.constant 16 : index
    %79 = memref.load %arg1[%c16] : memref<192xf32, #tpu.memory_space<smem>>
    %80 = vector.broadcast %79 : f32 to vector<16x128xf32>
    %81 = arith.mulf %74, %80 : vector<16x128xf32>
    %82 = arith.addf %68, %81 : vector<16x128xf32>
    %c17 = arith.constant 17 : index
    %83 = memref.load %arg1[%c17] : memref<192xf32, #tpu.memory_space<smem>>
    %84 = vector.broadcast %83 : f32 to vector<16x128xf32>
    %85 = arith.mulf %74, %84 : vector<16x128xf32>
    %86 = arith.addf %72, %85 : vector<16x128xf32>
    %c6_20 = arith.constant 6 : index
    %c0_21 = arith.constant 0 : index
    %c0_22 = arith.constant 0 : index
    %87 = vector.load %arg4[%c6_20, %c0_21, %c0_22] : memref<64x16x128xf32, #tpu.memory_space<vmem>>, vector<1x16x128xf32>
    %88 = vector.shape_cast %87 : vector<1x16x128xf32> to vector<16x128xf32>
    %c18 = arith.constant 18 : index
    %89 = memref.load %arg1[%c18] : memref<192xf32, #tpu.memory_space<smem>>
    %90 = vector.broadcast %89 : f32 to vector<16x128xf32>
    %91 = arith.mulf %88, %90 : vector<16x128xf32>
    %92 = arith.addf %78, %91 : vector<16x128xf32>
    %c19 = arith.constant 19 : index
    %93 = memref.load %arg1[%c19] : memref<192xf32, #tpu.memory_space<smem>>
    %94 = vector.broadcast %93 : f32 to vector<16x128xf32>
    %95 = arith.mulf %88, %94 : vector<16x128xf32>
    %96 = arith.addf %82, %95 : vector<16x128xf32>
    %c20 = arith.constant 20 : index
    %97 = memref.load %arg1[%c20] : memref<192xf32, #tpu.memory_space<smem>>
    %98 = vector.broadcast %97 : f32 to vector<16x128xf32>
    %99 = arith.mulf %88, %98 : vector<16x128xf32>
    %100 = arith.addf %86, %99 : vector<16x128xf32>
    %c7_23 = arith.constant 7 : index
    %c0_24 = arith.constant 0 : index
    %c0_25 = arith.constant 0 : index
    %101 = vector.load %arg4[%c7_23, %c0_24, %c0_25] : memref<64x16x128xf32, #tpu.memory_space<vmem>>, vector<1x16x128xf32>
    %102 = vector.shape_cast %101 : vector<1x16x128xf32> to vector<16x128xf32>
    %c21 = arith.constant 21 : index
    %103 = memref.load %arg1[%c21] : memref<192xf32, #tpu.memory_space<smem>>
    %104 = vector.broadcast %103 : f32 to vector<16x128xf32>
    %105 = arith.mulf %102, %104 : vector<16x128xf32>
    %106 = arith.addf %92, %105 : vector<16x128xf32>
    %c22 = arith.constant 22 : index
    %107 = memref.load %arg1[%c22] : memref<192xf32, #tpu.memory_space<smem>>
    %108 = vector.broadcast %107 : f32 to vector<16x128xf32>
    %109 = arith.mulf %102, %108 : vector<16x128xf32>
    %110 = arith.addf %96, %109 : vector<16x128xf32>
    %c23 = arith.constant 23 : index
    %111 = memref.load %arg1[%c23] : memref<192xf32, #tpu.memory_space<smem>>
    %112 = vector.broadcast %111 : f32 to vector<16x128xf32>
    %113 = arith.mulf %102, %112 : vector<16x128xf32>
    %114 = arith.addf %100, %113 : vector<16x128xf32>
    %c8_26 = arith.constant 8 : index
    %c0_27 = arith.constant 0 : index
    %c0_28 = arith.constant 0 : index
    %115 = vector.load %arg4[%c8_26, %c0_27, %c0_28] : memref<64x16x128xf32, #tpu.memory_space<vmem>>, vector<1x16x128xf32>
    %116 = vector.shape_cast %115 : vector<1x16x128xf32> to vector<16x128xf32>
    %c24 = arith.constant 24 : index
    %117 = memref.load %arg1[%c24] : memref<192xf32, #tpu.memory_space<smem>>
    %118 = vector.broadcast %117 : f32 to vector<16x128xf32>
    %119 = arith.mulf %116, %118 : vector<16x128xf32>
    %120 = arith.addf %106, %119 : vector<16x128xf32>
    %c25 = arith.constant 25 : index
    %121 = memref.load %arg1[%c25] : memref<192xf32, #tpu.memory_space<smem>>
    %122 = vector.broadcast %121 : f32 to vector<16x128xf32>
    %123 = arith.mulf %116, %122 : vector<16x128xf32>
    %124 = arith.addf %110, %123 : vector<16x128xf32>
    %c26 = arith.constant 26 : index
    %125 = memref.load %arg1[%c26] : memref<192xf32, #tpu.memory_space<smem>>
    %126 = vector.broadcast %125 : f32 to vector<16x128xf32>
    %127 = arith.mulf %116, %126 : vector<16x128xf32>
    %128 = arith.addf %114, %127 : vector<16x128xf32>
    %c9_29 = arith.constant 9 : index
    %c0_30 = arith.constant 0 : index
    %c0_31 = arith.constant 0 : index
    %129 = vector.load %arg4[%c9_29, %c0_30, %c0_31] : memref<64x16x128xf32, #tpu.memory_space<vmem>>, vector<1x16x128xf32>
    %130 = vector.shape_cast %129 : vector<1x16x128xf32> to vector<16x128xf32>
    %c27 = arith.constant 27 : index
    %131 = memref.load %arg1[%c27] : memref<192xf32, #tpu.memory_space<smem>>
    %132 = vector.broadcast %131 : f32 to vector<16x128xf32>
    %133 = arith.mulf %130, %132 : vector<16x128xf32>
    %134 = arith.addf %120, %133 : vector<16x128xf32>
    %c28 = arith.constant 28 : index
    %135 = memref.load %arg1[%c28] : memref<192xf32, #tpu.memory_space<smem>>
    %136 = vector.broadcast %135 : f32 to vector<16x128xf32>
    %137 = arith.mulf %130, %136 : vector<16x128xf32>
    %138 = arith.addf %124, %137 : vector<16x128xf32>
    %c29 = arith.constant 29 : index
    %139 = memref.load %arg1[%c29] : memref<192xf32, #tpu.memory_space<smem>>
    %140 = vector.broadcast %139 : f32 to vector<16x128xf32>
    %141 = arith.mulf %130, %140 : vector<16x128xf32>
    %142 = arith.addf %128, %141 : vector<16x128xf32>
    %c10_32 = arith.constant 10 : index
    %c0_33 = arith.constant 0 : index
    %c0_34 = arith.constant 0 : index
    %143 = vector.load %arg4[%c10_32, %c0_33, %c0_34] : memref<64x16x128xf32, #tpu.memory_space<vmem>>, vector<1x16x128xf32>
    %144 = vector.shape_cast %143 : vector<1x16x128xf32> to vector<16x128xf32>
    %c30 = arith.constant 30 : index
    %145 = memref.load %arg1[%c30] : memref<192xf32, #tpu.memory_space<smem>>
    %146 = vector.broadcast %145 : f32 to vector<16x128xf32>
    %147 = arith.mulf %144, %146 : vector<16x128xf32>
    %148 = arith.addf %134, %147 : vector<16x128xf32>
    %c31 = arith.constant 31 : index
    %149 = memref.load %arg1[%c31] : memref<192xf32, #tpu.memory_space<smem>>
    %150 = vector.broadcast %149 : f32 to vector<16x128xf32>
    %151 = arith.mulf %144, %150 : vector<16x128xf32>
    %152 = arith.addf %138, %151 : vector<16x128xf32>
    %c32 = arith.constant 32 : index
    %153 = memref.load %arg1[%c32] : memref<192xf32, #tpu.memory_space<smem>>
    %154 = vector.broadcast %153 : f32 to vector<16x128xf32>
    %155 = arith.mulf %144, %154 : vector<16x128xf32>
    %156 = arith.addf %142, %155 : vector<16x128xf32>
    %c11_35 = arith.constant 11 : index
    %c0_36 = arith.constant 0 : index
    %c0_37 = arith.constant 0 : index
    %157 = vector.load %arg4[%c11_35, %c0_36, %c0_37] : memref<64x16x128xf32, #tpu.memory_space<vmem>>, vector<1x16x128xf32>
    %158 = vector.shape_cast %157 : vector<1x16x128xf32> to vector<16x128xf32>
    %c33 = arith.constant 33 : index
    %159 = memref.load %arg1[%c33] : memref<192xf32, #tpu.memory_space<smem>>
    %160 = vector.broadcast %159 : f32 to vector<16x128xf32>
    %161 = arith.mulf %158, %160 : vector<16x128xf32>
    %162 = arith.addf %148, %161 : vector<16x128xf32>
    %c34 = arith.constant 34 : index
    %163 = memref.load %arg1[%c34] : memref<192xf32, #tpu.memory_space<smem>>
    %164 = vector.broadcast %163 : f32 to vector<16x128xf32>
    %165 = arith.mulf %158, %164 : vector<16x128xf32>
    %166 = arith.addf %152, %165 : vector<16x128xf32>
    %c35 = arith.constant 35 : index
    %167 = memref.load %arg1[%c35] : memref<192xf32, #tpu.memory_space<smem>>
    %168 = vector.broadcast %167 : f32 to vector<16x128xf32>
    %169 = arith.mulf %158, %168 : vector<16x128xf32>
    %170 = arith.addf %156, %169 : vector<16x128xf32>
    %c12_38 = arith.constant 12 : index
    %c0_39 = arith.constant 0 : index
    %c0_40 = arith.constant 0 : index
    %171 = vector.load %arg4[%c12_38, %c0_39, %c0_40] : memref<64x16x128xf32, #tpu.memory_space<vmem>>, vector<1x16x128xf32>
    %172 = vector.shape_cast %171 : vector<1x16x128xf32> to vector<16x128xf32>
    %c36 = arith.constant 36 : index
    %173 = memref.load %arg1[%c36] : memref<192xf32, #tpu.memory_space<smem>>
    %174 = vector.broadcast %173 : f32 to vector<16x128xf32>
    %175 = arith.mulf %172, %174 : vector<16x128xf32>
    %176 = arith.addf %162, %175 : vector<16x128xf32>
    %c37 = arith.constant 37 : index
    %177 = memref.load %arg1[%c37] : memref<192xf32, #tpu.memory_space<smem>>
    %178 = vector.broadcast %177 : f32 to vector<16x128xf32>
    %179 = arith.mulf %172, %178 : vector<16x128xf32>
    %180 = arith.addf %166, %179 : vector<16x128xf32>
    %c38 = arith.constant 38 : index
    %181 = memref.load %arg1[%c38] : memref<192xf32, #tpu.memory_space<smem>>
    %182 = vector.broadcast %181 : f32 to vector<16x128xf32>
    %183 = arith.mulf %172, %182 : vector<16x128xf32>
    %184 = arith.addf %170, %183 : vector<16x128xf32>
    %c13_41 = arith.constant 13 : index
    %c0_42 = arith.constant 0 : index
    %c0_43 = arith.constant 0 : index
    %185 = vector.load %arg4[%c13_41, %c0_42, %c0_43] : memref<64x16x128xf32, #tpu.memory_space<vmem>>, vector<1x16x128xf32>
    %186 = vector.shape_cast %185 : vector<1x16x128xf32> to vector<16x128xf32>
    %c39 = arith.constant 39 : index
    %187 = memref.load %arg1[%c39] : memref<192xf32, #tpu.memory_space<smem>>
    %188 = vector.broadcast %187 : f32 to vector<16x128xf32>
    %189 = arith.mulf %186, %188 : vector<16x128xf32>
    %190 = arith.addf %176, %189 : vector<16x128xf32>
    %c40 = arith.constant 40 : index
    %191 = memref.load %arg1[%c40] : memref<192xf32, #tpu.memory_space<smem>>
    %192 = vector.broadcast %191 : f32 to vector<16x128xf32>
    %193 = arith.mulf %186, %192 : vector<16x128xf32>
    %194 = arith.addf %180, %193 : vector<16x128xf32>
    %c41 = arith.constant 41 : index
    %195 = memref.load %arg1[%c41] : memref<192xf32, #tpu.memory_space<smem>>
    %196 = vector.broadcast %195 : f32 to vector<16x128xf32>
    %197 = arith.mulf %186, %196 : vector<16x128xf32>
    %198 = arith.addf %184, %197 : vector<16x128xf32>
    %c14_44 = arith.constant 14 : index
    %c0_45 = arith.constant 0 : index
    %c0_46 = arith.constant 0 : index
    %199 = vector.load %arg4[%c14_44, %c0_45, %c0_46] : memref<64x16x128xf32, #tpu.memory_space<vmem>>, vector<1x16x128xf32>
    %200 = vector.shape_cast %199 : vector<1x16x128xf32> to vector<16x128xf32>
    %c42 = arith.constant 42 : index
    %201 = memref.load %arg1[%c42] : memref<192xf32, #tpu.memory_space<smem>>
    %202 = vector.broadcast %201 : f32 to vector<16x128xf32>
    %203 = arith.mulf %200, %202 : vector<16x128xf32>
    %204 = arith.addf %190, %203 : vector<16x128xf32>
    %c43 = arith.constant 43 : index
    %205 = memref.load %arg1[%c43] : memref<192xf32, #tpu.memory_space<smem>>
    %206 = vector.broadcast %205 : f32 to vector<16x128xf32>
    %207 = arith.mulf %200, %206 : vector<16x128xf32>
    %208 = arith.addf %194, %207 : vector<16x128xf32>
    %c44 = arith.constant 44 : index
    %209 = memref.load %arg1[%c44] : memref<192xf32, #tpu.memory_space<smem>>
    %210 = vector.broadcast %209 : f32 to vector<16x128xf32>
    %211 = arith.mulf %200, %210 : vector<16x128xf32>
    %212 = arith.addf %198, %211 : vector<16x128xf32>
    %c15_47 = arith.constant 15 : index
    %c0_48 = arith.constant 0 : index
    %c0_49 = arith.constant 0 : index
    %213 = vector.load %arg4[%c15_47, %c0_48, %c0_49] : memref<64x16x128xf32, #tpu.memory_space<vmem>>, vector<1x16x128xf32>
    %214 = vector.shape_cast %213 : vector<1x16x128xf32> to vector<16x128xf32>
    %c45 = arith.constant 45 : index
    %215 = memref.load %arg1[%c45] : memref<192xf32, #tpu.memory_space<smem>>
    %216 = vector.broadcast %215 : f32 to vector<16x128xf32>
    %217 = arith.mulf %214, %216 : vector<16x128xf32>
    %218 = arith.addf %204, %217 : vector<16x128xf32>
    %c46 = arith.constant 46 : index
    %219 = memref.load %arg1[%c46] : memref<192xf32, #tpu.memory_space<smem>>
    %220 = vector.broadcast %219 : f32 to vector<16x128xf32>
    %221 = arith.mulf %214, %220 : vector<16x128xf32>
    %222 = arith.addf %208, %221 : vector<16x128xf32>
    %c47 = arith.constant 47 : index
    %223 = memref.load %arg1[%c47] : memref<192xf32, #tpu.memory_space<smem>>
    %224 = vector.broadcast %223 : f32 to vector<16x128xf32>
    %225 = arith.mulf %214, %224 : vector<16x128xf32>
    %226 = arith.addf %212, %225 : vector<16x128xf32>
    %c16_50 = arith.constant 16 : index
    %c0_51 = arith.constant 0 : index
    %c0_52 = arith.constant 0 : index
    %227 = vector.load %arg4[%c16_50, %c0_51, %c0_52] : memref<64x16x128xf32, #tpu.memory_space<vmem>>, vector<1x16x128xf32>
    %228 = vector.shape_cast %227 : vector<1x16x128xf32> to vector<16x128xf32>
    %c48 = arith.constant 48 : index
    %229 = memref.load %arg1[%c48] : memref<192xf32, #tpu.memory_space<smem>>
    %230 = vector.broadcast %229 : f32 to vector<16x128xf32>
    %231 = arith.mulf %228, %230 : vector<16x128xf32>
    %232 = arith.addf %218, %231 : vector<16x128xf32>
    %c49 = arith.constant 49 : index
    %233 = memref.load %arg1[%c49] : memref<192xf32, #tpu.memory_space<smem>>
    %234 = vector.broadcast %233 : f32 to vector<16x128xf32>
    %235 = arith.mulf %228, %234 : vector<16x128xf32>
    %236 = arith.addf %222, %235 : vector<16x128xf32>
    %c50 = arith.constant 50 : index
    %237 = memref.load %arg1[%c50] : memref<192xf32, #tpu.memory_space<smem>>
    %238 = vector.broadcast %237 : f32 to vector<16x128xf32>
    %239 = arith.mulf %228, %238 : vector<16x128xf32>
    %240 = arith.addf %226, %239 : vector<16x128xf32>
    %c17_53 = arith.constant 17 : index
    %c0_54 = arith.constant 0 : index
    %c0_55 = arith.constant 0 : index
    %241 = vector.load %arg4[%c17_53, %c0_54, %c0_55] : memref<64x16x128xf32, #tpu.memory_space<vmem>>, vector<1x16x128xf32>
    %242 = vector.shape_cast %241 : vector<1x16x128xf32> to vector<16x128xf32>
    %c51 = arith.constant 51 : index
    %243 = memref.load %arg1[%c51] : memref<192xf32, #tpu.memory_space<smem>>
    %244 = vector.broadcast %243 : f32 to vector<16x128xf32>
    %245 = arith.mulf %242, %244 : vector<16x128xf32>
    %246 = arith.addf %232, %245 : vector<16x128xf32>
    %c52 = arith.constant 52 : index
    %247 = memref.load %arg1[%c52] : memref<192xf32, #tpu.memory_space<smem>>
    %248 = vector.broadcast %247 : f32 to vector<16x128xf32>
    %249 = arith.mulf %242, %248 : vector<16x128xf32>
    %250 = arith.addf %236, %249 : vector<16x128xf32>
    %c53 = arith.constant 53 : index
    %251 = memref.load %arg1[%c53] : memref<192xf32, #tpu.memory_space<smem>>
    %252 = vector.broadcast %251 : f32 to vector<16x128xf32>
    %253 = arith.mulf %242, %252 : vector<16x128xf32>
    %254 = arith.addf %240, %253 : vector<16x128xf32>
    %c18_56 = arith.constant 18 : index
    %c0_57 = arith.constant 0 : index
    %c0_58 = arith.constant 0 : index
    %255 = vector.load %arg4[%c18_56, %c0_57, %c0_58] : memref<64x16x128xf32, #tpu.memory_space<vmem>>, vector<1x16x128xf32>
    %256 = vector.shape_cast %255 : vector<1x16x128xf32> to vector<16x128xf32>
    %c54 = arith.constant 54 : index
    %257 = memref.load %arg1[%c54] : memref<192xf32, #tpu.memory_space<smem>>
    %258 = vector.broadcast %257 : f32 to vector<16x128xf32>
    %259 = arith.mulf %256, %258 : vector<16x128xf32>
    %260 = arith.addf %246, %259 : vector<16x128xf32>
    %c55 = arith.constant 55 : index
    %261 = memref.load %arg1[%c55] : memref<192xf32, #tpu.memory_space<smem>>
    %262 = vector.broadcast %261 : f32 to vector<16x128xf32>
    %263 = arith.mulf %256, %262 : vector<16x128xf32>
    %264 = arith.addf %250, %263 : vector<16x128xf32>
    %c56 = arith.constant 56 : index
    %265 = memref.load %arg1[%c56] : memref<192xf32, #tpu.memory_space<smem>>
    %266 = vector.broadcast %265 : f32 to vector<16x128xf32>
    %267 = arith.mulf %256, %266 : vector<16x128xf32>
    %268 = arith.addf %254, %267 : vector<16x128xf32>
    %c19_59 = arith.constant 19 : index
    %c0_60 = arith.constant 0 : index
    %c0_61 = arith.constant 0 : index
    %269 = vector.load %arg4[%c19_59, %c0_60, %c0_61] : memref<64x16x128xf32, #tpu.memory_space<vmem>>, vector<1x16x128xf32>
    %270 = vector.shape_cast %269 : vector<1x16x128xf32> to vector<16x128xf32>
    %c57 = arith.constant 57 : index
    %271 = memref.load %arg1[%c57] : memref<192xf32, #tpu.memory_space<smem>>
    %272 = vector.broadcast %271 : f32 to vector<16x128xf32>
    %273 = arith.mulf %270, %272 : vector<16x128xf32>
    %274 = arith.addf %260, %273 : vector<16x128xf32>
    %c58 = arith.constant 58 : index
    %275 = memref.load %arg1[%c58] : memref<192xf32, #tpu.memory_space<smem>>
    %276 = vector.broadcast %275 : f32 to vector<16x128xf32>
    %277 = arith.mulf %270, %276 : vector<16x128xf32>
    %278 = arith.addf %264, %277 : vector<16x128xf32>
    %c59 = arith.constant 59 : index
    %279 = memref.load %arg1[%c59] : memref<192xf32, #tpu.memory_space<smem>>
    %280 = vector.broadcast %279 : f32 to vector<16x128xf32>
    %281 = arith.mulf %270, %280 : vector<16x128xf32>
    %282 = arith.addf %268, %281 : vector<16x128xf32>
    %c20_62 = arith.constant 20 : index
    %c0_63 = arith.constant 0 : index
    %c0_64 = arith.constant 0 : index
    %283 = vector.load %arg4[%c20_62, %c0_63, %c0_64] : memref<64x16x128xf32, #tpu.memory_space<vmem>>, vector<1x16x128xf32>
    %284 = vector.shape_cast %283 : vector<1x16x128xf32> to vector<16x128xf32>
    %c60 = arith.constant 60 : index
    %285 = memref.load %arg1[%c60] : memref<192xf32, #tpu.memory_space<smem>>
    %286 = vector.broadcast %285 : f32 to vector<16x128xf32>
    %287 = arith.mulf %284, %286 : vector<16x128xf32>
    %288 = arith.addf %274, %287 : vector<16x128xf32>
    %c61 = arith.constant 61 : index
    %289 = memref.load %arg1[%c61] : memref<192xf32, #tpu.memory_space<smem>>
    %290 = vector.broadcast %289 : f32 to vector<16x128xf32>
    %291 = arith.mulf %284, %290 : vector<16x128xf32>
    %292 = arith.addf %278, %291 : vector<16x128xf32>
    %c62 = arith.constant 62 : index
    %293 = memref.load %arg1[%c62] : memref<192xf32, #tpu.memory_space<smem>>
    %294 = vector.broadcast %293 : f32 to vector<16x128xf32>
    %295 = arith.mulf %284, %294 : vector<16x128xf32>
    %296 = arith.addf %282, %295 : vector<16x128xf32>
    %c21_65 = arith.constant 21 : index
    %c0_66 = arith.constant 0 : index
    %c0_67 = arith.constant 0 : index
    %297 = vector.load %arg4[%c21_65, %c0_66, %c0_67] : memref<64x16x128xf32, #tpu.memory_space<vmem>>, vector<1x16x128xf32>
    %298 = vector.shape_cast %297 : vector<1x16x128xf32> to vector<16x128xf32>
    %c63 = arith.constant 63 : index
    %299 = memref.load %arg1[%c63] : memref<192xf32, #tpu.memory_space<smem>>
    %300 = vector.broadcast %299 : f32 to vector<16x128xf32>
    %301 = arith.mulf %298, %300 : vector<16x128xf32>
    %302 = arith.addf %288, %301 : vector<16x128xf32>
    %c64 = arith.constant 64 : index
    %303 = memref.load %arg1[%c64] : memref<192xf32, #tpu.memory_space<smem>>
    %304 = vector.broadcast %303 : f32 to vector<16x128xf32>
    %305 = arith.mulf %298, %304 : vector<16x128xf32>
    %306 = arith.addf %292, %305 : vector<16x128xf32>
    %c65 = arith.constant 65 : index
    %307 = memref.load %arg1[%c65] : memref<192xf32, #tpu.memory_space<smem>>
    %308 = vector.broadcast %307 : f32 to vector<16x128xf32>
    %309 = arith.mulf %298, %308 : vector<16x128xf32>
    %310 = arith.addf %296, %309 : vector<16x128xf32>
    %c22_68 = arith.constant 22 : index
    %c0_69 = arith.constant 0 : index
    %c0_70 = arith.constant 0 : index
    %311 = vector.load %arg4[%c22_68, %c0_69, %c0_70] : memref<64x16x128xf32, #tpu.memory_space<vmem>>, vector<1x16x128xf32>
    %312 = vector.shape_cast %311 : vector<1x16x128xf32> to vector<16x128xf32>
    %c66 = arith.constant 66 : index
    %313 = memref.load %arg1[%c66] : memref<192xf32, #tpu.memory_space<smem>>
    %314 = vector.broadcast %313 : f32 to vector<16x128xf32>
    %315 = arith.mulf %312, %314 : vector<16x128xf32>
    %316 = arith.addf %302, %315 : vector<16x128xf32>
    %c67 = arith.constant 67 : index
    %317 = memref.load %arg1[%c67] : memref<192xf32, #tpu.memory_space<smem>>
    %318 = vector.broadcast %317 : f32 to vector<16x128xf32>
    %319 = arith.mulf %312, %318 : vector<16x128xf32>
    %320 = arith.addf %306, %319 : vector<16x128xf32>
    %c68 = arith.constant 68 : index
    %321 = memref.load %arg1[%c68] : memref<192xf32, #tpu.memory_space<smem>>
    %322 = vector.broadcast %321 : f32 to vector<16x128xf32>
    %323 = arith.mulf %312, %322 : vector<16x128xf32>
    %324 = arith.addf %310, %323 : vector<16x128xf32>
    %c23_71 = arith.constant 23 : index
    %c0_72 = arith.constant 0 : index
    %c0_73 = arith.constant 0 : index
    %325 = vector.load %arg4[%c23_71, %c0_72, %c0_73] : memref<64x16x128xf32, #tpu.memory_space<vmem>>, vector<1x16x128xf32>
    %326 = vector.shape_cast %325 : vector<1x16x128xf32> to vector<16x128xf32>
    %c69 = arith.constant 69 : index
    %327 = memref.load %arg1[%c69] : memref<192xf32, #tpu.memory_space<smem>>
    %328 = vector.broadcast %327 : f32 to vector<16x128xf32>
    %329 = arith.mulf %326, %328 : vector<16x128xf32>
    %330 = arith.addf %316, %329 : vector<16x128xf32>
    %c70 = arith.constant 70 : index
    %331 = memref.load %arg1[%c70] : memref<192xf32, #tpu.memory_space<smem>>
    %332 = vector.broadcast %331 : f32 to vector<16x128xf32>
    %333 = arith.mulf %326, %332 : vector<16x128xf32>
    %334 = arith.addf %320, %333 : vector<16x128xf32>
    %c71 = arith.constant 71 : index
    %335 = memref.load %arg1[%c71] : memref<192xf32, #tpu.memory_space<smem>>
    %336 = vector.broadcast %335 : f32 to vector<16x128xf32>
    %337 = arith.mulf %326, %336 : vector<16x128xf32>
    %338 = arith.addf %324, %337 : vector<16x128xf32>
    %c24_74 = arith.constant 24 : index
    %c0_75 = arith.constant 0 : index
    %c0_76 = arith.constant 0 : index
    %339 = vector.load %arg4[%c24_74, %c0_75, %c0_76] : memref<64x16x128xf32, #tpu.memory_space<vmem>>, vector<1x16x128xf32>
    %340 = vector.shape_cast %339 : vector<1x16x128xf32> to vector<16x128xf32>
    %c72 = arith.constant 72 : index
    %341 = memref.load %arg1[%c72] : memref<192xf32, #tpu.memory_space<smem>>
    %342 = vector.broadcast %341 : f32 to vector<16x128xf32>
    %343 = arith.mulf %340, %342 : vector<16x128xf32>
    %344 = arith.addf %330, %343 : vector<16x128xf32>
    %c73 = arith.constant 73 : index
    %345 = memref.load %arg1[%c73] : memref<192xf32, #tpu.memory_space<smem>>
    %346 = vector.broadcast %345 : f32 to vector<16x128xf32>
    %347 = arith.mulf %340, %346 : vector<16x128xf32>
    %348 = arith.addf %334, %347 : vector<16x128xf32>
    %c74 = arith.constant 74 : index
    %349 = memref.load %arg1[%c74] : memref<192xf32, #tpu.memory_space<smem>>
    %350 = vector.broadcast %349 : f32 to vector<16x128xf32>
    %351 = arith.mulf %340, %350 : vector<16x128xf32>
    %352 = arith.addf %338, %351 : vector<16x128xf32>
    %c25_77 = arith.constant 25 : index
    %c0_78 = arith.constant 0 : index
    %c0_79 = arith.constant 0 : index
    %353 = vector.load %arg4[%c25_77, %c0_78, %c0_79] : memref<64x16x128xf32, #tpu.memory_space<vmem>>, vector<1x16x128xf32>
    %354 = vector.shape_cast %353 : vector<1x16x128xf32> to vector<16x128xf32>
    %c75 = arith.constant 75 : index
    %355 = memref.load %arg1[%c75] : memref<192xf32, #tpu.memory_space<smem>>
    %356 = vector.broadcast %355 : f32 to vector<16x128xf32>
    %357 = arith.mulf %354, %356 : vector<16x128xf32>
    %358 = arith.addf %344, %357 : vector<16x128xf32>
    %c76 = arith.constant 76 : index
    %359 = memref.load %arg1[%c76] : memref<192xf32, #tpu.memory_space<smem>>
    %360 = vector.broadcast %359 : f32 to vector<16x128xf32>
    %361 = arith.mulf %354, %360 : vector<16x128xf32>
    %362 = arith.addf %348, %361 : vector<16x128xf32>
    %c77 = arith.constant 77 : index
    %363 = memref.load %arg1[%c77] : memref<192xf32, #tpu.memory_space<smem>>
    %364 = vector.broadcast %363 : f32 to vector<16x128xf32>
    %365 = arith.mulf %354, %364 : vector<16x128xf32>
    %366 = arith.addf %352, %365 : vector<16x128xf32>
    %c26_80 = arith.constant 26 : index
    %c0_81 = arith.constant 0 : index
    %c0_82 = arith.constant 0 : index
    %367 = vector.load %arg4[%c26_80, %c0_81, %c0_82] : memref<64x16x128xf32, #tpu.memory_space<vmem>>, vector<1x16x128xf32>
    %368 = vector.shape_cast %367 : vector<1x16x128xf32> to vector<16x128xf32>
    %c78 = arith.constant 78 : index
    %369 = memref.load %arg1[%c78] : memref<192xf32, #tpu.memory_space<smem>>
    %370 = vector.broadcast %369 : f32 to vector<16x128xf32>
    %371 = arith.mulf %368, %370 : vector<16x128xf32>
    %372 = arith.addf %358, %371 : vector<16x128xf32>
    %c79 = arith.constant 79 : index
    %373 = memref.load %arg1[%c79] : memref<192xf32, #tpu.memory_space<smem>>
    %374 = vector.broadcast %373 : f32 to vector<16x128xf32>
    %375 = arith.mulf %368, %374 : vector<16x128xf32>
    %376 = arith.addf %362, %375 : vector<16x128xf32>
    %c80 = arith.constant 80 : index
    %377 = memref.load %arg1[%c80] : memref<192xf32, #tpu.memory_space<smem>>
    %378 = vector.broadcast %377 : f32 to vector<16x128xf32>
    %379 = arith.mulf %368, %378 : vector<16x128xf32>
    %380 = arith.addf %366, %379 : vector<16x128xf32>
    %c27_83 = arith.constant 27 : index
    %c0_84 = arith.constant 0 : index
    %c0_85 = arith.constant 0 : index
    %381 = vector.load %arg4[%c27_83, %c0_84, %c0_85] : memref<64x16x128xf32, #tpu.memory_space<vmem>>, vector<1x16x128xf32>
    %382 = vector.shape_cast %381 : vector<1x16x128xf32> to vector<16x128xf32>
    %c81 = arith.constant 81 : index
    %383 = memref.load %arg1[%c81] : memref<192xf32, #tpu.memory_space<smem>>
    %384 = vector.broadcast %383 : f32 to vector<16x128xf32>
    %385 = arith.mulf %382, %384 : vector<16x128xf32>
    %386 = arith.addf %372, %385 : vector<16x128xf32>
    %c82 = arith.constant 82 : index
    %387 = memref.load %arg1[%c82] : memref<192xf32, #tpu.memory_space<smem>>
    %388 = vector.broadcast %387 : f32 to vector<16x128xf32>
    %389 = arith.mulf %382, %388 : vector<16x128xf32>
    %390 = arith.addf %376, %389 : vector<16x128xf32>
    %c83 = arith.constant 83 : index
    %391 = memref.load %arg1[%c83] : memref<192xf32, #tpu.memory_space<smem>>
    %392 = vector.broadcast %391 : f32 to vector<16x128xf32>
    %393 = arith.mulf %382, %392 : vector<16x128xf32>
    %394 = arith.addf %380, %393 : vector<16x128xf32>
    %c28_86 = arith.constant 28 : index
    %c0_87 = arith.constant 0 : index
    %c0_88 = arith.constant 0 : index
    %395 = vector.load %arg4[%c28_86, %c0_87, %c0_88] : memref<64x16x128xf32, #tpu.memory_space<vmem>>, vector<1x16x128xf32>
    %396 = vector.shape_cast %395 : vector<1x16x128xf32> to vector<16x128xf32>
    %c84 = arith.constant 84 : index
    %397 = memref.load %arg1[%c84] : memref<192xf32, #tpu.memory_space<smem>>
    %398 = vector.broadcast %397 : f32 to vector<16x128xf32>
    %399 = arith.mulf %396, %398 : vector<16x128xf32>
    %400 = arith.addf %386, %399 : vector<16x128xf32>
    %c85 = arith.constant 85 : index
    %401 = memref.load %arg1[%c85] : memref<192xf32, #tpu.memory_space<smem>>
    %402 = vector.broadcast %401 : f32 to vector<16x128xf32>
    %403 = arith.mulf %396, %402 : vector<16x128xf32>
    %404 = arith.addf %390, %403 : vector<16x128xf32>
    %c86 = arith.constant 86 : index
    %405 = memref.load %arg1[%c86] : memref<192xf32, #tpu.memory_space<smem>>
    %406 = vector.broadcast %405 : f32 to vector<16x128xf32>
    %407 = arith.mulf %396, %406 : vector<16x128xf32>
    %408 = arith.addf %394, %407 : vector<16x128xf32>
    %c29_89 = arith.constant 29 : index
    %c0_90 = arith.constant 0 : index
    %c0_91 = arith.constant 0 : index
    %409 = vector.load %arg4[%c29_89, %c0_90, %c0_91] : memref<64x16x128xf32, #tpu.memory_space<vmem>>, vector<1x16x128xf32>
    %410 = vector.shape_cast %409 : vector<1x16x128xf32> to vector<16x128xf32>
    %c87 = arith.constant 87 : index
    %411 = memref.load %arg1[%c87] : memref<192xf32, #tpu.memory_space<smem>>
    %412 = vector.broadcast %411 : f32 to vector<16x128xf32>
    %413 = arith.mulf %410, %412 : vector<16x128xf32>
    %414 = arith.addf %400, %413 : vector<16x128xf32>
    %c88 = arith.constant 88 : index
    %415 = memref.load %arg1[%c88] : memref<192xf32, #tpu.memory_space<smem>>
    %416 = vector.broadcast %415 : f32 to vector<16x128xf32>
    %417 = arith.mulf %410, %416 : vector<16x128xf32>
    %418 = arith.addf %404, %417 : vector<16x128xf32>
    %c89 = arith.constant 89 : index
    %419 = memref.load %arg1[%c89] : memref<192xf32, #tpu.memory_space<smem>>
    %420 = vector.broadcast %419 : f32 to vector<16x128xf32>
    %421 = arith.mulf %410, %420 : vector<16x128xf32>
    %422 = arith.addf %408, %421 : vector<16x128xf32>
    %c30_92 = arith.constant 30 : index
    %c0_93 = arith.constant 0 : index
    %c0_94 = arith.constant 0 : index
    %423 = vector.load %arg4[%c30_92, %c0_93, %c0_94] : memref<64x16x128xf32, #tpu.memory_space<vmem>>, vector<1x16x128xf32>
    %424 = vector.shape_cast %423 : vector<1x16x128xf32> to vector<16x128xf32>
    %c90 = arith.constant 90 : index
    %425 = memref.load %arg1[%c90] : memref<192xf32, #tpu.memory_space<smem>>
    %426 = vector.broadcast %425 : f32 to vector<16x128xf32>
    %427 = arith.mulf %424, %426 : vector<16x128xf32>
    %428 = arith.addf %414, %427 : vector<16x128xf32>
    %c91 = arith.constant 91 : index
    %429 = memref.load %arg1[%c91] : memref<192xf32, #tpu.memory_space<smem>>
    %430 = vector.broadcast %429 : f32 to vector<16x128xf32>
    %431 = arith.mulf %424, %430 : vector<16x128xf32>
    %432 = arith.addf %418, %431 : vector<16x128xf32>
    %c92 = arith.constant 92 : index
    %433 = memref.load %arg1[%c92] : memref<192xf32, #tpu.memory_space<smem>>
    %434 = vector.broadcast %433 : f32 to vector<16x128xf32>
    %435 = arith.mulf %424, %434 : vector<16x128xf32>
    %436 = arith.addf %422, %435 : vector<16x128xf32>
    %c31_95 = arith.constant 31 : index
    %c0_96 = arith.constant 0 : index
    %c0_97 = arith.constant 0 : index
    %437 = vector.load %arg4[%c31_95, %c0_96, %c0_97] : memref<64x16x128xf32, #tpu.memory_space<vmem>>, vector<1x16x128xf32>
    %438 = vector.shape_cast %437 : vector<1x16x128xf32> to vector<16x128xf32>
    %c93 = arith.constant 93 : index
    %439 = memref.load %arg1[%c93] : memref<192xf32, #tpu.memory_space<smem>>
    %440 = vector.broadcast %439 : f32 to vector<16x128xf32>
    %441 = arith.mulf %438, %440 : vector<16x128xf32>
    %442 = arith.addf %428, %441 : vector<16x128xf32>
    %c94 = arith.constant 94 : index
    %443 = memref.load %arg1[%c94] : memref<192xf32, #tpu.memory_space<smem>>
    %444 = vector.broadcast %443 : f32 to vector<16x128xf32>
    %445 = arith.mulf %438, %444 : vector<16x128xf32>
    %446 = arith.addf %432, %445 : vector<16x128xf32>
    %c95 = arith.constant 95 : index
    %447 = memref.load %arg1[%c95] : memref<192xf32, #tpu.memory_space<smem>>
    %448 = vector.broadcast %447 : f32 to vector<16x128xf32>
    %449 = arith.mulf %438, %448 : vector<16x128xf32>
    %450 = arith.addf %436, %449 : vector<16x128xf32>
    %c32_98 = arith.constant 32 : index
    %c0_99 = arith.constant 0 : index
    %c0_100 = arith.constant 0 : index
    %451 = vector.load %arg4[%c32_98, %c0_99, %c0_100] : memref<64x16x128xf32, #tpu.memory_space<vmem>>, vector<1x16x128xf32>
    %452 = vector.shape_cast %451 : vector<1x16x128xf32> to vector<16x128xf32>
    %c96 = arith.constant 96 : index
    %453 = memref.load %arg1[%c96] : memref<192xf32, #tpu.memory_space<smem>>
    %454 = vector.broadcast %453 : f32 to vector<16x128xf32>
    %455 = arith.mulf %452, %454 : vector<16x128xf32>
    %456 = arith.addf %442, %455 : vector<16x128xf32>
    %c97 = arith.constant 97 : index
    %457 = memref.load %arg1[%c97] : memref<192xf32, #tpu.memory_space<smem>>
    %458 = vector.broadcast %457 : f32 to vector<16x128xf32>
    %459 = arith.mulf %452, %458 : vector<16x128xf32>
    %460 = arith.addf %446, %459 : vector<16x128xf32>
    %c98 = arith.constant 98 : index
    %461 = memref.load %arg1[%c98] : memref<192xf32, #tpu.memory_space<smem>>
    %462 = vector.broadcast %461 : f32 to vector<16x128xf32>
    %463 = arith.mulf %452, %462 : vector<16x128xf32>
    %464 = arith.addf %450, %463 : vector<16x128xf32>
    %c33_101 = arith.constant 33 : index
    %c0_102 = arith.constant 0 : index
    %c0_103 = arith.constant 0 : index
    %465 = vector.load %arg4[%c33_101, %c0_102, %c0_103] : memref<64x16x128xf32, #tpu.memory_space<vmem>>, vector<1x16x128xf32>
    %466 = vector.shape_cast %465 : vector<1x16x128xf32> to vector<16x128xf32>
    %c99 = arith.constant 99 : index
    %467 = memref.load %arg1[%c99] : memref<192xf32, #tpu.memory_space<smem>>
    %468 = vector.broadcast %467 : f32 to vector<16x128xf32>
    %469 = arith.mulf %466, %468 : vector<16x128xf32>
    %470 = arith.addf %456, %469 : vector<16x128xf32>
    %c100 = arith.constant 100 : index
    %471 = memref.load %arg1[%c100] : memref<192xf32, #tpu.memory_space<smem>>
    %472 = vector.broadcast %471 : f32 to vector<16x128xf32>
    %473 = arith.mulf %466, %472 : vector<16x128xf32>
    %474 = arith.addf %460, %473 : vector<16x128xf32>
    %c101 = arith.constant 101 : index
    %475 = memref.load %arg1[%c101] : memref<192xf32, #tpu.memory_space<smem>>
    %476 = vector.broadcast %475 : f32 to vector<16x128xf32>
    %477 = arith.mulf %466, %476 : vector<16x128xf32>
    %478 = arith.addf %464, %477 : vector<16x128xf32>
    %c34_104 = arith.constant 34 : index
    %c0_105 = arith.constant 0 : index
    %c0_106 = arith.constant 0 : index
    %479 = vector.load %arg4[%c34_104, %c0_105, %c0_106] : memref<64x16x128xf32, #tpu.memory_space<vmem>>, vector<1x16x128xf32>
    %480 = vector.shape_cast %479 : vector<1x16x128xf32> to vector<16x128xf32>
    %c102 = arith.constant 102 : index
    %481 = memref.load %arg1[%c102] : memref<192xf32, #tpu.memory_space<smem>>
    %482 = vector.broadcast %481 : f32 to vector<16x128xf32>
    %483 = arith.mulf %480, %482 : vector<16x128xf32>
    %484 = arith.addf %470, %483 : vector<16x128xf32>
    %c103 = arith.constant 103 : index
    %485 = memref.load %arg1[%c103] : memref<192xf32, #tpu.memory_space<smem>>
    %486 = vector.broadcast %485 : f32 to vector<16x128xf32>
    %487 = arith.mulf %480, %486 : vector<16x128xf32>
    %488 = arith.addf %474, %487 : vector<16x128xf32>
    %c104 = arith.constant 104 : index
    %489 = memref.load %arg1[%c104] : memref<192xf32, #tpu.memory_space<smem>>
    %490 = vector.broadcast %489 : f32 to vector<16x128xf32>
    %491 = arith.mulf %480, %490 : vector<16x128xf32>
    %492 = arith.addf %478, %491 : vector<16x128xf32>
    %c35_107 = arith.constant 35 : index
    %c0_108 = arith.constant 0 : index
    %c0_109 = arith.constant 0 : index
    %493 = vector.load %arg4[%c35_107, %c0_108, %c0_109] : memref<64x16x128xf32, #tpu.memory_space<vmem>>, vector<1x16x128xf32>
    %494 = vector.shape_cast %493 : vector<1x16x128xf32> to vector<16x128xf32>
    %c105 = arith.constant 105 : index
    %495 = memref.load %arg1[%c105] : memref<192xf32, #tpu.memory_space<smem>>
    %496 = vector.broadcast %495 : f32 to vector<16x128xf32>
    %497 = arith.mulf %494, %496 : vector<16x128xf32>
    %498 = arith.addf %484, %497 : vector<16x128xf32>
    %c106 = arith.constant 106 : index
    %499 = memref.load %arg1[%c106] : memref<192xf32, #tpu.memory_space<smem>>
    %500 = vector.broadcast %499 : f32 to vector<16x128xf32>
    %501 = arith.mulf %494, %500 : vector<16x128xf32>
    %502 = arith.addf %488, %501 : vector<16x128xf32>
    %c107 = arith.constant 107 : index
    %503 = memref.load %arg1[%c107] : memref<192xf32, #tpu.memory_space<smem>>
    %504 = vector.broadcast %503 : f32 to vector<16x128xf32>
    %505 = arith.mulf %494, %504 : vector<16x128xf32>
    %506 = arith.addf %492, %505 : vector<16x128xf32>
    %c36_110 = arith.constant 36 : index
    %c0_111 = arith.constant 0 : index
    %c0_112 = arith.constant 0 : index
    %507 = vector.load %arg4[%c36_110, %c0_111, %c0_112] : memref<64x16x128xf32, #tpu.memory_space<vmem>>, vector<1x16x128xf32>
    %508 = vector.shape_cast %507 : vector<1x16x128xf32> to vector<16x128xf32>
    %c108 = arith.constant 108 : index
    %509 = memref.load %arg1[%c108] : memref<192xf32, #tpu.memory_space<smem>>
    %510 = vector.broadcast %509 : f32 to vector<16x128xf32>
    %511 = arith.mulf %508, %510 : vector<16x128xf32>
    %512 = arith.addf %498, %511 : vector<16x128xf32>
    %c109 = arith.constant 109 : index
    %513 = memref.load %arg1[%c109] : memref<192xf32, #tpu.memory_space<smem>>
    %514 = vector.broadcast %513 : f32 to vector<16x128xf32>
    %515 = arith.mulf %508, %514 : vector<16x128xf32>
    %516 = arith.addf %502, %515 : vector<16x128xf32>
    %c110 = arith.constant 110 : index
    %517 = memref.load %arg1[%c110] : memref<192xf32, #tpu.memory_space<smem>>
    %518 = vector.broadcast %517 : f32 to vector<16x128xf32>
    %519 = arith.mulf %508, %518 : vector<16x128xf32>
    %520 = arith.addf %506, %519 : vector<16x128xf32>
    %c37_113 = arith.constant 37 : index
    %c0_114 = arith.constant 0 : index
    %c0_115 = arith.constant 0 : index
    %521 = vector.load %arg4[%c37_113, %c0_114, %c0_115] : memref<64x16x128xf32, #tpu.memory_space<vmem>>, vector<1x16x128xf32>
    %522 = vector.shape_cast %521 : vector<1x16x128xf32> to vector<16x128xf32>
    %c111 = arith.constant 111 : index
    %523 = memref.load %arg1[%c111] : memref<192xf32, #tpu.memory_space<smem>>
    %524 = vector.broadcast %523 : f32 to vector<16x128xf32>
    %525 = arith.mulf %522, %524 : vector<16x128xf32>
    %526 = arith.addf %512, %525 : vector<16x128xf32>
    %c112 = arith.constant 112 : index
    %527 = memref.load %arg1[%c112] : memref<192xf32, #tpu.memory_space<smem>>
    %528 = vector.broadcast %527 : f32 to vector<16x128xf32>
    %529 = arith.mulf %522, %528 : vector<16x128xf32>
    %530 = arith.addf %516, %529 : vector<16x128xf32>
    %c113 = arith.constant 113 : index
    %531 = memref.load %arg1[%c113] : memref<192xf32, #tpu.memory_space<smem>>
    %532 = vector.broadcast %531 : f32 to vector<16x128xf32>
    %533 = arith.mulf %522, %532 : vector<16x128xf32>
    %534 = arith.addf %520, %533 : vector<16x128xf32>
    %c38_116 = arith.constant 38 : index
    %c0_117 = arith.constant 0 : index
    %c0_118 = arith.constant 0 : index
    %535 = vector.load %arg4[%c38_116, %c0_117, %c0_118] : memref<64x16x128xf32, #tpu.memory_space<vmem>>, vector<1x16x128xf32>
    %536 = vector.shape_cast %535 : vector<1x16x128xf32> to vector<16x128xf32>
    %c114 = arith.constant 114 : index
    %537 = memref.load %arg1[%c114] : memref<192xf32, #tpu.memory_space<smem>>
    %538 = vector.broadcast %537 : f32 to vector<16x128xf32>
    %539 = arith.mulf %536, %538 : vector<16x128xf32>
    %540 = arith.addf %526, %539 : vector<16x128xf32>
    %c115 = arith.constant 115 : index
    %541 = memref.load %arg1[%c115] : memref<192xf32, #tpu.memory_space<smem>>
    %542 = vector.broadcast %541 : f32 to vector<16x128xf32>
    %543 = arith.mulf %536, %542 : vector<16x128xf32>
    %544 = arith.addf %530, %543 : vector<16x128xf32>
    %c116 = arith.constant 116 : index
    %545 = memref.load %arg1[%c116] : memref<192xf32, #tpu.memory_space<smem>>
    %546 = vector.broadcast %545 : f32 to vector<16x128xf32>
    %547 = arith.mulf %536, %546 : vector<16x128xf32>
    %548 = arith.addf %534, %547 : vector<16x128xf32>
    %c39_119 = arith.constant 39 : index
    %c0_120 = arith.constant 0 : index
    %c0_121 = arith.constant 0 : index
    %549 = vector.load %arg4[%c39_119, %c0_120, %c0_121] : memref<64x16x128xf32, #tpu.memory_space<vmem>>, vector<1x16x128xf32>
    %550 = vector.shape_cast %549 : vector<1x16x128xf32> to vector<16x128xf32>
    %c117 = arith.constant 117 : index
    %551 = memref.load %arg1[%c117] : memref<192xf32, #tpu.memory_space<smem>>
    %552 = vector.broadcast %551 : f32 to vector<16x128xf32>
    %553 = arith.mulf %550, %552 : vector<16x128xf32>
    %554 = arith.addf %540, %553 : vector<16x128xf32>
    %c118 = arith.constant 118 : index
    %555 = memref.load %arg1[%c118] : memref<192xf32, #tpu.memory_space<smem>>
    %556 = vector.broadcast %555 : f32 to vector<16x128xf32>
    %557 = arith.mulf %550, %556 : vector<16x128xf32>
    %558 = arith.addf %544, %557 : vector<16x128xf32>
    %c119 = arith.constant 119 : index
    %559 = memref.load %arg1[%c119] : memref<192xf32, #tpu.memory_space<smem>>
    %560 = vector.broadcast %559 : f32 to vector<16x128xf32>
    %561 = arith.mulf %550, %560 : vector<16x128xf32>
    %562 = arith.addf %548, %561 : vector<16x128xf32>
    %c40_122 = arith.constant 40 : index
    %c0_123 = arith.constant 0 : index
    %c0_124 = arith.constant 0 : index
    %563 = vector.load %arg4[%c40_122, %c0_123, %c0_124] : memref<64x16x128xf32, #tpu.memory_space<vmem>>, vector<1x16x128xf32>
    %564 = vector.shape_cast %563 : vector<1x16x128xf32> to vector<16x128xf32>
    %c120 = arith.constant 120 : index
    %565 = memref.load %arg1[%c120] : memref<192xf32, #tpu.memory_space<smem>>
    %566 = vector.broadcast %565 : f32 to vector<16x128xf32>
    %567 = arith.mulf %564, %566 : vector<16x128xf32>
    %568 = arith.addf %554, %567 : vector<16x128xf32>
    %c121 = arith.constant 121 : index
    %569 = memref.load %arg1[%c121] : memref<192xf32, #tpu.memory_space<smem>>
    %570 = vector.broadcast %569 : f32 to vector<16x128xf32>
    %571 = arith.mulf %564, %570 : vector<16x128xf32>
    %572 = arith.addf %558, %571 : vector<16x128xf32>
    %c122 = arith.constant 122 : index
    %573 = memref.load %arg1[%c122] : memref<192xf32, #tpu.memory_space<smem>>
    %574 = vector.broadcast %573 : f32 to vector<16x128xf32>
    %575 = arith.mulf %564, %574 : vector<16x128xf32>
    %576 = arith.addf %562, %575 : vector<16x128xf32>
    %c41_125 = arith.constant 41 : index
    %c0_126 = arith.constant 0 : index
    %c0_127 = arith.constant 0 : index
    %577 = vector.load %arg4[%c41_125, %c0_126, %c0_127] : memref<64x16x128xf32, #tpu.memory_space<vmem>>, vector<1x16x128xf32>
    %578 = vector.shape_cast %577 : vector<1x16x128xf32> to vector<16x128xf32>
    %c123 = arith.constant 123 : index
    %579 = memref.load %arg1[%c123] : memref<192xf32, #tpu.memory_space<smem>>
    %580 = vector.broadcast %579 : f32 to vector<16x128xf32>
    %581 = arith.mulf %578, %580 : vector<16x128xf32>
    %582 = arith.addf %568, %581 : vector<16x128xf32>
    %c124 = arith.constant 124 : index
    %583 = memref.load %arg1[%c124] : memref<192xf32, #tpu.memory_space<smem>>
    %584 = vector.broadcast %583 : f32 to vector<16x128xf32>
    %585 = arith.mulf %578, %584 : vector<16x128xf32>
    %586 = arith.addf %572, %585 : vector<16x128xf32>
    %c125 = arith.constant 125 : index
    %587 = memref.load %arg1[%c125] : memref<192xf32, #tpu.memory_space<smem>>
    %588 = vector.broadcast %587 : f32 to vector<16x128xf32>
    %589 = arith.mulf %578, %588 : vector<16x128xf32>
    %590 = arith.addf %576, %589 : vector<16x128xf32>
    %c42_128 = arith.constant 42 : index
    %c0_129 = arith.constant 0 : index
    %c0_130 = arith.constant 0 : index
    %591 = vector.load %arg4[%c42_128, %c0_129, %c0_130] : memref<64x16x128xf32, #tpu.memory_space<vmem>>, vector<1x16x128xf32>
    %592 = vector.shape_cast %591 : vector<1x16x128xf32> to vector<16x128xf32>
    %c126 = arith.constant 126 : index
    %593 = memref.load %arg1[%c126] : memref<192xf32, #tpu.memory_space<smem>>
    %594 = vector.broadcast %593 : f32 to vector<16x128xf32>
    %595 = arith.mulf %592, %594 : vector<16x128xf32>
    %596 = arith.addf %582, %595 : vector<16x128xf32>
    %c127 = arith.constant 127 : index
    %597 = memref.load %arg1[%c127] : memref<192xf32, #tpu.memory_space<smem>>
    %598 = vector.broadcast %597 : f32 to vector<16x128xf32>
    %599 = arith.mulf %592, %598 : vector<16x128xf32>
    %600 = arith.addf %586, %599 : vector<16x128xf32>
    %c128 = arith.constant 128 : index
    %601 = memref.load %arg1[%c128] : memref<192xf32, #tpu.memory_space<smem>>
    %602 = vector.broadcast %601 : f32 to vector<16x128xf32>
    %603 = arith.mulf %592, %602 : vector<16x128xf32>
    %604 = arith.addf %590, %603 : vector<16x128xf32>
    %c43_131 = arith.constant 43 : index
    %c0_132 = arith.constant 0 : index
    %c0_133 = arith.constant 0 : index
    %605 = vector.load %arg4[%c43_131, %c0_132, %c0_133] : memref<64x16x128xf32, #tpu.memory_space<vmem>>, vector<1x16x128xf32>
    %606 = vector.shape_cast %605 : vector<1x16x128xf32> to vector<16x128xf32>
    %c129 = arith.constant 129 : index
    %607 = memref.load %arg1[%c129] : memref<192xf32, #tpu.memory_space<smem>>
    %608 = vector.broadcast %607 : f32 to vector<16x128xf32>
    %609 = arith.mulf %606, %608 : vector<16x128xf32>
    %610 = arith.addf %596, %609 : vector<16x128xf32>
    %c130 = arith.constant 130 : index
    %611 = memref.load %arg1[%c130] : memref<192xf32, #tpu.memory_space<smem>>
    %612 = vector.broadcast %611 : f32 to vector<16x128xf32>
    %613 = arith.mulf %606, %612 : vector<16x128xf32>
    %614 = arith.addf %600, %613 : vector<16x128xf32>
    %c131 = arith.constant 131 : index
    %615 = memref.load %arg1[%c131] : memref<192xf32, #tpu.memory_space<smem>>
    %616 = vector.broadcast %615 : f32 to vector<16x128xf32>
    %617 = arith.mulf %606, %616 : vector<16x128xf32>
    %618 = arith.addf %604, %617 : vector<16x128xf32>
    %c44_134 = arith.constant 44 : index
    %c0_135 = arith.constant 0 : index
    %c0_136 = arith.constant 0 : index
    %619 = vector.load %arg4[%c44_134, %c0_135, %c0_136] : memref<64x16x128xf32, #tpu.memory_space<vmem>>, vector<1x16x128xf32>
    %620 = vector.shape_cast %619 : vector<1x16x128xf32> to vector<16x128xf32>
    %c132 = arith.constant 132 : index
    %621 = memref.load %arg1[%c132] : memref<192xf32, #tpu.memory_space<smem>>
    %622 = vector.broadcast %621 : f32 to vector<16x128xf32>
    %623 = arith.mulf %620, %622 : vector<16x128xf32>
    %624 = arith.addf %610, %623 : vector<16x128xf32>
    %c133 = arith.constant 133 : index
    %625 = memref.load %arg1[%c133] : memref<192xf32, #tpu.memory_space<smem>>
    %626 = vector.broadcast %625 : f32 to vector<16x128xf32>
    %627 = arith.mulf %620, %626 : vector<16x128xf32>
    %628 = arith.addf %614, %627 : vector<16x128xf32>
    %c134 = arith.constant 134 : index
    %629 = memref.load %arg1[%c134] : memref<192xf32, #tpu.memory_space<smem>>
    %630 = vector.broadcast %629 : f32 to vector<16x128xf32>
    %631 = arith.mulf %620, %630 : vector<16x128xf32>
    %632 = arith.addf %618, %631 : vector<16x128xf32>
    %c45_137 = arith.constant 45 : index
    %c0_138 = arith.constant 0 : index
    %c0_139 = arith.constant 0 : index
    %633 = vector.load %arg4[%c45_137, %c0_138, %c0_139] : memref<64x16x128xf32, #tpu.memory_space<vmem>>, vector<1x16x128xf32>
    %634 = vector.shape_cast %633 : vector<1x16x128xf32> to vector<16x128xf32>
    %c135 = arith.constant 135 : index
    %635 = memref.load %arg1[%c135] : memref<192xf32, #tpu.memory_space<smem>>
    %636 = vector.broadcast %635 : f32 to vector<16x128xf32>
    %637 = arith.mulf %634, %636 : vector<16x128xf32>
    %638 = arith.addf %624, %637 : vector<16x128xf32>
    %c136 = arith.constant 136 : index
    %639 = memref.load %arg1[%c136] : memref<192xf32, #tpu.memory_space<smem>>
    %640 = vector.broadcast %639 : f32 to vector<16x128xf32>
    %641 = arith.mulf %634, %640 : vector<16x128xf32>
    %642 = arith.addf %628, %641 : vector<16x128xf32>
    %c137 = arith.constant 137 : index
    %643 = memref.load %arg1[%c137] : memref<192xf32, #tpu.memory_space<smem>>
    %644 = vector.broadcast %643 : f32 to vector<16x128xf32>
    %645 = arith.mulf %634, %644 : vector<16x128xf32>
    %646 = arith.addf %632, %645 : vector<16x128xf32>
    %c46_140 = arith.constant 46 : index
    %c0_141 = arith.constant 0 : index
    %c0_142 = arith.constant 0 : index
    %647 = vector.load %arg4[%c46_140, %c0_141, %c0_142] : memref<64x16x128xf32, #tpu.memory_space<vmem>>, vector<1x16x128xf32>
    %648 = vector.shape_cast %647 : vector<1x16x128xf32> to vector<16x128xf32>
    %c138 = arith.constant 138 : index
    %649 = memref.load %arg1[%c138] : memref<192xf32, #tpu.memory_space<smem>>
    %650 = vector.broadcast %649 : f32 to vector<16x128xf32>
    %651 = arith.mulf %648, %650 : vector<16x128xf32>
    %652 = arith.addf %638, %651 : vector<16x128xf32>
    %c139 = arith.constant 139 : index
    %653 = memref.load %arg1[%c139] : memref<192xf32, #tpu.memory_space<smem>>
    %654 = vector.broadcast %653 : f32 to vector<16x128xf32>
    %655 = arith.mulf %648, %654 : vector<16x128xf32>
    %656 = arith.addf %642, %655 : vector<16x128xf32>
    %c140 = arith.constant 140 : index
    %657 = memref.load %arg1[%c140] : memref<192xf32, #tpu.memory_space<smem>>
    %658 = vector.broadcast %657 : f32 to vector<16x128xf32>
    %659 = arith.mulf %648, %658 : vector<16x128xf32>
    %660 = arith.addf %646, %659 : vector<16x128xf32>
    %c47_143 = arith.constant 47 : index
    %c0_144 = arith.constant 0 : index
    %c0_145 = arith.constant 0 : index
    %661 = vector.load %arg4[%c47_143, %c0_144, %c0_145] : memref<64x16x128xf32, #tpu.memory_space<vmem>>, vector<1x16x128xf32>
    %662 = vector.shape_cast %661 : vector<1x16x128xf32> to vector<16x128xf32>
    %c141 = arith.constant 141 : index
    %663 = memref.load %arg1[%c141] : memref<192xf32, #tpu.memory_space<smem>>
    %664 = vector.broadcast %663 : f32 to vector<16x128xf32>
    %665 = arith.mulf %662, %664 : vector<16x128xf32>
    %666 = arith.addf %652, %665 : vector<16x128xf32>
    %c142 = arith.constant 142 : index
    %667 = memref.load %arg1[%c142] : memref<192xf32, #tpu.memory_space<smem>>
    %668 = vector.broadcast %667 : f32 to vector<16x128xf32>
    %669 = arith.mulf %662, %668 : vector<16x128xf32>
    %670 = arith.addf %656, %669 : vector<16x128xf32>
    %c143 = arith.constant 143 : index
    %671 = memref.load %arg1[%c143] : memref<192xf32, #tpu.memory_space<smem>>
    %672 = vector.broadcast %671 : f32 to vector<16x128xf32>
    %673 = arith.mulf %662, %672 : vector<16x128xf32>
    %674 = arith.addf %660, %673 : vector<16x128xf32>
    %c48_146 = arith.constant 48 : index
    %c0_147 = arith.constant 0 : index
    %c0_148 = arith.constant 0 : index
    %675 = vector.load %arg4[%c48_146, %c0_147, %c0_148] : memref<64x16x128xf32, #tpu.memory_space<vmem>>, vector<1x16x128xf32>
    %676 = vector.shape_cast %675 : vector<1x16x128xf32> to vector<16x128xf32>
    %c144 = arith.constant 144 : index
    %677 = memref.load %arg1[%c144] : memref<192xf32, #tpu.memory_space<smem>>
    %678 = vector.broadcast %677 : f32 to vector<16x128xf32>
    %679 = arith.mulf %676, %678 : vector<16x128xf32>
    %680 = arith.addf %666, %679 : vector<16x128xf32>
    %c145 = arith.constant 145 : index
    %681 = memref.load %arg1[%c145] : memref<192xf32, #tpu.memory_space<smem>>
    %682 = vector.broadcast %681 : f32 to vector<16x128xf32>
    %683 = arith.mulf %676, %682 : vector<16x128xf32>
    %684 = arith.addf %670, %683 : vector<16x128xf32>
    %c146 = arith.constant 146 : index
    %685 = memref.load %arg1[%c146] : memref<192xf32, #tpu.memory_space<smem>>
    %686 = vector.broadcast %685 : f32 to vector<16x128xf32>
    %687 = arith.mulf %676, %686 : vector<16x128xf32>
    %688 = arith.addf %674, %687 : vector<16x128xf32>
    %c49_149 = arith.constant 49 : index
    %c0_150 = arith.constant 0 : index
    %c0_151 = arith.constant 0 : index
    %689 = vector.load %arg4[%c49_149, %c0_150, %c0_151] : memref<64x16x128xf32, #tpu.memory_space<vmem>>, vector<1x16x128xf32>
    %690 = vector.shape_cast %689 : vector<1x16x128xf32> to vector<16x128xf32>
    %c147 = arith.constant 147 : index
    %691 = memref.load %arg1[%c147] : memref<192xf32, #tpu.memory_space<smem>>
    %692 = vector.broadcast %691 : f32 to vector<16x128xf32>
    %693 = arith.mulf %690, %692 : vector<16x128xf32>
    %694 = arith.addf %680, %693 : vector<16x128xf32>
    %c148 = arith.constant 148 : index
    %695 = memref.load %arg1[%c148] : memref<192xf32, #tpu.memory_space<smem>>
    %696 = vector.broadcast %695 : f32 to vector<16x128xf32>
    %697 = arith.mulf %690, %696 : vector<16x128xf32>
    %698 = arith.addf %684, %697 : vector<16x128xf32>
    %c149 = arith.constant 149 : index
    %699 = memref.load %arg1[%c149] : memref<192xf32, #tpu.memory_space<smem>>
    %700 = vector.broadcast %699 : f32 to vector<16x128xf32>
    %701 = arith.mulf %690, %700 : vector<16x128xf32>
    %702 = arith.addf %688, %701 : vector<16x128xf32>
    %c50_152 = arith.constant 50 : index
    %c0_153 = arith.constant 0 : index
    %c0_154 = arith.constant 0 : index
    %703 = vector.load %arg4[%c50_152, %c0_153, %c0_154] : memref<64x16x128xf32, #tpu.memory_space<vmem>>, vector<1x16x128xf32>
    %704 = vector.shape_cast %703 : vector<1x16x128xf32> to vector<16x128xf32>
    %c150 = arith.constant 150 : index
    %705 = memref.load %arg1[%c150] : memref<192xf32, #tpu.memory_space<smem>>
    %706 = vector.broadcast %705 : f32 to vector<16x128xf32>
    %707 = arith.mulf %704, %706 : vector<16x128xf32>
    %708 = arith.addf %694, %707 : vector<16x128xf32>
    %c151 = arith.constant 151 : index
    %709 = memref.load %arg1[%c151] : memref<192xf32, #tpu.memory_space<smem>>
    %710 = vector.broadcast %709 : f32 to vector<16x128xf32>
    %711 = arith.mulf %704, %710 : vector<16x128xf32>
    %712 = arith.addf %698, %711 : vector<16x128xf32>
    %c152 = arith.constant 152 : index
    %713 = memref.load %arg1[%c152] : memref<192xf32, #tpu.memory_space<smem>>
    %714 = vector.broadcast %713 : f32 to vector<16x128xf32>
    %715 = arith.mulf %704, %714 : vector<16x128xf32>
    %716 = arith.addf %702, %715 : vector<16x128xf32>
    %c51_155 = arith.constant 51 : index
    %c0_156 = arith.constant 0 : index
    %c0_157 = arith.constant 0 : index
    %717 = vector.load %arg4[%c51_155, %c0_156, %c0_157] : memref<64x16x128xf32, #tpu.memory_space<vmem>>, vector<1x16x128xf32>
    %718 = vector.shape_cast %717 : vector<1x16x128xf32> to vector<16x128xf32>
    %c153 = arith.constant 153 : index
    %719 = memref.load %arg1[%c153] : memref<192xf32, #tpu.memory_space<smem>>
    %720 = vector.broadcast %719 : f32 to vector<16x128xf32>
    %721 = arith.mulf %718, %720 : vector<16x128xf32>
    %722 = arith.addf %708, %721 : vector<16x128xf32>
    %c154 = arith.constant 154 : index
    %723 = memref.load %arg1[%c154] : memref<192xf32, #tpu.memory_space<smem>>
    %724 = vector.broadcast %723 : f32 to vector<16x128xf32>
    %725 = arith.mulf %718, %724 : vector<16x128xf32>
    %726 = arith.addf %712, %725 : vector<16x128xf32>
    %c155 = arith.constant 155 : index
    %727 = memref.load %arg1[%c155] : memref<192xf32, #tpu.memory_space<smem>>
    %728 = vector.broadcast %727 : f32 to vector<16x128xf32>
    %729 = arith.mulf %718, %728 : vector<16x128xf32>
    %730 = arith.addf %716, %729 : vector<16x128xf32>
    %c52_158 = arith.constant 52 : index
    %c0_159 = arith.constant 0 : index
    %c0_160 = arith.constant 0 : index
    %731 = vector.load %arg4[%c52_158, %c0_159, %c0_160] : memref<64x16x128xf32, #tpu.memory_space<vmem>>, vector<1x16x128xf32>
    %732 = vector.shape_cast %731 : vector<1x16x128xf32> to vector<16x128xf32>
    %c156 = arith.constant 156 : index
    %733 = memref.load %arg1[%c156] : memref<192xf32, #tpu.memory_space<smem>>
    %734 = vector.broadcast %733 : f32 to vector<16x128xf32>
    %735 = arith.mulf %732, %734 : vector<16x128xf32>
    %736 = arith.addf %722, %735 : vector<16x128xf32>
    %c157 = arith.constant 157 : index
    %737 = memref.load %arg1[%c157] : memref<192xf32, #tpu.memory_space<smem>>
    %738 = vector.broadcast %737 : f32 to vector<16x128xf32>
    %739 = arith.mulf %732, %738 : vector<16x128xf32>
    %740 = arith.addf %726, %739 : vector<16x128xf32>
    %c158 = arith.constant 158 : index
    %741 = memref.load %arg1[%c158] : memref<192xf32, #tpu.memory_space<smem>>
    %742 = vector.broadcast %741 : f32 to vector<16x128xf32>
    %743 = arith.mulf %732, %742 : vector<16x128xf32>
    %744 = arith.addf %730, %743 : vector<16x128xf32>
    %c53_161 = arith.constant 53 : index
    %c0_162 = arith.constant 0 : index
    %c0_163 = arith.constant 0 : index
    %745 = vector.load %arg4[%c53_161, %c0_162, %c0_163] : memref<64x16x128xf32, #tpu.memory_space<vmem>>, vector<1x16x128xf32>
    %746 = vector.shape_cast %745 : vector<1x16x128xf32> to vector<16x128xf32>
    %c159 = arith.constant 159 : index
    %747 = memref.load %arg1[%c159] : memref<192xf32, #tpu.memory_space<smem>>
    %748 = vector.broadcast %747 : f32 to vector<16x128xf32>
    %749 = arith.mulf %746, %748 : vector<16x128xf32>
    %750 = arith.addf %736, %749 : vector<16x128xf32>
    %c160 = arith.constant 160 : index
    %751 = memref.load %arg1[%c160] : memref<192xf32, #tpu.memory_space<smem>>
    %752 = vector.broadcast %751 : f32 to vector<16x128xf32>
    %753 = arith.mulf %746, %752 : vector<16x128xf32>
    %754 = arith.addf %740, %753 : vector<16x128xf32>
    %c161 = arith.constant 161 : index
    %755 = memref.load %arg1[%c161] : memref<192xf32, #tpu.memory_space<smem>>
    %756 = vector.broadcast %755 : f32 to vector<16x128xf32>
    %757 = arith.mulf %746, %756 : vector<16x128xf32>
    %758 = arith.addf %744, %757 : vector<16x128xf32>
    %c54_164 = arith.constant 54 : index
    %c0_165 = arith.constant 0 : index
    %c0_166 = arith.constant 0 : index
    %759 = vector.load %arg4[%c54_164, %c0_165, %c0_166] : memref<64x16x128xf32, #tpu.memory_space<vmem>>, vector<1x16x128xf32>
    %760 = vector.shape_cast %759 : vector<1x16x128xf32> to vector<16x128xf32>
    %c162 = arith.constant 162 : index
    %761 = memref.load %arg1[%c162] : memref<192xf32, #tpu.memory_space<smem>>
    %762 = vector.broadcast %761 : f32 to vector<16x128xf32>
    %763 = arith.mulf %760, %762 : vector<16x128xf32>
    %764 = arith.addf %750, %763 : vector<16x128xf32>
    %c163 = arith.constant 163 : index
    %765 = memref.load %arg1[%c163] : memref<192xf32, #tpu.memory_space<smem>>
    %766 = vector.broadcast %765 : f32 to vector<16x128xf32>
    %767 = arith.mulf %760, %766 : vector<16x128xf32>
    %768 = arith.addf %754, %767 : vector<16x128xf32>
    %c164 = arith.constant 164 : index
    %769 = memref.load %arg1[%c164] : memref<192xf32, #tpu.memory_space<smem>>
    %770 = vector.broadcast %769 : f32 to vector<16x128xf32>
    %771 = arith.mulf %760, %770 : vector<16x128xf32>
    %772 = arith.addf %758, %771 : vector<16x128xf32>
    %c55_167 = arith.constant 55 : index
    %c0_168 = arith.constant 0 : index
    %c0_169 = arith.constant 0 : index
    %773 = vector.load %arg4[%c55_167, %c0_168, %c0_169] : memref<64x16x128xf32, #tpu.memory_space<vmem>>, vector<1x16x128xf32>
    %774 = vector.shape_cast %773 : vector<1x16x128xf32> to vector<16x128xf32>
    %c165 = arith.constant 165 : index
    %775 = memref.load %arg1[%c165] : memref<192xf32, #tpu.memory_space<smem>>
    %776 = vector.broadcast %775 : f32 to vector<16x128xf32>
    %777 = arith.mulf %774, %776 : vector<16x128xf32>
    %778 = arith.addf %764, %777 : vector<16x128xf32>
    %c166 = arith.constant 166 : index
    %779 = memref.load %arg1[%c166] : memref<192xf32, #tpu.memory_space<smem>>
    %780 = vector.broadcast %779 : f32 to vector<16x128xf32>
    %781 = arith.mulf %774, %780 : vector<16x128xf32>
    %782 = arith.addf %768, %781 : vector<16x128xf32>
    %c167 = arith.constant 167 : index
    %783 = memref.load %arg1[%c167] : memref<192xf32, #tpu.memory_space<smem>>
    %784 = vector.broadcast %783 : f32 to vector<16x128xf32>
    %785 = arith.mulf %774, %784 : vector<16x128xf32>
    %786 = arith.addf %772, %785 : vector<16x128xf32>
    %c56_170 = arith.constant 56 : index
    %c0_171 = arith.constant 0 : index
    %c0_172 = arith.constant 0 : index
    %787 = vector.load %arg4[%c56_170, %c0_171, %c0_172] : memref<64x16x128xf32, #tpu.memory_space<vmem>>, vector<1x16x128xf32>
    %788 = vector.shape_cast %787 : vector<1x16x128xf32> to vector<16x128xf32>
    %c168 = arith.constant 168 : index
    %789 = memref.load %arg1[%c168] : memref<192xf32, #tpu.memory_space<smem>>
    %790 = vector.broadcast %789 : f32 to vector<16x128xf32>
    %791 = arith.mulf %788, %790 : vector<16x128xf32>
    %792 = arith.addf %778, %791 : vector<16x128xf32>
    %c169 = arith.constant 169 : index
    %793 = memref.load %arg1[%c169] : memref<192xf32, #tpu.memory_space<smem>>
    %794 = vector.broadcast %793 : f32 to vector<16x128xf32>
    %795 = arith.mulf %788, %794 : vector<16x128xf32>
    %796 = arith.addf %782, %795 : vector<16x128xf32>
    %c170 = arith.constant 170 : index
    %797 = memref.load %arg1[%c170] : memref<192xf32, #tpu.memory_space<smem>>
    %798 = vector.broadcast %797 : f32 to vector<16x128xf32>
    %799 = arith.mulf %788, %798 : vector<16x128xf32>
    %800 = arith.addf %786, %799 : vector<16x128xf32>
    %c57_173 = arith.constant 57 : index
    %c0_174 = arith.constant 0 : index
    %c0_175 = arith.constant 0 : index
    %801 = vector.load %arg4[%c57_173, %c0_174, %c0_175] : memref<64x16x128xf32, #tpu.memory_space<vmem>>, vector<1x16x128xf32>
    %802 = vector.shape_cast %801 : vector<1x16x128xf32> to vector<16x128xf32>
    %c171 = arith.constant 171 : index
    %803 = memref.load %arg1[%c171] : memref<192xf32, #tpu.memory_space<smem>>
    %804 = vector.broadcast %803 : f32 to vector<16x128xf32>
    %805 = arith.mulf %802, %804 : vector<16x128xf32>
    %806 = arith.addf %792, %805 : vector<16x128xf32>
    %c172 = arith.constant 172 : index
    %807 = memref.load %arg1[%c172] : memref<192xf32, #tpu.memory_space<smem>>
    %808 = vector.broadcast %807 : f32 to vector<16x128xf32>
    %809 = arith.mulf %802, %808 : vector<16x128xf32>
    %810 = arith.addf %796, %809 : vector<16x128xf32>
    %c173 = arith.constant 173 : index
    %811 = memref.load %arg1[%c173] : memref<192xf32, #tpu.memory_space<smem>>
    %812 = vector.broadcast %811 : f32 to vector<16x128xf32>
    %813 = arith.mulf %802, %812 : vector<16x128xf32>
    %814 = arith.addf %800, %813 : vector<16x128xf32>
    %c58_176 = arith.constant 58 : index
    %c0_177 = arith.constant 0 : index
    %c0_178 = arith.constant 0 : index
    %815 = vector.load %arg4[%c58_176, %c0_177, %c0_178] : memref<64x16x128xf32, #tpu.memory_space<vmem>>, vector<1x16x128xf32>
    %816 = vector.shape_cast %815 : vector<1x16x128xf32> to vector<16x128xf32>
    %c174 = arith.constant 174 : index
    %817 = memref.load %arg1[%c174] : memref<192xf32, #tpu.memory_space<smem>>
    %818 = vector.broadcast %817 : f32 to vector<16x128xf32>
    %819 = arith.mulf %816, %818 : vector<16x128xf32>
    %820 = arith.addf %806, %819 : vector<16x128xf32>
    %c175 = arith.constant 175 : index
    %821 = memref.load %arg1[%c175] : memref<192xf32, #tpu.memory_space<smem>>
    %822 = vector.broadcast %821 : f32 to vector<16x128xf32>
    %823 = arith.mulf %816, %822 : vector<16x128xf32>
    %824 = arith.addf %810, %823 : vector<16x128xf32>
    %c176 = arith.constant 176 : index
    %825 = memref.load %arg1[%c176] : memref<192xf32, #tpu.memory_space<smem>>
    %826 = vector.broadcast %825 : f32 to vector<16x128xf32>
    %827 = arith.mulf %816, %826 : vector<16x128xf32>
    %828 = arith.addf %814, %827 : vector<16x128xf32>
    %c59_179 = arith.constant 59 : index
    %c0_180 = arith.constant 0 : index
    %c0_181 = arith.constant 0 : index
    %829 = vector.load %arg4[%c59_179, %c0_180, %c0_181] : memref<64x16x128xf32, #tpu.memory_space<vmem>>, vector<1x16x128xf32>
    %830 = vector.shape_cast %829 : vector<1x16x128xf32> to vector<16x128xf32>
    %c177 = arith.constant 177 : index
    %831 = memref.load %arg1[%c177] : memref<192xf32, #tpu.memory_space<smem>>
    %832 = vector.broadcast %831 : f32 to vector<16x128xf32>
    %833 = arith.mulf %830, %832 : vector<16x128xf32>
    %834 = arith.addf %820, %833 : vector<16x128xf32>
    %c178 = arith.constant 178 : index
    %835 = memref.load %arg1[%c178] : memref<192xf32, #tpu.memory_space<smem>>
    %836 = vector.broadcast %835 : f32 to vector<16x128xf32>
    %837 = arith.mulf %830, %836 : vector<16x128xf32>
    %838 = arith.addf %824, %837 : vector<16x128xf32>
    %c179 = arith.constant 179 : index
    %839 = memref.load %arg1[%c179] : memref<192xf32, #tpu.memory_space<smem>>
    %840 = vector.broadcast %839 : f32 to vector<16x128xf32>
    %841 = arith.mulf %830, %840 : vector<16x128xf32>
    %842 = arith.addf %828, %841 : vector<16x128xf32>
    %c60_182 = arith.constant 60 : index
    %c0_183 = arith.constant 0 : index
    %c0_184 = arith.constant 0 : index
    %843 = vector.load %arg4[%c60_182, %c0_183, %c0_184] : memref<64x16x128xf32, #tpu.memory_space<vmem>>, vector<1x16x128xf32>
    %844 = vector.shape_cast %843 : vector<1x16x128xf32> to vector<16x128xf32>
    %c180 = arith.constant 180 : index
    %845 = memref.load %arg1[%c180] : memref<192xf32, #tpu.memory_space<smem>>
    %846 = vector.broadcast %845 : f32 to vector<16x128xf32>
    %847 = arith.mulf %844, %846 : vector<16x128xf32>
    %848 = arith.addf %834, %847 : vector<16x128xf32>
    %c181 = arith.constant 181 : index
    %849 = memref.load %arg1[%c181] : memref<192xf32, #tpu.memory_space<smem>>
    %850 = vector.broadcast %849 : f32 to vector<16x128xf32>
    %851 = arith.mulf %844, %850 : vector<16x128xf32>
    %852 = arith.addf %838, %851 : vector<16x128xf32>
    %c182 = arith.constant 182 : index
    %853 = memref.load %arg1[%c182] : memref<192xf32, #tpu.memory_space<smem>>
    %854 = vector.broadcast %853 : f32 to vector<16x128xf32>
    %855 = arith.mulf %844, %854 : vector<16x128xf32>
    %856 = arith.addf %842, %855 : vector<16x128xf32>
    %c61_185 = arith.constant 61 : index
    %c0_186 = arith.constant 0 : index
    %c0_187 = arith.constant 0 : index
    %857 = vector.load %arg4[%c61_185, %c0_186, %c0_187] : memref<64x16x128xf32, #tpu.memory_space<vmem>>, vector<1x16x128xf32>
    %858 = vector.shape_cast %857 : vector<1x16x128xf32> to vector<16x128xf32>
    %c183 = arith.constant 183 : index
    %859 = memref.load %arg1[%c183] : memref<192xf32, #tpu.memory_space<smem>>
    %860 = vector.broadcast %859 : f32 to vector<16x128xf32>
    %861 = arith.mulf %858, %860 : vector<16x128xf32>
    %862 = arith.addf %848, %861 : vector<16x128xf32>
    %c184 = arith.constant 184 : index
    %863 = memref.load %arg1[%c184] : memref<192xf32, #tpu.memory_space<smem>>
    %864 = vector.broadcast %863 : f32 to vector<16x128xf32>
    %865 = arith.mulf %858, %864 : vector<16x128xf32>
    %866 = arith.addf %852, %865 : vector<16x128xf32>
    %c185 = arith.constant 185 : index
    %867 = memref.load %arg1[%c185] : memref<192xf32, #tpu.memory_space<smem>>
    %868 = vector.broadcast %867 : f32 to vector<16x128xf32>
    %869 = arith.mulf %858, %868 : vector<16x128xf32>
    %870 = arith.addf %856, %869 : vector<16x128xf32>
    %c62_188 = arith.constant 62 : index
    %c0_189 = arith.constant 0 : index
    %c0_190 = arith.constant 0 : index
    %871 = vector.load %arg4[%c62_188, %c0_189, %c0_190] : memref<64x16x128xf32, #tpu.memory_space<vmem>>, vector<1x16x128xf32>
    %872 = vector.shape_cast %871 : vector<1x16x128xf32> to vector<16x128xf32>
    %c186 = arith.constant 186 : index
    %873 = memref.load %arg1[%c186] : memref<192xf32, #tpu.memory_space<smem>>
    %874 = vector.broadcast %873 : f32 to vector<16x128xf32>
    %875 = arith.mulf %872, %874 : vector<16x128xf32>
    %876 = arith.addf %862, %875 : vector<16x128xf32>
    %c187 = arith.constant 187 : index
    %877 = memref.load %arg1[%c187] : memref<192xf32, #tpu.memory_space<smem>>
    %878 = vector.broadcast %877 : f32 to vector<16x128xf32>
    %879 = arith.mulf %872, %878 : vector<16x128xf32>
    %880 = arith.addf %866, %879 : vector<16x128xf32>
    %c188 = arith.constant 188 : index
    %881 = memref.load %arg1[%c188] : memref<192xf32, #tpu.memory_space<smem>>
    %882 = vector.broadcast %881 : f32 to vector<16x128xf32>
    %883 = arith.mulf %872, %882 : vector<16x128xf32>
    %884 = arith.addf %870, %883 : vector<16x128xf32>
    %c63_191 = arith.constant 63 : index
    %c0_192 = arith.constant 0 : index
    %c0_193 = arith.constant 0 : index
    %885 = vector.load %arg4[%c63_191, %c0_192, %c0_193] : memref<64x16x128xf32, #tpu.memory_space<vmem>>, vector<1x16x128xf32>
    %886 = vector.shape_cast %885 : vector<1x16x128xf32> to vector<16x128xf32>
    %c189 = arith.constant 189 : index
    %887 = memref.load %arg1[%c189] : memref<192xf32, #tpu.memory_space<smem>>
    %888 = vector.broadcast %887 : f32 to vector<16x128xf32>
    %889 = arith.mulf %886, %888 : vector<16x128xf32>
    %890 = arith.addf %876, %889 : vector<16x128xf32>
    %c190 = arith.constant 190 : index
    %891 = memref.load %arg1[%c190] : memref<192xf32, #tpu.memory_space<smem>>
    %892 = vector.broadcast %891 : f32 to vector<16x128xf32>
    %893 = arith.mulf %886, %892 : vector<16x128xf32>
    %894 = arith.addf %880, %893 : vector<16x128xf32>
    %c191 = arith.constant 191 : index
    %895 = memref.load %arg1[%c191] : memref<192xf32, #tpu.memory_space<smem>>
    %896 = vector.broadcast %895 : f32 to vector<16x128xf32>
    %897 = arith.mulf %886, %896 : vector<16x128xf32>
    %898 = arith.addf %884, %897 : vector<16x128xf32>
    %c0_194 = arith.constant 0 : index
    %899 = memref.load %arg2[%c0_194] : memref<3xf32, #tpu.memory_space<smem>>
    %900 = vector.broadcast %899 : f32 to vector<16x128xf32>
    %901 = arith.addf %890, %900 : vector<16x128xf32>
    %cst_195 = arith.constant 0.000000e+00 : f32
    %902 = vector.broadcast %cst_195 : f32 to vector<16x128xf32>
    %903 = arith.maximumf %901, %902 : vector<16x128xf32>
    %904 = math.absf %901 : vector<16x128xf32>
    %cst_196 = arith.constant 0.000000e+00 : f32
    %905 = vector.broadcast %cst_196 : f32 to vector<16x128xf32>
    %906 = arith.subf %905, %904 : vector<16x128xf32>
    %907 = math.exp %906 : vector<16x128xf32>
    %cst_197 = arith.constant 1.000000e+00 : f32
    %908 = vector.broadcast %cst_197 : f32 to vector<16x128xf32>
    %909 = arith.addf %908, %907 : vector<16x128xf32>
    %910 = math.log %909 : vector<16x128xf32>
    %911 = arith.addf %903, %910 : vector<16x128xf32>
    %c1_198 = arith.constant 1 : index
    %912 = memref.load %arg2[%c1_198] : memref<3xf32, #tpu.memory_space<smem>>
    %913 = vector.broadcast %912 : f32 to vector<16x128xf32>
    %914 = arith.addf %894, %913 : vector<16x128xf32>
    %cst_199 = arith.constant 0.000000e+00 : f32
    %915 = vector.broadcast %cst_199 : f32 to vector<16x128xf32>
    %916 = arith.maximumf %914, %915 : vector<16x128xf32>
    %917 = math.absf %914 : vector<16x128xf32>
    %cst_200 = arith.constant 0.000000e+00 : f32
    %918 = vector.broadcast %cst_200 : f32 to vector<16x128xf32>
    %919 = arith.subf %918, %917 : vector<16x128xf32>
    %920 = math.exp %919 : vector<16x128xf32>
    %cst_201 = arith.constant 1.000000e+00 : f32
    %921 = vector.broadcast %cst_201 : f32 to vector<16x128xf32>
    %922 = arith.addf %921, %920 : vector<16x128xf32>
    %923 = math.log %922 : vector<16x128xf32>
    %924 = arith.addf %916, %923 : vector<16x128xf32>
    %c2_202 = arith.constant 2 : index
    %925 = memref.load %arg2[%c2_202] : memref<3xf32, #tpu.memory_space<smem>>
    %926 = vector.broadcast %925 : f32 to vector<16x128xf32>
    %927 = arith.addf %898, %926 : vector<16x128xf32>
    %cst_203 = arith.constant 0.000000e+00 : f32
    %928 = vector.broadcast %cst_203 : f32 to vector<16x128xf32>
    %929 = arith.maximumf %927, %928 : vector<16x128xf32>
    %930 = math.absf %927 : vector<16x128xf32>
    %cst_204 = arith.constant 0.000000e+00 : f32
    %931 = vector.broadcast %cst_204 : f32 to vector<16x128xf32>
    %932 = arith.subf %931, %930 : vector<16x128xf32>
    %933 = math.exp %932 : vector<16x128xf32>
    %cst_205 = arith.constant 1.000000e+00 : f32
    %934 = vector.broadcast %cst_205 : f32 to vector<16x128xf32>
    %935 = arith.addf %934, %933 : vector<16x128xf32>
    %936 = math.log %935 : vector<16x128xf32>
    %937 = arith.addf %929, %936 : vector<16x128xf32>
    %c0_206 = arith.constant 0 : index
    %c0_207 = arith.constant 0 : index
    %938 = vector.load %arg5[%c0_206, %c0_207] : memref<16x128xf32, #tpu.memory_space<vmem>>, vector<16x128xf32>
    %cst_208 = arith.constant 0.148184747 : f32
    %939 = vector.broadcast %cst_208 : f32 to vector<16x128xf32>
    %940 = arith.mulf %939, %938 : vector<16x128xf32>
    %941 = math.sqrt %911 : vector<16x128xf32>
    %942 = arith.mulf %940, %941 : vector<16x128xf32>
    %cst_209 = arith.constant 0.0784159973 : f32
    %943 = vector.broadcast %cst_209 : f32 to vector<16x128xf32>
    %944 = arith.mulf %943, %938 : vector<16x128xf32>
    %945 = math.sqrt %924 : vector<16x128xf32>
    %946 = arith.mulf %944, %945 : vector<16x128xf32>
    %cst_210 = arith.constant 0.0414959602 : f32
    %947 = vector.broadcast %cst_210 : f32 to vector<16x128xf32>
    %948 = arith.mulf %947, %938 : vector<16x128xf32>
    %949 = math.sqrt %937 : vector<16x128xf32>
    %950 = arith.mulf %948, %949 : vector<16x128xf32>
    %cst_211 = arith.constant 1.000000e+00 : f32
    %951 = vector.broadcast %cst_211 : f32 to vector<16x128xf32>
    %952 = arith.divf %951, %911 : vector<16x128xf32>
    %953 = arith.mulf %924, %952 : vector<16x128xf32>
    %954 = math.sqrt %953 : vector<16x128xf32>
    %955 = math.sqrt %954 : vector<16x128xf32>
    %cst_212 = arith.constant 3.826300e-01 : f32
    %956 = vector.broadcast %cst_212 : f32 to vector<16x128xf32>
    %957 = arith.mulf %956, %955 : vector<16x128xf32>
    %958 = arith.mulf %937, %952 : vector<16x128xf32>
    %959 = math.sqrt %958 : vector<16x128xf32>
    %960 = math.sqrt %959 : vector<16x128xf32>
    %961 = math.sqrt %960 : vector<16x128xf32>
    %cst_213 = arith.constant 3.826300e-01 : f32
    %962 = vector.broadcast %cst_213 : f32 to vector<16x128xf32>
    %963 = arith.mulf %962, %961 : vector<16x128xf32>
    %964 = arith.divf %937, %924 : vector<16x128xf32>
    %965 = math.sqrt %964 : vector<16x128xf32>
    %966 = math.sqrt %965 : vector<16x128xf32>
    %cst_214 = arith.constant 3.826300e-01 : f32
    %967 = vector.broadcast %cst_214 : f32 to vector<16x128xf32>
    %968 = arith.mulf %967, %966 : vector<16x128xf32>
    %c0_215 = arith.constant 0 : index
    %c0_216 = arith.constant 0 : index
    %c0_217 = arith.constant 0 : index
    %969 = vector.load %arg3[%c0_215, %c0_216, %c0_217] : memref<3x16x128xf32, #tpu.memory_space<vmem>>, vector<1x16x128xf32>
    %970 = vector.shape_cast %969 : vector<1x16x128xf32> to vector<16x128xf32>
    %c1_218 = arith.constant 1 : index
    %c0_219 = arith.constant 0 : index
    %c0_220 = arith.constant 0 : index
    %971 = vector.load %arg3[%c1_218, %c0_219, %c0_220] : memref<3x16x128xf32, #tpu.memory_space<vmem>>, vector<1x16x128xf32>
    %972 = vector.shape_cast %971 : vector<1x16x128xf32> to vector<16x128xf32>
    %c2_221 = arith.constant 2 : index
    %c0_222 = arith.constant 0 : index
    %c0_223 = arith.constant 0 : index
    %973 = vector.load %arg3[%c2_221, %c0_222, %c0_223] : memref<3x16x128xf32, #tpu.memory_space<vmem>>, vector<1x16x128xf32>
    %974 = vector.shape_cast %973 : vector<1x16x128xf32> to vector<16x128xf32>
    %975 = vector.shape_cast %970 : vector<16x128xf32> to vector<16x1x128xf32>
    %976 = vector.shape_cast %970 : vector<16x128xf32> to vector<1x16x128xf32>
    %977 = vector.broadcast %975 : vector<16x1x128xf32> to vector<16x16x128xf32>
    %978 = vector.broadcast %976 : vector<1x16x128xf32> to vector<16x16x128xf32>
    %979 = arith.subf %977, %978 : vector<16x16x128xf32>
    %980 = vector.shape_cast %972 : vector<16x128xf32> to vector<16x1x128xf32>
    %981 = vector.shape_cast %972 : vector<16x128xf32> to vector<1x16x128xf32>
    %982 = vector.broadcast %980 : vector<16x1x128xf32> to vector<16x16x128xf32>
    %983 = vector.broadcast %981 : vector<1x16x128xf32> to vector<16x16x128xf32>
    %984 = arith.subf %982, %983 : vector<16x16x128xf32>
    %985 = vector.shape_cast %974 : vector<16x128xf32> to vector<16x1x128xf32>
    %986 = vector.shape_cast %974 : vector<16x128xf32> to vector<1x16x128xf32>
    %987 = vector.broadcast %985 : vector<16x1x128xf32> to vector<16x16x128xf32>
    %988 = vector.broadcast %986 : vector<1x16x128xf32> to vector<16x16x128xf32>
    %989 = arith.subf %987, %988 : vector<16x16x128xf32>
    %990 = arith.mulf %979, %979 : vector<16x16x128xf32>
    %991 = arith.mulf %984, %984 : vector<16x16x128xf32>
    %992 = arith.addf %990, %991 : vector<16x16x128xf32>
    %993 = arith.mulf %989, %989 : vector<16x16x128xf32>
    %994 = arith.addf %992, %993 : vector<16x16x128xf32>
    %995 = math.sqrt %994 : vector<16x16x128xf32>
    %996 = vector.shape_cast %942 : vector<16x128xf32> to vector<16x1x128xf32>
    %997 = vector.shape_cast %942 : vector<16x128xf32> to vector<1x16x128xf32>
    %998 = vector.broadcast %996 : vector<16x1x128xf32> to vector<16x16x128xf32>
    %999 = vector.broadcast %997 : vector<1x16x128xf32> to vector<16x16x128xf32>
    %1000 = arith.mulf %998, %999 : vector<16x16x128xf32>
    %1001 = vector.shape_cast %946 : vector<16x128xf32> to vector<16x1x128xf32>
    %1002 = vector.shape_cast %946 : vector<16x128xf32> to vector<1x16x128xf32>
    %1003 = vector.broadcast %1001 : vector<16x1x128xf32> to vector<16x16x128xf32>
    %1004 = vector.broadcast %1002 : vector<1x16x128xf32> to vector<16x16x128xf32>
    %1005 = arith.mulf %1003, %1004 : vector<16x16x128xf32>
    %1006 = vector.shape_cast %950 : vector<16x128xf32> to vector<16x1x128xf32>
    %1007 = vector.shape_cast %950 : vector<16x128xf32> to vector<1x16x128xf32>
    %1008 = vector.broadcast %1006 : vector<16x1x128xf32> to vector<16x16x128xf32>
    %1009 = vector.broadcast %1007 : vector<1x16x128xf32> to vector<16x16x128xf32>
    %1010 = arith.mulf %1008, %1009 : vector<16x16x128xf32>
    %1011 = vector.shape_cast %957 : vector<16x128xf32> to vector<16x1x128xf32>
    %1012 = vector.shape_cast %957 : vector<16x128xf32> to vector<1x16x128xf32>
    %1013 = vector.broadcast %1011 : vector<16x1x128xf32> to vector<16x16x128xf32>
    %1014 = vector.broadcast %1012 : vector<1x16x128xf32> to vector<16x16x128xf32>
    %1015 = arith.mulf %1013, %1014 : vector<16x16x128xf32>
    %1016 = vector.shape_cast %963 : vector<16x128xf32> to vector<16x1x128xf32>
    %1017 = vector.shape_cast %963 : vector<16x128xf32> to vector<1x16x128xf32>
    %1018 = vector.broadcast %1016 : vector<16x1x128xf32> to vector<16x16x128xf32>
    %1019 = vector.broadcast %1017 : vector<1x16x128xf32> to vector<16x16x128xf32>
    %1020 = arith.mulf %1018, %1019 : vector<16x16x128xf32>
    %1021 = arith.addf %1015, %1020 : vector<16x16x128xf32>
    %1022 = vector.shape_cast %968 : vector<16x128xf32> to vector<16x1x128xf32>
    %1023 = vector.shape_cast %968 : vector<16x128xf32> to vector<1x16x128xf32>
    %1024 = vector.broadcast %1022 : vector<16x1x128xf32> to vector<16x16x128xf32>
    %1025 = vector.broadcast %1023 : vector<1x16x128xf32> to vector<16x16x128xf32>
    %1026 = arith.mulf %1024, %1025 : vector<16x16x128xf32>
    %1027 = arith.addf %1021, %1026 : vector<16x16x128xf32>
    %cst_224 = arith.constant 3.500000e-01 : f32
    %1028 = vector.broadcast %cst_224 : f32 to vector<16x16x128xf32>
    %1029 = arith.addf %1028, %1027 : vector<16x16x128xf32>
    %1030 = arith.mulf %994, %994 : vector<16x16x128xf32>
    %1031 = arith.mulf %1030, %994 : vector<16x16x128xf32>
    %1032 = arith.mulf %1031, %994 : vector<16x16x128xf32>
    %1033 = arith.mulf %1032, %994 : vector<16x16x128xf32>
    %1034 = arith.mulf %1029, %1029 : vector<16x16x128xf32>
    %1035 = arith.mulf %1034, %1034 : vector<16x16x128xf32>
    %1036 = arith.mulf %1035, %1034 : vector<16x16x128xf32>
    %1037 = arith.mulf %1036, %1034 : vector<16x16x128xf32>
    %1038 = arith.mulf %1037, %1034 : vector<16x16x128xf32>
    %1039 = arith.addf %1031, %1036 : vector<16x16x128xf32>
    %1040 = arith.divf %1000, %1039 : vector<16x16x128xf32>
    %1041 = arith.addf %1032, %1037 : vector<16x16x128xf32>
    %1042 = arith.divf %1005, %1041 : vector<16x16x128xf32>
    %1043 = arith.addf %1040, %1042 : vector<16x16x128xf32>
    %1044 = arith.addf %1033, %1038 : vector<16x16x128xf32>
    %1045 = arith.divf %1010, %1044 : vector<16x16x128xf32>
    %1046 = arith.addf %1043, %1045 : vector<16x16x128xf32>
    %1047 = tpu.iota {dimensions = array<i32: 0>} : vector<16x16x128xi32>
    %1048 = tpu.iota {dimensions = array<i32: 1>} : vector<16x16x128xi32>
    %1049 = arith.cmpi sgt, %1048, %1047 : vector<16x16x128xi32>
    %cst_225 = arith.constant 6.400000e+01 : f32
    %1050 = vector.broadcast %cst_225 : f32 to vector<16x16x128xf32>
    %1051 = arith.cmpf olt, %994, %1050 : vector<16x16x128xf32>
    %1052 = arith.andi %1049, %1051 : vector<16x16x128xi1>
    %cst_226 = arith.constant 0.392699093 : f32
    %1053 = vector.broadcast %cst_226 : f32 to vector<16x16x128xf32>
    %1054 = arith.mulf %1053, %995 : vector<16x16x128xf32>
    %1055 = math.cos %1054 : vector<16x16x128xf32>
    %cst_227 = arith.constant 5.000000e-01 : f32
    %1056 = vector.broadcast %cst_227 : f32 to vector<16x16x128xf32>
    %1057 = arith.mulf %1056, %1055 : vector<16x16x128xf32>
    %cst_228 = arith.constant 5.000000e-01 : f32
    %1058 = vector.broadcast %cst_228 : f32 to vector<16x16x128xf32>
    %1059 = arith.addf %1057, %1058 : vector<16x16x128xf32>
    %cst_229 = arith.constant 0.000000e+00 : f32
    %1060 = vector.broadcast %cst_229 : f32 to vector<16x16x128xf32>
    %1061 = arith.select %1052, %1059, %1060 : vector<16x16x128xi1>, vector<16x16x128xf32>
    %1062 = arith.mulf %1046, %1061 : vector<16x16x128xf32>
    %cst_230 = arith.constant dense<0.000000e+00> : vector<16x128xf32>
    %1063 = vector.multi_reduction <add>, %1062, %cst_230 [0] : vector<16x16x128xf32> to vector<16x128xf32>
    %1064 = vector.shape_cast %1063 : vector<16x128xf32> to vector<1x16x128xf32>
    %cst_231 = arith.constant dense<0.000000e+00> : vector<1x128xf32>
    %1065 = vector.multi_reduction <add>, %1064, %cst_231 [1] : vector<1x16x128xf32> to vector<1x128xf32>
    %1066 = vector.shape_cast %1065 : vector<1x128xf32> to vector<1x1x128xf32>
    %cst_232 = arith.constant 0.000000e+00 : f32
    %1067 = vector.broadcast %cst_232 : f32 to vector<1x1x128xf32>
    %1068 = arith.subf %1067, %1066 : vector<1x1x128xf32>
    %c0_233 = arith.constant 0 : index
    %c0_234 = arith.constant 0 : index
    %c0_235 = arith.constant 0 : index
    %1069 = vector.load %arg6[%c0_233, %c0_234, %c0_235] : memref<1x1x128xf32, #tpu.memory_space<vmem>>, vector<1x1x128xf32>
    tpu.vector_store %arg6[%c0_233, %c0_234, %c0_235], %1068 {strides = array<i32>} : memref<1x1x128xf32, #tpu.memory_space<vmem>>, vector<1x1x128xf32>,
    return
  }
  func.func @transform_0(%arg0: i32) -> i32 {
    %c0_i32 = arith.constant 0 : i32
    %c0_i32_0 = arith.constant 0 : i32
    return %c0_i32 : i32
  }
  func.func @transform_1(%arg0: i32) -> i32 {
    %c0_i32 = arith.constant 0 : i32
    %c0_i32_0 = arith.constant 0 : i32
    return %c0_i32 : i32
  }
  func.func @transform_2(%arg0: i32) -> (i32, i32, i32) {
    %c0_i32 = arith.constant 0 : i32
    %c0_i32_0 = arith.constant 0 : i32
    %c0_i32_1 = arith.constant 0 : i32
    return %c0_i32, %c0_i32_0, %arg0 : i32, i32, i32
  }
  func.func @transform_3(%arg0: i32) -> (i32, i32, i32) {
    %c0_i32 = arith.constant 0 : i32
    %c0_i32_0 = arith.constant 0 : i32
    %c0_i32_1 = arith.constant 0 : i32
    return %c0_i32, %c0_i32_0, %arg0 : i32, i32, i32
  }
  func.func @transform_4(%arg0: i32) -> (i32, i32) {
    %c0_i32 = arith.constant 0 : i32
    %c0_i32_0 = arith.constant 0 : i32
    return %c0_i32, %arg0 : i32, i32
  }
  func.func @transform_5(%arg0: i32) -> (i32, i32, i32) {
    %c0_i32 = arith.constant 0 : i32
    %c0_i32_0 = arith.constant 0 : i32
    %c0_i32_1 = arith.constant 0 : i32
    return %arg0, %c0_i32, %c0_i32_0 : i32, i32, i32
  }
}

</mosaic_0001>

<llo_original>
// kernel: tpu_custom_call.1
$region0: #{tpu_custom_call.1}
  #allocation0 [shape = 'u32[]', space=smem, size = 0x4, offset = 0x4, fixed_abs, tag = 'smem constant byte address 0x4 - core index']
  #allocation1 [shape = 'u32[144,128]{1,0:T(1,128)}', space=vmem, size = 0x12000, scoped, tag = 'internal scratch']
  %s0 = inlined_call_operand.hbm [shape: f32[192], index: 0, kind: input, shape index: {}]
  %s1 = inlined_call_operand.vmem [shape: f32[3], index: 1, kind: input, shape index: {}]
  %s2 = inlined_call_operand.hbm [shape: f32[3,16,128], index: 2, kind: input, shape index: {}]
  %s3 = inlined_call_operand.hbm [shape: f32[64,16,128], index: 3, kind: input, shape index: {}]
  %s4 = inlined_call_operand.hbm [shape: f32[16,128], index: 4, kind: input, shape index: {}]
  %s5 = inlined_call_operand.hbm [shape: f32[1,1,128], index: 5, kind: output, shape index: {}]
  %s6 = sld [smem:[#allocation0]]
  $region50: #{tpu_custom_call.1} parent=0
    _
  %s8 = ssub.s32 1, %s6
  %s9 = scalar_select 0, %s8, %s6
  $region1: #{tpu_custom_call.1} parent=0
    #allocation2 [shape = 'u8[1024]{0}', space=smem, size = 0x400, scoped, tag = 'input window, operand 0, single buffered']
    #allocation3 [shape = 's32[1]{0}', space=sflag, size = 0x4, scoped, tag = 'scoped memory for tpu_custom_call.1']
    #allocation4 [shape = 's32[1]{0}', space=sflag, size = 0x4, scoped, tag = 'scoped memory for tpu_custom_call.1']
    #allocation5 [shape = 's32[1]{0}', space=sflag, size = 0x4, scoped, tag = 'scoped memory for tpu_custom_call.1']
    #allocation6 [shape = 's32[1]{0}', space=sflag, size = 0x4, scoped, tag = 'scoped memory for tpu_custom_call.1']
    #allocation7 [shape = 'u8[512]{0}', space=smem, size = 0x200, scoped, tag = 'input window, operand 1, single buffered']
    #allocation8 [shape = 'u8[24576]{0}', space=vmem, size = 0x6000, scoped, tag = 'input window, operand 2, single buffered']
    #allocation9 [shape = 'u8[524288]{0}', space=vmem, size = 0x80000, scoped, tag = 'input window, operand 3, single buffered']
    #allocation10 [shape = 's32[1]{0}', space=sflag, size = 0x4, scoped, tag = 'scoped memory for tpu_custom_call.1']
    #allocation11 [shape = 'u8[8192]{0}', space=vmem, size = 0x2000, scoped, tag = 'input window, operand 4, single buffered']
    #allocation12 [shape = 'u8[512]{0}', space=vmem, size = 0x400, scoped, tag = 'output window, operand 0, single buffered']
    %10 = vsyncpa [#allocation5], 0
    %11 = vsyncpa [#allocation6], 0
    %12 = vsyncpa [#allocation3], 0
    %13 = vsyncpa [#allocation10], 0
    %14 = vsyncpa [#allocation4], 0
    // Predicated region
    $region2: #{tpu_custom_call.1} parent=1 // pred_check
      _
    $region3: #{tpu_custom_call.1} parent=1 // pred_check_branch
      %16 = sbr.rel (0) target = $region5
    $region4: #{tpu_custom_call.1} parent=1 // pred_region
      %s18 = ssub.s32 32, 32
      %19 = vsyncadd [#allocation5], %s18
      %22 = dma.hbm_to_smem %s0, 32, [#allocation2], [#allocation5]
    $region5: #{tpu_custom_call.1} parent=1 // pred_fallthru
      _
    // Predicated region
    $region6: #{tpu_custom_call.1} parent=1 // pred_check
      _
    $region7: #{tpu_custom_call.1} parent=1 // pred_check_branch
      %24 = sbr.rel (0) target = $region9
    $region8: #{tpu_custom_call.1} parent=1 // pred_region
      %s26 = ssub.s32 16, 16
      %27 = vsyncadd [#allocation6], %s26
      %s29 = sshll.u32 %s1, 4
      %s30 = int_to_ptr.vmem [resolvable:$true] %s29
      %32 = dma.vmem_to_smem %s30, 16, [#allocation7], [#allocation6]
    $region9: #{tpu_custom_call.1} parent=1 // pred_fallthru
      _
    // Predicated region
    $region10: #{tpu_custom_call.1} parent=1 // pred_check
      _
    $region11: #{tpu_custom_call.1} parent=1 // pred_check_branch
      %34 = sbr.rel (0) target = $region13
    $region12: #{tpu_custom_call.1} parent=1 // pred_region
      %s36 = ssub.s32 768, 768
      %37 = vsyncadd [#allocation3], %s36
      %s38 = sshll.u32 [#allocation8], 4
      %s39 = int_to_ptr.vmem [resolvable:$true] %s38
      %44 = dma.hbm_to_vmem [thread:$0]  %s2, 768, %s39, [#allocation3], 128, 128, 8
    $region13: #{tpu_custom_call.1} parent=1 // pred_fallthru
      _
    // Predicated region
    $region14: #{tpu_custom_call.1} parent=1 // pred_check
      _
    $region15: #{tpu_custom_call.1} parent=1 // pred_check_branch
      %46 = sbr.rel (0) target = $region17
    $region16: #{tpu_custom_call.1} parent=1 // pred_region
      %s48 = ssub.s32 16384, 16384
      %49 = vsyncadd [#allocation10], %s48
      %s50 = sshll.u32 [#allocation9], 4
      %s51 = int_to_ptr.vmem [resolvable:$true] %s50
      %56 = dma.hbm_to_vmem [thread:$0]  %s3, 16384, %s51, [#allocation10], 128, 128, 8
    $region17: #{tpu_custom_call.1} parent=1 // pred_fallthru
      _
    // Predicated region
    $region18: #{tpu_custom_call.1} parent=1 // pred_check
      _
    $region19: #{tpu_custom_call.1} parent=1 // pred_check_branch
      %58 = sbr.rel (0) target = $region21
    $region20: #{tpu_custom_call.1} parent=1 // pred_region
      %s60 = ssub.s32 256, 256
      %61 = vsyncadd [#allocation10], %s60
      %s62 = sshll.u32 [#allocation11], 4
      %s63 = int_to_ptr.vmem [resolvable:$true] %s62
      %68 = dma.hbm_to_vmem [thread:$0]  %s4, 256, %s63, [#allocation10], 128, 128, 8
    $region21: #{tpu_custom_call.1} parent=1 // pred_fallthru
      _
    // Predicated region
    $region22: #{tpu_custom_call.1} parent=1 // pred_check
      _
    $region23: #{tpu_custom_call.1} parent=1 // pred_check_branch
      %70 = sbr.rel (0) target = $region25
    $region24: #{tpu_custom_call.1} parent=1 // pred_region
      %71 = dma.done [#allocation5], 32
    $region25: #{tpu_custom_call.1} parent=1 // pred_fallthru
      _
    // Predicated region
    $region26: #{tpu_custom_call.1} parent=1 // pred_check
      _
    $region27: #{tpu_custom_call.1} parent=1 // pred_check_branch
      %73 = sbr.rel (0) target = $region29
    $region28: #{tpu_custom_call.1} parent=1 // pred_region
      %74 = dma.done [#allocation6], 16
    $region29: #{tpu_custom_call.1} parent=1 // pred_fallthru
      _
    // Predicated region
    $region30: #{tpu_custom_call.1} parent=1 // pred_check
      _
    $region31: #{tpu_custom_call.1} parent=1 // pred_check_branch
      %76 = sbr.rel (0) target = $region33
    $region32: #{tpu_custom_call.1} parent=1 // pred_region
      %77 = dma.done [#allocation3], 768
    $region33: #{tpu_custom_call.1} parent=1 // pred_fallthru
      _
    // Predicated region
    $region34: #{tpu_custom_call.1} parent=1 // pred_check
      _
    $region35: #{tpu_custom_call.1} parent=1 // pred_check_branch
      %79 = sbr.rel (0) target = $region37
    $region36: #{tpu_custom_call.1} parent=1 // pred_region
      %80 = dma.done [#allocation10], 16384
    $region37: #{tpu_custom_call.1} parent=1 // pred_fallthru
      _
    // Predicated region
    $region38: #{tpu_custom_call.1} parent=1 // pred_check
      _
    $region39: #{tpu_custom_call.1} parent=1 // pred_check_branch
      %82 = sbr.rel (0) target = $region41
    $region40: #{tpu_custom_call.1} parent=1 // pred_region
      %83 = dma.done [#allocation10], 256
    $region41: #{tpu_custom_call.1} parent=1 // pred_fallthru
      _
    %84 = sfence
    %v85 = vld [vmem:[#allocation9] sm:$0xff]
    %v86 = vld [vmem:[#allocation9 + $0x8] sm:$0xff]
    %s87 = sld [smem:[#allocation2]]
    %v88 = vstv %s87
    %v89 = vmul.f32 %v85, %v88
    %v90 = vmul.f32 %v86, %v88
    %v91 = vadd.f32 %v89, 0.0
    %v92 = vadd.f32 %v90, 0.0
    %s93 = sld [smem:[#allocation2 + $0x1]]
    %v94 = vstv %s93
    %v95 = vmul.f32 %v85, %v94
    %v96 = vmul.f32 %v86, %v94
    %v97 = vadd.f32 %v95, 0.0
    %v98 = vadd.f32 %v96, 0.0
    %s99 = sld [smem:[#allocation2 + $0x2]]
    %v100 = vstv %s99
    %v101 = vmul.f32 %v85, %v100
    %v102 = vmul.f32 %v86, %v100
    %v103 = vadd.f32 %v101, 0.0
    %v104 = vadd.f32 %v102, 0.0
    %s105 = scalar_lea.vmem [#allocation9], 16
    %v106 = vld [vmem:[%s105] sm:$0xff]
    %v107 = vld [vmem:[%s105 + $0x8] sm:$0xff]
    %s108 = sld [smem:[#allocation2 + $0x3]]
    %v109 = vstv %s108
    %v110 = vmul.f32 %v106, %v109
    %v111 = vmul.f32 %v107, %v109
    %v112 = vadd.f32 %v91, %v110
    %v113 = vadd.f32 %v92, %v111
    %s114 = sld [smem:[#allocation2 + $0x4]]
    %v115 = vstv %s114
    %v116 = vmul.f32 %v106, %v115
    %v117 = vmul.f32 %v107, %v115
    %v118 = vadd.f32 %v97, %v116
    %v119 = vadd.f32 %v98, %v117
    %s120 = sld [smem:[#allocation2 + $0x5]]
    %v121 = vstv %s120
    %v122 = vmul.f32 %v106, %v121
    %v123 = vmul.f32 %v107, %v121
    %v124 = vadd.f32 %v103, %v122
    %v125 = vadd.f32 %v104, %v123
    %s126 = scalar_lea.vmem [#allocation9], 32
    %v127 = vld [vmem:[%s126] sm:$0xff]
    %v128 = vld [vmem:[%s126 + $0x8] sm:$0xff]
    %s129 = sld [smem:[#allocation2 + $0x6]]
    %v130 = vstv %s129
    %v131 = vmul.f32 %v127, %v130
    %v132 = vmul.f32 %v128, %v130
    %v133 = vadd.f32 %v112, %v131
    %v134 = vadd.f32 %v113, %v132
    %s135 = sld [smem:[#allocation2 + $0x7]]
    %v136 = vstv %s135
    %v137 = vmul.f32 %v127, %v136
    %v138 = vmul.f32 %v128, %v136
    %v139 = vadd.f32 %v118, %v137
    %v140 = vadd.f32 %v119, %v138
    %s141 = sld [smem:[#allocation2 + $0x8]]
    %v142 = vstv %s141
    %v143 = vmul.f32 %v127, %v142
    %v144 = vmul.f32 %v128, %v142
    %v145 = vadd.f32 %v124, %v143
    %v146 = vadd.f32 %v125, %v144
    %s147 = scalar_lea.vmem [#allocation9], 48
    %v148 = vld [vmem:[%s147] sm:$0xff]
    %v149 = vld [vmem:[%s147 + $0x8] sm:$0xff]
    %s150 = sld [smem:[#allocation2 + $0x9]]
    %v151 = vstv %s150
    %v152 = vmul.f32 %v148, %v151
    %v153 = vmul.f32 %v149, %v151
    %v154 = vadd.f32 %v133, %v152
    %v155 = vadd.f32 %v134, %v153
    %s156 = sld [smem:[#allocation2 + $0xa]]
    %v157 = vstv %s156
    %v158 = vmul.f32 %v148, %v157
    %v159 = vmul.f32 %v149, %v157
    %v160 = vadd.f32 %v139, %v158
    %v161 = vadd.f32 %v140, %v159
    %s162 = sld [smem:[#allocation2 + $0xb]]
    %v163 = vstv %s162
    %v164 = vmul.f32 %v148, %v163
    %v165 = vmul.f32 %v149, %v163
    %v166 = vadd.f32 %v145, %v164
    %v167 = vadd.f32 %v146, %v165
    %s168 = scalar_lea.vmem [#allocation9], 64
    %v169 = vld [vmem:[%s168] sm:$0xff]
    %v170 = vld [vmem:[%s168 + $0x8] sm:$0xff]
    %s171 = sld [smem:[#allocation2 + $0xc]]
    %v172 = vstv %s171
    %v173 = vmul.f32 %v169, %v172
    %v174 = vmul.f32 %v170, %v172
    %v175 = vadd.f32 %v154, %v173
    %v176 = vadd.f32 %v155, %v174
    %s177 = sld [smem:[#allocation2 + $0xd]]
    %v178 = vstv %s177
    %v179 = vmul.f32 %v169, %v178
    %v180 = vmul.f32 %v170, %v178
    %v181 = vadd.f32 %v160, %v179
    %v182 = vadd.f32 %v161, %v180
    %s183 = sld [smem:[#allocation2 + $0xe]]
    %v184 = vstv %s183
    %v185 = vmul.f32 %v169, %v184
    %v186 = vmul.f32 %v170, %v184
    %v187 = vadd.f32 %v166, %v185
    %v188 = vadd.f32 %v167, %v186
    %s189 = scalar_lea.vmem [#allocation9], 80
    %v190 = vld [vmem:[%s189] sm:$0xff]
    %v191 = vld [vmem:[%s189 + $0x8] sm:$0xff]
    %s192 = sld [smem:[#allocation2 + $0xf]]
    %v193 = vstv %s192
    %v194 = vmul.f32 %v190, %v193
    %v195 = vmul.f32 %v191, %v193
    %v196 = vadd.f32 %v175, %v194
    %v197 = vadd.f32 %v176, %v195
    %s198 = sld [smem:[#allocation2 + $0x10]]
    %v199 = vstv %s198
    %v200 = vmul.f32 %v190, %v199
    %v201 = vmul.f32 %v191, %v199
    %v202 = vadd.f32 %v181, %v200
    %v203 = vadd.f32 %v182, %v201
    %s204 = sld [smem:[#allocation2 + $0x11]]
    %v205 = vstv %s204
    %v206 = vmul.f32 %v190, %v205
    %v207 = vmul.f32 %v191, %v205
    %v208 = vadd.f32 %v187, %v206
    %v209 = vadd.f32 %v188, %v207
    %s210 = scalar_lea.vmem [#allocation9], 96
    %v211 = vld [vmem:[%s210] sm:$0xff]
    %v212 = vld [vmem:[%s210 + $0x8] sm:$0xff]
    %s213 = sld [smem:[#allocation2 + $0x12]]
    %v214 = vstv %s213
    %v215 = vmul.f32 %v211, %v214
    %v216 = vmul.f32 %v212, %v214
    %v217 = vadd.f32 %v196, %v215
    %v218 = vadd.f32 %v197, %v216
    %s219 = sld [smem:[#allocation2 + $0x13]]
    %v220 = vstv %s219
    %v221 = vmul.f32 %v211, %v220
    %v222 = vmul.f32 %v212, %v220
    %v223 = vadd.f32 %v202, %v221
    %v224 = vadd.f32 %v203, %v222
    %s225 = sld [smem:[#allocation2 + $0x14]]
    %v226 = vstv %s225
    %v227 = vmul.f32 %v211, %v226
    %v228 = vmul.f32 %v212, %v226
    %v229 = vadd.f32 %v208, %v227
    %v230 = vadd.f32 %v209, %v228
    %s231 = scalar_lea.vmem [#allocation9], 112
    %v232 = vld [vmem:[%s231] sm:$0xff]
    %v233 = vld [vmem:[%s231 + $0x8] sm:$0xff]
    %s234 = sld [smem:[#allocation2 + $0x15]]
    %v235 = vstv %s234
    %v236 = vmul.f32 %v232, %v235
    %v237 = vmul.f32 %v233, %v235
    %v238 = vadd.f32 %v217, %v236
    %v239 = vadd.f32 %v218, %v237
    %s240 = sld [smem:[#allocation2 + $0x16]]
    %v241 = vstv %s240
    %v242 = vmul.f32 %v232, %v241
    %v243 = vmul.f32 %v233, %v241
    %v244 = vadd.f32 %v223, %v242
    %v245 = vadd.f32 %v224, %v243
    %s246 = sld [smem:[#allocation2 + $0x17]]
    %v247 = vstv %s246
    %v248 = vmul.f32 %v232, %v247
    %v249 = vmul.f32 %v233, %v247
    %v250 = vadd.f32 %v229, %v248
    %v251 = vadd.f32 %v230, %v249
    %s252 = scalar_lea.vmem [#allocation9], 128
    %v253 = vld [vmem:[%s252] sm:$0xff]
    %v254 = vld [vmem:[%s252 + $0x8] sm:$0xff]
    %s255 = sld [smem:[#allocation2 + $0x18]]
    %v256 = vstv %s255
    %v257 = vmul.f32 %v253, %v256
    %v258 = vmul.f32 %v254, %v256
    %v259 = vadd.f32 %v238, %v257
    %v260 = vadd.f32 %v239, %v258
    %s261 = sld [smem:[#allocation2 + $0x19]]
    %v262 = vstv %s261
    %v263 = vmul.f32 %v253, %v262
    %v264 = vmul.f32 %v254, %v262
    %v265 = vadd.f32 %v244, %v263
    %v266 = vadd.f32 %v245, %v264
    %s267 = sld [smem:[#allocation2 + $0x1a]]
    %v268 = vstv %s267
    %v269 = vmul.f32 %v253, %v268
    %v270 = vmul.f32 %v254, %v268
    %v271 = vadd.f32 %v250, %v269
    %v272 = vadd.f32 %v251, %v270
    %s273 = scalar_lea.vmem [#allocation9], 144
    %v274 = vld [vmem:[%s273] sm:$0xff]
    %v275 = vld [vmem:[%s273 + $0x8] sm:$0xff]
    %s276 = sld [smem:[#allocation2 + $0x1b]]
    %v277 = vstv %s276
    %v278 = vmul.f32 %v274, %v277
    %v279 = vmul.f32 %v275, %v277
    %v280 = vadd.f32 %v259, %v278
    %v281 = vadd.f32 %v260, %v279
    %s282 = sld [smem:[#allocation2 + $0x1c]]
    %v283 = vstv %s282
    %v284 = vmul.f32 %v274, %v283
    %v285 = vmul.f32 %v275, %v283
    %v286 = vadd.f32 %v265, %v284
    %v287 = vadd.f32 %v266, %v285
    %s288 = sld [smem:[#allocation2 + $0x1d]]
    %v289 = vstv %s288
    %v290 = vmul.f32 %v274, %v289
    %v291 = vmul.f32 %v275, %v289
    %v292 = vadd.f32 %v271, %v290
    %v293 = vadd.f32 %v272, %v291
    %s294 = scalar_lea.vmem [#allocation9], 160
    %v295 = vld [vmem:[%s294] sm:$0xff]
    %v296 = vld [vmem:[%s294 + $0x8] sm:$0xff]
    %s297 = sld [smem:[#allocation2 + $0x1e]]
    %v298 = vstv %s297
    %v299 = vmul.f32 %v295, %v298
    %v300 = vmul.f32 %v296, %v298
    %v301 = vadd.f32 %v280, %v299
    %v302 = vadd.f32 %v281, %v300
    %s303 = sld [smem:[#allocation2 + $0x1f]]
    %v304 = vstv %s303
    %v305 = vmul.f32 %v295, %v304
    %v306 = vmul.f32 %v296, %v304
    %v307 = vadd.f32 %v286, %v305
    %v308 = vadd.f32 %v287, %v306
    %s309 = sld [smem:[#allocation2 + $0x20]]
    %v310 = vstv %s309
    %v311 = vmul.f32 %v295, %v310
    %v312 = vmul.f32 %v296, %v310
    %v313 = vadd.f32 %v292, %v311
    %v314 = vadd.f32 %v293, %v312
    %s315 = scalar_lea.vmem [#allocation9], 176
    %v316 = vld [vmem:[%s315] sm:$0xff]
    %v317 = vld [vmem:[%s315 + $0x8] sm:$0xff]
    %s318 = sld [smem:[#allocation2 + $0x21]]
    %v319 = vstv %s318
    %v320 = vmul.f32 %v316, %v319
    %v321 = vmul.f32 %v317, %v319
    %v322 = vadd.f32 %v301, %v320
    %v323 = vadd.f32 %v302, %v321
    %s324 = sld [smem:[#allocation2 + $0x22]]
    %v325 = vstv %s324
    %v326 = vmul.f32 %v316, %v325
    %v327 = vmul.f32 %v317, %v325
    %v328 = vadd.f32 %v307, %v326
    %v329 = vadd.f32 %v308, %v327
    %s330 = sld [smem:[#allocation2 + $0x23]]
    %v331 = vstv %s330
    %v332 = vmul.f32 %v316, %v331
    %v333 = vmul.f32 %v317, %v331
    %v334 = vadd.f32 %v313, %v332
    %v335 = vadd.f32 %v314, %v333
    %s336 = scalar_lea.vmem [#allocation9], 192
    %v337 = vld [vmem:[%s336] sm:$0xff]
    %v338 = vld [vmem:[%s336 + $0x8] sm:$0xff]
    %s339 = sld [smem:[#allocation2 + $0x24]]
    %v340 = vstv %s339
    %v341 = vmul.f32 %v337, %v340
    %v342 = vmul.f32 %v338, %v340
    %v343 = vadd.f32 %v322, %v341
    %v344 = vadd.f32 %v323, %v342
    %s345 = sld [smem:[#allocation2 + $0x25]]
    %v346 = vstv %s345
    %v347 = vmul.f32 %v337, %v346
    %v348 = vmul.f32 %v338, %v346
    %v349 = vadd.f32 %v328, %v347
    %v350 = vadd.f32 %v329, %v348
    %s351 = sld [smem:[#allocation2 + $0x26]]
    %v352 = vstv %s351
    %v353 = vmul.f32 %v337, %v352
    %v354 = vmul.f32 %v338, %v352
    %v355 = vadd.f32 %v334, %v353
    %v356 = vadd.f32 %v335, %v354
    %s357 = scalar_lea.vmem [#allocation9], 208
    %v358 = vld [vmem:[%s357] sm:$0xff]
    %v359 = vld [vmem:[%s357 + $0x8] sm:$0xff]
    %s360 = sld [smem:[#allocation2 + $0x27]]
    %v361 = vstv %s360
    %v362 = vmul.f32 %v358, %v361
    %v363 = vmul.f32 %v359, %v361
    %v364 = vadd.f32 %v343, %v362
    %v365 = vadd.f32 %v344, %v363
    %s366 = sld [smem:[#allocation2 + $0x28]]
    %v367 = vstv %s366
    %v368 = vmul.f32 %v358, %v367
    %v369 = vmul.f32 %v359, %v367
    %v370 = vadd.f32 %v349, %v368
    %v371 = vadd.f32 %v350, %v369
    %s372 = sld [smem:[#allocation2 + $0x29]]
    %v373 = vstv %s372
    %v374 = vmul.f32 %v358, %v373
    %v375 = vmul.f32 %v359, %v373
    %v376 = vadd.f32 %v355, %v374
    %v377 = vadd.f32 %v356, %v375
    %s378 = scalar_lea.vmem [#allocation9], 224
    %v379 = vld [vmem:[%s378] sm:$0xff]
    %v380 = vld [vmem:[%s378 + $0x8] sm:$0xff]
    %s381 = sld [smem:[#allocation2 + $0x2a]]
    %v382 = vstv %s381
    %v383 = vmul.f32 %v379, %v382
    %v384 = vmul.f32 %v380, %v382
    %v385 = vadd.f32 %v364, %v383
    %v386 = vadd.f32 %v365, %v384
    %s387 = sld [smem:[#allocation2 + $0x2b]]
    %v388 = vstv %s387
    %v389 = vmul.f32 %v379, %v388
    %v390 = vmul.f32 %v380, %v388
    %v391 = vadd.f32 %v370, %v389
    %v392 = vadd.f32 %v371, %v390
    %s393 = sld [smem:[#allocation2 + $0x2c]]
    %v394 = vstv %s393
    %v395 = vmul.f32 %v379, %v394
    %v396 = vmul.f32 %v380, %v394
    %v397 = vadd.f32 %v376, %v395
    %v398 = vadd.f32 %v377, %v396
    %s399 = scalar_lea.vmem [#allocation9], 240
    %v400 = vld [vmem:[%s399] sm:$0xff]
    %v401 = vld [vmem:[%s399 + $0x8] sm:$0xff]
    %s402 = sld [smem:[#allocation2 + $0x2d]]
    %v403 = vstv %s402
    %v404 = vmul.f32 %v400, %v403
    %v405 = vmul.f32 %v401, %v403
    %v406 = vadd.f32 %v385, %v404
    %v407 = vadd.f32 %v386, %v405
    %s408 = sld [smem:[#allocation2 + $0x2e]]
    %v409 = vstv %s408
    %v410 = vmul.f32 %v400, %v409
    %v411 = vmul.f32 %v401, %v409
    %v412 = vadd.f32 %v391, %v410
    %v413 = vadd.f32 %v392, %v411
    %s414 = sld [smem:[#allocation2 + $0x2f]]
    %v415 = vstv %s414
    %v416 = vmul.f32 %v400, %v415
    %v417 = vmul.f32 %v401, %v415
    %v418 = vadd.f32 %v397, %v416
    %v419 = vadd.f32 %v398, %v417
    %s420 = scalar_lea.vmem [#allocation9], 256
    %v421 = vld [vmem:[%s420] sm:$0xff]
    %v422 = vld [vmem:[%s420 + $0x8] sm:$0xff]
    %s423 = sld [smem:[#allocation2 + $0x30]]
    %v424 = vstv %s423
    %v425 = vmul.f32 %v421, %v424
    %v426 = vmul.f32 %v422, %v424
    %v427 = vadd.f32 %v406, %v425
    %v428 = vadd.f32 %v407, %v426
    %s429 = sld [smem:[#allocation2 + $0x31]]
    %v430 = vstv %s429
    %v431 = vmul.f32 %v421, %v430
    %v432 = vmul.f32 %v422, %v430
    %v433 = vadd.f32 %v412, %v431
    %v434 = vadd.f32 %v413, %v432
    %s435 = sld [smem:[#allocation2 + $0x32]]
    %v436 = vstv %s435
    %v437 = vmul.f32 %v421, %v436
    %v438 = vmul.f32 %v422, %v436
    %v439 = vadd.f32 %v418, %v437
    %v440 = vadd.f32 %v419, %v438
    %s441 = scalar_lea.vmem [#allocation9], 272
    %v442 = vld [vmem:[%s441] sm:$0xff]
    %v443 = vld [vmem:[%s441 + $0x8] sm:$0xff]
    %s444 = sld [smem:[#allocation2 + $0x33]]
    %v445 = vstv %s444
    %v446 = vmul.f32 %v442, %v445
    %v447 = vmul.f32 %v443, %v445
    %v448 = vadd.f32 %v427, %v446
    %v449 = vadd.f32 %v428, %v447
    %s450 = sld [smem:[#allocation2 + $0x34]]
    %v451 = vstv %s450
    %v452 = vmul.f32 %v442, %v451
    %v453 = vmul.f32 %v443, %v451
    %v454 = vadd.f32 %v433, %v452
    %v455 = vadd.f32 %v434, %v453
    %s456 = sld [smem:[#allocation2 + $0x35]]
    %v457 = vstv %s456
    %v458 = vmul.f32 %v442, %v457
    %v459 = vmul.f32 %v443, %v457
    %v460 = vadd.f32 %v439, %v458
    %v461 = vadd.f32 %v440, %v459
    %s462 = scalar_lea.vmem [#allocation9], 288
    %v463 = vld [vmem:[%s462] sm:$0xff]
    %v464 = vld [vmem:[%s462 + $0x8] sm:$0xff]
    %s465 = sld [smem:[#allocation2 + $0x36]]
    %v466 = vstv %s465
    %v467 = vmul.f32 %v463, %v466
    %v468 = vmul.f32 %v464, %v466
    %v469 = vadd.f32 %v448, %v467
    %v470 = vadd.f32 %v449, %v468
    %s471 = sld [smem:[#allocation2 + $0x37]]
    %v472 = vstv %s471
    %v473 = vmul.f32 %v463, %v472
    %v474 = vmul.f32 %v464, %v472
    %v475 = vadd.f32 %v454, %v473
    %v476 = vadd.f32 %v455, %v474
    %s477 = sld [smem:[#allocation2 + $0x38]]
    %v478 = vstv %s477
    %v479 = vmul.f32 %v463, %v478
    %v480 = vmul.f32 %v464, %v478
    %v481 = vadd.f32 %v460, %v479
    %v482 = vadd.f32 %v461, %v480
    %s483 = scalar_lea.vmem [#allocation9], 304
    %v484 = vld [vmem:[%s483] sm:$0xff]
    %v485 = vld [vmem:[%s483 + $0x8] sm:$0xff]
    %s486 = sld [smem:[#allocation2 + $0x39]]
    %v487 = vstv %s486
    %v488 = vmul.f32 %v484, %v487
    %v489 = vmul.f32 %v485, %v487
    %v490 = vadd.f32 %v469, %v488
    %v491 = vadd.f32 %v470, %v489
    %s492 = sld [smem:[#allocation2 + $0x3a]]
    %v493 = vstv %s492
    %v494 = vmul.f32 %v484, %v493
    %v495 = vmul.f32 %v485, %v493
    %v496 = vadd.f32 %v475, %v494
    %v497 = vadd.f32 %v476, %v495
    %s498 = sld [smem:[#allocation2 + $0x3b]]
    %v499 = vstv %s498
    %v500 = vmul.f32 %v484, %v499
    %v501 = vmul.f32 %v485, %v499
    %v502 = vadd.f32 %v481, %v500
    %v503 = vadd.f32 %v482, %v501
    %s504 = scalar_lea.vmem [#allocation9], 320
    %v505 = vld [vmem:[%s504] sm:$0xff]
    %v506 = vld [vmem:[%s504 + $0x8] sm:$0xff]
    %s507 = sld [smem:[#allocation2 + $0x3c]]
    %v508 = vstv %s507
    %v509 = vmul.f32 %v505, %v508
    %v510 = vmul.f32 %v506, %v508
    %v511 = vadd.f32 %v490, %v509
    %v512 = vadd.f32 %v491, %v510
    %s513 = sld [smem:[#allocation2 + $0x3d]]
    %v514 = vstv %s513
    %v515 = vmul.f32 %v505, %v514
    %v516 = vmul.f32 %v506, %v514
    %v517 = vadd.f32 %v496, %v515
    %v518 = vadd.f32 %v497, %v516
    %s519 = sld [smem:[#allocation2 + $0x3e]]
    %v520 = vstv %s519
    %v521 = vmul.f32 %v505, %v520
    %v522 = vmul.f32 %v506, %v520
    %v523 = vadd.f32 %v502, %v521
    %v524 = vadd.f32 %v503, %v522
    %s525 = scalar_lea.vmem [#allocation9], 336
    %v526 = vld [vmem:[%s525] sm:$0xff]
    %v527 = vld [vmem:[%s525 + $0x8] sm:$0xff]
    %s528 = sld [smem:[#allocation2 + $0x3f]]
    %v529 = vstv %s528
    %v530 = vmul.f32 %v526, %v529
    %v531 = vmul.f32 %v527, %v529
    %v532 = vadd.f32 %v511, %v530
    %v533 = vadd.f32 %v512, %v531
    %s534 = sld [smem:[#allocation2 + $0x40]]
    %v535 = vstv %s534
    %v536 = vmul.f32 %v526, %v535
    %v537 = vmul.f32 %v527, %v535
    %v538 = vadd.f32 %v517, %v536
    %v539 = vadd.f32 %v518, %v537
    %s540 = sld [smem:[#allocation2 + $0x41]]
    %v541 = vstv %s540
    %v542 = vmul.f32 %v526, %v541
    %v543 = vmul.f32 %v527, %v541
    %v544 = vadd.f32 %v523, %v542
    %v545 = vadd.f32 %v524, %v543
    %s546 = scalar_lea.vmem [#allocation9], 352
    %v547 = vld [vmem:[%s546] sm:$0xff]
    %v548 = vld [vmem:[%s546 + $0x8] sm:$0xff]
    %s549 = sld [smem:[#allocation2 + $0x42]]
    %v550 = vstv %s549
    %v551 = vmul.f32 %v547, %v550
    %v552 = vmul.f32 %v548, %v550
    %v553 = vadd.f32 %v532, %v551
    %v554 = vadd.f32 %v533, %v552
    %s555 = sld [smem:[#allocation2 + $0x43]]
    %v556 = vstv %s555
    %v557 = vmul.f32 %v547, %v556
    %v558 = vmul.f32 %v548, %v556
    %v559 = vadd.f32 %v538, %v557
    %v560 = vadd.f32 %v539, %v558
    %s561 = sld [smem:[#allocation2 + $0x44]]
    %v562 = vstv %s561
    %v563 = vmul.f32 %v547, %v562
    %v564 = vmul.f32 %v548, %v562
    %v565 = vadd.f32 %v544, %v563
    %v566 = vadd.f32 %v545, %v564
    %s567 = scalar_lea.vmem [#allocation9], 368
    %v568 = vld [vmem:[%s567] sm:$0xff]
    %v569 = vld [vmem:[%s567 + $0x8] sm:$0xff]
    %s570 = sld [smem:[#allocation2 + $0x45]]
    %v571 = vstv %s570
    %v572 = vmul.f32 %v568, %v571
    %v573 = vmul.f32 %v569, %v571
    %v574 = vadd.f32 %v553, %v572
    %v575 = vadd.f32 %v554, %v573
    %s576 = sld [smem:[#allocation2 + $0x46]]
    %v577 = vstv %s576
    %v578 = vmul.f32 %v568, %v577
    %v579 = vmul.f32 %v569, %v577
    %v580 = vadd.f32 %v559, %v578
    %v581 = vadd.f32 %v560, %v579
    %s582 = sld [smem:[#allocation2 + $0x47]]
    %v583 = vstv %s582
    %v584 = vmul.f32 %v568, %v583
    %v585 = vmul.f32 %v569, %v583
    %v586 = vadd.f32 %v565, %v584
    %v587 = vadd.f32 %v566, %v585
    %s588 = scalar_lea.vmem [#allocation9], 384
    %v589 = vld [vmem:[%s588] sm:$0xff]
    %v590 = vld [vmem:[%s588 + $0x8] sm:$0xff]
    %s591 = sld [smem:[#allocation2 + $0x48]]
    %v592 = vstv %s591
    %v593 = vmul.f32 %v589, %v592
    %v594 = vmul.f32 %v590, %v592
    %v595 = vadd.f32 %v574, %v593
    %v596 = vadd.f32 %v575, %v594
    %s597 = sld [smem:[#allocation2 + $0x49]]
    %v598 = vstv %s597
    %v599 = vmul.f32 %v589, %v598
    %v600 = vmul.f32 %v590, %v598
    %v601 = vadd.f32 %v580, %v599
    %v602 = vadd.f32 %v581, %v600
    %s603 = sld [smem:[#allocation2 + $0x4a]]
    %v604 = vstv %s603
    %v605 = vmul.f32 %v589, %v604
    %v606 = vmul.f32 %v590, %v604
    %v607 = vadd.f32 %v586, %v605
    %v608 = vadd.f32 %v587, %v606
    %s609 = scalar_lea.vmem [#allocation9], 400
    %v610 = vld [vmem:[%s609] sm:$0xff]
    %v611 = vld [vmem:[%s609 + $0x8] sm:$0xff]
    %s612 = sld [smem:[#allocation2 + $0x4b]]
    %v613 = vstv %s612
    %v614 = vmul.f32 %v610, %v613
    %v615 = vmul.f32 %v611, %v613
    %v616 = vadd.f32 %v595, %v614
    %v617 = vadd.f32 %v596, %v615
    %s618 = sld [smem:[#allocation2 + $0x4c]]
    %v619 = vstv %s618
    %v620 = vmul.f32 %v610, %v619
    %v621 = vmul.f32 %v611, %v619
    %v622 = vadd.f32 %v601, %v620
    %v623 = vadd.f32 %v602, %v621
    %s624 = sld [smem:[#allocation2 + $0x4d]]
    %v625 = vstv %s624
    %v626 = vmul.f32 %v610, %v625
    %v627 = vmul.f32 %v611, %v625
    %v628 = vadd.f32 %v607, %v626
    %v629 = vadd.f32 %v608, %v627
    %s630 = scalar_lea.vmem [#allocation9], 416
    %v631 = vld [vmem:[%s630] sm:$0xff]
    %v632 = vld [vmem:[%s630 + $0x8] sm:$0xff]
    %s633 = sld [smem:[#allocation2 + $0x4e]]
    %v634 = vstv %s633
    %v635 = vmul.f32 %v631, %v634
    %v636 = vmul.f32 %v632, %v634
    %v637 = vadd.f32 %v616, %v635
    %v638 = vadd.f32 %v617, %v636
    %s639 = sld [smem:[#allocation2 + $0x4f]]
    %v640 = vstv %s639
    %v641 = vmul.f32 %v631, %v640
    %v642 = vmul.f32 %v632, %v640
    %v643 = vadd.f32 %v622, %v641
    %v644 = vadd.f32 %v623, %v642
    %s645 = sld [smem:[#allocation2 + $0x50]]
    %v646 = vstv %s645
    %v647 = vmul.f32 %v631, %v646
    %v648 = vmul.f32 %v632, %v646
    %v649 = vadd.f32 %v628, %v647
    %v650 = vadd.f32 %v629, %v648
    %s651 = scalar_lea.vmem [#allocation9], 432
    %v652 = vld [vmem:[%s651] sm:$0xff]
    %v653 = vld [vmem:[%s651 + $0x8] sm:$0xff]
    %s654 = sld [smem:[#allocation2 + $0x51]]
    %v655 = vstv %s654
    %v656 = vmul.f32 %v652, %v655
    %v657 = vmul.f32 %v653, %v655
    %v658 = vadd.f32 %v637, %v656
    %v659 = vadd.f32 %v638, %v657
    %s660 = sld [smem:[#allocation2 + $0x52]]
    %v661 = vstv %s660
    %v662 = vmul.f32 %v652, %v661
    %v663 = vmul.f32 %v653, %v661
    %v664 = vadd.f32 %v643, %v662
    %v665 = vadd.f32 %v644, %v663
    %s666 = sld [smem:[#allocation2 + $0x53]]
    %v667 = vstv %s666
    %v668 = vmul.f32 %v652, %v667
    %v669 = vmul.f32 %v653, %v667
    %v670 = vadd.f32 %v649, %v668
    %v671 = vadd.f32 %v650, %v669
    %s672 = scalar_lea.vmem [#allocation9], 448
    %v673 = vld [vmem:[%s672] sm:$0xff]
    %v674 = vld [vmem:[%s672 + $0x8] sm:$0xff]
    %s675 = sld [smem:[#allocation2 + $0x54]]
    %v676 = vstv %s675
    %v677 = vmul.f32 %v673, %v676
    %v678 = vmul.f32 %v674, %v676
    %v679 = vadd.f32 %v658, %v677
    %v680 = vadd.f32 %v659, %v678
    %s681 = sld [smem:[#allocation2 + $0x55]]
    %v682 = vstv %s681
    %v683 = vmul.f32 %v673, %v682
    %v684 = vmul.f32 %v674, %v682
    %v685 = vadd.f32 %v664, %v683
    %v686 = vadd.f32 %v665, %v684
    %s687 = sld [smem:[#allocation2 + $0x56]]
    %v688 = vstv %s687
    %v689 = vmul.f32 %v673, %v688
    %v690 = vmul.f32 %v674, %v688
    %v691 = vadd.f32 %v670, %v689
    %v692 = vadd.f32 %v671, %v690
    %s693 = scalar_lea.vmem [#allocation9], 464
    %v694 = vld [vmem:[%s693] sm:$0xff]
    %v695 = vld [vmem:[%s693 + $0x8] sm:$0xff]
    %s696 = sld [smem:[#allocation2 + $0x57]]
    %v697 = vstv %s696
    %v698 = vmul.f32 %v694, %v697
    %v699 = vmul.f32 %v695, %v697
    %v700 = vadd.f32 %v679, %v698
    %v701 = vadd.f32 %v680, %v699
    %s702 = sld [smem:[#allocation2 + $0x58]]
    %v703 = vstv %s702
    %v704 = vmul.f32 %v694, %v703
    %v705 = vmul.f32 %v695, %v703
    %v706 = vadd.f32 %v685, %v704
    %v707 = vadd.f32 %v686, %v705
    %s708 = sld [smem:[#allocation2 + $0x59]]
    %v709 = vstv %s708
    %v710 = vmul.f32 %v694, %v709
    %v711 = vmul.f32 %v695, %v709
    %v712 = vadd.f32 %v691, %v710
    %v713 = vadd.f32 %v692, %v711
    %s714 = scalar_lea.vmem [#allocation9], 480
    %v715 = vld [vmem:[%s714] sm:$0xff]
    %v716 = vld [vmem:[%s714 + $0x8] sm:$0xff]
    %s717 = sld [smem:[#allocation2 + $0x5a]]
    %v718 = vstv %s717
    %v719 = vmul.f32 %v715, %v718
    %v720 = vmul.f32 %v716, %v718
    %v721 = vadd.f32 %v700, %v719
    %v722 = vadd.f32 %v701, %v720
    %s723 = sld [smem:[#allocation2 + $0x5b]]
    %v724 = vstv %s723
    %v725 = vmul.f32 %v715, %v724
    %v726 = vmul.f32 %v716, %v724
    %v727 = vadd.f32 %v706, %v725
    %v728 = vadd.f32 %v707, %v726
    %s729 = sld [smem:[#allocation2 + $0x5c]]
    %v730 = vstv %s729
    %v731 = vmul.f32 %v715, %v730
    %v732 = vmul.f32 %v716, %v730
    %v733 = vadd.f32 %v712, %v731
    %v734 = vadd.f32 %v713, %v732
    %s735 = scalar_lea.vmem [#allocation9], 496
    %v736 = vld [vmem:[%s735] sm:$0xff]
    %v737 = vld [vmem:[%s735 + $0x8] sm:$0xff]
    %s738 = sld [smem:[#allocation2 + $0x5d]]
    %v739 = vstv %s738
    %v740 = vmul.f32 %v736, %v739
    %v741 = vmul.f32 %v737, %v739
    %v742 = vadd.f32 %v721, %v740
    %v743 = vadd.f32 %v722, %v741
    %s744 = sld [smem:[#allocation2 + $0x5e]]
    %v745 = vstv %s744
    %v746 = vmul.f32 %v736, %v745
    %v747 = vmul.f32 %v737, %v745
    %v748 = vadd.f32 %v727, %v746
    %v749 = vadd.f32 %v728, %v747
    %s750 = sld [smem:[#allocation2 + $0x5f]]
    %v751 = vstv %s750
    %v752 = vmul.f32 %v736, %v751
    %v753 = vmul.f32 %v737, %v751
    %v754 = vadd.f32 %v733, %v752
    %v755 = vadd.f32 %v734, %v753
    %s756 = scalar_lea.vmem [#allocation9], 512
    %v757 = vld [vmem:[%s756] sm:$0xff]
    %v758 = vld [vmem:[%s756 + $0x8] sm:$0xff]
    %s759 = sld [smem:[#allocation2 + $0x60]]
    %v760 = vstv %s759
    %v761 = vmul.f32 %v757, %v760
    %v762 = vmul.f32 %v758, %v760
    %v763 = vadd.f32 %v742, %v761
    %v764 = vadd.f32 %v743, %v762
    %s765 = sld [smem:[#allocation2 + $0x61]]
    %v766 = vstv %s765
    %v767 = vmul.f32 %v757, %v766
    %v768 = vmul.f32 %v758, %v766
    %v769 = vadd.f32 %v748, %v767
    %v770 = vadd.f32 %v749, %v768
    %s771 = sld [smem:[#allocation2 + $0x62]]
    %v772 = vstv %s771
    %v773 = vmul.f32 %v757, %v772
    %v774 = vmul.f32 %v758, %v772
    %v775 = vadd.f32 %v754, %v773
    %v776 = vadd.f32 %v755, %v774
    %s777 = scalar_lea.vmem [#allocation9], 528
    %v778 = vld [vmem:[%s777] sm:$0xff]
    %v779 = vld [vmem:[%s777 + $0x8] sm:$0xff]
    %s780 = sld [smem:[#allocation2 + $0x63]]
    %v781 = vstv %s780
    %v782 = vmul.f32 %v778, %v781
    %v783 = vmul.f32 %v779, %v781
    %v784 = vadd.f32 %v763, %v782
    %v785 = vadd.f32 %v764, %v783
    %s786 = sld [smem:[#allocation2 + $0x64]]
    %v787 = vstv %s786
    %v788 = vmul.f32 %v778, %v787
    %v789 = vmul.f32 %v779, %v787
    %v790 = vadd.f32 %v769, %v788
    %v791 = vadd.f32 %v770, %v789
    %s792 = sld [smem:[#allocation2 + $0x65]]
    %v793 = vstv %s792
    %v794 = vmul.f32 %v778, %v793
    %v795 = vmul.f32 %v779, %v793
    %v796 = vadd.f32 %v775, %v794
    %v797 = vadd.f32 %v776, %v795
    %s798 = scalar_lea.vmem [#allocation9], 544
    %v799 = vld [vmem:[%s798] sm:$0xff]
    %v800 = vld [vmem:[%s798 + $0x8] sm:$0xff]
    %s801 = sld [smem:[#allocation2 + $0x66]]
    %v802 = vstv %s801
    %v803 = vmul.f32 %v799, %v802
    %v804 = vmul.f32 %v800, %v802
    %v805 = vadd.f32 %v784, %v803
    %v806 = vadd.f32 %v785, %v804
    %s807 = sld [smem:[#allocation2 + $0x67]]
    %v808 = vstv %s807
    %v809 = vmul.f32 %v799, %v808
    %v810 = vmul.f32 %v800, %v808
    %v811 = vadd.f32 %v790, %v809
    %v812 = vadd.f32 %v791, %v810
    %s813 = sld [smem:[#allocation2 + $0x68]]
    %v814 = vstv %s813
    %v815 = vmul.f32 %v799, %v814
    %v816 = vmul.f32 %v800, %v814
    %v817 = vadd.f32 %v796, %v815
    %v818 = vadd.f32 %v797, %v816
    %s819 = scalar_lea.vmem [#allocation9], 560
    %v820 = vld [vmem:[%s819] sm:$0xff]
    %v821 = vld [vmem:[%s819 + $0x8] sm:$0xff]
    %s822 = sld [smem:[#allocation2 + $0x69]]
    %v823 = vstv %s822
    %v824 = vmul.f32 %v820, %v823
    %v825 = vmul.f32 %v821, %v823
    %v826 = vadd.f32 %v805, %v824
    %v827 = vadd.f32 %v806, %v825
    %s828 = sld [smem:[#allocation2 + $0x6a]]
    %v829 = vstv %s828
    %v830 = vmul.f32 %v820, %v829
    %v831 = vmul.f32 %v821, %v829
    %v832 = vadd.f32 %v811, %v830
    %v833 = vadd.f32 %v812, %v831
    %s834 = sld [smem:[#allocation2 + $0x6b]]
    %v835 = vstv %s834
    %v836 = vmul.f32 %v820, %v835
    %v837 = vmul.f32 %v821, %v835
    %v838 = vadd.f32 %v817, %v836
    %v839 = vadd.f32 %v818, %v837
    %s840 = scalar_lea.vmem [#allocation9], 576
    %v841 = vld [vmem:[%s840] sm:$0xff]
    %v842 = vld [vmem:[%s840 + $0x8] sm:$0xff]
    %s843 = sld [smem:[#allocation2 + $0x6c]]
    %v844 = vstv %s843
    %v845 = vmul.f32 %v841, %v844
    %v846 = vmul.f32 %v842, %v844
    %v847 = vadd.f32 %v826, %v845
    %v848 = vadd.f32 %v827, %v846
    %s849 = sld [smem:[#allocation2 + $0x6d]]
    %v850 = vstv %s849
    %v851 = vmul.f32 %v841, %v850
    %v852 = vmul.f32 %v842, %v850
    %v853 = vadd.f32 %v832, %v851
    %v854 = vadd.f32 %v833, %v852
    %s855 = sld [smem:[#allocation2 + $0x6e]]
    %v856 = vstv %s855
    %v857 = vmul.f32 %v841, %v856
    %v858 = vmul.f32 %v842, %v856
    %v859 = vadd.f32 %v838, %v857
    %v860 = vadd.f32 %v839, %v858
    %s861 = scalar_lea.vmem [#allocation9], 592
    %v862 = vld [vmem:[%s861] sm:$0xff]
    %v863 = vld [vmem:[%s861 + $0x8] sm:$0xff]
    %s864 = sld [smem:[#allocation2 + $0x6f]]
    %v865 = vstv %s864
    %v866 = vmul.f32 %v862, %v865
    %v867 = vmul.f32 %v863, %v865
    %v868 = vadd.f32 %v847, %v866
    %v869 = vadd.f32 %v848, %v867
    %s870 = sld [smem:[#allocation2 + $0x70]]
    %v871 = vstv %s870
    %v872 = vmul.f32 %v862, %v871
    %v873 = vmul.f32 %v863, %v871
    %v874 = vadd.f32 %v853, %v872
    %v875 = vadd.f32 %v854, %v873
    %s876 = sld [smem:[#allocation2 + $0x71]]
    %v877 = vstv %s876
    %v878 = vmul.f32 %v862, %v877
    %v879 = vmul.f32 %v863, %v877
    %v880 = vadd.f32 %v859, %v878
    %v881 = vadd.f32 %v860, %v879
    %s882 = scalar_lea.vmem [#allocation9], 608
    %v883 = vld [vmem:[%s882] sm:$0xff]
    %v884 = vld [vmem:[%s882 + $0x8] sm:$0xff]
    %s885 = sld [smem:[#allocation2 + $0x72]]
    %v886 = vstv %s885
    %v887 = vmul.f32 %v883, %v886
    %v888 = vmul.f32 %v884, %v886
    %v889 = vadd.f32 %v868, %v887
    %v890 = vadd.f32 %v869, %v888
    %s891 = sld [smem:[#allocation2 + $0x73]]
    %v892 = vstv %s891
    %v893 = vmul.f32 %v883, %v892
    %v894 = vmul.f32 %v884, %v892
    %v895 = vadd.f32 %v874, %v893
    %v896 = vadd.f32 %v875, %v894
    %s897 = sld [smem:[#allocation2 + $0x74]]
    %v898 = vstv %s897
    %v899 = vmul.f32 %v883, %v898
    %v900 = vmul.f32 %v884, %v898
    %v901 = vadd.f32 %v880, %v899
    %v902 = vadd.f32 %v881, %v900
    %s903 = scalar_lea.vmem [#allocation9], 624
    %v904 = vld [vmem:[%s903] sm:$0xff]
    %v905 = vld [vmem:[%s903 + $0x8] sm:$0xff]
    %s906 = sld [smem:[#allocation2 + $0x75]]
    %v907 = vstv %s906
    %v908 = vmul.f32 %v904, %v907
    %v909 = vmul.f32 %v905, %v907
    %v910 = vadd.f32 %v889, %v908
    %v911 = vadd.f32 %v890, %v909
    %s912 = sld [smem:[#allocation2 + $0x76]]
    %v913 = vstv %s912
    %v914 = vmul.f32 %v904, %v913
    %v915 = vmul.f32 %v905, %v913
    %v916 = vadd.f32 %v895, %v914
    %v917 = vadd.f32 %v896, %v915
    %s918 = sld [smem:[#allocation2 + $0x77]]
    %v919 = vstv %s918
    %v920 = vmul.f32 %v904, %v919
    %v921 = vmul.f32 %v905, %v919
    %v922 = vadd.f32 %v901, %v920
    %v923 = vadd.f32 %v902, %v921
    %s924 = scalar_lea.vmem [#allocation9], 640
    %v925 = vld [vmem:[%s924] sm:$0xff]
    %v926 = vld [vmem:[%s924 + $0x8] sm:$0xff]
    %s927 = sld [smem:[#allocation2 + $0x78]]
    %v928 = vstv %s927
    %v929 = vmul.f32 %v925, %v928
    %v930 = vmul.f32 %v926, %v928
    %v931 = vadd.f32 %v910, %v929
    %v932 = vadd.f32 %v911, %v930
    %s933 = sld [smem:[#allocation2 + $0x79]]
    %v934 = vstv %s933
    %v935 = vmul.f32 %v925, %v934
    %v936 = vmul.f32 %v926, %v934
    %v937 = vadd.f32 %v916, %v935
    %v938 = vadd.f32 %v917, %v936
    %s939 = sld [smem:[#allocation2 + $0x7a]]
    %v940 = vstv %s939
    %v941 = vmul.f32 %v925, %v940
    %v942 = vmul.f32 %v926, %v940
    %v943 = vadd.f32 %v922, %v941
    %v944 = vadd.f32 %v923, %v942
    %s945 = scalar_lea.vmem [#allocation9], 656
    %v946 = vld [vmem:[%s945] sm:$0xff]
    %v947 = vld [vmem:[%s945 + $0x8] sm:$0xff]
    %s948 = sld [smem:[#allocation2 + $0x7b]]
    %v949 = vstv %s948
    %v950 = vmul.f32 %v946, %v949
    %v951 = vmul.f32 %v947, %v949
    %v952 = vadd.f32 %v931, %v950
    %v953 = vadd.f32 %v932, %v951
    %s954 = sld [smem:[#allocation2 + $0x7c]]
    %v955 = vstv %s954
    %v956 = vmul.f32 %v946, %v955
    %v957 = vmul.f32 %v947, %v955
    %v958 = vadd.f32 %v937, %v956
    %v959 = vadd.f32 %v938, %v957
    %s960 = sld [smem:[#allocation2 + $0x7d]]
    %v961 = vstv %s960
    %v962 = vmul.f32 %v946, %v961
    %v963 = vmul.f32 %v947, %v961
    %v964 = vadd.f32 %v943, %v962
    %v965 = vadd.f32 %v944, %v963
    %s966 = scalar_lea.vmem [#allocation9], 672
    %v967 = vld [vmem:[%s966] sm:$0xff]
    %v968 = vld [vmem:[%s966 + $0x8] sm:$0xff]
    %s969 = sld [smem:[#allocation2 + $0x7e]]
    %v970 = vstv %s969
    %v971 = vmul.f32 %v967, %v970
    %v972 = vmul.f32 %v968, %v970
    %v973 = vadd.f32 %v952, %v971
    %v974 = vadd.f32 %v953, %v972
    %s975 = sld [smem:[#allocation2 + $0x7f]]
    %v976 = vstv %s975
    %v977 = vmul.f32 %v967, %v976
    %v978 = vmul.f32 %v968, %v976
    %v979 = vadd.f32 %v958, %v977
    %v980 = vadd.f32 %v959, %v978
    %s981 = sld [smem:[#allocation2 + $0x80]]
    %v982 = vstv %s981
    %v983 = vmul.f32 %v967, %v982
    %v984 = vmul.f32 %v968, %v982
    %v985 = vadd.f32 %v964, %v983
    %v986 = vadd.f32 %v965, %v984
    %s987 = scalar_lea.vmem [#allocation9], 688
    %v988 = vld [vmem:[%s987] sm:$0xff]
    %v989 = vld [vmem:[%s987 + $0x8] sm:$0xff]
    %s990 = sld [smem:[#allocation2 + $0x81]]
    %v991 = vstv %s990
    %v992 = vmul.f32 %v988, %v991
    %v993 = vmul.f32 %v989, %v991
    %v994 = vadd.f32 %v973, %v992
    %v995 = vadd.f32 %v974, %v993
    %s996 = sld [smem:[#allocation2 + $0x82]]
    %v997 = vstv %s996
    %v998 = vmul.f32 %v988, %v997
    %v999 = vmul.f32 %v989, %v997
    %v1000 = vadd.f32 %v979, %v998
    %v1001 = vadd.f32 %v980, %v999
    %s1002 = sld [smem:[#allocation2 + $0x83]]
    %v1003 = vstv %s1002
    %v1004 = vmul.f32 %v988, %v1003
    %v1005 = vmul.f32 %v989, %v1003
    %v1006 = vadd.f32 %v985, %v1004
    %v1007 = vadd.f32 %v986, %v1005
    %s1008 = scalar_lea.vmem [#allocation9], 704
    %v1009 = vld [vmem:[%s1008] sm:$0xff]
    %v1010 = vld [vmem:[%s1008 + $0x8] sm:$0xff]
    %s1011 = sld [smem:[#allocation2 + $0x84]]
    %v1012 = vstv %s1011
    %v1013 = vmul.f32 %v1009, %v1012
    %v1014 = vmul.f32 %v1010, %v1012
    %v1015 = vadd.f32 %v994, %v1013
    %v1016 = vadd.f32 %v995, %v1014
    %s1017 = sld [smem:[#allocation2 + $0x85]]
    %v1018 = vstv %s1017
    %v1019 = vmul.f32 %v1009, %v1018
    %v1020 = vmul.f32 %v1010, %v1018
    %v1021 = vadd.f32 %v1000, %v1019
    %v1022 = vadd.f32 %v1001, %v1020
    %s1023 = sld [smem:[#allocation2 + $0x86]]
    %v1024 = vstv %s1023
    %v1025 = vmul.f32 %v1009, %v1024
    %v1026 = vmul.f32 %v1010, %v1024
    %v1027 = vadd.f32 %v1006, %v1025
    %v1028 = vadd.f32 %v1007, %v1026
    %s1029 = scalar_lea.vmem [#allocation9], 720
    %v1030 = vld [vmem:[%s1029] sm:$0xff]
    %v1031 = vld [vmem:[%s1029 + $0x8] sm:$0xff]
    %s1032 = sld [smem:[#allocation2 + $0x87]]
    %v1033 = vstv %s1032
    %v1034 = vmul.f32 %v1030, %v1033
    %v1035 = vmul.f32 %v1031, %v1033
    %v1036 = vadd.f32 %v1015, %v1034
    %v1037 = vadd.f32 %v1016, %v1035
    %s1038 = sld [smem:[#allocation2 + $0x88]]
    %v1039 = vstv %s1038
    %v1040 = vmul.f32 %v1030, %v1039
    %v1041 = vmul.f32 %v1031, %v1039
    %v1042 = vadd.f32 %v1021, %v1040
    %v1043 = vadd.f32 %v1022, %v1041
    %s1044 = sld [smem:[#allocation2 + $0x89]]
    %v1045 = vstv %s1044
    %v1046 = vmul.f32 %v1030, %v1045
    %v1047 = vmul.f32 %v1031, %v1045
    %v1048 = vadd.f32 %v1027, %v1046
    %v1049 = vadd.f32 %v1028, %v1047
    %s1050 = scalar_lea.vmem [#allocation9], 736
    %v1051 = vld [vmem:[%s1050] sm:$0xff]
    %v1052 = vld [vmem:[%s1050 + $0x8] sm:$0xff]
    %s1053 = sld [smem:[#allocation2 + $0x8a]]
    %v1054 = vstv %s1053
    %v1055 = vmul.f32 %v1051, %v1054
    %v1056 = vmul.f32 %v1052, %v1054
    %v1057 = vadd.f32 %v1036, %v1055
    %v1058 = vadd.f32 %v1037, %v1056
    %s1059 = sld [smem:[#allocation2 + $0x8b]]
    %v1060 = vstv %s1059
    %v1061 = vmul.f32 %v1051, %v1060
    %v1062 = vmul.f32 %v1052, %v1060
    %v1063 = vadd.f32 %v1042, %v1061
    %v1064 = vadd.f32 %v1043, %v1062
    %s1065 = sld [smem:[#allocation2 + $0x8c]]
    %v1066 = vstv %s1065
    %v1067 = vmul.f32 %v1051, %v1066
    %v1068 = vmul.f32 %v1052, %v1066
    %v1069 = vadd.f32 %v1048, %v1067
    %v1070 = vadd.f32 %v1049, %v1068
    %s1071 = scalar_lea.vmem [#allocation9], 752
    %v1072 = vld [vmem:[%s1071] sm:$0xff]
    %v1073 = vld [vmem:[%s1071 + $0x8] sm:$0xff]
    %s1074 = sld [smem:[#allocation2 + $0x8d]]
    %v1075 = vstv %s1074
    %v1076 = vmul.f32 %v1072, %v1075
    %v1077 = vmul.f32 %v1073, %v1075
    %v1078 = vadd.f32 %v1057, %v1076
    %v1079 = vadd.f32 %v1058, %v1077
    %s1080 = sld [smem:[#allocation2 + $0x8e]]
    %v1081 = vstv %s1080
    %v1082 = vmul.f32 %v1072, %v1081
    %v1083 = vmul.f32 %v1073, %v1081
    %v1084 = vadd.f32 %v1063, %v1082
    %v1085 = vadd.f32 %v1064, %v1083
    %s1086 = sld [smem:[#allocation2 + $0x8f]]
    %v1087 = vstv %s1086
    %v1088 = vmul.f32 %v1072, %v1087
    %v1089 = vmul.f32 %v1073, %v1087
    %v1090 = vadd.f32 %v1069, %v1088
    %v1091 = vadd.f32 %v1070, %v1089
    %s1092 = scalar_lea.vmem [#allocation9], 768
    %v1093 = vld [vmem:[%s1092] sm:$0xff]
    %v1094 = vld [vmem:[%s1092 + $0x8] sm:$0xff]
    %s1095 = sld [smem:[#allocation2 + $0x90]]
    %v1096 = vstv %s1095
    %v1097 = vmul.f32 %v1093, %v1096
    %v1098 = vmul.f32 %v1094, %v1096
    %v1099 = vadd.f32 %v1078, %v1097
    %v1100 = vadd.f32 %v1079, %v1098
    %s1101 = sld [smem:[#allocation2 + $0x91]]
    %v1102 = vstv %s1101
    %v1103 = vmul.f32 %v1093, %v1102
    %v1104 = vmul.f32 %v1094, %v1102
    %v1105 = vadd.f32 %v1084, %v1103
    %v1106 = vadd.f32 %v1085, %v1104
    %s1107 = sld [smem:[#allocation2 + $0x92]]
    %v1108 = vstv %s1107
    %v1109 = vmul.f32 %v1093, %v1108
    %v1110 = vmul.f32 %v1094, %v1108
    %v1111 = vadd.f32 %v1090, %v1109
    %v1112 = vadd.f32 %v1091, %v1110
    %s1113 = scalar_lea.vmem [#allocation9], 784
    %v1114 = vld [vmem:[%s1113] sm:$0xff]
    %v1115 = vld [vmem:[%s1113 + $0x8] sm:$0xff]
    %s1116 = sld [smem:[#allocation2 + $0x93]]
    %v1117 = vstv %s1116
    %v1118 = vmul.f32 %v1114, %v1117
    %v1119 = vmul.f32 %v1115, %v1117
    %v1120 = vadd.f32 %v1099, %v1118
    %v1121 = vadd.f32 %v1100, %v1119
    %s1122 = sld [smem:[#allocation2 + $0x94]]
    %v1123 = vstv %s1122
    %v1124 = vmul.f32 %v1114, %v1123
    %v1125 = vmul.f32 %v1115, %v1123
    %v1126 = vadd.f32 %v1105, %v1124
    %v1127 = vadd.f32 %v1106, %v1125
    %s1128 = sld [smem:[#allocation2 + $0x95]]
    %v1129 = vstv %s1128
    %v1130 = vmul.f32 %v1114, %v1129
    %v1131 = vmul.f32 %v1115, %v1129
    %v1132 = vadd.f32 %v1111, %v1130
    %v1133 = vadd.f32 %v1112, %v1131
    %s1134 = scalar_lea.vmem [#allocation9], 800
    %v1135 = vld [vmem:[%s1134] sm:$0xff]
    %v1136 = vld [vmem:[%s1134 + $0x8] sm:$0xff]
    %s1137 = sld [smem:[#allocation2 + $0x96]]
    %v1138 = vstv %s1137
    %v1139 = vmul.f32 %v1135, %v1138
    %v1140 = vmul.f32 %v1136, %v1138
    %v1141 = vadd.f32 %v1120, %v1139
    %v1142 = vadd.f32 %v1121, %v1140
    %s1143 = sld [smem:[#allocation2 + $0x97]]
    %v1144 = vstv %s1143
    %v1145 = vmul.f32 %v1135, %v1144
    %v1146 = vmul.f32 %v1136, %v1144
    %v1147 = vadd.f32 %v1126, %v1145
    %v1148 = vadd.f32 %v1127, %v1146
    %s1149 = sld [smem:[#allocation2 + $0x98]]
    %v1150 = vstv %s1149
    %v1151 = vmul.f32 %v1135, %v1150
    %v1152 = vmul.f32 %v1136, %v1150
    %v1153 = vadd.f32 %v1132, %v1151
    %v1154 = vadd.f32 %v1133, %v1152
    %s1155 = scalar_lea.vmem [#allocation9], 816
    %v1156 = vld [vmem:[%s1155] sm:$0xff]
    %v1157 = vld [vmem:[%s1155 + $0x8] sm:$0xff]
    %s1158 = sld [smem:[#allocation2 + $0x99]]
    %v1159 = vstv %s1158
    %v1160 = vmul.f32 %v1156, %v1159
    %v1161 = vmul.f32 %v1157, %v1159
    %v1162 = vadd.f32 %v1141, %v1160
    %v1163 = vadd.f32 %v1142, %v1161
    %s1164 = sld [smem:[#allocation2 + $0x9a]]
    %v1165 = vstv %s1164
    %v1166 = vmul.f32 %v1156, %v1165
    %v1167 = vmul.f32 %v1157, %v1165
    %v1168 = vadd.f32 %v1147, %v1166
    %v1169 = vadd.f32 %v1148, %v1167
    %s1170 = sld [smem:[#allocation2 + $0x9b]]
    %v1171 = vstv %s1170
    %v1172 = vmul.f32 %v1156, %v1171
    %v1173 = vmul.f32 %v1157, %v1171
    %v1174 = vadd.f32 %v1153, %v1172
    %v1175 = vadd.f32 %v1154, %v1173
    %s1176 = scalar_lea.vmem [#allocation9], 832
    %v1177 = vld [vmem:[%s1176] sm:$0xff]
    %v1178 = vld [vmem:[%s1176 + $0x8] sm:$0xff]
    %s1179 = sld [smem:[#allocation2 + $0x9c]]
    %v1180 = vstv %s1179
    %v1181 = vmul.f32 %v1177, %v1180
    %v1182 = vmul.f32 %v1178, %v1180
    %v1183 = vadd.f32 %v1162, %v1181
    %v1184 = vadd.f32 %v1163, %v1182
    %s1185 = sld [smem:[#allocation2 + $0x9d]]
    %v1186 = vstv %s1185
    %v1187 = vmul.f32 %v1177, %v1186
    %v1188 = vmul.f32 %v1178, %v1186
    %v1189 = vadd.f32 %v1168, %v1187
    %v1190 = vadd.f32 %v1169, %v1188
    %s1191 = sld [smem:[#allocation2 + $0x9e]]
    %v1192 = vstv %s1191
    %v1193 = vmul.f32 %v1177, %v1192
    %v1194 = vmul.f32 %v1178, %v1192
    %v1195 = vadd.f32 %v1174, %v1193
    %v1196 = vadd.f32 %v1175, %v1194
    %s1197 = scalar_lea.vmem [#allocation9], 848
    %v1198 = vld [vmem:[%s1197] sm:$0xff]
    %v1199 = vld [vmem:[%s1197 + $0x8] sm:$0xff]
    %s1200 = sld [smem:[#allocation2 + $0x9f]]
    %v1201 = vstv %s1200
    %v1202 = vmul.f32 %v1198, %v1201
    %v1203 = vmul.f32 %v1199, %v1201
    %v1204 = vadd.f32 %v1183, %v1202
    %v1205 = vadd.f32 %v1184, %v1203
    %s1206 = sld [smem:[#allocation2 + $0xa0]]
    %v1207 = vstv %s1206
    %v1208 = vmul.f32 %v1198, %v1207
    %v1209 = vmul.f32 %v1199, %v1207
    %v1210 = vadd.f32 %v1189, %v1208
    %v1211 = vadd.f32 %v1190, %v1209
    %s1212 = sld [smem:[#allocation2 + $0xa1]]
    %v1213 = vstv %s1212
    %v1214 = vmul.f32 %v1198, %v1213
    %v1215 = vmul.f32 %v1199, %v1213
    %v1216 = vadd.f32 %v1195, %v1214
    %v1217 = vadd.f32 %v1196, %v1215
    %s1218 = scalar_lea.vmem [#allocation9], 864
    %v1219 = vld [vmem:[%s1218] sm:$0xff]
    %v1220 = vld [vmem:[%s1218 + $0x8] sm:$0xff]
    %s1221 = sld [smem:[#allocation2 + $0xa2]]
    %v1222 = vstv %s1221
    %v1223 = vmul.f32 %v1219, %v1222
    %v1224 = vmul.f32 %v1220, %v1222
    %v1225 = vadd.f32 %v1204, %v1223
    %v1226 = vadd.f32 %v1205, %v1224
    %s1227 = sld [smem:[#allocation2 + $0xa3]]
    %v1228 = vstv %s1227
    %v1229 = vmul.f32 %v1219, %v1228
    %v1230 = vmul.f32 %v1220, %v1228
    %v1231 = vadd.f32 %v1210, %v1229
    %v1232 = vadd.f32 %v1211, %v1230
    %s1233 = sld [smem:[#allocation2 + $0xa4]]
    %v1234 = vstv %s1233
    %v1235 = vmul.f32 %v1219, %v1234
    %v1236 = vmul.f32 %v1220, %v1234
    %v1237 = vadd.f32 %v1216, %v1235
    %v1238 = vadd.f32 %v1217, %v1236
    %s1239 = scalar_lea.vmem [#allocation9], 880
    %v1240 = vld [vmem:[%s1239] sm:$0xff]
    %v1241 = vld [vmem:[%s1239 + $0x8] sm:$0xff]
    %s1242 = sld [smem:[#allocation2 + $0xa5]]
    %v1243 = vstv %s1242
    %v1244 = vmul.f32 %v1240, %v1243
    %v1245 = vmul.f32 %v1241, %v1243
    %v1246 = vadd.f32 %v1225, %v1244
    %v1247 = vadd.f32 %v1226, %v1245
    %s1248 = sld [smem:[#allocation2 + $0xa6]]
    %v1249 = vstv %s1248
    %v1250 = vmul.f32 %v1240, %v1249
    %v1251 = vmul.f32 %v1241, %v1249
    %v1252 = vadd.f32 %v1231, %v1250
    %v1253 = vadd.f32 %v1232, %v1251
    %s1254 = sld [smem:[#allocation2 + $0xa7]]
    %v1255 = vstv %s1254
    %v1256 = vmul.f32 %v1240, %v1255
    %v1257 = vmul.f32 %v1241, %v1255
    %v1258 = vadd.f32 %v1237, %v1256
    %v1259 = vadd.f32 %v1238, %v1257
    %s1260 = scalar_lea.vmem [#allocation9], 896
    %v1261 = vld [vmem:[%s1260] sm:$0xff]
    %v1262 = vld [vmem:[%s1260 + $0x8] sm:$0xff]
    %s1263 = sld [smem:[#allocation2 + $0xa8]]
    %v1264 = vstv %s1263
    %v1265 = vmul.f32 %v1261, %v1264
    %v1266 = vmul.f32 %v1262, %v1264
    %v1267 = vadd.f32 %v1246, %v1265
    %v1268 = vadd.f32 %v1247, %v1266
    %s1269 = sld [smem:[#allocation2 + $0xa9]]
    %v1270 = vstv %s1269
    %v1271 = vmul.f32 %v1261, %v1270
    %v1272 = vmul.f32 %v1262, %v1270
    %v1273 = vadd.f32 %v1252, %v1271
    %v1274 = vadd.f32 %v1253, %v1272
    %s1275 = sld [smem:[#allocation2 + $0xaa]]
    %v1276 = vstv %s1275
    %v1277 = vmul.f32 %v1261, %v1276
    %v1278 = vmul.f32 %v1262, %v1276
    %v1279 = vadd.f32 %v1258, %v1277
    %v1280 = vadd.f32 %v1259, %v1278
    %s1281 = scalar_lea.vmem [#allocation9], 912
    %v1282 = vld [vmem:[%s1281] sm:$0xff]
    %v1283 = vld [vmem:[%s1281 + $0x8] sm:$0xff]
    %s1284 = sld [smem:[#allocation2 + $0xab]]
    %v1285 = vstv %s1284
    %v1286 = vmul.f32 %v1282, %v1285
    %v1287 = vmul.f32 %v1283, %v1285
    %v1288 = vadd.f32 %v1267, %v1286
    %v1289 = vadd.f32 %v1268, %v1287
    %s1290 = sld [smem:[#allocation2 + $0xac]]
    %v1291 = vstv %s1290
    %v1292 = vmul.f32 %v1282, %v1291
    %v1293 = vmul.f32 %v1283, %v1291
    %v1294 = vadd.f32 %v1273, %v1292
    %v1295 = vadd.f32 %v1274, %v1293
    %s1296 = sld [smem:[#allocation2 + $0xad]]
    %v1297 = vstv %s1296
    %v1298 = vmul.f32 %v1282, %v1297
    %v1299 = vmul.f32 %v1283, %v1297
    %v1300 = vadd.f32 %v1279, %v1298
    %v1301 = vadd.f32 %v1280, %v1299
    %s1302 = scalar_lea.vmem [#allocation9], 928
    %v1303 = vld [vmem:[%s1302] sm:$0xff]
    %v1304 = vld [vmem:[%s1302 + $0x8] sm:$0xff]
    %s1305 = sld [smem:[#allocation2 + $0xae]]
    %v1306 = vstv %s1305
    %v1307 = vmul.f32 %v1303, %v1306
    %v1308 = vmul.f32 %v1304, %v1306
    %v1309 = vadd.f32 %v1288, %v1307
    %v1310 = vadd.f32 %v1289, %v1308
    %s1311 = sld [smem:[#allocation2 + $0xaf]]
    %v1312 = vstv %s1311
    %v1313 = vmul.f32 %v1303, %v1312
    %v1314 = vmul.f32 %v1304, %v1312
    %v1315 = vadd.f32 %v1294, %v1313
    %v1316 = vadd.f32 %v1295, %v1314
    %s1317 = sld [smem:[#allocation2 + $0xb0]]
    %v1318 = vstv %s1317
    %v1319 = vmul.f32 %v1303, %v1318
    %v1320 = vmul.f32 %v1304, %v1318
    %v1321 = vadd.f32 %v1300, %v1319
    %v1322 = vadd.f32 %v1301, %v1320
    %s1323 = scalar_lea.vmem [#allocation9], 944
    %v1324 = vld [vmem:[%s1323] sm:$0xff]
    %v1325 = vld [vmem:[%s1323 + $0x8] sm:$0xff]
    %s1326 = sld [smem:[#allocation2 + $0xb1]]
    %v1327 = vstv %s1326
    %v1328 = vmul.f32 %v1324, %v1327
    %v1329 = vmul.f32 %v1325, %v1327
    %v1330 = vadd.f32 %v1309, %v1328
    %v1331 = vadd.f32 %v1310, %v1329
    %s1332 = sld [smem:[#allocation2 + $0xb2]]
    %v1333 = vstv %s1332
    %v1334 = vmul.f32 %v1324, %v1333
    %v1335 = vmul.f32 %v1325, %v1333
    %v1336 = vadd.f32 %v1315, %v1334
    %v1337 = vadd.f32 %v1316, %v1335
    %s1338 = sld [smem:[#allocation2 + $0xb3]]
    %v1339 = vstv %s1338
    %v1340 = vmul.f32 %v1324, %v1339
    %v1341 = vmul.f32 %v1325, %v1339
    %v1342 = vadd.f32 %v1321, %v1340
    %v1343 = vadd.f32 %v1322, %v1341
    %s1344 = scalar_lea.vmem [#allocation9], 960
    %v1345 = vld [vmem:[%s1344] sm:$0xff]
    %v1346 = vld [vmem:[%s1344 + $0x8] sm:$0xff]
    %s1347 = sld [smem:[#allocation2 + $0xb4]]
    %v1348 = vstv %s1347
    %v1349 = vmul.f32 %v1345, %v1348
    %v1350 = vmul.f32 %v1346, %v1348
    %v1351 = vadd.f32 %v1330, %v1349
    %v1352 = vadd.f32 %v1331, %v1350
    %s1353 = sld [smem:[#allocation2 + $0xb5]]
    %v1354 = vstv %s1353
    %v1355 = vmul.f32 %v1345, %v1354
    %v1356 = vmul.f32 %v1346, %v1354
    %v1357 = vadd.f32 %v1336, %v1355
    %v1358 = vadd.f32 %v1337, %v1356
    %s1359 = sld [smem:[#allocation2 + $0xb6]]
    %v1360 = vstv %s1359
    %v1361 = vmul.f32 %v1345, %v1360
    %v1362 = vmul.f32 %v1346, %v1360
    %v1363 = vadd.f32 %v1342, %v1361
    %v1364 = vadd.f32 %v1343, %v1362
    %s1365 = scalar_lea.vmem [#allocation9], 976
    %v1366 = vld [vmem:[%s1365] sm:$0xff]
    %v1367 = vld [vmem:[%s1365 + $0x8] sm:$0xff]
    %s1368 = sld [smem:[#allocation2 + $0xb7]]
    %v1369 = vstv %s1368
    %v1370 = vmul.f32 %v1366, %v1369
    %v1371 = vmul.f32 %v1367, %v1369
    %v1372 = vadd.f32 %v1351, %v1370
    %v1373 = vadd.f32 %v1352, %v1371
    %s1374 = sld [smem:[#allocation2 + $0xb8]]
    %v1375 = vstv %s1374
    %v1376 = vmul.f32 %v1366, %v1375
    %v1377 = vmul.f32 %v1367, %v1375
    %v1378 = vadd.f32 %v1357, %v1376
    %v1379 = vadd.f32 %v1358, %v1377
    %s1380 = sld [smem:[#allocation2 + $0xb9]]
    %v1381 = vstv %s1380
    %v1382 = vmul.f32 %v1366, %v1381
    %v1383 = vmul.f32 %v1367, %v1381
    %v1384 = vadd.f32 %v1363, %v1382
    %v1385 = vadd.f32 %v1364, %v1383
    %s1386 = scalar_lea.vmem [#allocation9], 992
    %v1387 = vld [vmem:[%s1386] sm:$0xff]
    %v1388 = vld [vmem:[%s1386 + $0x8] sm:$0xff]
    %s1389 = sld [smem:[#allocation2 + $0xba]]
    %v1390 = vstv %s1389
    %v1391 = vmul.f32 %v1387, %v1390
    %v1392 = vmul.f32 %v1388, %v1390
    %v1393 = vadd.f32 %v1372, %v1391
    %v1394 = vadd.f32 %v1373, %v1392
    %s1395 = sld [smem:[#allocation2 + $0xbb]]
    %v1396 = vstv %s1395
    %v1397 = vmul.f32 %v1387, %v1396
    %v1398 = vmul.f32 %v1388, %v1396
    %v1399 = vadd.f32 %v1378, %v1397
    %v1400 = vadd.f32 %v1379, %v1398
    %s1401 = sld [smem:[#allocation2 + $0xbc]]
    %v1402 = vstv %s1401
    %v1403 = vmul.f32 %v1387, %v1402
    %v1404 = vmul.f32 %v1388, %v1402
    %v1405 = vadd.f32 %v1384, %v1403
    %v1406 = vadd.f32 %v1385, %v1404
    %s1407 = scalar_lea.vmem [#allocation9], 1008
    %v1408 = vld [vmem:[%s1407] sm:$0xff]
    %v1409 = vld [vmem:[%s1407 + $0x8] sm:$0xff]
    %s1410 = sld [smem:[#allocation2 + $0xbd]]
    %v1411 = vstv %s1410
    %v1412 = vmul.f32 %v1408, %v1411
    %v1413 = vmul.f32 %v1409, %v1411
    %v1414 = vadd.f32 %v1393, %v1412
    %v1415 = vadd.f32 %v1394, %v1413
    %s1416 = sld [smem:[#allocation2 + $0xbe]]
    %v1417 = vstv %s1416
    %v1418 = vmul.f32 %v1408, %v1417
    %v1419 = vmul.f32 %v1409, %v1417
    %v1420 = vadd.f32 %v1399, %v1418
    %v1421 = vadd.f32 %v1400, %v1419
    %s1422 = sld [smem:[#allocation2 + $0xbf]]
    %v1423 = vstv %s1422
    %v1424 = vmul.f32 %v1408, %v1423
    %v1425 = vmul.f32 %v1409, %v1423
    %v1426 = vadd.f32 %v1405, %v1424
    %v1427 = vadd.f32 %v1406, %v1425
    %s1428 = sld [smem:[#allocation7]]
    %v1429 = vstv %s1428
    %v1430 = vadd.f32 %v1414, %v1429
    %v1431 = vadd.f32 %v1415, %v1429
    %v1432 = vmax.f32 %v1430, 0.0
    %v1433 = vmax.f32 %v1431, 0.0
    %v1434 = vand.u32 2147483647, %v1430
    %v1435 = vand.u32 2147483647, %v1431
    %v1436 = vsub.f32 0.0, %v1434
    %v1437 = vsub.f32 0.0, %v1435
    %v1438 = vmul.f32 %v1436, 1.442695
    %v1439 = vpow.pop %v1438
    %v1440 = vmul.f32 %v1437, 1.442695
    %v1441 = vpow.pop %v1440
    %v1442 = vadd.f32 %v1439, 1.0
    %v1443 = vadd.f32 %v1441, 1.0
    %v1444 = vlog2.pop %v1442
    %v1445 = vmul.f32 %v1444, 0.6931472
    %v1446 = vlog2.pop %v1443
    %v1447 = vmul.f32 %v1446, 0.6931472
    %v1448 = vadd.f32 %v1432, %v1445
    %v1449 = vadd.f32 %v1433, %v1447
    %s1450 = sld [smem:[#allocation7 + $0x1]]
    %v1451 = vstv %s1450
    %v1452 = vadd.f32 %v1420, %v1451
    %v1453 = vadd.f32 %v1421, %v1451
    %v1454 = vmax.f32 %v1452, 0.0
    %v1455 = vmax.f32 %v1453, 0.0
    %v1456 = vand.u32 2147483647, %v1452
    %v1457 = vand.u32 2147483647, %v1453
    %v1458 = vsub.f32 0.0, %v1456
    %v1459 = vsub.f32 0.0, %v1457
    %v1460 = vmul.f32 %v1458, 1.442695
    %v1461 = vpow.pop %v1460
    %v1462 = vmul.f32 %v1459, 1.442695
    %v1463 = vpow.pop %v1462
    %v1464 = vadd.f32 %v1461, 1.0
    %v1465 = vadd.f32 %v1463, 1.0
    %v1466 = vlog2.pop %v1464
    %v1467 = vmul.f32 %v1466, 0.6931472
    %v1468 = vlog2.pop %v1465
    %v1469 = vmul.f32 %v1468, 0.6931472
    %v1470 = vadd.f32 %v1454, %v1467
    %v1471 = vadd.f32 %v1455, %v1469
    %s1472 = sld [smem:[#allocation7 + $0x2]]
    %v1473 = vstv %s1472
    %v1474 = vadd.f32 %v1426, %v1473
    %v1475 = vadd.f32 %v1427, %v1473
    %v1476 = vmax.f32 %v1474, 0.0
    %v1477 = vmax.f32 %v1475, 0.0
    %v1478 = vand.u32 2147483647, %v1474
    %v1479 = vand.u32 2147483647, %v1475
    %v1480 = vsub.f32 0.0, %v1478
    %v1481 = vsub.f32 0.0, %v1479
    %v1482 = vmul.f32 %v1480, 1.442695
    %v1483 = vpow.pop %v1482
    %v1484 = vmul.f32 %v1481, 1.442695
    %v1485 = vpow.pop %v1484
    %v1486 = vadd.f32 %v1483, 1.0
    %v1487 = vadd.f32 %v1485, 1.0
    %v1488 = vlog2.pop %v1486
    %v1489 = vmul.f32 %v1488, 0.6931472
    %v1490 = vlog2.pop %v1487
    %v1491 = vmul.f32 %v1490, 0.6931472
    %v1492 = vadd.f32 %v1476, %v1489
    %v1493 = vadd.f32 %v1477, %v1491
    %v1494 = vld [vmem:[#allocation11] sm:$0xff]
    %v1495 = vld [vmem:[#allocation11 + $0x8] sm:$0xff]
    %v1496 = vmul.f32 %v1494, 0.14818475
    %v1497 = vmul.f32 %v1495, 0.14818475
    %v1498 = vrsqrt.pop %v1448
    %v1499 = vmul.f32 %v1448, %v1498
    %vm1500 = vcmp.eq.f32.partialorder %v1448, inf
    %v1501 = vsel %vm1500, %v1448, %v1499
    %vm1502 = vcmp.eq.f32.partialorder %v1448, 0.0
    %v1503 = vand.u32 %v1448, 2147483648
    %v1504 = vsel %vm1502, %v1503, %v1501
    %v1505 = vrsqrt.pop %v1449
    %v1506 = vmul.f32 %v1449, %v1505
    %vm1507 = vcmp.eq.f32.partialorder %v1449, inf
    %v1508 = vsel %vm1507, %v1449, %v1506
    %vm1509 = vcmp.eq.f32.partialorder %v1449, 0.0
    %v1510 = vand.u32 %v1449, 2147483648
    %v1511 = vsel %vm1509, %v1510, %v1508
    %v1512 = vmul.f32 %v1496, %v1504
    %v1513 = vmul.f32 %v1497, %v1511
    %v1514 = vmul.f32 %v1494, 0.078416
    %v1515 = vmul.f32 %v1495, 0.078416
    %v1516 = vrsqrt.pop %v1470
    %v1517 = vmul.f32 %v1470, %v1516
    %vm1518 = vcmp.eq.f32.partialorder %v1470, inf
    %v1519 = vsel %vm1518, %v1470, %v1517
    %vm1520 = vcmp.eq.f32.partialorder %v1470, 0.0
    %v1521 = vand.u32 %v1470, 2147483648
    %v1522 = vsel %vm1520, %v1521, %v1519
    %v1523 = vrsqrt.pop %v1471
    %v1524 = vmul.f32 %v1471, %v1523
    %vm1525 = vcmp.eq.f32.partialorder %v1471, inf
    %v1526 = vsel %vm1525, %v1471, %v1524
    %vm1527 = vcmp.eq.f32.partialorder %v1471, 0.0
    %v1528 = vand.u32 %v1471, 2147483648
    %v1529 = vsel %vm1527, %v1528, %v1526
    %v1530 = vmul.f32 %v1514, %v1522
    %v1531 = vmul.f32 %v1515, %v1529
    %v1532 = vmul.f32 %v1494, 0.04149596
    %v1533 = vmul.f32 %v1495, 0.04149596
    %v1534 = vrsqrt.pop %v1492
    %v1535 = vmul.f32 %v1492, %v1534
    %vm1536 = vcmp.eq.f32.partialorder %v1492, inf
    %v1537 = vsel %vm1536, %v1492, %v1535
    %vm1538 = vcmp.eq.f32.partialorder %v1492, 0.0
    %v1539 = vand.u32 %v1492, 2147483648
    %v1540 = vsel %vm1538, %v1539, %v1537
    %v1541 = vrsqrt.pop %v1493
    %v1542 = vmul.f32 %v1493, %v1541
    %vm1543 = vcmp.eq.f32.partialorder %v1493, inf
    %v1544 = vsel %vm1543, %v1493, %v1542
    %vm1545 = vcmp.eq.f32.partialorder %v1493, 0.0
    %v1546 = vand.u32 %v1493, 2147483648
    %v1547 = vsel %vm1545, %v1546, %v1544
    %v1548 = vmul.f32 %v1532, %v1540
    %v1549 = vmul.f32 %v1533, %v1547
    %v1550 = vrcp.pop %v1448
    %v1551 = vmul.f32 1.0, %v1550
    %v1552 = vrcp.pop %v1449
    %v1553 = vmul.f32 1.0, %v1552
    %v1554 = vmul.f32 %v1470, %v1551
    %v1555 = vmul.f32 %v1471, %v1553
    %v1556 = vrsqrt.pop %v1554
    %v1557 = vmul.f32 %v1554, %v1556
    %vm1558 = vcmp.eq.f32.partialorder %v1554, inf
    %v1559 = vsel %vm1558, %v1554, %v1557
    %vm1560 = vcmp.eq.f32.partialorder %v1554, 0.0
    %v1561 = vand.u32 %v1554, 2147483648
    %v1562 = vsel %vm1560, %v1561, %v1559
    %v1563 = vrsqrt.pop %v1555
    %v1564 = vmul.f32 %v1555, %v1563
    %vm1565 = vcmp.eq.f32.partialorder %v1555, inf
    %v1566 = vsel %vm1565, %v1555, %v1564
    %vm1567 = vcmp.eq.f32.partialorder %v1555, 0.0
    %v1568 = vand.u32 %v1555, 2147483648
    %v1569 = vsel %vm1567, %v1568, %v1566
    %v1570 = vrsqrt.pop %v1562
    %v1571 = vmul.f32 %v1562, %v1570
    %vm1572 = vcmp.eq.f32.partialorder %v1562, inf
    %v1573 = vsel %vm1572, %v1562, %v1571
    %vm1574 = vcmp.eq.f32.partialorder %v1562, 0.0
    %v1575 = vand.u32 %v1562, 2147483648
    %v1576 = vsel %vm1574, %v1575, %v1573
    %v1577 = vrsqrt.pop %v1569
    %v1578 = vmul.f32 %v1569, %v1577
    %vm1579 = vcmp.eq.f32.partialorder %v1569, inf
    %v1580 = vsel %vm1579, %v1569, %v1578
    %vm1581 = vcmp.eq.f32.partialorder %v1569, 0.0
    %v1582 = vand.u32 %v1569, 2147483648
    %v1583 = vsel %vm1581, %v1582, %v1580
    %v1584 = vmul.f32 %v1576, 0.38263
    %v1585 = vmul.f32 %v1583, 0.38263
    %v1586 = vmul.f32 %v1492, %v1551
    %v1587 = vmul.f32 %v1493, %v1553
    %v1588 = vrsqrt.pop %v1586
    %v1589 = vmul.f32 %v1586, %v1588
    %vm1590 = vcmp.eq.f32.partialorder %v1586, inf
    %v1591 = vsel %vm1590, %v1586, %v1589
    %vm1592 = vcmp.eq.f32.partialorder %v1586, 0.0
    %v1593 = vand.u32 %v1586, 2147483648
    %v1594 = vsel %vm1592, %v1593, %v1591
    %v1595 = vrsqrt.pop %v1587
    %v1596 = vmul.f32 %v1587, %v1595
    %vm1597 = vcmp.eq.f32.partialorder %v1587, inf
    %v1598 = vsel %vm1597, %v1587, %v1596
    %vm1599 = vcmp.eq.f32.partialorder %v1587, 0.0
    %v1600 = vand.u32 %v1587, 2147483648
    %v1601 = vsel %vm1599, %v1600, %v1598
    %v1602 = vrsqrt.pop %v1594
    %v1603 = vmul.f32 %v1594, %v1602
    %vm1604 = vcmp.eq.f32.partialorder %v1594, inf
    %v1605 = vsel %vm1604, %v1594, %v1603
    %vm1606 = vcmp.eq.f32.partialorder %v1594, 0.0
    %v1607 = vand.u32 %v1594, 2147483648
    %v1608 = vsel %vm1606, %v1607, %v1605
    %v1609 = vrsqrt.pop %v1601
    %v1610 = vmul.f32 %v1601, %v1609
    %vm1611 = vcmp.eq.f32.partialorder %v1601, inf
    %v1612 = vsel %vm1611, %v1601, %v1610
    %vm1613 = vcmp.eq.f32.partialorder %v1601, 0.0
    %v1614 = vand.u32 %v1601, 2147483648
    %v1615 = vsel %vm1613, %v1614, %v1612
    %v1616 = vrsqrt.pop %v1608
    %v1617 = vmul.f32 %v1608, %v1616
    %vm1618 = vcmp.eq.f32.partialorder %v1608, inf
    %v1619 = vsel %vm1618, %v1608, %v1617
    %vm1620 = vcmp.eq.f32.partialorder %v1608, 0.0
    %v1621 = vand.u32 %v1608, 2147483648
    %v1622 = vsel %vm1620, %v1621, %v1619
    %v1623 = vrsqrt.pop %v1615
    %v1624 = vmul.f32 %v1615, %v1623
    %vm1625 = vcmp.eq.f32.partialorder %v1615, inf
    %v1626 = vsel %vm1625, %v1615, %v1624
    %vm1627 = vcmp.eq.f32.partialorder %v1615, 0.0
    %v1628 = vand.u32 %v1615, 2147483648
    %v1629 = vsel %vm1627, %v1628, %v1626
    %v1630 = vmul.f32 %v1622, 0.38263
    %v1631 = vmul.f32 %v1629, 0.38263
    %v1632 = vrcp.pop %v1470
    %v1633 = vmul.f32 %v1492, %v1632
    %v1634 = vrcp.pop %v1471
    %v1635 = vmul.f32 %v1493, %v1634
    %v1636 = vrsqrt.pop %v1633
    %v1637 = vmul.f32 %v1633, %v1636
    %vm1638 = vcmp.eq.f32.partialorder %v1633, inf
    %v1639 = vsel %vm1638, %v1633, %v1637
    %vm1640 = vcmp.eq.f32.partialorder %v1633, 0.0
    %v1641 = vand.u32 %v1633, 2147483648
    %v1642 = vsel %vm1640, %v1641, %v1639
    %v1643 = vrsqrt.pop %v1635
    %v1644 = vmul.f32 %v1635, %v1643
    %vm1645 = vcmp.eq.f32.partialorder %v1635, inf
    %v1646 = vsel %vm1645, %v1635, %v1644
    %vm1647 = vcmp.eq.f32.partialorder %v1635, 0.0
    %v1648 = vand.u32 %v1635, 2147483648
    %v1649 = vsel %vm1647, %v1648, %v1646
    %v1650 = vrsqrt.pop %v1642
    %v1651 = vmul.f32 %v1642, %v1650
    %vm1652 = vcmp.eq.f32.partialorder %v1642, inf
    %v1653 = vsel %vm1652, %v1642, %v1651
    %vm1654 = vcmp.eq.f32.partialorder %v1642, 0.0
    %v1655 = vand.u32 %v1642, 2147483648
    %v1656 = vsel %vm1654, %v1655, %v1653
    %v1657 = vrsqrt.pop %v1649
    %v1658 = vmul.f32 %v1649, %v1657
    %vm1659 = vcmp.eq.f32.partialorder %v1649, inf
    %v1660 = vsel %vm1659, %v1649, %v1658
    %vm1661 = vcmp.eq.f32.partialorder %v1649, 0.0
    %v1662 = vand.u32 %v1649, 2147483648
    %v1663 = vsel %vm1661, %v1662, %v1660
    %v1664 = vmul.f32 %v1656, 0.38263
    %v1665 = vmul.f32 %v1663, 0.38263
    %v1666 = vld [vmem:[#allocation8] sm:$0xff]
    %v1667 = vld [vmem:[#allocation8 + $0x8] sm:$0xff]
    %s1668 = scalar_lea.vmem [#allocation8], 16
    %v1669 = vld [vmem:[%s1668] sm:$0xff]
    %v1670 = vld [vmem:[%s1668 + $0x8] sm:$0xff]
    %s1671 = scalar_lea.vmem [#allocation8], 32
    %v1672 = vld [vmem:[%s1671] sm:$0xff]
    %v1673 = vld [vmem:[%s1671 + $0x8] sm:$0xff]
    %v1676 = vcombine.high %v1666, %v1666
    %v1678 = vunpack.c.l.s4 1966171168
    %v1679 = vunpack.c.0.s8 %v1678
    %v1680 = vlaneseq
    %v1681 = vshrl.u32 %v1680, 7
    %v1682 = vsub.s32 %v1679, %v1681
    %v1683 = vrot.slane %v1666, %v1682
    %v1685 = vunpack.c.l.s4 1966171168
    %v1686 = vunpack.c.0.s8 %v1685
    %v1687 = vlaneseq
    %v1688 = vshrl.u32 %v1687, 7
    %v1689 = vsub.s32 %v1686, %v1688
    %v1690 = vrot.slane %v1676, %v1689
    %v1691 = vcombine.high %v1683, %v1683
    %v1692 = vcombine.high %v1690, %v1690
    %v1694 = vunpack.c.l.s4 1966171168
    %v1695 = vunpack.c.0.s8 %v1694
    %v1696 = vlaneseq
    %v1697 = vshrl.u32 %v1696, 7
    %v1698 = vsub.s32 %v1695, %v1697
    %v1699 = vrot.slane %v1683, %v1698
    %v1701 = vunpack.c.l.s4 1966171168
    %v1702 = vunpack.c.0.s8 %v1701
    %v1703 = vlaneseq
    %v1704 = vshrl.u32 %v1703, 7
    %v1705 = vsub.s32 %v1702, %v1704
    %v1706 = vrot.slane %v1690, %v1705
    %v1708 = vunpack.c.l.s4 1966171168
    %v1709 = vunpack.c.0.s8 %v1708
    %v1710 = vlaneseq
    %v1711 = vshrl.u32 %v1710, 7
    %v1712 = vsub.s32 %v1709, %v1711
    %v1713 = vrot.slane %v1691, %v1712
    %v1715 = vunpack.c.l.s4 1966171168
    %v1716 = vunpack.c.0.s8 %v1715
    %v1717 = vlaneseq
    %v1718 = vshrl.u32 %v1717, 7
    %v1719 = vsub.s32 %v1716, %v1718
    %v1720 = vrot.slane %v1692, %v1719
    %v1721 = vcombine.high %v1699, %v1699
    %v1722 = vcombine.high %v1706, %v1706
    %v1723 = vcombine.high %v1713, %v1713
    %v1724 = vcombine.high %v1720, %v1720
    %v1725 = vcombine.high %v1667, %v1667
    %v1727 = vunpack.c.l.s4 1966171168
    %v1728 = vunpack.c.0.s8 %v1727
    %v1729 = vlaneseq
    %v1730 = vshrl.u32 %v1729, 7
    %v1731 = vsub.s32 %v1728, %v1730
    %v1732 = vrot.slane %v1667, %v1731
    %v1734 = vunpack.c.l.s4 1966171168
    %v1735 = vunpack.c.0.s8 %v1734
    %v1736 = vlaneseq
    %v1737 = vshrl.u32 %v1736, 7
    %v1738 = vsub.s32 %v1735, %v1737
    %v1739 = vrot.slane %v1725, %v1738
    %v1740 = vcombine.high %v1732, %v1732
    %v1741 = vcombine.high %v1739, %v1739
    %v1743 = vunpack.c.l.s4 1966171168
    %v1744 = vunpack.c.0.s8 %v1743
    %v1745 = vlaneseq
    %v1746 = vshrl.u32 %v1745, 7
    %v1747 = vsub.s32 %v1744, %v1746
    %v1748 = vrot.slane %v1732, %v1747
    %v1750 = vunpack.c.l.s4 1966171168
    %v1751 = vunpack.c.0.s8 %v1750
    %v1752 = vlaneseq
    %v1753 = vshrl.u32 %v1752, 7
    %v1754 = vsub.s32 %v1751, %v1753
    %v1755 = vrot.slane %v1739, %v1754
    %v1757 = vunpack.c.l.s4 1966171168
    %v1758 = vunpack.c.0.s8 %v1757
    %v1759 = vlaneseq
    %v1760 = vshrl.u32 %v1759, 7
    %v1761 = vsub.s32 %v1758, %v1760
    %v1762 = vrot.slane %v1740, %v1761
    %v1764 = vunpack.c.l.s4 1966171168
    %v1765 = vunpack.c.0.s8 %v1764
    %v1766 = vlaneseq
    %v1767 = vshrl.u32 %v1766, 7
    %v1768 = vsub.s32 %v1765, %v1767
    %v1769 = vrot.slane %v1741, %v1768
    %v1770 = vcombine.high %v1748, %v1748
    %v1771 = vcombine.high %v1755, %v1755
    %v1772 = vcombine.high %v1762, %v1762
    %v1773 = vcombine.high %v1769, %v1769
    %v1774 = vlaneseq
    %v1775 = vshrl.u32 %v1774, 7
    %v1776 = vsub.s32 0, %v1775
    %v1777 = vrot.slane %v1699, %v1776
    %v1778 = vlaneseq
    %v1779 = vshrl.u32 %v1778, 7
    %v1780 = vsub.s32 0, %v1779
    %v1781 = vrot.slane %v1713, %v1780
    %v1782 = vlaneseq
    %v1783 = vshrl.u32 %v1782, 7
    %v1784 = vsub.s32 0, %v1783
    %v1785 = vrot.slane %v1721, %v1784
    %v1786 = vlaneseq
    %v1787 = vshrl.u32 %v1786, 7
    %v1788 = vsub.s32 0, %v1787
    %v1789 = vrot.slane %v1723, %v1788
    %v1790 = vlaneseq
    %v1791 = vshrl.u32 %v1790, 7
    %v1792 = vsub.s32 0, %v1791
    %v1793 = vrot.slane %v1706, %v1792
    %v1794 = vlaneseq
    %v1795 = vshrl.u32 %v1794, 7
    %v1796 = vsub.s32 0, %v1795
    %v1797 = vrot.slane %v1720, %v1796
    %v1798 = vlaneseq
    %v1799 = vshrl.u32 %v1798, 7
    %v1800 = vsub.s32 0, %v1799
    %v1801 = vrot.slane %v1722, %v1800
    %v1802 = vlaneseq
    %v1803 = vshrl.u32 %v1802, 7
    %v1804 = vsub.s32 0, %v1803
    %v1805 = vrot.slane %v1724, %v1804
    %v1806 = vlaneseq
    %v1807 = vshrl.u32 %v1806, 7
    %v1808 = vsub.s32 0, %v1807
    %v1809 = vrot.slane %v1748, %v1808
    %v1810 = vlaneseq
    %v1811 = vshrl.u32 %v1810, 7
    %v1812 = vsub.s32 0, %v1811
    %v1813 = vrot.slane %v1762, %v1812
    %v1814 = vlaneseq
    %v1815 = vshrl.u32 %v1814, 7
    %v1816 = vsub.s32 0, %v1815
    %v1817 = vrot.slane %v1770, %v1816
    %v1818 = vlaneseq
    %v1819 = vshrl.u32 %v1818, 7
    %v1820 = vsub.s32 0, %v1819
    %v1821 = vrot.slane %v1772, %v1820
    %v1822 = vlaneseq
    %v1823 = vshrl.u32 %v1822, 7
    %v1824 = vsub.s32 0, %v1823
    %v1825 = vrot.slane %v1755, %v1824
    %v1826 = vlaneseq
    %v1827 = vshrl.u32 %v1826, 7
    %v1828 = vsub.s32 0, %v1827
    %v1829 = vrot.slane %v1769, %v1828
    %v1830 = vlaneseq
    %v1831 = vshrl.u32 %v1830, 7
    %v1832 = vsub.s32 0, %v1831
    %v1833 = vrot.slane %v1771, %v1832
    %v1834 = vlaneseq
    %v1835 = vshrl.u32 %v1834, 7
    %v1836 = vsub.s32 0, %v1835
    %v1837 = vrot.slane %v1773, %v1836
    %v1854 = vsub.f32 %v1777, %v1666
    %v1855 = vsub.f32 %v1777, %v1667
    %v1856 = vsub.f32 %v1781, %v1666
    %v1857 = vsub.f32 %v1781, %v1667
    %v1858 = vsub.f32 %v1785, %v1666
    %v1859 = vsub.f32 %v1785, %v1667
    %v1860 = vsub.f32 %v1789, %v1666
    %v1861 = vsub.f32 %v1789, %v1667
    %v1862 = vsub.f32 %v1793, %v1666
    %v1863 = vsub.f32 %v1793, %v1667
    %v1864 = vsub.f32 %v1797, %v1666
    %v1865 = vsub.f32 %v1797, %v1667
    %v1866 = vsub.f32 %v1801, %v1666
    %v1867 = vsub.f32 %v1801, %v1667
    %v1868 = vsub.f32 %v1805, %v1666
    %v1869 = vsub.f32 %v1805, %v1667
    %v1870 = vsub.f32 %v1809, %v1666
    %v1871 = vsub.f32 %v1809, %v1667
    %v1872 = vsub.f32 %v1813, %v1666
    %v1873 = vsub.f32 %v1813, %v1667
    %v1874 = vsub.f32 %v1817, %v1666
    %v1875 = vsub.f32 %v1817, %v1667
    %v1876 = vsub.f32 %v1821, %v1666
    %v1877 = vsub.f32 %v1821, %v1667
    %v1878 = vsub.f32 %v1825, %v1666
    %v1879 = vsub.f32 %v1825, %v1667
    %v1880 = vsub.f32 %v1829, %v1666
    %v1881 = vsub.f32 %v1829, %v1667
    %v1882 = vsub.f32 %v1833, %v1666
    %v1883 = vsub.f32 %v1833, %v1667
    %v1884 = vsub.f32 %v1837, %v1666
    %v1885 = vsub.f32 %v1837, %v1667
    %v1888 = vcombine.high %v1669, %v1669
    %v1890 = vunpack.c.l.s4 1966171168
    %v1891 = vunpack.c.0.s8 %v1890
    %v1892 = vlaneseq
    %v1893 = vshrl.u32 %v1892, 7
    %v1894 = vsub.s32 %v1891, %v1893
    %v1895 = vrot.slane %v1669, %v1894
    %v1897 = vunpack.c.l.s4 1966171168
    %v1898 = vunpack.c.0.s8 %v1897
    %v1899 = vlaneseq
    %v1900 = vshrl.u32 %v1899, 7
    %v1901 = vsub.s32 %v1898, %v1900
    %v1902 = vrot.slane %v1888, %v1901
    %v1903 = vcombine.high %v1895, %v1895
    %v1904 = vcombine.high %v1902, %v1902
    %v1906 = vunpack.c.l.s4 1966171168
    %v1907 = vunpack.c.0.s8 %v1906
    %v1908 = vlaneseq
    %v1909 = vshrl.u32 %v1908, 7
    %v1910 = vsub.s32 %v1907, %v1909
    %v1911 = vrot.slane %v1895, %v1910
    %v1913 = vunpack.c.l.s4 1966171168
    %v1914 = vunpack.c.0.s8 %v1913
    %v1915 = vlaneseq
    %v1916 = vshrl.u32 %v1915, 7
    %v1917 = vsub.s32 %v1914, %v1916
    %v1918 = vrot.slane %v1902, %v1917
    %v1920 = vunpack.c.l.s4 1966171168
    %v1921 = vunpack.c.0.s8 %v1920
    %v1922 = vlaneseq
    %v1923 = vshrl.u32 %v1922, 7
    %v1924 = vsub.s32 %v1921, %v1923
    %v1925 = vrot.slane %v1903, %v1924
    %v1927 = vunpack.c.l.s4 1966171168
    %v1928 = vunpack.c.0.s8 %v1927
    %v1929 = vlaneseq
    %v1930 = vshrl.u32 %v1929, 7
    %v1931 = vsub.s32 %v1928, %v1930
    %v1932 = vrot.slane %v1904, %v1931
    %v1933 = vcombine.high %v1911, %v1911
    %v1934 = vcombine.high %v1918, %v1918
    %v1935 = vcombine.high %v1925, %v1925
    %v1936 = vcombine.high %v1932, %v1932
    %v1937 = vcombine.high %v1670, %v1670
    %v1939 = vunpack.c.l.s4 1966171168
    %v1940 = vunpack.c.0.s8 %v1939
    %v1941 = vlaneseq
    %v1942 = vshrl.u32 %v1941, 7
    %v1943 = vsub.s32 %v1940, %v1942
    %v1944 = vrot.slane %v1670, %v1943
    %v1946 = vunpack.c.l.s4 1966171168
    %v1947 = vunpack.c.0.s8 %v1946
    %v1948 = vlaneseq
    %v1949 = vshrl.u32 %v1948, 7
    %v1950 = vsub.s32 %v1947, %v1949
    %v1951 = vrot.slane %v1937, %v1950
    %v1952 = vcombine.high %v1944, %v1944
    %v1953 = vcombine.high %v1951, %v1951
    %v1955 = vunpack.c.l.s4 1966171168
    %v1956 = vunpack.c.0.s8 %v1955
    %v1957 = vlaneseq
    %v1958 = vshrl.u32 %v1957, 7
    %v1959 = vsub.s32 %v1956, %v1958
    %v1960 = vrot.slane %v1944, %v1959
    %v1962 = vunpack.c.l.s4 1966171168
    %v1963 = vunpack.c.0.s8 %v1962
    %v1964 = vlaneseq
    %v1965 = vshrl.u32 %v1964, 7
    %v1966 = vsub.s32 %v1963, %v1965
    %v1967 = vrot.slane %v1951, %v1966
    %v1969 = vunpack.c.l.s4 1966171168
    %v1970 = vunpack.c.0.s8 %v1969
    %v1971 = vlaneseq
    %v1972 = vshrl.u32 %v1971, 7
    %v1973 = vsub.s32 %v1970, %v1972
    %v1974 = vrot.slane %v1952, %v1973
    %v1976 = vunpack.c.l.s4 1966171168
    %v1977 = vunpack.c.0.s8 %v1976
    %v1978 = vlaneseq
    %v1979 = vshrl.u32 %v1978, 7
    %v1980 = vsub.s32 %v1977, %v1979
    %v1981 = vrot.slane %v1953, %v1980
    %v1982 = vcombine.high %v1960, %v1960
    %v1983 = vcombine.high %v1967, %v1967
    %v1984 = vcombine.high %v1974, %v1974
    %v1985 = vcombine.high %v1981, %v1981
    %v1986 = vlaneseq
    %v1987 = vshrl.u32 %v1986, 7
    %v1988 = vsub.s32 0, %v1987
    %v1989 = vrot.slane %v1911, %v1988
    %v1990 = vlaneseq
    %v1991 = vshrl.u32 %v1990, 7
    %v1992 = vsub.s32 0, %v1991
    %v1993 = vrot.slane %v1925, %v1992
    %v1994 = vlaneseq
    %v1995 = vshrl.u32 %v1994, 7
    %v1996 = vsub.s32 0, %v1995
    %v1997 = vrot.slane %v1933, %v1996
    %v1998 = vlaneseq
    %v1999 = vshrl.u32 %v1998, 7
    %v2000 = vsub.s32 0, %v1999
    %v2001 = vrot.slane %v1935, %v2000
    %v2002 = vlaneseq
    %v2003 = vshrl.u32 %v2002, 7
    %v2004 = vsub.s32 0, %v2003
    %v2005 = vrot.slane %v1918, %v2004
    %v2006 = vlaneseq
    %v2007 = vshrl.u32 %v2006, 7
    %v2008 = vsub.s32 0, %v2007
    %v2009 = vrot.slane %v1932, %v2008
    %v2010 = vlaneseq
    %v2011 = vshrl.u32 %v2010, 7
    %v2012 = vsub.s32 0, %v2011
    %v2013 = vrot.slane %v1934, %v2012
    %v2014 = vlaneseq
    %v2015 = vshrl.u32 %v2014, 7
    %v2016 = vsub.s32 0, %v2015
    %v2017 = vrot.slane %v1936, %v2016
    %v2018 = vlaneseq
    %v2019 = vshrl.u32 %v2018, 7
    %v2020 = vsub.s32 0, %v2019
    %v2021 = vrot.slane %v1960, %v2020
    %v2022 = vlaneseq
    %v2023 = vshrl.u32 %v2022, 7
    %v2024 = vsub.s32 0, %v2023
    %v2025 = vrot.slane %v1974, %v2024
    %v2026 = vlaneseq
    %v2027 = vshrl.u32 %v2026, 7
    %v2028 = vsub.s32 0, %v2027
    %v2029 = vrot.slane %v1982, %v2028
    %v2030 = vlaneseq
    %v2031 = vshrl.u32 %v2030, 7
    %v2032 = vsub.s32 0, %v2031
    %v2033 = vrot.slane %v1984, %v2032
    %v2034 = vlaneseq
    %v2035 = vshrl.u32 %v2034, 7
    %v2036 = vsub.s32 0, %v2035
    %v2037 = vrot.slane %v1967, %v2036
    %v2038 = vlaneseq
    %v2039 = vshrl.u32 %v2038, 7
    %v2040 = vsub.s32 0, %v2039
    %v2041 = vrot.slane %v1981, %v2040
    %v2042 = vlaneseq
    %v2043 = vshrl.u32 %v2042, 7
    %v2044 = vsub.s32 0, %v2043
    %v2045 = vrot.slane %v1983, %v2044
    %v2046 = vlaneseq
    %v2047 = vshrl.u32 %v2046, 7
    %v2048 = vsub.s32 0, %v2047
    %v2049 = vrot.slane %v1985, %v2048
    %v2066 = vsub.f32 %v1989, %v1669
    %v2067 = vsub.f32 %v1989, %v1670
    %v2068 = vsub.f32 %v1993, %v1669
    %v2069 = vsub.f32 %v1993, %v1670
    %v2070 = vsub.f32 %v1997, %v1669
    %v2071 = vsub.f32 %v1997, %v1670
    %v2072 = vsub.f32 %v2001, %v1669
    %v2073 = vsub.f32 %v2001, %v1670
    %v2074 = vsub.f32 %v2005, %v1669
    %v2075 = vsub.f32 %v2005, %v1670
    %v2076 = vsub.f32 %v2009, %v1669
    %v2077 = vsub.f32 %v2009, %v1670
    %v2078 = vsub.f32 %v2013, %v1669
    %v2079 = vsub.f32 %v2013, %v1670
    %v2080 = vsub.f32 %v2017, %v1669
    %v2081 = vsub.f32 %v2017, %v1670
    %v2082 = vsub.f32 %v2021, %v1669
    %v2083 = vsub.f32 %v2021, %v1670
    %v2084 = vsub.f32 %v2025, %v1669
    %v2085 = vsub.f32 %v2025, %v1670
    %v2086 = vsub.f32 %v2029, %v1669
    %v2087 = vsub.f32 %v2029, %v1670
    %v2088 = vsub.f32 %v2033, %v1669
    %v2089 = vsub.f32 %v2033, %v1670
    %v2090 = vsub.f32 %v2037, %v1669
    %v2091 = vsub.f32 %v2037, %v1670
    %v2092 = vsub.f32 %v2041, %v1669
    %v2093 = vsub.f32 %v2041, %v1670
    %v2094 = vsub.f32 %v2045, %v1669
    %v2095 = vsub.f32 %v2045, %v1670
    %v2096 = vsub.f32 %v2049, %v1669
    %v2097 = vsub.f32 %v2049, %v1670
    %v2100 = vcombine.high %v1672, %v1672
    %v2102 = vunpack.c.l.s4 1966171168
    %v2103 = vunpack.c.0.s8 %v2102
    %v2104 = vlaneseq
    %v2105 = vshrl.u32 %v2104, 7
    %v2106 = vsub.s32 %v2103, %v2105
    %v2107 = vrot.slane %v1672, %v2106
    %v2109 = vunpack.c.l.s4 1966171168
    %v2110 = vunpack.c.0.s8 %v2109
    %v2111 = vlaneseq
    %v2112 = vshrl.u32 %v2111, 7
    %v2113 = vsub.s32 %v2110, %v2112
    %v2114 = vrot.slane %v2100, %v2113
    %v2115 = vcombine.high %v2107, %v2107
    %v2116 = vcombine.high %v2114, %v2114
    %v2118 = vunpack.c.l.s4 1966171168
    %v2119 = vunpack.c.0.s8 %v2118
    %v2120 = vlaneseq
    %v2121 = vshrl.u32 %v2120, 7
    %v2122 = vsub.s32 %v2119, %v2121
    %v2123 = vrot.slane %v2107, %v2122
    %v2125 = vunpack.c.l.s4 1966171168
    %v2126 = vunpack.c.0.s8 %v2125
    %v2127 = vlaneseq
    %v2128 = vshrl.u32 %v2127, 7
    %v2129 = vsub.s32 %v2126, %v2128
    %v2130 = vrot.slane %v2114, %v2129
    %v2132 = vunpack.c.l.s4 1966171168
    %v2133 = vunpack.c.0.s8 %v2132
    %v2134 = vlaneseq
    %v2135 = vshrl.u32 %v2134, 7
    %v2136 = vsub.s32 %v2133, %v2135
    %v2137 = vrot.slane %v2115, %v2136
    %v2139 = vunpack.c.l.s4 1966171168
    %v2140 = vunpack.c.0.s8 %v2139
    %v2141 = vlaneseq
    %v2142 = vshrl.u32 %v2141, 7
    %v2143 = vsub.s32 %v2140, %v2142
    %v2144 = vrot.slane %v2116, %v2143
    %v2145 = vcombine.high %v2123, %v2123
    %v2146 = vcombine.high %v2130, %v2130
    %v2147 = vcombine.high %v2137, %v2137
    %v2148 = vcombine.high %v2144, %v2144
    %v2149 = vcombine.high %v1673, %v1673
    %v2151 = vunpack.c.l.s4 1966171168
    %v2152 = vunpack.c.0.s8 %v2151
    %v2153 = vlaneseq
    %v2154 = vshrl.u32 %v2153, 7
    %v2155 = vsub.s32 %v2152, %v2154
    %v2156 = vrot.slane %v1673, %v2155
    %v2158 = vunpack.c.l.s4 1966171168
    %v2159 = vunpack.c.0.s8 %v2158
    %v2160 = vlaneseq
    %v2161 = vshrl.u32 %v2160, 7
    %v2162 = vsub.s32 %v2159, %v2161
    %v2163 = vrot.slane %v2149, %v2162
    %v2164 = vcombine.high %v2156, %v2156
    %v2165 = vcombine.high %v2163, %v2163
    %v2167 = vunpack.c.l.s4 1966171168
    %v2168 = vunpack.c.0.s8 %v2167
    %v2169 = vlaneseq
    %v2170 = vshrl.u32 %v2169, 7
    %v2171 = vsub.s32 %v2168, %v2170
    %v2172 = vrot.slane %v2156, %v2171
    %v2174 = vunpack.c.l.s4 1966171168
    %v2175 = vunpack.c.0.s8 %v2174
    %v2176 = vlaneseq
    %v2177 = vshrl.u32 %v2176, 7
    %v2178 = vsub.s32 %v2175, %v2177
    %v2179 = vrot.slane %v2163, %v2178
    %v2181 = vunpack.c.l.s4 1966171168
    %v2182 = vunpack.c.0.s8 %v2181
    %v2183 = vlaneseq
    %v2184 = vshrl.u32 %v2183, 7
    %v2185 = vsub.s32 %v2182, %v2184
    %v2186 = vrot.slane %v2164, %v2185
    %v2188 = vunpack.c.l.s4 1966171168
    %v2189 = vunpack.c.0.s8 %v2188
    %v2190 = vlaneseq
    %v2191 = vshrl.u32 %v2190, 7
    %v2192 = vsub.s32 %v2189, %v2191
    %v2193 = vrot.slane %v2165, %v2192
    %v2194 = vcombine.high %v2172, %v2172
    %v2195 = vcombine.high %v2179, %v2179
    %v2196 = vcombine.high %v2186, %v2186
    %v2197 = vcombine.high %v2193, %v2193
    %v2198 = vlaneseq
    %v2199 = vshrl.u32 %v2198, 7
    %v2200 = vsub.s32 0, %v2199
    %v2201 = vrot.slane %v2123, %v2200
    %v2202 = vlaneseq
    %v2203 = vshrl.u32 %v2202, 7
    %v2204 = vsub.s32 0, %v2203
    %v2205 = vrot.slane %v2137, %v2204
    %v2206 = vlaneseq
    %v2207 = vshrl.u32 %v2206, 7
    %v2208 = vsub.s32 0, %v2207
    %v2209 = vrot.slane %v2145, %v2208
    %v2210 = vlaneseq
    %v2211 = vshrl.u32 %v2210, 7
    %v2212 = vsub.s32 0, %v2211
    %v2213 = vrot.slane %v2147, %v2212
    %v2214 = vlaneseq
    %v2215 = vshrl.u32 %v2214, 7
    %v2216 = vsub.s32 0, %v2215
    %v2217 = vrot.slane %v2130, %v2216
    %v2218 = vlaneseq
    %v2219 = vshrl.u32 %v2218, 7
    %v2220 = vsub.s32 0, %v2219
    %v2221 = vrot.slane %v2144, %v2220
    %v2222 = vlaneseq
    %v2223 = vshrl.u32 %v2222, 7
    %v2224 = vsub.s32 0, %v2223
    %v2225 = vrot.slane %v2146, %v2224
    %v2226 = vlaneseq
    %v2227 = vshrl.u32 %v2226, 7
    %v2228 = vsub.s32 0, %v2227
    %v2229 = vrot.slane %v2148, %v2228
    %v2230 = vlaneseq
    %v2231 = vshrl.u32 %v2230, 7
    %v2232 = vsub.s32 0, %v2231
    %v2233 = vrot.slane %v2172, %v2232
    %v2234 = vlaneseq
    %v2235 = vshrl.u32 %v2234, 7
    %v2236 = vsub.s32 0, %v2235
    %v2237 = vrot.slane %v2186, %v2236
    %v2238 = vlaneseq
    %v2239 = vshrl.u32 %v2238, 7
    %v2240 = vsub.s32 0, %v2239
    %v2241 = vrot.slane %v2194, %v2240
    %v2242 = vlaneseq
    %v2243 = vshrl.u32 %v2242, 7
    %v2244 = vsub.s32 0, %v2243
    %v2245 = vrot.slane %v2196, %v2244
    %v2246 = vlaneseq
    %v2247 = vshrl.u32 %v2246, 7
    %v2248 = vsub.s32 0, %v2247
    %v2249 = vrot.slane %v2179, %v2248
    %v2250 = vlaneseq
    %v2251 = vshrl.u32 %v2250, 7
    %v2252 = vsub.s32 0, %v2251
    %v2253 = vrot.slane %v2193, %v2252
    %v2254 = vlaneseq
    %v2255 = vshrl.u32 %v2254, 7
    %v2256 = vsub.s32 0, %v2255
    %v2257 = vrot.slane %v2195, %v2256
    %v2258 = vlaneseq
    %v2259 = vshrl.u32 %v2258, 7
    %v2260 = vsub.s32 0, %v2259
    %v2261 = vrot.slane %v2197, %v2260
    %v2278 = vsub.f32 %v2201, %v1672
    %v2279 = vsub.f32 %v2201, %v1673
    %v2280 = vsub.f32 %v2205, %v1672
    %v2281 = vsub.f32 %v2205, %v1673
    %v2282 = vsub.f32 %v2209, %v1672
    %v2283 = vsub.f32 %v2209, %v1673
    %v2284 = vsub.f32 %v2213, %v1672
    %v2285 = vsub.f32 %v2213, %v1673
    %v2286 = vsub.f32 %v2217, %v1672
    %v2287 = vsub.f32 %v2217, %v1673
    %v2288 = vsub.f32 %v2221, %v1672
    %v2289 = vsub.f32 %v2221, %v1673
    %v2290 = vsub.f32 %v2225, %v1672
    %v2291 = vsub.f32 %v2225, %v1673
    %v2292 = vsub.f32 %v2229, %v1672
    %v2293 = vsub.f32 %v2229, %v1673
    %v2294 = vsub.f32 %v2233, %v1672
    %v2295 = vsub.f32 %v2233, %v1673
    %v2296 = vsub.f32 %v2237, %v1672
    %v2297 = vsub.f32 %v2237, %v1673
    %v2298 = vsub.f32 %v2241, %v1672
    %v2299 = vsub.f32 %v2241, %v1673
    %v2300 = vsub.f32 %v2245, %v1672
    %v2301 = vsub.f32 %v2245, %v1673
    %v2302 = vsub.f32 %v2249, %v1672
    %v2303 = vsub.f32 %v2249, %v1673
    %v2304 = vsub.f32 %v2253, %v1672
    %v2305 = vsub.f32 %v2253, %v1673
    %v2306 = vsub.f32 %v2257, %v1672
    %v2307 = vsub.f32 %v2257, %v1673
    %v2308 = vsub.f32 %v2261, %v1672
    %v2309 = vsub.f32 %v2261, %v1673
    %v2310 = vmul.f32 %v1854, %v1854
    %v2311 = vmul.f32 %v1855, %v1855
    %v2312 = vmul.f32 %v1856, %v1856
    %v2313 = vmul.f32 %v1857, %v1857
    %v2314 = vmul.f32 %v1858, %v1858
    %v2315 = vmul.f32 %v1859, %v1859
    %v2316 = vmul.f32 %v1860, %v1860
    %v2317 = vmul.f32 %v1861, %v1861
    %v2318 = vmul.f32 %v1862, %v1862
    %v2319 = vmul.f32 %v1863, %v1863
    %v2320 = vmul.f32 %v1864, %v1864
    %v2321 = vmul.f32 %v1865, %v1865
    %v2322 = vmul.f32 %v1866, %v1866
    %v2323 = vmul.f32 %v1867, %v1867
    %v2324 = vmul.f32 %v1868, %v1868
    %v2325 = vmul.f32 %v1869, %v1869
    %v2326 = vmul.f32 %v1870, %v1870
    %v2327 = vmul.f32 %v1871, %v1871
    %v2328 = vmul.f32 %v1872, %v1872
    %v2329 = vmul.f32 %v1873, %v1873
    %v2330 = vmul.f32 %v1874, %v1874
    %v2331 = vmul.f32 %v1875, %v1875
    %v2332 = vmul.f32 %v1876, %v1876
    %v2333 = vmul.f32 %v1877, %v1877
    %v2334 = vmul.f32 %v1878, %v1878
    %v2335 = vmul.f32 %v1879, %v1879
    %v2336 = vmul.f32 %v1880, %v1880
    %v2337 = vmul.f32 %v1881, %v1881
    %v2338 = vmul.f32 %v1882, %v1882
    %v2339 = vmul.f32 %v1883, %v1883
    %v2340 = vmul.f32 %v1884, %v1884
    %v2341 = vmul.f32 %v1885, %v1885
    %v2342 = vmul.f32 %v2066, %v2066
    %v2343 = vmul.f32 %v2067, %v2067
    %v2344 = vmul.f32 %v2068, %v2068
    %v2345 = vmul.f32 %v2069, %v2069
    %v2346 = vmul.f32 %v2070, %v2070
    %v2347 = vmul.f32 %v2071, %v2071
    %v2348 = vmul.f32 %v2072, %v2072
    %v2349 = vmul.f32 %v2073, %v2073
    %v2350 = vmul.f32 %v2074, %v2074
    %v2351 = vmul.f32 %v2075, %v2075
    %v2352 = vmul.f32 %v2076, %v2076
    %v2353 = vmul.f32 %v2077, %v2077
    %v2354 = vmul.f32 %v2078, %v2078
    %v2355 = vmul.f32 %v2079, %v2079
    %v2356 = vmul.f32 %v2080, %v2080
    %v2357 = vmul.f32 %v2081, %v2081
    %v2358 = vmul.f32 %v2082, %v2082
    %v2359 = vmul.f32 %v2083, %v2083
    %v2360 = vmul.f32 %v2084, %v2084
    %v2361 = vmul.f32 %v2085, %v2085
    %v2362 = vmul.f32 %v2086, %v2086
    %v2363 = vmul.f32 %v2087, %v2087
    %v2364 = vmul.f32 %v2088, %v2088
    %v2365 = vmul.f32 %v2089, %v2089
    %v2366 = vmul.f32 %v2090, %v2090
    %v2367 = vmul.f32 %v2091, %v2091
    %v2368 = vmul.f32 %v2092, %v2092
    %v2369 = vmul.f32 %v2093, %v2093
    %v2370 = vmul.f32 %v2094, %v2094
    %v2371 = vmul.f32 %v2095, %v2095
    %v2372 = vmul.f32 %v2096, %v2096
    %v2373 = vmul.f32 %v2097, %v2097
    %v2374 = vadd.f32 %v2310, %v2342
    %v2375 = vadd.f32 %v2311, %v2343
    %v2376 = vadd.f32 %v2312, %v2344
    %v2377 = vadd.f32 %v2313, %v2345
    %v2378 = vadd.f32 %v2314, %v2346
    %v2379 = vadd.f32 %v2315, %v2347
    %v2380 = vadd.f32 %v2316, %v2348
    %v2381 = vadd.f32 %v2317, %v2349
    %v2382 = vadd.f32 %v2318, %v2350
    %v2383 = vadd.f32 %v2319, %v2351
    %v2384 = vadd.f32 %v2320, %v2352
    %v2385 = vadd.f32 %v2321, %v2353
    %v2386 = vadd.f32 %v2322, %v2354
    %v2387 = vadd.f32 %v2323, %v2355
    %v2388 = vadd.f32 %v2324, %v2356
    %v2389 = vadd.f32 %v2325, %v2357
    %v2390 = vadd.f32 %v2326, %v2358
    %v2391 = vadd.f32 %v2327, %v2359
    %v2392 = vadd.f32 %v2328, %v2360
    %v2393 = vadd.f32 %v2329, %v2361
    %v2394 = vadd.f32 %v2330, %v2362
    %v2395 = vadd.f32 %v2331, %v2363
    %v2396 = vadd.f32 %v2332, %v2364
    %v2397 = vadd.f32 %v2333, %v2365
    %v2398 = vadd.f32 %v2334, %v2366
    %v2399 = vadd.f32 %v2335, %v2367
    %v2400 = vadd.f32 %v2336, %v2368
    %v2401 = vadd.f32 %v2337, %v2369
    %v2402 = vadd.f32 %v2338, %v2370
    %v2403 = vadd.f32 %v2339, %v2371
    %v2404 = vadd.f32 %v2340, %v2372
    %v2405 = vadd.f32 %v2341, %v2373
    %v2406 = vmul.f32 %v2278, %v2278
    %v2407 = vmul.f32 %v2279, %v2279
    %v2408 = vmul.f32 %v2280, %v2280
    %v2409 = vmul.f32 %v2281, %v2281
    %v2410 = vmul.f32 %v2282, %v2282
    %v2411 = vmul.f32 %v2283, %v2283
    %v2412 = vmul.f32 %v2284, %v2284
    %v2413 = vmul.f32 %v2285, %v2285
    %v2414 = vmul.f32 %v2286, %v2286
    %v2415 = vmul.f32 %v2287, %v2287
    %v2416 = vmul.f32 %v2288, %v2288
    %v2417 = vmul.f32 %v2289, %v2289
    %v2418 = vmul.f32 %v2290, %v2290
    %v2419 = vmul.f32 %v2291, %v2291
    %v2420 = vmul.f32 %v2292, %v2292
    %v2421 = vmul.f32 %v2293, %v2293
    %v2422 = vmul.f32 %v2294, %v2294
    %v2423 = vmul.f32 %v2295, %v2295
    %v2424 = vmul.f32 %v2296, %v2296
    %v2425 = vmul.f32 %v2297, %v2297
    %v2426 = vmul.f32 %v2298, %v2298
    %v2427 = vmul.f32 %v2299, %v2299
    %v2428 = vmul.f32 %v2300, %v2300
    %v2429 = vmul.f32 %v2301, %v2301
    %v2430 = vmul.f32 %v2302, %v2302
    %v2431 = vmul.f32 %v2303, %v2303
    %v2432 = vmul.f32 %v2304, %v2304
    %v2433 = vmul.f32 %v2305, %v2305
    %v2434 = vmul.f32 %v2306, %v2306
    %v2435 = vmul.f32 %v2307, %v2307
    %v2436 = vmul.f32 %v2308, %v2308
    %v2437 = vmul.f32 %v2309, %v2309
    %v2438 = vadd.f32 %v2374, %v2406
    %v2439 = vadd.f32 %v2375, %v2407
    %v2440 = vadd.f32 %v2376, %v2408
    %v2441 = vadd.f32 %v2377, %v2409
    %v2442 = vadd.f32 %v2378, %v2410
    %v2443 = vadd.f32 %v2379, %v2411
    %v2444 = vadd.f32 %v2380, %v2412
    %v2445 = vadd.f32 %v2381, %v2413
    %v2446 = vadd.f32 %v2382, %v2414
    %v2447 = vadd.f32 %v2383, %v2415
    %v2448 = vadd.f32 %v2384, %v2416
    %v2449 = vadd.f32 %v2385, %v2417
    %v2450 = vadd.f32 %v2386, %v2418
    %v2451 = vadd.f32 %v2387, %v2419
    %v2452 = vadd.f32 %v2388, %v2420
    %v2453 = vadd.f32 %v2389, %v2421
    %v2454 = vadd.f32 %v2390, %v2422
    %v2455 = vadd.f32 %v2391, %v2423
    %v2456 = vadd.f32 %v2392, %v2424
    %v2457 = vadd.f32 %v2393, %v2425
    %v2458 = vadd.f32 %v2394, %v2426
    %v2459 = vadd.f32 %v2395, %v2427
    %v2460 = vadd.f32 %v2396, %v2428
    %v2461 = vadd.f32 %v2397, %v2429
    %v2462 = vadd.f32 %v2398, %v2430
    %v2463 = vadd.f32 %v2399, %v2431
    %v2464 = vadd.f32 %v2400, %v2432
    %v2465 = vadd.f32 %v2401, %v2433
    %v2466 = vadd.f32 %v2402, %v2434
    %v2467 = vadd.f32 %v2403, %v2435
    %v2468 = vadd.f32 %v2404, %v2436
    %v2469 = vadd.f32 %v2405, %v2437
    %v2470 = vrsqrt.pop %v2438
    %v2471 = vmul.f32 %v2438, %v2470
    %vm2472 = vcmp.eq.f32.partialorder %v2438, inf
    %v2473 = vsel %vm2472, %v2438, %v2471
    %vm2474 = vcmp.eq.f32.partialorder %v2438, 0.0
    %v2475 = vand.u32 %v2438, 2147483648
    %v2476 = vsel %vm2474, %v2475, %v2473
    %v2477 = vrsqrt.pop %v2439
    %v2478 = vmul.f32 %v2439, %v2477
    %vm2479 = vcmp.eq.f32.partialorder %v2439, inf
    %v2480 = vsel %vm2479, %v2439, %v2478
    %vm2481 = vcmp.eq.f32.partialorder %v2439, 0.0
    %v2482 = vand.u32 %v2439, 2147483648
    %v2483 = vsel %vm2481, %v2482, %v2480
    %v2484 = vrsqrt.pop %v2440
    %v2485 = vmul.f32 %v2440, %v2484
    %vm2486 = vcmp.eq.f32.partialorder %v2440, inf
    %v2487 = vsel %vm2486, %v2440, %v2485
    %vm2488 = vcmp.eq.f32.partialorder %v2440, 0.0
    %v2489 = vand.u32 %v2440, 2147483648
    %v2490 = vsel %vm2488, %v2489, %v2487
    %v2491 = vrsqrt.pop %v2441
    %v2492 = vmul.f32 %v2441, %v2491
    %vm2493 = vcmp.eq.f32.partialorder %v2441, inf
    %v2494 = vsel %vm2493, %v2441, %v2492
    %vm2495 = vcmp.eq.f32.partialorder %v2441, 0.0
    %v2496 = vand.u32 %v2441, 2147483648
    %v2497 = vsel %vm2495, %v2496, %v2494
    %v2498 = vrsqrt.pop %v2442
    %v2499 = vmul.f32 %v2442, %v2498
    %vm2500 = vcmp.eq.f32.partialorder %v2442, inf
    %v2501 = vsel %vm2500, %v2442, %v2499
    %vm2502 = vcmp.eq.f32.partialorder %v2442, 0.0
    %v2503 = vand.u32 %v2442, 2147483648
    %v2504 = vsel %vm2502, %v2503, %v2501
    %v2505 = vrsqrt.pop %v2443
    %v2506 = vmul.f32 %v2443, %v2505
    %vm2507 = vcmp.eq.f32.partialorder %v2443, inf
    %v2508 = vsel %vm2507, %v2443, %v2506
    %vm2509 = vcmp.eq.f32.partialorder %v2443, 0.0
    %v2510 = vand.u32 %v2443, 2147483648
    %v2511 = vsel %vm2509, %v2510, %v2508
    %v2512 = vrsqrt.pop %v2444
    %v2513 = vmul.f32 %v2444, %v2512
    %vm2514 = vcmp.eq.f32.partialorder %v2444, inf
    %v2515 = vsel %vm2514, %v2444, %v2513
    %vm2516 = vcmp.eq.f32.partialorder %v2444, 0.0
    %v2517 = vand.u32 %v2444, 2147483648
    %v2518 = vsel %vm2516, %v2517, %v2515
    %v2519 = vrsqrt.pop %v2445
    %v2520 = vmul.f32 %v2445, %v2519
    %vm2521 = vcmp.eq.f32.partialorder %v2445, inf
    %v2522 = vsel %vm2521, %v2445, %v2520
    %vm2523 = vcmp.eq.f32.partialorder %v2445, 0.0
    %v2524 = vand.u32 %v2445, 2147483648
    %v2525 = vsel %vm2523, %v2524, %v2522
    %v2526 = vrsqrt.pop %v2446
    %v2527 = vmul.f32 %v2446, %v2526
    %vm2528 = vcmp.eq.f32.partialorder %v2446, inf
    %v2529 = vsel %vm2528, %v2446, %v2527
    %vm2530 = vcmp.eq.f32.partialorder %v2446, 0.0
    %v2531 = vand.u32 %v2446, 2147483648
    %v2532 = vsel %vm2530, %v2531, %v2529
    %v2533 = vrsqrt.pop %v2447
    %v2534 = vmul.f32 %v2447, %v2533
    %vm2535 = vcmp.eq.f32.partialorder %v2447, inf
    %v2536 = vsel %vm2535, %v2447, %v2534
    %vm2537 = vcmp.eq.f32.partialorder %v2447, 0.0
    %v2538 = vand.u32 %v2447, 2147483648
    %v2539 = vsel %vm2537, %v2538, %v2536
    %v2540 = vrsqrt.pop %v2448
    %v2541 = vmul.f32 %v2448, %v2540
    %vm2542 = vcmp.eq.f32.partialorder %v2448, inf
    %v2543 = vsel %vm2542, %v2448, %v2541
    %vm2544 = vcmp.eq.f32.partialorder %v2448, 0.0
    %v2545 = vand.u32 %v2448, 2147483648
    %v2546 = vsel %vm2544, %v2545, %v2543
    %v2547 = vrsqrt.pop %v2449
    %v2548 = vmul.f32 %v2449, %v2547
    %vm2549 = vcmp.eq.f32.partialorder %v2449, inf
    %v2550 = vsel %vm2549, %v2449, %v2548
    %vm2551 = vcmp.eq.f32.partialorder %v2449, 0.0
    %v2552 = vand.u32 %v2449, 2147483648
    %v2553 = vsel %vm2551, %v2552, %v2550
    %v2554 = vrsqrt.pop %v2450
    %v2555 = vmul.f32 %v2450, %v2554
    %vm2556 = vcmp.eq.f32.partialorder %v2450, inf
    %v2557 = vsel %vm2556, %v2450, %v2555
    %vm2558 = vcmp.eq.f32.partialorder %v2450, 0.0
    %v2559 = vand.u32 %v2450, 2147483648
    %v2560 = vsel %vm2558, %v2559, %v2557
    %v2561 = vrsqrt.pop %v2451
    %v2562 = vmul.f32 %v2451, %v2561
    %vm2563 = vcmp.eq.f32.partialorder %v2451, inf
    %v2564 = vsel %vm2563, %v2451, %v2562
    %vm2565 = vcmp.eq.f32.partialorder %v2451, 0.0
    %v2566 = vand.u32 %v2451, 2147483648
    %v2567 = vsel %vm2565, %v2566, %v2564
    %v2568 = vrsqrt.pop %v2452
    %v2569 = vmul.f32 %v2452, %v2568
    %vm2570 = vcmp.eq.f32.partialorder %v2452, inf
    %v2571 = vsel %vm2570, %v2452, %v2569
    %vm2572 = vcmp.eq.f32.partialorder %v2452, 0.0
    %v2573 = vand.u32 %v2452, 2147483648
    %v2574 = vsel %vm2572, %v2573, %v2571
    %v2575 = vrsqrt.pop %v2453
    %v2576 = vmul.f32 %v2453, %v2575
    %vm2577 = vcmp.eq.f32.partialorder %v2453, inf
    %v2578 = vsel %vm2577, %v2453, %v2576
    %vm2579 = vcmp.eq.f32.partialorder %v2453, 0.0
    %v2580 = vand.u32 %v2453, 2147483648
    %v2581 = vsel %vm2579, %v2580, %v2578
    %v2582 = vrsqrt.pop %v2454
    %v2583 = vmul.f32 %v2454, %v2582
    %vm2584 = vcmp.eq.f32.partialorder %v2454, inf
    %v2585 = vsel %vm2584, %v2454, %v2583
    %vm2586 = vcmp.eq.f32.partialorder %v2454, 0.0
    %v2587 = vand.u32 %v2454, 2147483648
    %v2588 = vsel %vm2586, %v2587, %v2585
    %v2589 = vrsqrt.pop %v2455
    %v2590 = vmul.f32 %v2455, %v2589
    %vm2591 = vcmp.eq.f32.partialorder %v2455, inf
    %v2592 = vsel %vm2591, %v2455, %v2590
    %vm2593 = vcmp.eq.f32.partialorder %v2455, 0.0
    %v2594 = vand.u32 %v2455, 2147483648
    %v2595 = vsel %vm2593, %v2594, %v2592
    %v2596 = vrsqrt.pop %v2456
    %v2597 = vmul.f32 %v2456, %v2596
    %vm2598 = vcmp.eq.f32.partialorder %v2456, inf
    %v2599 = vsel %vm2598, %v2456, %v2597
    %vm2600 = vcmp.eq.f32.partialorder %v2456, 0.0
    %v2601 = vand.u32 %v2456, 2147483648
    %v2602 = vsel %vm2600, %v2601, %v2599
    %v2603 = vrsqrt.pop %v2457
    %v2604 = vmul.f32 %v2457, %v2603
    %vm2605 = vcmp.eq.f32.partialorder %v2457, inf
    %v2606 = vsel %vm2605, %v2457, %v2604
    %vm2607 = vcmp.eq.f32.partialorder %v2457, 0.0
    %v2608 = vand.u32 %v2457, 2147483648
    %v2609 = vsel %vm2607, %v2608, %v2606
    %v2610 = vrsqrt.pop %v2458
    %v2611 = vmul.f32 %v2458, %v2610
    %vm2612 = vcmp.eq.f32.partialorder %v2458, inf
    %v2613 = vsel %vm2612, %v2458, %v2611
    %vm2614 = vcmp.eq.f32.partialorder %v2458, 0.0
    %v2615 = vand.u32 %v2458, 2147483648
    %v2616 = vsel %vm2614, %v2615, %v2613
    %v2617 = vrsqrt.pop %v2459
    %v2618 = vmul.f32 %v2459, %v2617
    %vm2619 = vcmp.eq.f32.partialorder %v2459, inf
    %v2620 = vsel %vm2619, %v2459, %v2618
    %vm2621 = vcmp.eq.f32.partialorder %v2459, 0.0
    %v2622 = vand.u32 %v2459, 2147483648
    %v2623 = vsel %vm2621, %v2622, %v2620
    %v2624 = vrsqrt.pop %v2460
    %v2625 = vmul.f32 %v2460, %v2624
    %vm2626 = vcmp.eq.f32.partialorder %v2460, inf
    %v2627 = vsel %vm2626, %v2460, %v2625
    %vm2628 = vcmp.eq.f32.partialorder %v2460, 0.0
    %v2629 = vand.u32 %v2460, 2147483648
    %v2630 = vsel %vm2628, %v2629, %v2627
    %v2631 = vrsqrt.pop %v2461
    %v2632 = vmul.f32 %v2461, %v2631
    %vm2633 = vcmp.eq.f32.partialorder %v2461, inf
    %v2634 = vsel %vm2633, %v2461, %v2632
    %vm2635 = vcmp.eq.f32.partialorder %v2461, 0.0
    %v2636 = vand.u32 %v2461, 2147483648
    %v2637 = vsel %vm2635, %v2636, %v2634
    %v2638 = vrsqrt.pop %v2462
    %v2639 = vmul.f32 %v2462, %v2638
    %vm2640 = vcmp.eq.f32.partialorder %v2462, inf
    %v2641 = vsel %vm2640, %v2462, %v2639
    %vm2642 = vcmp.eq.f32.partialorder %v2462, 0.0
    %v2643 = vand.u32 %v2462, 2147483648
    %v2644 = vsel %vm2642, %v2643, %v2641
    %v2645 = vrsqrt.pop %v2463
    %v2646 = vmul.f32 %v2463, %v2645
    %vm2647 = vcmp.eq.f32.partialorder %v2463, inf
    %v2648 = vsel %vm2647, %v2463, %v2646
    %vm2649 = vcmp.eq.f32.partialorder %v2463, 0.0
    %v2650 = vand.u32 %v2463, 2147483648
    %v2651 = vsel %vm2649, %v2650, %v2648
    %v2652 = vrsqrt.pop %v2464
    %v2653 = vmul.f32 %v2464, %v2652
    %vm2654 = vcmp.eq.f32.partialorder %v2464, inf
    %v2655 = vsel %vm2654, %v2464, %v2653
    %vm2656 = vcmp.eq.f32.partialorder %v2464, 0.0
    %v2657 = vand.u32 %v2464, 2147483648
    %v2658 = vsel %vm2656, %v2657, %v2655
    %v2659 = vrsqrt.pop %v2465
    %v2660 = vmul.f32 %v2465, %v2659
    %vm2661 = vcmp.eq.f32.partialorder %v2465, inf
    %v2662 = vsel %vm2661, %v2465, %v2660
    %vm2663 = vcmp.eq.f32.partialorder %v2465, 0.0
    %v2664 = vand.u32 %v2465, 2147483648
    %v2665 = vsel %vm2663, %v2664, %v2662
    %v2666 = vrsqrt.pop %v2466
    %v2667 = vmul.f32 %v2466, %v2666
    %vm2668 = vcmp.eq.f32.partialorder %v2466, inf
    %v2669 = vsel %vm2668, %v2466, %v2667
    %vm2670 = vcmp.eq.f32.partialorder %v2466, 0.0
    %v2671 = vand.u32 %v2466, 2147483648
    %v2672 = vsel %vm2670, %v2671, %v2669
    %v2673 = vrsqrt.pop %v2467
    %v2674 = vmul.f32 %v2467, %v2673
    %vm2675 = vcmp.eq.f32.partialorder %v2467, inf
    %v2676 = vsel %vm2675, %v2467, %v2674
    %vm2677 = vcmp.eq.f32.partialorder %v2467, 0.0
    %v2678 = vand.u32 %v2467, 2147483648
    %v2679 = vsel %vm2677, %v2678, %v2676
    %v2680 = vrsqrt.pop %v2468
    %v2681 = vmul.f32 %v2468, %v2680
    %vm2682 = vcmp.eq.f32.partialorder %v2468, inf
    %v2683 = vsel %vm2682, %v2468, %v2681
    %vm2684 = vcmp.eq.f32.partialorder %v2468, 0.0
    %v2685 = vand.u32 %v2468, 2147483648
    %v2686 = vsel %vm2684, %v2685, %v2683
    %v2687 = vrsqrt.pop %v2469
    %v2688 = vmul.f32 %v2469, %v2687
    %vm2689 = vcmp.eq.f32.partialorder %v2469, inf
    %v2690 = vsel %vm2689, %v2469, %v2688
    %vm2691 = vcmp.eq.f32.partialorder %v2469, 0.0
    %v2692 = vand.u32 %v2469, 2147483648
    %v2693 = vsel %vm2691, %v2692, %v2690
    %v2696 = vcombine.high %v1512, %v1512
    %v2698 = vunpack.c.l.s4 1966171168
    %v2699 = vunpack.c.0.s8 %v2698
    %v2700 = vlaneseq
    %v2701 = vshrl.u32 %v2700, 7
    %v2702 = vsub.s32 %v2699, %v2701
    %v2703 = vrot.slane %v1512, %v2702
    %v2705 = vunpack.c.l.s4 1966171168
    %v2706 = vunpack.c.0.s8 %v2705
    %v2707 = vlaneseq
    %v2708 = vshrl.u32 %v2707, 7
    %v2709 = vsub.s32 %v2706, %v2708
    %v2710 = vrot.slane %v2696, %v2709
    %v2711 = vcombine.high %v2703, %v2703
    %v2712 = vcombine.high %v2710, %v2710
    %v2714 = vunpack.c.l.s4 1966171168
    %v2715 = vunpack.c.0.s8 %v2714
    %v2716 = vlaneseq
    %v2717 = vshrl.u32 %v2716, 7
    %v2718 = vsub.s32 %v2715, %v2717
    %v2719 = vrot.slane %v2703, %v2718
    %v2721 = vunpack.c.l.s4 1966171168
    %v2722 = vunpack.c.0.s8 %v2721
    %v2723 = vlaneseq
    %v2724 = vshrl.u32 %v2723, 7
    %v2725 = vsub.s32 %v2722, %v2724
    %v2726 = vrot.slane %v2710, %v2725
    %v2728 = vunpack.c.l.s4 1966171168
    %v2729 = vunpack.c.0.s8 %v2728
    %v2730 = vlaneseq
    %v2731 = vshrl.u32 %v2730, 7
    %v2732 = vsub.s32 %v2729, %v2731
    %v2733 = vrot.slane %v2711, %v2732
    %v2735 = vunpack.c.l.s4 1966171168
    %v2736 = vunpack.c.0.s8 %v2735
    %v2737 = vlaneseq
    %v2738 = vshrl.u32 %v2737, 7
    %v2739 = vsub.s32 %v2736, %v2738
    %v2740 = vrot.slane %v2712, %v2739
    %v2741 = vcombine.high %v2719, %v2719
    %v2742 = vcombine.high %v2726, %v2726
    %v2743 = vcombine.high %v2733, %v2733
    %v2744 = vcombine.high %v2740, %v2740
    %v2745 = vcombine.high %v1513, %v1513
    %v2747 = vunpack.c.l.s4 1966171168
    %v2748 = vunpack.c.0.s8 %v2747
    %v2749 = vlaneseq
    %v2750 = vshrl.u32 %v2749, 7
    %v2751 = vsub.s32 %v2748, %v2750
    %v2752 = vrot.slane %v1513, %v2751
    %v2754 = vunpack.c.l.s4 1966171168
    %v2755 = vunpack.c.0.s8 %v2754
    %v2756 = vlaneseq
    %v2757 = vshrl.u32 %v2756, 7
    %v2758 = vsub.s32 %v2755, %v2757
    %v2759 = vrot.slane %v2745, %v2758
    %v2760 = vcombine.high %v2752, %v2752
    %v2761 = vcombine.high %v2759, %v2759
    %v2763 = vunpack.c.l.s4 1966171168
    %v2764 = vunpack.c.0.s8 %v2763
    %v2765 = vlaneseq
    %v2766 = vshrl.u32 %v2765, 7
    %v2767 = vsub.s32 %v2764, %v2766
    %v2768 = vrot.slane %v2752, %v2767
    %v2770 = vunpack.c.l.s4 1966171168
    %v2771 = vunpack.c.0.s8 %v2770
    %v2772 = vlaneseq
    %v2773 = vshrl.u32 %v2772, 7
    %v2774 = vsub.s32 %v2771, %v2773
    %v2775 = vrot.slane %v2759, %v2774
    %v2777 = vunpack.c.l.s4 1966171168
    %v2778 = vunpack.c.0.s8 %v2777
    %v2779 = vlaneseq
    %v2780 = vshrl.u32 %v2779, 7
    %v2781 = vsub.s32 %v2778, %v2780
    %v2782 = vrot.slane %v2760, %v2781
    %v2784 = vunpack.c.l.s4 1966171168
    %v2785 = vunpack.c.0.s8 %v2784
    %v2786 = vlaneseq
    %v2787 = vshrl.u32 %v2786, 7
    %v2788 = vsub.s32 %v2785, %v2787
    %v2789 = vrot.slane %v2761, %v2788
    %v2790 = vcombine.high %v2768, %v2768
    %v2791 = vcombine.high %v2775, %v2775
    %v2792 = vcombine.high %v2782, %v2782
    %v2793 = vcombine.high %v2789, %v2789
    %v2794 = vlaneseq
    %v2795 = vshrl.u32 %v2794, 7
    %v2796 = vsub.s32 0, %v2795
    %v2797 = vrot.slane %v2719, %v2796
    %v2798 = vlaneseq
    %v2799 = vshrl.u32 %v2798, 7
    %v2800 = vsub.s32 0, %v2799
    %v2801 = vrot.slane %v2733, %v2800
    %v2802 = vlaneseq
    %v2803 = vshrl.u32 %v2802, 7
    %v2804 = vsub.s32 0, %v2803
    %v2805 = vrot.slane %v2741, %v2804
    %v2806 = vlaneseq
    %v2807 = vshrl.u32 %v2806, 7
    %v2808 = vsub.s32 0, %v2807
    %v2809 = vrot.slane %v2743, %v2808
    %v2810 = vlaneseq
    %v2811 = vshrl.u32 %v2810, 7
    %v2812 = vsub.s32 0, %v2811
    %v2813 = vrot.slane %v2726, %v2812
    %v2814 = vlaneseq
    %v2815 = vshrl.u32 %v2814, 7
    %v2816 = vsub.s32 0, %v2815
    %v2817 = vrot.slane %v2740, %v2816
    %v2818 = vlaneseq
    %v2819 = vshrl.u32 %v2818, 7
    %v2820 = vsub.s32 0, %v2819
    %v2821 = vrot.slane %v2742, %v2820
    %v2822 = vlaneseq
    %v2823 = vshrl.u32 %v2822, 7
    %v2824 = vsub.s32 0, %v2823
    %v2825 = vrot.slane %v2744, %v2824
    %v2826 = vlaneseq
    %v2827 = vshrl.u32 %v2826, 7
    %v2828 = vsub.s32 0, %v2827
    %v2829 = vrot.slane %v2768, %v2828
    %v2830 = vlaneseq
    %v2831 = vshrl.u32 %v2830, 7
    %v2832 = vsub.s32 0, %v2831
    %v2833 = vrot.slane %v2782, %v2832
    %v2834 = vlaneseq
    %v2835 = vshrl.u32 %v2834, 7
    %v2836 = vsub.s32 0, %v2835
    %v2837 = vrot.slane %v2790, %v2836
    %v2838 = vlaneseq
    %v2839 = vshrl.u32 %v2838, 7
    %v2840 = vsub.s32 0, %v2839
    %v2841 = vrot.slane %v2792, %v2840
    %v2842 = vlaneseq
    %v2843 = vshrl.u32 %v2842, 7
    %v2844 = vsub.s32 0, %v2843
    %v2845 = vrot.slane %v2775, %v2844
    %v2846 = vlaneseq
    %v2847 = vshrl.u32 %v2846, 7
    %v2848 = vsub.s32 0, %v2847
    %v2849 = vrot.slane %v2789, %v2848
    %v2850 = vlaneseq
    %v2851 = vshrl.u32 %v2850, 7
    %v2852 = vsub.s32 0, %v2851
    %v2853 = vrot.slane %v2791, %v2852
    %v2854 = vlaneseq
    %v2855 = vshrl.u32 %v2854, 7
    %v2856 = vsub.s32 0, %v2855
    %v2857 = vrot.slane %v2793, %v2856
    %v2874 = vmul.f32 %v2797, %v1512
    %v2875 = vmul.f32 %v2797, %v1513
    %v2876 = vmul.f32 %v2801, %v1512
    %v2877 = vmul.f32 %v2801, %v1513
    %v2878 = vmul.f32 %v2805, %v1512
    %v2879 = vmul.f32 %v2805, %v1513
    %v2880 = vmul.f32 %v2809, %v1512
    %v2881 = vmul.f32 %v2809, %v1513
    %v2882 = vmul.f32 %v2813, %v1512
    %v2883 = vmul.f32 %v2813, %v1513
    %v2884 = vmul.f32 %v2817, %v1512
    %v2885 = vmul.f32 %v2817, %v1513
    %v2886 = vmul.f32 %v2821, %v1512
    %v2887 = vmul.f32 %v2821, %v1513
    %v2888 = vmul.f32 %v2825, %v1512
    %v2889 = vmul.f32 %v2825, %v1513
    %v2890 = vmul.f32 %v2829, %v1512
    %v2891 = vmul.f32 %v2829, %v1513
    %v2892 = vmul.f32 %v2833, %v1512
    %v2893 = vmul.f32 %v2833, %v1513
    %v2894 = vmul.f32 %v2837, %v1512
    %v2895 = vmul.f32 %v2837, %v1513
    %v2896 = vmul.f32 %v2841, %v1512
    %v2897 = vmul.f32 %v2841, %v1513
    %v2898 = vmul.f32 %v2845, %v1512
    %v2899 = vmul.f32 %v2845, %v1513
    %v2900 = vmul.f32 %v2849, %v1512
    %v2901 = vmul.f32 %v2849, %v1513
    %v2902 = vmul.f32 %v2853, %v1512
    %v2903 = vmul.f32 %v2853, %v1513
    %v2904 = vmul.f32 %v2857, %v1512
    %v2905 = vmul.f32 %v2857, %v1513
    %v2908 = vcombine.high %v1530, %v1530
    %v2910 = vunpack.c.l.s4 1966171168
    %v2911 = vunpack.c.0.s8 %v2910
    %v2912 = vlaneseq
    %v2913 = vshrl.u32 %v2912, 7
    %v2914 = vsub.s32 %v2911, %v2913
    %v2915 = vrot.slane %v1530, %v2914
    %v2917 = vunpack.c.l.s4 1966171168
    %v2918 = vunpack.c.0.s8 %v2917
    %v2919 = vlaneseq
    %v2920 = vshrl.u32 %v2919, 7
    %v2921 = vsub.s32 %v2918, %v2920
    %v2922 = vrot.slane %v2908, %v2921
    %v2923 = vcombine.high %v2915, %v2915
    %v2924 = vcombine.high %v2922, %v2922
    %v2926 = vunpack.c.l.s4 1966171168
    %v2927 = vunpack.c.0.s8 %v2926
    %v2928 = vlaneseq
    %v2929 = vshrl.u32 %v2928, 7
    %v2930 = vsub.s32 %v2927, %v2929
    %v2931 = vrot.slane %v2915, %v2930
    %v2933 = vunpack.c.l.s4 1966171168
    %v2934 = vunpack.c.0.s8 %v2933
    %v2935 = vlaneseq
    %v2936 = vshrl.u32 %v2935, 7
    %v2937 = vsub.s32 %v2934, %v2936
    %v2938 = vrot.slane %v2922, %v2937
    %v2940 = vunpack.c.l.s4 1966171168
    %v2941 = vunpack.c.0.s8 %v2940
    %v2942 = vlaneseq
    %v2943 = vshrl.u32 %v2942, 7
    %v2944 = vsub.s32 %v2941, %v2943
    %v2945 = vrot.slane %v2923, %v2944
    %v2947 = vunpack.c.l.s4 1966171168
    %v2948 = vunpack.c.0.s8 %v2947
    %v2949 = vlaneseq
    %v2950 = vshrl.u32 %v2949, 7
    %v2951 = vsub.s32 %v2948, %v2950
    %v2952 = vrot.slane %v2924, %v2951
    %v2953 = vcombine.high %v2931, %v2931
    %v2954 = vcombine.high %v2938, %v2938
    %v2955 = vcombine.high %v2945, %v2945
    %v2956 = vcombine.high %v2952, %v2952
    %v2957 = vcombine.high %v1531, %v1531
    %v2959 = vunpack.c.l.s4 1966171168
    %v2960 = vunpack.c.0.s8 %v2959
    %v2961 = vlaneseq
    %v2962 = vshrl.u32 %v2961, 7
    %v2963 = vsub.s32 %v2960, %v2962
    %v2964 = vrot.slane %v1531, %v2963
    %v2966 = vunpack.c.l.s4 1966171168
    %v2967 = vunpack.c.0.s8 %v2966
    %v2968 = vlaneseq
    %v2969 = vshrl.u32 %v2968, 7
    %v2970 = vsub.s32 %v2967, %v2969
    %v2971 = vrot.slane %v2957, %v2970
    %v2972 = vcombine.high %v2964, %v2964
    %v2973 = vcombine.high %v2971, %v2971
    %v2975 = vunpack.c.l.s4 1966171168
    %v2976 = vunpack.c.0.s8 %v2975
    %v2977 = vlaneseq
    %v2978 = vshrl.u32 %v2977, 7
    %v2979 = vsub.s32 %v2976, %v2978
    %v2980 = vrot.slane %v2964, %v2979
    %v2982 = vunpack.c.l.s4 1966171168
    %v2983 = vunpack.c.0.s8 %v2982
    %v2984 = vlaneseq
    %v2985 = vshrl.u32 %v2984, 7
    %v2986 = vsub.s32 %v2983, %v2985
    %v2987 = vrot.slane %v2971, %v2986
    %v2989 = vunpack.c.l.s4 1966171168
    %v2990 = vunpack.c.0.s8 %v2989
    %v2991 = vlaneseq
    %v2992 = vshrl.u32 %v2991, 7
    %v2993 = vsub.s32 %v2990, %v2992
    %v2994 = vrot.slane %v2972, %v2993
    %v2996 = vunpack.c.l.s4 1966171168
    %v2997 = vunpack.c.0.s8 %v2996
    %v2998 = vlaneseq
    %v2999 = vshrl.u32 %v2998, 7
    %v3000 = vsub.s32 %v2997, %v2999
    %v3001 = vrot.slane %v2973, %v3000
    %v3002 = vcombine.high %v2980, %v2980
    %v3003 = vcombine.high %v2987, %v2987
    %v3004 = vcombine.high %v2994, %v2994
    %v3005 = vcombine.high %v3001, %v3001
    %v3006 = vlaneseq
    %v3007 = vshrl.u32 %v3006, 7
    %v3008 = vsub.s32 0, %v3007
    %v3009 = vrot.slane %v2931, %v3008
    %v3010 = vlaneseq
    %v3011 = vshrl.u32 %v3010, 7
    %v3012 = vsub.s32 0, %v3011
    %v3013 = vrot.slane %v2945, %v3012
    %v3014 = vlaneseq
    %v3015 = vshrl.u32 %v3014, 7
    %v3016 = vsub.s32 0, %v3015
    %v3017 = vrot.slane %v2953, %v3016
    %v3018 = vlaneseq
    %v3019 = vshrl.u32 %v3018, 7
    %v3020 = vsub.s32 0, %v3019
    %v3021 = vrot.slane %v2955, %v3020
    %v3022 = vlaneseq
    %v3023 = vshrl.u32 %v3022, 7
    %v3024 = vsub.s32 0, %v3023
    %v3025 = vrot.slane %v2938, %v3024
    %v3026 = vlaneseq
    %v3027 = vshrl.u32 %v3026, 7
    %v3028 = vsub.s32 0, %v3027
    %v3029 = vrot.slane %v2952, %v3028
    %v3030 = vlaneseq
    %v3031 = vshrl.u32 %v3030, 7
    %v3032 = vsub.s32 0, %v3031
    %v3033 = vrot.slane %v2954, %v3032
    %v3034 = vlaneseq
    %v3035 = vshrl.u32 %v3034, 7
    %v3036 = vsub.s32 0, %v3035
    %v3037 = vrot.slane %v2956, %v3036
    %v3038 = vlaneseq
    %v3039 = vshrl.u32 %v3038, 7
    %v3040 = vsub.s32 0, %v3039
    %v3041 = vrot.slane %v2980, %v3040
    %v3042 = vlaneseq
    %v3043 = vshrl.u32 %v3042, 7
    %v3044 = vsub.s32 0, %v3043
    %v3045 = vrot.slane %v2994, %v3044
    %v3046 = vlaneseq
    %v3047 = vshrl.u32 %v3046, 7
    %v3048 = vsub.s32 0, %v3047
    %v3049 = vrot.slane %v3002, %v3048
    %v3050 = vlaneseq
    %v3051 = vshrl.u32 %v3050, 7
    %v3052 = vsub.s32 0, %v3051
    %v3053 = vrot.slane %v3004, %v3052
    %v3054 = vlaneseq
    %v3055 = vshrl.u32 %v3054, 7
    %v3056 = vsub.s32 0, %v3055
    %v3057 = vrot.slane %v2987, %v3056
    %v3058 = vlaneseq
    %v3059 = vshrl.u32 %v3058, 7
    %v3060 = vsub.s32 0, %v3059
    %v3061 = vrot.slane %v3001, %v3060
    %v3062 = vlaneseq
    %v3063 = vshrl.u32 %v3062, 7
    %v3064 = vsub.s32 0, %v3063
    %v3065 = vrot.slane %v3003, %v3064
    %v3066 = vlaneseq
    %v3067 = vshrl.u32 %v3066, 7
    %v3068 = vsub.s32 0, %v3067
    %v3069 = vrot.slane %v3005, %v3068
    %v3086 = vmul.f32 %v3009, %v1530
    %v3087 = vmul.f32 %v3009, %v1531
    %v3088 = vmul.f32 %v3013, %v1530
    %v3089 = vmul.f32 %v3013, %v1531
    %v3090 = vmul.f32 %v3017, %v1530
    %v3091 = vmul.f32 %v3017, %v1531
    %v3092 = vmul.f32 %v3021, %v1530
    %v3093 = vmul.f32 %v3021, %v1531
    %v3094 = vmul.f32 %v3025, %v1530
    %v3095 = vmul.f32 %v3025, %v1531
    %v3096 = vmul.f32 %v3029, %v1530
    %v3097 = vmul.f32 %v3029, %v1531
    %v3098 = vmul.f32 %v3033, %v1530
    %v3099 = vmul.f32 %v3033, %v1531
    %v3100 = vmul.f32 %v3037, %v1530
    %v3101 = vmul.f32 %v3037, %v1531
    %v3102 = vmul.f32 %v3041, %v1530
    %v3103 = vmul.f32 %v3041, %v1531
    %v3104 = vmul.f32 %v3045, %v1530
    %v3105 = vmul.f32 %v3045, %v1531
    %v3106 = vmul.f32 %v3049, %v1530
    %v3107 = vmul.f32 %v3049, %v1531
    %v3108 = vmul.f32 %v3053, %v1530
    %v3109 = vmul.f32 %v3053, %v1531
    %v3110 = vmul.f32 %v3057, %v1530
    %v3111 = vmul.f32 %v3057, %v1531
    %v3112 = vmul.f32 %v3061, %v1530
    %v3113 = vmul.f32 %v3061, %v1531
    %v3114 = vmul.f32 %v3065, %v1530
    %v3115 = vmul.f32 %v3065, %v1531
    %v3116 = vmul.f32 %v3069, %v1530
    %v3117 = vmul.f32 %v3069, %v1531
    %v3120 = vcombine.high %v1548, %v1548
    %v3122 = vunpack.c.l.s4 1966171168
    %v3123 = vunpack.c.0.s8 %v3122
    %v3124 = vlaneseq
    %v3125 = vshrl.u32 %v3124, 7
    %v3126 = vsub.s32 %v3123, %v3125
    %v3127 = vrot.slane %v1548, %v3126
    %v3129 = vunpack.c.l.s4 1966171168
    %v3130 = vunpack.c.0.s8 %v3129
    %v3131 = vlaneseq
    %v3132 = vshrl.u32 %v3131, 7
    %v3133 = vsub.s32 %v3130, %v3132
    %v3134 = vrot.slane %v3120, %v3133
    %v3135 = vcombine.high %v3127, %v3127
    %v3136 = vcombine.high %v3134, %v3134
    %v3138 = vunpack.c.l.s4 1966171168
    %v3139 = vunpack.c.0.s8 %v3138
    %v3140 = vlaneseq
    %v3141 = vshrl.u32 %v3140, 7
    %v3142 = vsub.s32 %v3139, %v3141
    %v3143 = vrot.slane %v3127, %v3142
    %v3145 = vunpack.c.l.s4 1966171168
    %v3146 = vunpack.c.0.s8 %v3145
    %v3147 = vlaneseq
    %v3148 = vshrl.u32 %v3147, 7
    %v3149 = vsub.s32 %v3146, %v3148
    %v3150 = vrot.slane %v3134, %v3149
    %v3152 = vunpack.c.l.s4 1966171168
    %v3153 = vunpack.c.0.s8 %v3152
    %v3154 = vlaneseq
    %v3155 = vshrl.u32 %v3154, 7
    %v3156 = vsub.s32 %v3153, %v3155
    %v3157 = vrot.slane %v3135, %v3156
    %v3159 = vunpack.c.l.s4 1966171168
    %v3160 = vunpack.c.0.s8 %v3159
    %v3161 = vlaneseq
    %v3162 = vshrl.u32 %v3161, 7
    %v3163 = vsub.s32 %v3160, %v3162
    %v3164 = vrot.slane %v3136, %v3163
    %v3165 = vcombine.high %v3143, %v3143
    %v3166 = vcombine.high %v3150, %v3150
    %v3167 = vcombine.high %v3157, %v3157
    %v3168 = vcombine.high %v3164, %v3164
    %v3169 = vcombine.high %v1549, %v1549
    %v3171 = vunpack.c.l.s4 1966171168
    %v3172 = vunpack.c.0.s8 %v3171
    %v3173 = vlaneseq
    %v3174 = vshrl.u32 %v3173, 7
    %v3175 = vsub.s32 %v3172, %v3174
    %v3176 = vrot.slane %v1549, %v3175
    %v3178 = vunpack.c.l.s4 1966171168
    %v3179 = vunpack.c.0.s8 %v3178
    %v3180 = vlaneseq
    %v3181 = vshrl.u32 %v3180, 7
    %v3182 = vsub.s32 %v3179, %v3181
    %v3183 = vrot.slane %v3169, %v3182
    %v3184 = vcombine.high %v3176, %v3176
    %v3185 = vcombine.high %v3183, %v3183
    %v3187 = vunpack.c.l.s4 1966171168
    %v3188 = vunpack.c.0.s8 %v3187
    %v3189 = vlaneseq
    %v3190 = vshrl.u32 %v3189, 7
    %v3191 = vsub.s32 %v3188, %v3190
    %v3192 = vrot.slane %v3176, %v3191
    %v3194 = vunpack.c.l.s4 1966171168
    %v3195 = vunpack.c.0.s8 %v3194
    %v3196 = vlaneseq
    %v3197 = vshrl.u32 %v3196, 7
    %v3198 = vsub.s32 %v3195, %v3197
    %v3199 = vrot.slane %v3183, %v3198
    %v3201 = vunpack.c.l.s4 1966171168
    %v3202 = vunpack.c.0.s8 %v3201
    %v3203 = vlaneseq
    %v3204 = vshrl.u32 %v3203, 7
    %v3205 = vsub.s32 %v3202, %v3204
    %v3206 = vrot.slane %v3184, %v3205
    %v3208 = vunpack.c.l.s4 1966171168
    %v3209 = vunpack.c.0.s8 %v3208
    %v3210 = vlaneseq
    %v3211 = vshrl.u32 %v3210, 7
    %v3212 = vsub.s32 %v3209, %v3211
    %v3213 = vrot.slane %v3185, %v3212
    %v3214 = vcombine.high %v3192, %v3192
    %v3215 = vcombine.high %v3199, %v3199
    %v3216 = vcombine.high %v3206, %v3206
    %v3217 = vcombine.high %v3213, %v3213
    %v3218 = vlaneseq
    %v3219 = vshrl.u32 %v3218, 7
    %v3220 = vsub.s32 0, %v3219
    %v3221 = vrot.slane %v3143, %v3220
    %v3222 = vlaneseq
    %v3223 = vshrl.u32 %v3222, 7
    %v3224 = vsub.s32 0, %v3223
    %v3225 = vrot.slane %v3157, %v3224
    %v3226 = vlaneseq
    %v3227 = vshrl.u32 %v3226, 7
    %v3228 = vsub.s32 0, %v3227
    %v3229 = vrot.slane %v3165, %v3228
    %v3230 = vlaneseq
    %v3231 = vshrl.u32 %v3230, 7
    %v3232 = vsub.s32 0, %v3231
    %v3233 = vrot.slane %v3167, %v3232
    %v3234 = vlaneseq
    %v3235 = vshrl.u32 %v3234, 7
    %v3236 = vsub.s32 0, %v3235
    %v3237 = vrot.slane %v3150, %v3236
    %v3238 = vlaneseq
    %v3239 = vshrl.u32 %v3238, 7
    %v3240 = vsub.s32 0, %v3239
    %v3241 = vrot.slane %v3164, %v3240
    %v3242 = vlaneseq
    %v3243 = vshrl.u32 %v3242, 7
    %v3244 = vsub.s32 0, %v3243
    %v3245 = vrot.slane %v3166, %v3244
    %v3246 = vlaneseq
    %v3247 = vshrl.u32 %v3246, 7
    %v3248 = vsub.s32 0, %v3247
    %v3249 = vrot.slane %v3168, %v3248
    %v3250 = vlaneseq
    %v3251 = vshrl.u32 %v3250, 7
    %v3252 = vsub.s32 0, %v3251
    %v3253 = vrot.slane %v3192, %v3252
    %v3254 = vlaneseq
    %v3255 = vshrl.u32 %v3254, 7
    %v3256 = vsub.s32 0, %v3255
    %v3257 = vrot.slane %v3206, %v3256
    %v3258 = vlaneseq
    %v3259 = vshrl.u32 %v3258, 7
    %v3260 = vsub.s32 0, %v3259
    %v3261 = vrot.slane %v3214, %v3260
    %v3262 = vlaneseq
    %v3263 = vshrl.u32 %v3262, 7
    %v3264 = vsub.s32 0, %v3263
    %v3265 = vrot.slane %v3216, %v3264
    %v3266 = vlaneseq
    %v3267 = vshrl.u32 %v3266, 7
    %v3268 = vsub.s32 0, %v3267
    %v3269 = vrot.slane %v3199, %v3268
    %v3270 = vlaneseq
    %v3271 = vshrl.u32 %v3270, 7
    %v3272 = vsub.s32 0, %v3271
    %v3273 = vrot.slane %v3213, %v3272
    %v3274 = vlaneseq
    %v3275 = vshrl.u32 %v3274, 7
    %v3276 = vsub.s32 0, %v3275
    %v3277 = vrot.slane %v3215, %v3276
    %v3278 = vlaneseq
    %v3279 = vshrl.u32 %v3278, 7
    %v3280 = vsub.s32 0, %v3279
    %v3281 = vrot.slane %v3217, %v3280
    %v3298 = vmul.f32 %v3221, %v1548
    %v3299 = vmul.f32 %v3221, %v1549
    %v3300 = vmul.f32 %v3225, %v1548
    %v3301 = vmul.f32 %v3225, %v1549
    %v3302 = vmul.f32 %v3229, %v1548
    %v3303 = vmul.f32 %v3229, %v1549
    %v3304 = vmul.f32 %v3233, %v1548
    %v3305 = vmul.f32 %v3233, %v1549
    %v3306 = vmul.f32 %v3237, %v1548
    %v3307 = vmul.f32 %v3237, %v1549
    %v3308 = vmul.f32 %v3241, %v1548
    %v3309 = vmul.f32 %v3241, %v1549
    %v3310 = vmul.f32 %v3245, %v1548
    %v3311 = vmul.f32 %v3245, %v1549
    %v3312 = vmul.f32 %v3249, %v1548
    %v3313 = vmul.f32 %v3249, %v1549
    %v3314 = vmul.f32 %v3253, %v1548
    %v3315 = vmul.f32 %v3253, %v1549
    %v3316 = vmul.f32 %v3257, %v1548
    %v3317 = vmul.f32 %v3257, %v1549
    %v3318 = vmul.f32 %v3261, %v1548
    %v3319 = vmul.f32 %v3261, %v1549
    %v3320 = vmul.f32 %v3265, %v1548
    %v3321 = vmul.f32 %v3265, %v1549
    %v3322 = vmul.f32 %v3269, %v1548
    %v3323 = vmul.f32 %v3269, %v1549
    %v3324 = vmul.f32 %v3273, %v1548
    %v3325 = vmul.f32 %v3273, %v1549
    %v3326 = vmul.f32 %v3277, %v1548
    %v3327 = vmul.f32 %v3277, %v1549
    %v3328 = vmul.f32 %v3281, %v1548
    %v3329 = vmul.f32 %v3281, %v1549
    %v3332 = vcombine.high %v1584, %v1584
    %v3334 = vunpack.c.l.s4 1966171168
    %v3335 = vunpack.c.0.s8 %v3334
    %v3336 = vlaneseq
    %v3337 = vshrl.u32 %v3336, 7
    %v3338 = vsub.s32 %v3335, %v3337
    %v3339 = vrot.slane %v1584, %v3338
    %v3341 = vunpack.c.l.s4 1966171168
    %v3342 = vunpack.c.0.s8 %v3341
    %v3343 = vlaneseq
    %v3344 = vshrl.u32 %v3343, 7
    %v3345 = vsub.s32 %v3342, %v3344
    %v3346 = vrot.slane %v3332, %v3345
    %v3347 = vcombine.high %v3339, %v3339
    %v3348 = vcombine.high %v3346, %v3346
    %v3350 = vunpack.c.l.s4 1966171168
    %v3351 = vunpack.c.0.s8 %v3350
    %v3352 = vlaneseq
    %v3353 = vshrl.u32 %v3352, 7
    %v3354 = vsub.s32 %v3351, %v3353
    %v3355 = vrot.slane %v3339, %v3354
    %v3357 = vunpack.c.l.s4 1966171168
    %v3358 = vunpack.c.0.s8 %v3357
    %v3359 = vlaneseq
    %v3360 = vshrl.u32 %v3359, 7
    %v3361 = vsub.s32 %v3358, %v3360
    %v3362 = vrot.slane %v3346, %v3361
    %v3364 = vunpack.c.l.s4 1966171168
    %v3365 = vunpack.c.0.s8 %v3364
    %v3366 = vlaneseq
    %v3367 = vshrl.u32 %v3366, 7
    %v3368 = vsub.s32 %v3365, %v3367
    %v3369 = vrot.slane %v3347, %v3368
    %v3371 = vunpack.c.l.s4 1966171168
    %v3372 = vunpack.c.0.s8 %v3371
    %v3373 = vlaneseq
    %v3374 = vshrl.u32 %v3373, 7
    %v3375 = vsub.s32 %v3372, %v3374
    %v3376 = vrot.slane %v3348, %v3375
    %v3377 = vcombine.high %v3355, %v3355
    %v3378 = vcombine.high %v3362, %v3362
    %v3379 = vcombine.high %v3369, %v3369
    %v3380 = vcombine.high %v3376, %v3376
    %v3381 = vcombine.high %v1585, %v1585
    %v3383 = vunpack.c.l.s4 1966171168
    %v3384 = vunpack.c.0.s8 %v3383
    %v3385 = vlaneseq
    %v3386 = vshrl.u32 %v3385, 7
    %v3387 = vsub.s32 %v3384, %v3386
    %v3388 = vrot.slane %v1585, %v3387
    %v3390 = vunpack.c.l.s4 1966171168
    %v3391 = vunpack.c.0.s8 %v3390
    %v3392 = vlaneseq
    %v3393 = vshrl.u32 %v3392, 7
    %v3394 = vsub.s32 %v3391, %v3393
    %v3395 = vrot.slane %v3381, %v3394
    %v3396 = vcombine.high %v3388, %v3388
    %v3397 = vcombine.high %v3395, %v3395
    %v3399 = vunpack.c.l.s4 1966171168
    %v3400 = vunpack.c.0.s8 %v3399
    %v3401 = vlaneseq
    %v3402 = vshrl.u32 %v3401, 7
    %v3403 = vsub.s32 %v3400, %v3402
    %v3404 = vrot.slane %v3388, %v3403
    %v3406 = vunpack.c.l.s4 1966171168
    %v3407 = vunpack.c.0.s8 %v3406
    %v3408 = vlaneseq
    %v3409 = vshrl.u32 %v3408, 7
    %v3410 = vsub.s32 %v3407, %v3409
    %v3411 = vrot.slane %v3395, %v3410
    %v3413 = vunpack.c.l.s4 1966171168
    %v3414 = vunpack.c.0.s8 %v3413
    %v3415 = vlaneseq
    %v3416 = vshrl.u32 %v3415, 7
    %v3417 = vsub.s32 %v3414, %v3416
    %v3418 = vrot.slane %v3396, %v3417
    %v3420 = vunpack.c.l.s4 1966171168
    %v3421 = vunpack.c.0.s8 %v3420
    %v3422 = vlaneseq
    %v3423 = vshrl.u32 %v3422, 7
    %v3424 = vsub.s32 %v3421, %v3423
    %v3425 = vrot.slane %v3397, %v3424
    %v3426 = vcombine.high %v3404, %v3404
    %v3427 = vcombine.high %v3411, %v3411
    %v3428 = vcombine.high %v3418, %v3418
    %v3429 = vcombine.high %v3425, %v3425
    %v3430 = vlaneseq
    %v3431 = vshrl.u32 %v3430, 7
    %v3432 = vsub.s32 0, %v3431
    %v3433 = vrot.slane %v3355, %v3432
    %v3434 = vlaneseq
    %v3435 = vshrl.u32 %v3434, 7
    %v3436 = vsub.s32 0, %v3435
    %v3437 = vrot.slane %v3369, %v3436
    %v3438 = vlaneseq
    %v3439 = vshrl.u32 %v3438, 7
    %v3440 = vsub.s32 0, %v3439
    %v3441 = vrot.slane %v3377, %v3440
    %v3442 = vlaneseq
    %v3443 = vshrl.u32 %v3442, 7
    %v3444 = vsub.s32 0, %v3443
    %v3445 = vrot.slane %v3379, %v3444
    %v3446 = vlaneseq
    %v3447 = vshrl.u32 %v3446, 7
    %v3448 = vsub.s32 0, %v3447
    %v3449 = vrot.slane %v3362, %v3448
    %v3450 = vlaneseq
    %v3451 = vshrl.u32 %v3450, 7
    %v3452 = vsub.s32 0, %v3451
    %v3453 = vrot.slane %v3376, %v3452
    %v3454 = vlaneseq
    %v3455 = vshrl.u32 %v3454, 7
    %v3456 = vsub.s32 0, %v3455
    %v3457 = vrot.slane %v3378, %v3456
    %v3458 = vlaneseq
    %v3459 = vshrl.u32 %v3458, 7
    %v3460 = vsub.s32 0, %v3459
    %v3461 = vrot.slane %v3380, %v3460
    %v3462 = vlaneseq
    %v3463 = vshrl.u32 %v3462, 7
    %v3464 = vsub.s32 0, %v3463
    %v3465 = vrot.slane %v3404, %v3464
    %v3466 = vlaneseq
    %v3467 = vshrl.u32 %v3466, 7
    %v3468 = vsub.s32 0, %v3467
    %v3469 = vrot.slane %v3418, %v3468
    %v3470 = vlaneseq
    %v3471 = vshrl.u32 %v3470, 7
    %v3472 = vsub.s32 0, %v3471
    %v3473 = vrot.slane %v3426, %v3472
    %v3474 = vlaneseq
    %v3475 = vshrl.u32 %v3474, 7
    %v3476 = vsub.s32 0, %v3475
    %v3477 = vrot.slane %v3428, %v3476
    %v3478 = vlaneseq
    %v3479 = vshrl.u32 %v3478, 7
    %v3480 = vsub.s32 0, %v3479
    %v3481 = vrot.slane %v3411, %v3480
    %v3482 = vlaneseq
    %v3483 = vshrl.u32 %v3482, 7
    %v3484 = vsub.s32 0, %v3483
    %v3485 = vrot.slane %v3425, %v3484
    %v3486 = vlaneseq
    %v3487 = vshrl.u32 %v3486, 7
    %v3488 = vsub.s32 0, %v3487
    %v3489 = vrot.slane %v3427, %v3488
    %v3490 = vlaneseq
    %v3491 = vshrl.u32 %v3490, 7
    %v3492 = vsub.s32 0, %v3491
    %v3493 = vrot.slane %v3429, %v3492
    %v3510 = vmul.f32 %v3433, %v1584
    %v3511 = vmul.f32 %v3433, %v1585
    %v3512 = vmul.f32 %v3437, %v1584
    %v3513 = vmul.f32 %v3437, %v1585
    %v3514 = vmul.f32 %v3441, %v1584
    %v3515 = vmul.f32 %v3441, %v1585
    %v3516 = vmul.f32 %v3445, %v1584
    %v3517 = vmul.f32 %v3445, %v1585
    %v3518 = vmul.f32 %v3449, %v1584
    %v3519 = vmul.f32 %v3449, %v1585
    %v3520 = vmul.f32 %v3453, %v1584
    %v3521 = vmul.f32 %v3453, %v1585
    %v3522 = vmul.f32 %v3457, %v1584
    %v3523 = vmul.f32 %v3457, %v1585
    %v3524 = vmul.f32 %v3461, %v1584
    %v3525 = vmul.f32 %v3461, %v1585
    %v3526 = vmul.f32 %v3465, %v1584
    %v3527 = vmul.f32 %v3465, %v1585
    %v3528 = vmul.f32 %v3469, %v1584
    %v3529 = vmul.f32 %v3469, %v1585
    %v3530 = vmul.f32 %v3473, %v1584
    %v3531 = vmul.f32 %v3473, %v1585
    %v3532 = vmul.f32 %v3477, %v1584
    %v3533 = vmul.f32 %v3477, %v1585
    %v3534 = vmul.f32 %v3481, %v1584
    %v3535 = vmul.f32 %v3481, %v1585
    %v3536 = vmul.f32 %v3485, %v1584
    %v3537 = vmul.f32 %v3485, %v1585
    %v3538 = vmul.f32 %v3489, %v1584
    %v3539 = vmul.f32 %v3489, %v1585
    %v3540 = vmul.f32 %v3493, %v1584
    %v3541 = vmul.f32 %v3493, %v1585
    %v3544 = vcombine.high %v1630, %v1630
    %v3546 = vunpack.c.l.s4 1966171168
    %v3547 = vunpack.c.0.s8 %v3546
    %v3548 = vlaneseq
    %v3549 = vshrl.u32 %v3548, 7
    %v3550 = vsub.s32 %v3547, %v3549
    %v3551 = vrot.slane %v1630, %v3550
    %v3553 = vunpack.c.l.s4 1966171168
    %v3554 = vunpack.c.0.s8 %v3553
    %v3555 = vlaneseq
    %v3556 = vshrl.u32 %v3555, 7
    %v3557 = vsub.s32 %v3554, %v3556
    %v3558 = vrot.slane %v3544, %v3557
    %v3559 = vcombine.high %v3551, %v3551
    %v3560 = vcombine.high %v3558, %v3558
    %v3562 = vunpack.c.l.s4 1966171168
    %v3563 = vunpack.c.0.s8 %v3562
    %v3564 = vlaneseq
    %v3565 = vshrl.u32 %v3564, 7
    %v3566 = vsub.s32 %v3563, %v3565
    %v3567 = vrot.slane %v3551, %v3566
    %v3569 = vunpack.c.l.s4 1966171168
    %v3570 = vunpack.c.0.s8 %v3569
    %v3571 = vlaneseq
    %v3572 = vshrl.u32 %v3571, 7
    %v3573 = vsub.s32 %v3570, %v3572
    %v3574 = vrot.slane %v3558, %v3573
    %v3576 = vunpack.c.l.s4 1966171168
    %v3577 = vunpack.c.0.s8 %v3576
    %v3578 = vlaneseq
    %v3579 = vshrl.u32 %v3578, 7
    %v3580 = vsub.s32 %v3577, %v3579
    %v3581 = vrot.slane %v3559, %v3580
    %v3583 = vunpack.c.l.s4 1966171168
    %v3584 = vunpack.c.0.s8 %v3583
    %v3585 = vlaneseq
    %v3586 = vshrl.u32 %v3585, 7
    %v3587 = vsub.s32 %v3584, %v3586
    %v3588 = vrot.slane %v3560, %v3587
    %v3589 = vcombine.high %v3567, %v3567
    %v3590 = vcombine.high %v3574, %v3574
    %v3591 = vcombine.high %v3581, %v3581
    %v3592 = vcombine.high %v3588, %v3588
    %v3593 = vcombine.high %v1631, %v1631
    %v3595 = vunpack.c.l.s4 1966171168
    %v3596 = vunpack.c.0.s8 %v3595
    %v3597 = vlaneseq
    %v3598 = vshrl.u32 %v3597, 7
    %v3599 = vsub.s32 %v3596, %v3598
    %v3600 = vrot.slane %v1631, %v3599
    %v3602 = vunpack.c.l.s4 1966171168
    %v3603 = vunpack.c.0.s8 %v3602
    %v3604 = vlaneseq
    %v3605 = vshrl.u32 %v3604, 7
    %v3606 = vsub.s32 %v3603, %v3605
    %v3607 = vrot.slane %v3593, %v3606
    %v3608 = vcombine.high %v3600, %v3600
    %v3609 = vcombine.high %v3607, %v3607
    %v3611 = vunpack.c.l.s4 1966171168
    %v3612 = vunpack.c.0.s8 %v3611
    %v3613 = vlaneseq
    %v3614 = vshrl.u32 %v3613, 7
    %v3615 = vsub.s32 %v3612, %v3614
    %v3616 = vrot.slane %v3600, %v3615
    %v3618 = vunpack.c.l.s4 1966171168
    %v3619 = vunpack.c.0.s8 %v3618
    %v3620 = vlaneseq
    %v3621 = vshrl.u32 %v3620, 7
    %v3622 = vsub.s32 %v3619, %v3621
    %v3623 = vrot.slane %v3607, %v3622
    %v3625 = vunpack.c.l.s4 1966171168
    %v3626 = vunpack.c.0.s8 %v3625
    %v3627 = vlaneseq
    %v3628 = vshrl.u32 %v3627, 7
    %v3629 = vsub.s32 %v3626, %v3628
    %v3630 = vrot.slane %v3608, %v3629
    %v3632 = vunpack.c.l.s4 1966171168
    %v3633 = vunpack.c.0.s8 %v3632
    %v3634 = vlaneseq
    %v3635 = vshrl.u32 %v3634, 7
    %v3636 = vsub.s32 %v3633, %v3635
    %v3637 = vrot.slane %v3609, %v3636
    %v3638 = vcombine.high %v3616, %v3616
    %v3639 = vcombine.high %v3623, %v3623
    %v3640 = vcombine.high %v3630, %v3630
    %v3641 = vcombine.high %v3637, %v3637
    %v3642 = vlaneseq
    %v3643 = vshrl.u32 %v3642, 7
    %v3644 = vsub.s32 0, %v3643
    %v3645 = vrot.slane %v3567, %v3644
    %v3646 = vlaneseq
    %v3647 = vshrl.u32 %v3646, 7
    %v3648 = vsub.s32 0, %v3647
    %v3649 = vrot.slane %v3581, %v3648
    %v3650 = vlaneseq
    %v3651 = vshrl.u32 %v3650, 7
    %v3652 = vsub.s32 0, %v3651
    %v3653 = vrot.slane %v3589, %v3652
    %v3654 = vlaneseq
    %v3655 = vshrl.u32 %v3654, 7
    %v3656 = vsub.s32 0, %v3655
    %v3657 = vrot.slane %v3591, %v3656
    %v3658 = vlaneseq
    %v3659 = vshrl.u32 %v3658, 7
    %v3660 = vsub.s32 0, %v3659
    %v3661 = vrot.slane %v3574, %v3660
    %v3662 = vlaneseq
    %v3663 = vshrl.u32 %v3662, 7
    %v3664 = vsub.s32 0, %v3663
    %v3665 = vrot.slane %v3588, %v3664
    %v3666 = vlaneseq
    %v3667 = vshrl.u32 %v3666, 7
    %v3668 = vsub.s32 0, %v3667
    %v3669 = vrot.slane %v3590, %v3668
    %v3670 = vlaneseq
    %v3671 = vshrl.u32 %v3670, 7
    %v3672 = vsub.s32 0, %v3671
    %v3673 = vrot.slane %v3592, %v3672
    %v3674 = vlaneseq
    %v3675 = vshrl.u32 %v3674, 7
    %v3676 = vsub.s32 0, %v3675
    %v3677 = vrot.slane %v3616, %v3676
    %v3678 = vlaneseq
    %v3679 = vshrl.u32 %v3678, 7
    %v3680 = vsub.s32 0, %v3679
    %v3681 = vrot.slane %v3630, %v3680
    %v3682 = vlaneseq
    %v3683 = vshrl.u32 %v3682, 7
    %v3684 = vsub.s32 0, %v3683
    %v3685 = vrot.slane %v3638, %v3684
    %v3686 = vlaneseq
    %v3687 = vshrl.u32 %v3686, 7
    %v3688 = vsub.s32 0, %v3687
    %v3689 = vrot.slane %v3640, %v3688
    %v3690 = vlaneseq
    %v3691 = vshrl.u32 %v3690, 7
    %v3692 = vsub.s32 0, %v3691
    %v3693 = vrot.slane %v3623, %v3692
    %v3694 = vlaneseq
    %v3695 = vshrl.u32 %v3694, 7
    %v3696 = vsub.s32 0, %v3695
    %v3697 = vrot.slane %v3637, %v3696
    %v3698 = vlaneseq
    %v3699 = vshrl.u32 %v3698, 7
    %v3700 = vsub.s32 0, %v3699
    %v3701 = vrot.slane %v3639, %v3700
    %v3702 = vlaneseq
    %v3703 = vshrl.u32 %v3702, 7
    %v3704 = vsub.s32 0, %v3703
    %v3705 = vrot.slane %v3641, %v3704
    %v3722 = vmul.f32 %v3645, %v1630
    %v3723 = vmul.f32 %v3645, %v1631
    %v3724 = vmul.f32 %v3649, %v1630
    %v3725 = vmul.f32 %v3649, %v1631
    %v3726 = vmul.f32 %v3653, %v1630
    %v3727 = vmul.f32 %v3653, %v1631
    %v3728 = vmul.f32 %v3657, %v1630
    %v3729 = vmul.f32 %v3657, %v1631
    %v3730 = vmul.f32 %v3661, %v1630
    %v3731 = vmul.f32 %v3661, %v1631
    %v3732 = vmul.f32 %v3665, %v1630
    %v3733 = vmul.f32 %v3665, %v1631
    %v3734 = vmul.f32 %v3669, %v1630
    %v3735 = vmul.f32 %v3669, %v1631
    %v3736 = vmul.f32 %v3673, %v1630
    %v3737 = vmul.f32 %v3673, %v1631
    %v3738 = vmul.f32 %v3677, %v1630
    %v3739 = vmul.f32 %v3677, %v1631
    %v3740 = vmul.f32 %v3681, %v1630
    %v3741 = vmul.f32 %v3681, %v1631
    %v3742 = vmul.f32 %v3685, %v1630
    %v3743 = vmul.f32 %v3685, %v1631
    %v3744 = vmul.f32 %v3689, %v1630
    %v3745 = vmul.f32 %v3689, %v1631
    %v3746 = vmul.f32 %v3693, %v1630
    %v3747 = vmul.f32 %v3693, %v1631
    %v3748 = vmul.f32 %v3697, %v1630
    %v3749 = vmul.f32 %v3697, %v1631
    %v3750 = vmul.f32 %v3701, %v1630
    %v3751 = vmul.f32 %v3701, %v1631
    %v3752 = vmul.f32 %v3705, %v1630
    %v3753 = vmul.f32 %v3705, %v1631
    %v3754 = vadd.f32 %v3510, %v3722
    %v3755 = vadd.f32 %v3511, %v3723
    %v3756 = vadd.f32 %v3512, %v3724
    %v3757 = vadd.f32 %v3513, %v3725
    %v3758 = vadd.f32 %v3514, %v3726
    %v3759 = vadd.f32 %v3515, %v3727
    %v3760 = vadd.f32 %v3516, %v3728
    %v3761 = vadd.f32 %v3517, %v3729
    %v3762 = vadd.f32 %v3518, %v3730
    %v3763 = vadd.f32 %v3519, %v3731
    %v3764 = vadd.f32 %v3520, %v3732
    %v3765 = vadd.f32 %v3521, %v3733
    %v3766 = vadd.f32 %v3522, %v3734
    %v3767 = vadd.f32 %v3523, %v3735
    %v3768 = vadd.f32 %v3524, %v3736
    %v3769 = vadd.f32 %v3525, %v3737
    %v3770 = vadd.f32 %v3526, %v3738
    %v3771 = vadd.f32 %v3527, %v3739
    %v3772 = vadd.f32 %v3528, %v3740
    %v3773 = vadd.f32 %v3529, %v3741
    %v3774 = vadd.f32 %v3530, %v3742
    %v3775 = vadd.f32 %v3531, %v3743
    %v3776 = vadd.f32 %v3532, %v3744
    %v3777 = vadd.f32 %v3533, %v3745
    %v3778 = vadd.f32 %v3534, %v3746
    %v3779 = vadd.f32 %v3535, %v3747
    %v3780 = vadd.f32 %v3536, %v3748
    %v3781 = vadd.f32 %v3537, %v3749
    %v3782 = vadd.f32 %v3538, %v3750
    %v3783 = vadd.f32 %v3539, %v3751
    %v3784 = vadd.f32 %v3540, %v3752
    %v3785 = vadd.f32 %v3541, %v3753
    %v3788 = vcombine.high %v1664, %v1664
    %v3790 = vunpack.c.l.s4 1966171168
    %v3791 = vunpack.c.0.s8 %v3790
    %v3792 = vlaneseq
    %v3793 = vshrl.u32 %v3792, 7
    %v3794 = vsub.s32 %v3791, %v3793
    %v3795 = vrot.slane %v1664, %v3794
    %v3797 = vunpack.c.l.s4 1966171168
    %v3798 = vunpack.c.0.s8 %v3797
    %v3799 = vlaneseq
    %v3800 = vshrl.u32 %v3799, 7
    %v3801 = vsub.s32 %v3798, %v3800
    %v3802 = vrot.slane %v3788, %v3801
    %v3803 = vcombine.high %v3795, %v3795
    %v3804 = vcombine.high %v3802, %v3802
    %v3806 = vunpack.c.l.s4 1966171168
    %v3807 = vunpack.c.0.s8 %v3806
    %v3808 = vlaneseq
    %v3809 = vshrl.u32 %v3808, 7
    %v3810 = vsub.s32 %v3807, %v3809
    %v3811 = vrot.slane %v3795, %v3810
    %v3813 = vunpack.c.l.s4 1966171168
    %v3814 = vunpack.c.0.s8 %v3813
    %v3815 = vlaneseq
    %v3816 = vshrl.u32 %v3815, 7
    %v3817 = vsub.s32 %v3814, %v3816
    %v3818 = vrot.slane %v3802, %v3817
    %v3820 = vunpack.c.l.s4 1966171168
    %v3821 = vunpack.c.0.s8 %v3820
    %v3822 = vlaneseq
    %v3823 = vshrl.u32 %v3822, 7
    %v3824 = vsub.s32 %v3821, %v3823
    %v3825 = vrot.slane %v3803, %v3824
    %v3827 = vunpack.c.l.s4 1966171168
    %v3828 = vunpack.c.0.s8 %v3827
    %v3829 = vlaneseq
    %v3830 = vshrl.u32 %v3829, 7
    %v3831 = vsub.s32 %v3828, %v3830
    %v3832 = vrot.slane %v3804, %v3831
    %v3833 = vcombine.high %v3811, %v3811
    %v3834 = vcombine.high %v3818, %v3818
    %v3835 = vcombine.high %v3825, %v3825
    %v3836 = vcombine.high %v3832, %v3832
    %v3837 = vcombine.high %v1665, %v1665
    %v3839 = vunpack.c.l.s4 1966171168
    %v3840 = vunpack.c.0.s8 %v3839
    %v3841 = vlaneseq
    %v3842 = vshrl.u32 %v3841, 7
    %v3843 = vsub.s32 %v3840, %v3842
    %v3844 = vrot.slane %v1665, %v3843
    %v3846 = vunpack.c.l.s4 1966171168
    %v3847 = vunpack.c.0.s8 %v3846
    %v3848 = vlaneseq
    %v3849 = vshrl.u32 %v3848, 7
    %v3850 = vsub.s32 %v3847, %v3849
    %v3851 = vrot.slane %v3837, %v3850
    %v3852 = vcombine.high %v3844, %v3844
    %v3853 = vcombine.high %v3851, %v3851
    %v3855 = vunpack.c.l.s4 1966171168
    %v3856 = vunpack.c.0.s8 %v3855
    %v3857 = vlaneseq
    %v3858 = vshrl.u32 %v3857, 7
    %v3859 = vsub.s32 %v3856, %v3858
    %v3860 = vrot.slane %v3844, %v3859
    %v3862 = vunpack.c.l.s4 1966171168
    %v3863 = vunpack.c.0.s8 %v3862
    %v3864 = vlaneseq
    %v3865 = vshrl.u32 %v3864, 7
    %v3866 = vsub.s32 %v3863, %v3865
    %v3867 = vrot.slane %v3851, %v3866
    %v3869 = vunpack.c.l.s4 1966171168
    %v3870 = vunpack.c.0.s8 %v3869
    %v3871 = vlaneseq
    %v3872 = vshrl.u32 %v3871, 7
    %v3873 = vsub.s32 %v3870, %v3872
    %v3874 = vrot.slane %v3852, %v3873
    %v3876 = vunpack.c.l.s4 1966171168
    %v3877 = vunpack.c.0.s8 %v3876
    %v3878 = vlaneseq
    %v3879 = vshrl.u32 %v3878, 7
    %v3880 = vsub.s32 %v3877, %v3879
    %v3881 = vrot.slane %v3853, %v3880
    %v3882 = vcombine.high %v3860, %v3860
    %v3883 = vcombine.high %v3867, %v3867
    %v3884 = vcombine.high %v3874, %v3874
    %v3885 = vcombine.high %v3881, %v3881
    %v3886 = vlaneseq
    %v3887 = vshrl.u32 %v3886, 7
    %v3888 = vsub.s32 0, %v3887
    %v3889 = vrot.slane %v3811, %v3888
    %v3890 = vlaneseq
    %v3891 = vshrl.u32 %v3890, 7
    %v3892 = vsub.s32 0, %v3891
    %v3893 = vrot.slane %v3825, %v3892
    %v3894 = vlaneseq
    %v3895 = vshrl.u32 %v3894, 7
    %v3896 = vsub.s32 0, %v3895
    %v3897 = vrot.slane %v3833, %v3896
    %v3898 = vlaneseq
    %v3899 = vshrl.u32 %v3898, 7
    %v3900 = vsub.s32 0, %v3899
    %v3901 = vrot.slane %v3835, %v3900
    %v3902 = vlaneseq
    %v3903 = vshrl.u32 %v3902, 7
    %v3904 = vsub.s32 0, %v3903
    %v3905 = vrot.slane %v3818, %v3904
    %v3906 = vlaneseq
    %v3907 = vshrl.u32 %v3906, 7
    %v3908 = vsub.s32 0, %v3907
    %v3909 = vrot.slane %v3832, %v3908
    %v3910 = vlaneseq
    %v3911 = vshrl.u32 %v3910, 7
    %v3912 = vsub.s32 0, %v3911
    %v3913 = vrot.slane %v3834, %v3912
    %v3914 = vlaneseq
    %v3915 = vshrl.u32 %v3914, 7
    %v3916 = vsub.s32 0, %v3915
    %v3917 = vrot.slane %v3836, %v3916
    %v3918 = vlaneseq
    %v3919 = vshrl.u32 %v3918, 7
    %v3920 = vsub.s32 0, %v3919
    %v3921 = vrot.slane %v3860, %v3920
    %v3922 = vlaneseq
    %v3923 = vshrl.u32 %v3922, 7
    %v3924 = vsub.s32 0, %v3923
    %v3925 = vrot.slane %v3874, %v3924
    %v3926 = vlaneseq
    %v3927 = vshrl.u32 %v3926, 7
    %v3928 = vsub.s32 0, %v3927
    %v3929 = vrot.slane %v3882, %v3928
    %v3930 = vlaneseq
    %v3931 = vshrl.u32 %v3930, 7
    %v3932 = vsub.s32 0, %v3931
    %v3933 = vrot.slane %v3884, %v3932
    %v3934 = vlaneseq
    %v3935 = vshrl.u32 %v3934, 7
    %v3936 = vsub.s32 0, %v3935
    %v3937 = vrot.slane %v3867, %v3936
    %v3938 = vlaneseq
    %v3939 = vshrl.u32 %v3938, 7
    %v3940 = vsub.s32 0, %v3939
    %v3941 = vrot.slane %v3881, %v3940
    %v3942 = vlaneseq
    %v3943 = vshrl.u32 %v3942, 7
    %v3944 = vsub.s32 0, %v3943
    %v3945 = vrot.slane %v3883, %v3944
    %v3946 = vlaneseq
    %v3947 = vshrl.u32 %v3946, 7
    %v3948 = vsub.s32 0, %v3947
    %v3949 = vrot.slane %v3885, %v3948
    %v3966 = vmul.f32 %v3889, %v1664
    %v3967 = vmul.f32 %v3889, %v1665
    %v3968 = vmul.f32 %v3893, %v1664
    %v3969 = vmul.f32 %v3893, %v1665
    %v3970 = vmul.f32 %v3897, %v1664
    %v3971 = vmul.f32 %v3897, %v1665
    %v3972 = vmul.f32 %v3901, %v1664
    %v3973 = vmul.f32 %v3901, %v1665
    %v3974 = vmul.f32 %v3905, %v1664
    %v3975 = vmul.f32 %v3905, %v1665
    %v3976 = vmul.f32 %v3909, %v1664
    %v3977 = vmul.f32 %v3909, %v1665
    %v3978 = vmul.f32 %v3913, %v1664
    %v3979 = vmul.f32 %v3913, %v1665
    %v3980 = vmul.f32 %v3917, %v1664
    %v3981 = vmul.f32 %v3917, %v1665
    %v3982 = vmul.f32 %v3921, %v1664
    %v3983 = vmul.f32 %v3921, %v1665
    %v3984 = vmul.f32 %v3925, %v1664
    %v3985 = vmul.f32 %v3925, %v1665
    %v3986 = vmul.f32 %v3929, %v1664
    %v3987 = vmul.f32 %v3929, %v1665
    %v3988 = vmul.f32 %v3933, %v1664
    %v3989 = vmul.f32 %v3933, %v1665
    %v3990 = vmul.f32 %v3937, %v1664
    %v3991 = vmul.f32 %v3937, %v1665
    %v3992 = vmul.f32 %v3941, %v1664
    %v3993 = vmul.f32 %v3941, %v1665
    %v3994 = vmul.f32 %v3945, %v1664
    %v3995 = vmul.f32 %v3945, %v1665
    %v3996 = vmul.f32 %v3949, %v1664
    %v3997 = vmul.f32 %v3949, %v1665
    %v3998 = vadd.f32 %v3754, %v3966
    %v3999 = vadd.f32 %v3755, %v3967
    %v4000 = vadd.f32 %v3756, %v3968
    %v4001 = vadd.f32 %v3757, %v3969
    %v4002 = vadd.f32 %v3758, %v3970
    %v4003 = vadd.f32 %v3759, %v3971
    %v4004 = vadd.f32 %v3760, %v3972
    %v4005 = vadd.f32 %v3761, %v3973
    %v4006 = vadd.f32 %v3762, %v3974
    %v4007 = vadd.f32 %v3763, %v3975
    %v4008 = vadd.f32 %v3764, %v3976
    %v4009 = vadd.f32 %v3765, %v3977
    %v4010 = vadd.f32 %v3766, %v3978
    %v4011 = vadd.f32 %v3767, %v3979
    %v4012 = vadd.f32 %v3768, %v3980
    %v4013 = vadd.f32 %v3769, %v3981
    %v4014 = vadd.f32 %v3770, %v3982
    %v4015 = vadd.f32 %v3771, %v3983
    %v4016 = vadd.f32 %v3772, %v3984
    %v4017 = vadd.f32 %v3773, %v3985
    %v4018 = vadd.f32 %v3774, %v3986
    %v4019 = vadd.f32 %v3775, %v3987
    %v4020 = vadd.f32 %v3776, %v3988
    %v4021 = vadd.f32 %v3777, %v3989
    %v4022 = vadd.f32 %v3778, %v3990
    %v4023 = vadd.f32 %v3779, %v3991
    %v4024 = vadd.f32 %v3780, %v3992
    %v4025 = vadd.f32 %v3781, %v3993
    %v4026 = vadd.f32 %v3782, %v3994
    %v4027 = vadd.f32 %v3783, %v3995
    %v4028 = vadd.f32 %v3784, %v3996
    %v4029 = vadd.f32 %v3785, %v3997
    %v4030 = vadd.f32 %v3998, 0.35
    %v4031 = vadd.f32 %v3999, 0.35
    %v4032 = vadd.f32 %v4000, 0.35
    %v4033 = vadd.f32 %v4001, 0.35
    %v4034 = vadd.f32 %v4002, 0.35
    %v4035 = vadd.f32 %v4003, 0.35
    %v4036 = vadd.f32 %v4004, 0.35
    %v4037 = vadd.f32 %v4005, 0.35
    %v4038 = vadd.f32 %v4006, 0.35
    %v4039 = vadd.f32 %v4007, 0.35
    %v4040 = vadd.f32 %v4008, 0.35
    %v4041 = vadd.f32 %v4009, 0.35
    %v4042 = vadd.f32 %v4010, 0.35
    %v4043 = vadd.f32 %v4011, 0.35
    %v4044 = vadd.f32 %v4012, 0.35
    %v4045 = vadd.f32 %v4013, 0.35
    %v4046 = vadd.f32 %v4014, 0.35
    %v4047 = vadd.f32 %v4015, 0.35
    %v4048 = vadd.f32 %v4016, 0.35
    %v4049 = vadd.f32 %v4017, 0.35
    %v4050 = vadd.f32 %v4018, 0.35
    %v4051 = vadd.f32 %v4019, 0.35
    %v4052 = vadd.f32 %v4020, 0.35
    %v4053 = vadd.f32 %v4021, 0.35
    %v4054 = vadd.f32 %v4022, 0.35
    %v4055 = vadd.f32 %v4023, 0.35
    %v4056 = vadd.f32 %v4024, 0.35
    %v4057 = vadd.f32 %v4025, 0.35
    %v4058 = vadd.f32 %v4026, 0.35
    %v4059 = vadd.f32 %v4027, 0.35
    %v4060 = vadd.f32 %v4028, 0.35
    %v4061 = vadd.f32 %v4029, 0.35
    %v4062 = vmul.f32 %v2438, %v2438
    %v4063 = vmul.f32 %v2439, %v2439
    %v4064 = vmul.f32 %v2440, %v2440
    %v4065 = vmul.f32 %v2441, %v2441
    %v4066 = vmul.f32 %v2442, %v2442
    %v4067 = vmul.f32 %v2443, %v2443
    %v4068 = vmul.f32 %v2444, %v2444
    %v4069 = vmul.f32 %v2445, %v2445
    %v4070 = vmul.f32 %v2446, %v2446
    %v4071 = vmul.f32 %v2447, %v2447
    %v4072 = vmul.f32 %v2448, %v2448
    %v4073 = vmul.f32 %v2449, %v2449
    %v4074 = vmul.f32 %v2450, %v2450
    %v4075 = vmul.f32 %v2451, %v2451
    %v4076 = vmul.f32 %v2452, %v2452
    %v4077 = vmul.f32 %v2453, %v2453
    %v4078 = vmul.f32 %v2454, %v2454
    %v4079 = vmul.f32 %v2455, %v2455
    %v4080 = vmul.f32 %v2456, %v2456
    %v4081 = vmul.f32 %v2457, %v2457
    %v4082 = vmul.f32 %v2458, %v2458
    %v4083 = vmul.f32 %v2459, %v2459
    %v4084 = vmul.f32 %v2460, %v2460
    %v4085 = vmul.f32 %v2461, %v2461
    %v4086 = vmul.f32 %v2462, %v2462
    %v4087 = vmul.f32 %v2463, %v2463
    %v4088 = vmul.f32 %v2464, %v2464
    %v4089 = vmul.f32 %v2465, %v2465
    %v4090 = vmul.f32 %v2466, %v2466
    %v4091 = vmul.f32 %v2467, %v2467
    %v4092 = vmul.f32 %v2468, %v2468
    %v4093 = vmul.f32 %v2469, %v2469
    %v4094 = vmul.f32 %v4062, %v2438
    %v4095 = vmul.f32 %v4063, %v2439
    %v4096 = vmul.f32 %v4064, %v2440
    %v4097 = vmul.f32 %v4065, %v2441
    %v4098 = vmul.f32 %v4066, %v2442
    %v4099 = vmul.f32 %v4067, %v2443
    %v4100 = vmul.f32 %v4068, %v2444
    %v4101 = vmul.f32 %v4069, %v2445
    %v4102 = vmul.f32 %v4070, %v2446
    %v4103 = vmul.f32 %v4071, %v2447
    %v4104 = vmul.f32 %v4072, %v2448
    %v4105 = vmul.f32 %v4073, %v2449
    %v4106 = vmul.f32 %v4074, %v2450
    %v4107 = vmul.f32 %v4075, %v2451
    %v4108 = vmul.f32 %v4076, %v2452
    %v4109 = vmul.f32 %v4077, %v2453
    %v4110 = vmul.f32 %v4078, %v2454
    %v4111 = vmul.f32 %v4079, %v2455
    %v4112 = vmul.f32 %v4080, %v2456
    %v4113 = vmul.f32 %v4081, %v2457
    %v4114 = vmul.f32 %v4082, %v2458
    %v4115 = vmul.f32 %v4083, %v2459
    %v4116 = vmul.f32 %v4084, %v2460
    %v4117 = vmul.f32 %v4085, %v2461
    %v4118 = vmul.f32 %v4086, %v2462
    %v4119 = vmul.f32 %v4087, %v2463
    %v4120 = vmul.f32 %v4088, %v2464
    %v4121 = vmul.f32 %v4089, %v2465
    %v4122 = vmul.f32 %v4090, %v2466
    %v4123 = vmul.f32 %v4091, %v2467
    %v4124 = vmul.f32 %v4092, %v2468
    %v4125 = vmul.f32 %v4093, %v2469
    %v4126 = vmul.f32 %v4094, %v2438
    %v4127 = vmul.f32 %v4095, %v2439
    %v4128 = vmul.f32 %v4096, %v2440
    %v4129 = vmul.f32 %v4097, %v2441
    %v4130 = vmul.f32 %v4098, %v2442
    %v4131 = vmul.f32 %v4099, %v2443
    %v4132 = vmul.f32 %v4100, %v2444
    %v4133 = vmul.f32 %v4101, %v2445
    %v4134 = vmul.f32 %v4102, %v2446
    %v4135 = vmul.f32 %v4103, %v2447
    %v4136 = vmul.f32 %v4104, %v2448
    %v4137 = vmul.f32 %v4105, %v2449
    %v4138 = vmul.f32 %v4106, %v2450
    %v4139 = vmul.f32 %v4107, %v2451
    %v4140 = vmul.f32 %v4108, %v2452
    %v4141 = vmul.f32 %v4109, %v2453
    %v4142 = vmul.f32 %v4110, %v2454
    %v4143 = vmul.f32 %v4111, %v2455
    %v4144 = vmul.f32 %v4112, %v2456
    %v4145 = vmul.f32 %v4113, %v2457
    %v4146 = vmul.f32 %v4114, %v2458
    %v4147 = vmul.f32 %v4115, %v2459
    %v4148 = vmul.f32 %v4116, %v2460
    %v4149 = vmul.f32 %v4117, %v2461
    %v4150 = vmul.f32 %v4118, %v2462
    %v4151 = vmul.f32 %v4119, %v2463
    %v4152 = vmul.f32 %v4120, %v2464
    %v4153 = vmul.f32 %v4121, %v2465
    %v4154 = vmul.f32 %v4122, %v2466
    %v4155 = vmul.f32 %v4123, %v2467
    %v4156 = vmul.f32 %v4124, %v2468
    %v4157 = vmul.f32 %v4125, %v2469
    %v4158 = vmul.f32 %v4126, %v2438
    %v4159 = vmul.f32 %v4127, %v2439
    %v4160 = vmul.f32 %v4128, %v2440
    %v4161 = vmul.f32 %v4129, %v2441
    %v4162 = vmul.f32 %v4130, %v2442
    %v4163 = vmul.f32 %v4131, %v2443
    %v4164 = vmul.f32 %v4132, %v2444
    %v4165 = vmul.f32 %v4133, %v2445
    %v4166 = vmul.f32 %v4134, %v2446
    %v4167 = vmul.f32 %v4135, %v2447
    %v4168 = vmul.f32 %v4136, %v2448
    %v4169 = vmul.f32 %v4137, %v2449
    %v4170 = vmul.f32 %v4138, %v2450
    %v4171 = vmul.f32 %v4139, %v2451
    %v4172 = vmul.f32 %v4140, %v2452
    %v4173 = vmul.f32 %v4141, %v2453
    %v4174 = vmul.f32 %v4142, %v2454
    %v4175 = vmul.f32 %v4143, %v2455
    %v4176 = vmul.f32 %v4144, %v2456
    %v4177 = vmul.f32 %v4145, %v2457
    %v4178 = vmul.f32 %v4146, %v2458
    %v4179 = vmul.f32 %v4147, %v2459
    %v4180 = vmul.f32 %v4148, %v2460
    %v4181 = vmul.f32 %v4149, %v2461
    %v4182 = vmul.f32 %v4150, %v2462
    %v4183 = vmul.f32 %v4151, %v2463
    %v4184 = vmul.f32 %v4152, %v2464
    %v4185 = vmul.f32 %v4153, %v2465
    %v4186 = vmul.f32 %v4154, %v2466
    %v4187 = vmul.f32 %v4155, %v2467
    %v4188 = vmul.f32 %v4156, %v2468
    %v4189 = vmul.f32 %v4157, %v2469
    %v4190 = vmul.f32 %v4030, %v4030
    %v4191 = vmul.f32 %v4031, %v4031
    %v4192 = vmul.f32 %v4032, %v4032
    %v4193 = vmul.f32 %v4033, %v4033
    %v4194 = vmul.f32 %v4034, %v4034
    %v4195 = vmul.f32 %v4035, %v4035
    %v4196 = vmul.f32 %v4036, %v4036
    %v4197 = vmul.f32 %v4037, %v4037
    %v4198 = vmul.f32 %v4038, %v4038
    %v4199 = vmul.f32 %v4039, %v4039
    %v4200 = vmul.f32 %v4040, %v4040
    %v4201 = vmul.f32 %v4041, %v4041
    %v4202 = vmul.f32 %v4042, %v4042
    %v4203 = vmul.f32 %v4043, %v4043
    %v4204 = vmul.f32 %v4044, %v4044
    %v4205 = vmul.f32 %v4045, %v4045
    %v4206 = vmul.f32 %v4046, %v4046
    %v4207 = vmul.f32 %v4047, %v4047
    %v4208 = vmul.f32 %v4048, %v4048
    %v4209 = vmul.f32 %v4049, %v4049
    %v4210 = vmul.f32 %v4050, %v4050
    %v4211 = vmul.f32 %v4051, %v4051
    %v4212 = vmul.f32 %v4052, %v4052
    %v4213 = vmul.f32 %v4053, %v4053
    %v4214 = vmul.f32 %v4054, %v4054
    %v4215 = vmul.f32 %v4055, %v4055
    %v4216 = vmul.f32 %v4056, %v4056
    %v4217 = vmul.f32 %v4057, %v4057
    %v4218 = vmul.f32 %v4058, %v4058
    %v4219 = vmul.f32 %v4059, %v4059
    %v4220 = vmul.f32 %v4060, %v4060
    %v4221 = vmul.f32 %v4061, %v4061
    %v4222 = vmul.f32 %v4190, %v4190
    %v4223 = vmul.f32 %v4191, %v4191
    %v4224 = vmul.f32 %v4192, %v4192
    %v4225 = vmul.f32 %v4193, %v4193
    %v4226 = vmul.f32 %v4194, %v4194
    %v4227 = vmul.f32 %v4195, %v4195
    %v4228 = vmul.f32 %v4196, %v4196
    %v4229 = vmul.f32 %v4197, %v4197
    %v4230 = vmul.f32 %v4198, %v4198
    %v4231 = vmul.f32 %v4199, %v4199
    %v4232 = vmul.f32 %v4200, %v4200
    %v4233 = vmul.f32 %v4201, %v4201
    %v4234 = vmul.f32 %v4202, %v4202
    %v4235 = vmul.f32 %v4203, %v4203
    %v4236 = vmul.f32 %v4204, %v4204
    %v4237 = vmul.f32 %v4205, %v4205
    %v4238 = vmul.f32 %v4206, %v4206
    %v4239 = vmul.f32 %v4207, %v4207
    %v4240 = vmul.f32 %v4208, %v4208
    %v4241 = vmul.f32 %v4209, %v4209
    %v4242 = vmul.f32 %v4210, %v4210
    %v4243 = vmul.f32 %v4211, %v4211
    %v4244 = vmul.f32 %v4212, %v4212
    %v4245 = vmul.f32 %v4213, %v4213
    %v4246 = vmul.f32 %v4214, %v4214
    %v4247 = vmul.f32 %v4215, %v4215
    %v4248 = vmul.f32 %v4216, %v4216
    %v4249 = vmul.f32 %v4217, %v4217
    %v4250 = vmul.f32 %v4218, %v4218
    %v4251 = vmul.f32 %v4219, %v4219
    %v4252 = vmul.f32 %v4220, %v4220
    %v4253 = vmul.f32 %v4221, %v4221
    %v4254 = vmul.f32 %v4222, %v4190
    %v4255 = vmul.f32 %v4223, %v4191
    %v4256 = vmul.f32 %v4224, %v4192
    %v4257 = vmul.f32 %v4225, %v4193
    %v4258 = vmul.f32 %v4226, %v4194
    %v4259 = vmul.f32 %v4227, %v4195
    %v4260 = vmul.f32 %v4228, %v4196
    %v4261 = vmul.f32 %v4229, %v4197
    %v4262 = vmul.f32 %v4230, %v4198
    %v4263 = vmul.f32 %v4231, %v4199
    %v4264 = vmul.f32 %v4232, %v4200
    %v4265 = vmul.f32 %v4233, %v4201
    %v4266 = vmul.f32 %v4234, %v4202
    %v4267 = vmul.f32 %v4235, %v4203
    %v4268 = vmul.f32 %v4236, %v4204
    %v4269 = vmul.f32 %v4237, %v4205
    %v4270 = vmul.f32 %v4238, %v4206
    %v4271 = vmul.f32 %v4239, %v4207
    %v4272 = vmul.f32 %v4240, %v4208
    %v4273 = vmul.f32 %v4241, %v4209
    %v4274 = vmul.f32 %v4242, %v4210
    %v4275 = vmul.f32 %v4243, %v4211
    %v4276 = vmul.f32 %v4244, %v4212
    %v4277 = vmul.f32 %v4245, %v4213
    %v4278 = vmul.f32 %v4246, %v4214
    %v4279 = vmul.f32 %v4247, %v4215
    %v4280 = vmul.f32 %v4248, %v4216
    %v4281 = vmul.f32 %v4249, %v4217
    %v4282 = vmul.f32 %v4250, %v4218
    %v4283 = vmul.f32 %v4251, %v4219
    %v4284 = vmul.f32 %v4252, %v4220
    %v4285 = vmul.f32 %v4253, %v4221
    %v4286 = vmul.f32 %v4254, %v4190
    %v4287 = vmul.f32 %v4255, %v4191
    %v4288 = vmul.f32 %v4256, %v4192
    %v4289 = vmul.f32 %v4257, %v4193
    %v4290 = vmul.f32 %v4258, %v4194
    %v4291 = vmul.f32 %v4259, %v4195
    %v4292 = vmul.f32 %v4260, %v4196
    %v4293 = vmul.f32 %v4261, %v4197
    %v4294 = vmul.f32 %v4262, %v4198
    %v4295 = vmul.f32 %v4263, %v4199
    %v4296 = vmul.f32 %v4264, %v4200
    %v4297 = vmul.f32 %v4265, %v4201
    %v4298 = vmul.f32 %v4266, %v4202
    %v4299 = vmul.f32 %v4267, %v4203
    %v4300 = vmul.f32 %v4268, %v4204
    %v4301 = vmul.f32 %v4269, %v4205
    %v4302 = vmul.f32 %v4270, %v4206
    %v4303 = vmul.f32 %v4271, %v4207
    %v4304 = vmul.f32 %v4272, %v4208
    %v4305 = vmul.f32 %v4273, %v4209
    %v4306 = vmul.f32 %v4274, %v4210
    %v4307 = vmul.f32 %v4275, %v4211
    %v4308 = vmul.f32 %v4276, %v4212
    %v4309 = vmul.f32 %v4277, %v4213
    %v4310 = vmul.f32 %v4278, %v4214
    %v4311 = vmul.f32 %v4279, %v4215
    %v4312 = vmul.f32 %v4280, %v4216
    %v4313 = vmul.f32 %v4281, %v4217
    %v4314 = vmul.f32 %v4282, %v4218
    %v4315 = vmul.f32 %v4283, %v4219
    %v4316 = vmul.f32 %v4284, %v4220
    %v4317 = vmul.f32 %v4285, %v4221
    %v4318 = vmul.f32 %v4286, %v4190
    %v4319 = vmul.f32 %v4287, %v4191
    %v4320 = vmul.f32 %v4288, %v4192
    %v4321 = vmul.f32 %v4289, %v4193
    %v4322 = vmul.f32 %v4290, %v4194
    %v4323 = vmul.f32 %v4291, %v4195
    %v4324 = vmul.f32 %v4292, %v4196
    %v4325 = vmul.f32 %v4293, %v4197
    %v4326 = vmul.f32 %v4294, %v4198
    %v4327 = vmul.f32 %v4295, %v4199
    %v4328 = vmul.f32 %v4296, %v4200
    %v4329 = vmul.f32 %v4297, %v4201
    %v4330 = vmul.f32 %v4298, %v4202
    %v4331 = vmul.f32 %v4299, %v4203
    %v4332 = vmul.f32 %v4300, %v4204
    %v4333 = vmul.f32 %v4301, %v4205
    %v4334 = vmul.f32 %v4302, %v4206
    %v4335 = vmul.f32 %v4303, %v4207
    %v4336 = vmul.f32 %v4304, %v4208
    %v4337 = vmul.f32 %v4305, %v4209
    %v4338 = vmul.f32 %v4306, %v4210
    %v4339 = vmul.f32 %v4307, %v4211
    %v4340 = vmul.f32 %v4308, %v4212
    %v4341 = vmul.f32 %v4309, %v4213
    %v4342 = vmul.f32 %v4310, %v4214
    %v4343 = vmul.f32 %v4311, %v4215
    %v4344 = vmul.f32 %v4312, %v4216
    %v4345 = vmul.f32 %v4313, %v4217
    %v4346 = vmul.f32 %v4314, %v4218
    %v4347 = vmul.f32 %v4315, %v4219
    %v4348 = vmul.f32 %v4316, %v4220
    %v4349 = vmul.f32 %v4317, %v4221
    %v4350 = vadd.f32 %v4094, %v4254
    %v4351 = vadd.f32 %v4095, %v4255
    %v4352 = vadd.f32 %v4096, %v4256
    %v4353 = vadd.f32 %v4097, %v4257
    %v4354 = vadd.f32 %v4098, %v4258
    %v4355 = vadd.f32 %v4099, %v4259
    %v4356 = vadd.f32 %v4100, %v4260
    %v4357 = vadd.f32 %v4101, %v4261
    %v4358 = vadd.f32 %v4102, %v4262
    %v4359 = vadd.f32 %v4103, %v4263
    %v4360 = vadd.f32 %v4104, %v4264
    %v4361 = vadd.f32 %v4105, %v4265
    %v4362 = vadd.f32 %v4106, %v4266
    %v4363 = vadd.f32 %v4107, %v4267
    %v4364 = vadd.f32 %v4108, %v4268
    %v4365 = vadd.f32 %v4109, %v4269
    %v4366 = vadd.f32 %v4110, %v4270
    %v4367 = vadd.f32 %v4111, %v4271
    %v4368 = vadd.f32 %v4112, %v4272
    %v4369 = vadd.f32 %v4113, %v4273
    %v4370 = vadd.f32 %v4114, %v4274
    %v4371 = vadd.f32 %v4115, %v4275
    %v4372 = vadd.f32 %v4116, %v4276
    %v4373 = vadd.f32 %v4117, %v4277
    %v4374 = vadd.f32 %v4118, %v4278
    %v4375 = vadd.f32 %v4119, %v4279
    %v4376 = vadd.f32 %v4120, %v4280
    %v4377 = vadd.f32 %v4121, %v4281
    %v4378 = vadd.f32 %v4122, %v4282
    %v4379 = vadd.f32 %v4123, %v4283
    %v4380 = vadd.f32 %v4124, %v4284
    %v4381 = vadd.f32 %v4125, %v4285
    %v4382 = vrcp.pop %v4350
    %v4383 = vmul.f32 %v2874, %v4382
    %v4384 = vrcp.pop %v4351
    %v4385 = vmul.f32 %v2875, %v4384
    %v4386 = vrcp.pop %v4352
    %v4387 = vmul.f32 %v2876, %v4386
    %v4388 = vrcp.pop %v4353
    %v4389 = vmul.f32 %v2877, %v4388
    %v4390 = vrcp.pop %v4354
    %v4391 = vmul.f32 %v2878, %v4390
    %v4392 = vrcp.pop %v4355
    %v4393 = vmul.f32 %v2879, %v4392
    %v4394 = vrcp.pop %v4356
    %v4395 = vmul.f32 %v2880, %v4394
    %v4396 = vrcp.pop %v4357
    %v4397 = vmul.f32 %v2881, %v4396
    %v4398 = vrcp.pop %v4358
    %v4399 = vmul.f32 %v2882, %v4398
    %v4400 = vrcp.pop %v4359
    %v4401 = vmul.f32 %v2883, %v4400
    %v4402 = vrcp.pop %v4360
    %v4403 = vmul.f32 %v2884, %v4402
    %v4404 = vrcp.pop %v4361
    %v4405 = vmul.f32 %v2885, %v4404
    %v4406 = vrcp.pop %v4362
    %v4407 = vmul.f32 %v2886, %v4406
    %v4408 = vrcp.pop %v4363
    %v4409 = vmul.f32 %v2887, %v4408
    %v4410 = vrcp.pop %v4364
    %v4411 = vmul.f32 %v2888, %v4410
    %v4412 = vrcp.pop %v4365
    %v4413 = vmul.f32 %v2889, %v4412
    %v4414 = vrcp.pop %v4366
    %v4415 = vmul.f32 %v2890, %v4414
    %v4416 = vrcp.pop %v4367
    %v4417 = vmul.f32 %v2891, %v4416
    %v4418 = vrcp.pop %v4368
    %v4419 = vmul.f32 %v2892, %v4418
    %v4420 = vrcp.pop %v4369
    %v4421 = vmul.f32 %v2893, %v4420
    %v4422 = vrcp.pop %v4370
    %v4423 = vmul.f32 %v2894, %v4422
    %v4424 = vrcp.pop %v4371
    %v4425 = vmul.f32 %v2895, %v4424
    %v4426 = vrcp.pop %v4372
    %v4427 = vmul.f32 %v2896, %v4426
    %v4428 = vrcp.pop %v4373
    %v4429 = vmul.f32 %v2897, %v4428
    %v4430 = vrcp.pop %v4374
    %v4431 = vmul.f32 %v2898, %v4430
    %v4432 = vrcp.pop %v4375
    %v4433 = vmul.f32 %v2899, %v4432
    %v4434 = vrcp.pop %v4376
    %v4435 = vmul.f32 %v2900, %v4434
    %v4436 = vrcp.pop %v4377
    %v4437 = vmul.f32 %v2901, %v4436
    %v4438 = vrcp.pop %v4378
    %v4439 = vmul.f32 %v2902, %v4438
    %v4440 = vrcp.pop %v4379
    %v4441 = vmul.f32 %v2903, %v4440
    %v4442 = vrcp.pop %v4380
    %v4443 = vmul.f32 %v2904, %v4442
    %v4444 = vrcp.pop %v4381
    %v4445 = vmul.f32 %v2905, %v4444
    %v4446 = vadd.f32 %v4126, %v4286
    %v4447 = vadd.f32 %v4127, %v4287
    %v4448 = vadd.f32 %v4128, %v4288
    %v4449 = vadd.f32 %v4129, %v4289
    %v4450 = vadd.f32 %v4130, %v4290
    %v4451 = vadd.f32 %v4131, %v4291
    %v4452 = vadd.f32 %v4132, %v4292
    %v4453 = vadd.f32 %v4133, %v4293
    %v4454 = vadd.f32 %v4134, %v4294
    %v4455 = vadd.f32 %v4135, %v4295
    %v4456 = vadd.f32 %v4136, %v4296
    %v4457 = vadd.f32 %v4137, %v4297
    %v4458 = vadd.f32 %v4138, %v4298
    %v4459 = vadd.f32 %v4139, %v4299
    %v4460 = vadd.f32 %v4140, %v4300
    %v4461 = vadd.f32 %v4141, %v4301
    %v4462 = vadd.f32 %v4142, %v4302
    %v4463 = vadd.f32 %v4143, %v4303
    %v4464 = vadd.f32 %v4144, %v4304
    %v4465 = vadd.f32 %v4145, %v4305
    %v4466 = vadd.f32 %v4146, %v4306
    %v4467 = vadd.f32 %v4147, %v4307
    %v4468 = vadd.f32 %v4148, %v4308
    %v4469 = vadd.f32 %v4149, %v4309
    %v4470 = vadd.f32 %v4150, %v4310
    %v4471 = vadd.f32 %v4151, %v4311
    %v4472 = vadd.f32 %v4152, %v4312
    %v4473 = vadd.f32 %v4153, %v4313
    %v4474 = vadd.f32 %v4154, %v4314
    %v4475 = vadd.f32 %v4155, %v4315
    %v4476 = vadd.f32 %v4156, %v4316
    %v4477 = vadd.f32 %v4157, %v4317
    %v4478 = vrcp.pop %v4446
    %v4479 = vmul.f32 %v3086, %v4478
    %v4480 = vrcp.pop %v4447
    %v4481 = vmul.f32 %v3087, %v4480
    %v4482 = vrcp.pop %v4448
    %v4483 = vmul.f32 %v3088, %v4482
    %v4484 = vrcp.pop %v4449
    %v4485 = vmul.f32 %v3089, %v4484
    %v4486 = vrcp.pop %v4450
    %v4487 = vmul.f32 %v3090, %v4486
    %v4488 = vrcp.pop %v4451
    %v4489 = vmul.f32 %v3091, %v4488
    %v4490 = vrcp.pop %v4452
    %v4491 = vmul.f32 %v3092, %v4490
    %v4492 = vrcp.pop %v4453
    %v4493 = vmul.f32 %v3093, %v4492
    %v4494 = vrcp.pop %v4454
    %v4495 = vmul.f32 %v3094, %v4494
    %v4496 = vrcp.pop %v4455
    %v4497 = vmul.f32 %v3095, %v4496
    %v4498 = vrcp.pop %v4456
    %v4499 = vmul.f32 %v3096, %v4498
    %v4500 = vrcp.pop %v4457
    %v4501 = vmul.f32 %v3097, %v4500
    %v4502 = vrcp.pop %v4458
    %v4503 = vmul.f32 %v3098, %v4502
    %v4504 = vrcp.pop %v4459
    %v4505 = vmul.f32 %v3099, %v4504
    %v4506 = vrcp.pop %v4460
    %v4507 = vmul.f32 %v3100, %v4506
    %v4508 = vrcp.pop %v4461
    %v4509 = vmul.f32 %v3101, %v4508
    %v4510 = vrcp.pop %v4462
    %v4511 = vmul.f32 %v3102, %v4510
    %v4512 = vrcp.pop %v4463
    %v4513 = vmul.f32 %v3103, %v4512
    %v4514 = vrcp.pop %v4464
    %v4515 = vmul.f32 %v3104, %v4514
    %v4516 = vrcp.pop %v4465
    %v4517 = vmul.f32 %v3105, %v4516
    %v4518 = vrcp.pop %v4466
    %v4519 = vmul.f32 %v3106, %v4518
    %v4520 = vrcp.pop %v4467
    %v4521 = vmul.f32 %v3107, %v4520
    %v4522 = vrcp.pop %v4468
    %v4523 = vmul.f32 %v3108, %v4522
    %v4524 = vrcp.pop %v4469
    %v4525 = vmul.f32 %v3109, %v4524
    %v4526 = vrcp.pop %v4470
    %v4527 = vmul.f32 %v3110, %v4526
    %v4528 = vrcp.pop %v4471
    %v4529 = vmul.f32 %v3111, %v4528
    %v4530 = vrcp.pop %v4472
    %v4531 = vmul.f32 %v3112, %v4530
    %v4532 = vrcp.pop %v4473
    %v4533 = vmul.f32 %v3113, %v4532
    %v4534 = vrcp.pop %v4474
    %v4535 = vmul.f32 %v3114, %v4534
    %v4536 = vrcp.pop %v4475
    %v4537 = vmul.f32 %v3115, %v4536
    %v4538 = vrcp.pop %v4476
    %v4539 = vmul.f32 %v3116, %v4538
    %v4540 = vrcp.pop %v4477
    %v4541 = vmul.f32 %v3117, %v4540
    %v4542 = vadd.f32 %v4383, %v4479
    %v4543 = vadd.f32 %v4385, %v4481
    %v4544 = vadd.f32 %v4387, %v4483
    %v4545 = vadd.f32 %v4389, %v4485
    %v4546 = vadd.f32 %v4391, %v4487
    %v4547 = vadd.f32 %v4393, %v4489
    %v4548 = vadd.f32 %v4395, %v4491
    %v4549 = vadd.f32 %v4397, %v4493
    %v4550 = vadd.f32 %v4399, %v4495
    %v4551 = vadd.f32 %v4401, %v4497
    %v4552 = vadd.f32 %v4403, %v4499
    %v4553 = vadd.f32 %v4405, %v4501
    %v4554 = vadd.f32 %v4407, %v4503
    %v4555 = vadd.f32 %v4409, %v4505
    %v4556 = vadd.f32 %v4411, %v4507
    %v4557 = vadd.f32 %v4413, %v4509
    %v4558 = vadd.f32 %v4415, %v4511
    %v4559 = vadd.f32 %v4417, %v4513
    %v4560 = vadd.f32 %v4419, %v4515
    %v4561 = vadd.f32 %v4421, %v4517
    %v4562 = vadd.f32 %v4423, %v4519
    %v4563 = vadd.f32 %v4425, %v4521
    %v4564 = vadd.f32 %v4427, %v4523
    %v4565 = vadd.f32 %v4429, %v4525
    %v4566 = vadd.f32 %v4431, %v4527
    %v4567 = vadd.f32 %v4433, %v4529
    %v4568 = vadd.f32 %v4435, %v4531
    %v4569 = vadd.f32 %v4437, %v4533
    %v4570 = vadd.f32 %v4439, %v4535
    %v4571 = vadd.f32 %v4441, %v4537
    %v4572 = vadd.f32 %v4443, %v4539
    %v4573 = vadd.f32 %v4445, %v4541
    %v4574 = vadd.f32 %v4158, %v4318
    %v4575 = vadd.f32 %v4159, %v4319
    %v4576 = vadd.f32 %v4160, %v4320
    %v4577 = vadd.f32 %v4161, %v4321
    %v4578 = vadd.f32 %v4162, %v4322
    %v4579 = vadd.f32 %v4163, %v4323
    %v4580 = vadd.f32 %v4164, %v4324
    %v4581 = vadd.f32 %v4165, %v4325
    %v4582 = vadd.f32 %v4166, %v4326
    %v4583 = vadd.f32 %v4167, %v4327
    %v4584 = vadd.f32 %v4168, %v4328
    %v4585 = vadd.f32 %v4169, %v4329
    %v4586 = vadd.f32 %v4170, %v4330
    %v4587 = vadd.f32 %v4171, %v4331
    %v4588 = vadd.f32 %v4172, %v4332
    %v4589 = vadd.f32 %v4173, %v4333
    %v4590 = vadd.f32 %v4174, %v4334
    %v4591 = vadd.f32 %v4175, %v4335
    %v4592 = vadd.f32 %v4176, %v4336
    %v4593 = vadd.f32 %v4177, %v4337
    %v4594 = vadd.f32 %v4178, %v4338
    %v4595 = vadd.f32 %v4179, %v4339
    %v4596 = vadd.f32 %v4180, %v4340
    %v4597 = vadd.f32 %v4181, %v4341
    %v4598 = vadd.f32 %v4182, %v4342
    %v4599 = vadd.f32 %v4183, %v4343
    %v4600 = vadd.f32 %v4184, %v4344
    %v4601 = vadd.f32 %v4185, %v4345
    %v4602 = vadd.f32 %v4186, %v4346
    %v4603 = vadd.f32 %v4187, %v4347
    %v4604 = vadd.f32 %v4188, %v4348
    %v4605 = vadd.f32 %v4189, %v4349
    %v4606 = vrcp.pop %v4574
    %v4607 = vmul.f32 %v3298, %v4606
    %v4608 = vrcp.pop %v4575
    %v4609 = vmul.f32 %v3299, %v4608
    %v4610 = vrcp.pop %v4576
    %v4611 = vmul.f32 %v3300, %v4610
    %v4612 = vrcp.pop %v4577
    %v4613 = vmul.f32 %v3301, %v4612
    %v4614 = vrcp.pop %v4578
    %v4615 = vmul.f32 %v3302, %v4614
    %v4616 = vrcp.pop %v4579
    %v4617 = vmul.f32 %v3303, %v4616
    %v4618 = vrcp.pop %v4580
    %v4619 = vmul.f32 %v3304, %v4618
    %v4620 = vrcp.pop %v4581
    %v4621 = vmul.f32 %v3305, %v4620
    %v4622 = vrcp.pop %v4582
    %v4623 = vmul.f32 %v3306, %v4622
    %v4624 = vrcp.pop %v4583
    %v4625 = vmul.f32 %v3307, %v4624
    %v4626 = vrcp.pop %v4584
    %v4627 = vmul.f32 %v3308, %v4626
    %v4628 = vrcp.pop %v4585
    %v4629 = vmul.f32 %v3309, %v4628
    %v4630 = vrcp.pop %v4586
    %v4631 = vmul.f32 %v3310, %v4630
    %v4632 = vrcp.pop %v4587
    %v4633 = vmul.f32 %v3311, %v4632
    %v4634 = vrcp.pop %v4588
    %v4635 = vmul.f32 %v3312, %v4634
    %v4636 = vrcp.pop %v4589
    %v4637 = vmul.f32 %v3313, %v4636
    %v4638 = vrcp.pop %v4590
    %v4639 = vmul.f32 %v3314, %v4638
    %v4640 = vrcp.pop %v4591
    %v4641 = vmul.f32 %v3315, %v4640
    %v4642 = vrcp.pop %v4592
    %v4643 = vmul.f32 %v3316, %v4642
    %v4644 = vrcp.pop %v4593
    %v4645 = vmul.f32 %v3317, %v4644
    %v4646 = vrcp.pop %v4594
    %v4647 = vmul.f32 %v3318, %v4646
    %v4648 = vrcp.pop %v4595
    %v4649 = vmul.f32 %v3319, %v4648
    %v4650 = vrcp.pop %v4596
    %v4651 = vmul.f32 %v3320, %v4650
    %v4652 = vrcp.pop %v4597
    %v4653 = vmul.f32 %v3321, %v4652
    %v4654 = vrcp.pop %v4598
    %v4655 = vmul.f32 %v3322, %v4654
    %v4656 = vrcp.pop %v4599
    %v4657 = vmul.f32 %v3323, %v4656
    %v4658 = vrcp.pop %v4600
    %v4659 = vmul.f32 %v3324, %v4658
    %v4660 = vrcp.pop %v4601
    %v4661 = vmul.f32 %v3325, %v4660
    %v4662 = vrcp.pop %v4602
    %v4663 = vmul.f32 %v3326, %v4662
    %v4664 = vrcp.pop %v4603
    %v4665 = vmul.f32 %v3327, %v4664
    %v4666 = vrcp.pop %v4604
    %v4667 = vmul.f32 %v3328, %v4666
    %v4668 = vrcp.pop %v4605
    %v4669 = vmul.f32 %v3329, %v4668
    %v4670 = vadd.f32 %v4542, %v4607
    %v4671 = vadd.f32 %v4543, %v4609
    %v4672 = vadd.f32 %v4544, %v4611
    %v4673 = vadd.f32 %v4545, %v4613
    %v4674 = vadd.f32 %v4546, %v4615
    %v4675 = vadd.f32 %v4547, %v4617
    %v4676 = vadd.f32 %v4548, %v4619
    %v4677 = vadd.f32 %v4549, %v4621
    %v4678 = vadd.f32 %v4550, %v4623
    %v4679 = vadd.f32 %v4551, %v4625
    %v4680 = vadd.f32 %v4552, %v4627
    %v4681 = vadd.f32 %v4553, %v4629
    %v4682 = vadd.f32 %v4554, %v4631
    %v4683 = vadd.f32 %v4555, %v4633
    %v4684 = vadd.f32 %v4556, %v4635
    %v4685 = vadd.f32 %v4557, %v4637
    %v4686 = vadd.f32 %v4558, %v4639
    %v4687 = vadd.f32 %v4559, %v4641
    %v4688 = vadd.f32 %v4560, %v4643
    %v4689 = vadd.f32 %v4561, %v4645
    %v4690 = vadd.f32 %v4562, %v4647
    %v4691 = vadd.f32 %v4563, %v4649
    %v4692 = vadd.f32 %v4564, %v4651
    %v4693 = vadd.f32 %v4565, %v4653
    %v4694 = vadd.f32 %v4566, %v4655
    %v4695 = vadd.f32 %v4567, %v4657
    %v4696 = vadd.f32 %v4568, %v4659
    %v4697 = vadd.f32 %v4569, %v4661
    %v4698 = vadd.f32 %v4570, %v4663
    %v4699 = vadd.f32 %v4571, %v4665
    %v4700 = vadd.f32 %v4572, %v4667
    %v4701 = vadd.f32 %v4573, %v4669
    %v4702 = vlaneseq
    %v4703 = vshrl.u32 %v4702, 7
    %v4704 = vadd.s32 %v4703, 8
    %vm4705 = vcmp.gt.s32.totalorder %v4703, 0
    %vm4706 = vcmp.gt.s32.totalorder %v4704, 0
    %vm4707 = vcmp.gt.s32.totalorder %v4703, 1
    %vm4708 = vcmp.gt.s32.totalorder %v4704, 1
    %vm4709 = vcmp.gt.s32.totalorder %v4703, 2
    %vm4710 = vcmp.gt.s32.totalorder %v4704, 2
    %vm4711 = vcmp.gt.s32.totalorder %v4703, 3
    %vm4712 = vcmp.gt.s32.totalorder %v4704, 3
    %vm4713 = vcmp.gt.s32.totalorder %v4703, 4
    %vm4714 = vcmp.gt.s32.totalorder %v4704, 4
    %vm4715 = vcmp.gt.s32.totalorder %v4703, 5
    %vm4716 = vcmp.gt.s32.totalorder %v4704, 5
    %vm4717 = vcmp.gt.s32.totalorder %v4703, 6
    %vm4718 = vcmp.gt.s32.totalorder %v4704, 6
    %vm4719 = vcmp.gt.s32.totalorder %v4703, 7
    %vm4720 = vcmp.gt.s32.totalorder %v4704, 7
    %vm4721 = vcmp.gt.s32.totalorder %v4703, 8
    %vm4722 = vcmp.gt.s32.totalorder %v4704, 8
    %vm4723 = vcmp.gt.s32.totalorder %v4703, 9
    %vm4724 = vcmp.gt.s32.totalorder %v4704, 9
    %vm4725 = vcmp.gt.s32.totalorder %v4703, 10
    %vm4726 = vcmp.gt.s32.totalorder %v4704, 10
    %vm4727 = vcmp.gt.s32.totalorder %v4703, 11
    %vm4728 = vcmp.gt.s32.totalorder %v4704, 11
    %vm4729 = vcmp.gt.s32.totalorder %v4703, 12
    %vm4730 = vcmp.gt.s32.totalorder %v4704, 12
    %vm4731 = vcmp.gt.s32.totalorder %v4703, 13
    %vm4732 = vcmp.gt.s32.totalorder %v4704, 13
    %vm4733 = vcmp.gt.s32.totalorder %v4703, 14
    %vm4734 = vcmp.gt.s32.totalorder %v4704, 14
    %vm4735 = vcmp.gt.s32.totalorder %v4703, 15
    %vm4736 = vcmp.gt.s32.totalorder %v4704, 15
    %vm4737 = vcmp.lt.f32.partialorder %v2438, 64.0
    %vm4738 = vcmp.lt.f32.partialorder %v2439, 64.0
    %vm4739 = vcmp.lt.f32.partialorder %v2440, 64.0
    %vm4740 = vcmp.lt.f32.partialorder %v2441, 64.0
    %vm4741 = vcmp.lt.f32.partialorder %v2442, 64.0
    %vm4742 = vcmp.lt.f32.partialorder %v2443, 64.0
    %vm4743 = vcmp.lt.f32.partialorder %v2444, 64.0
    %vm4744 = vcmp.lt.f32.partialorder %v2445, 64.0
    %vm4745 = vcmp.lt.f32.partialorder %v2446, 64.0
    %vm4746 = vcmp.lt.f32.partialorder %v2447, 64.0
    %vm4747 = vcmp.lt.f32.partialorder %v2448, 64.0
    %vm4748 = vcmp.lt.f32.partialorder %v2449, 64.0
    %vm4749 = vcmp.lt.f32.partialorder %v2450, 64.0
    %vm4750 = vcmp.lt.f32.partialorder %v2451, 64.0
    %vm4751 = vcmp.lt.f32.partialorder %v2452, 64.0
    %vm4752 = vcmp.lt.f32.partialorder %v2453, 64.0
    %vm4753 = vcmp.lt.f32.partialorder %v2454, 64.0
    %vm4754 = vcmp.lt.f32.partialorder %v2455, 64.0
    %vm4755 = vcmp.lt.f32.partialorder %v2456, 64.0
    %vm4756 = vcmp.lt.f32.partialorder %v2457, 64.0
    %vm4757 = vcmp.lt.f32.partialorder %v2458, 64.0
    %vm4758 = vcmp.lt.f32.partialorder %v2459, 64.0
    %vm4759 = vcmp.lt.f32.partialorder %v2460, 64.0
    %vm4760 = vcmp.lt.f32.partialorder %v2461, 64.0
    %vm4761 = vcmp.lt.f32.partialorder %v2462, 64.0
    %vm4762 = vcmp.lt.f32.partialorder %v2463, 64.0
    %vm4763 = vcmp.lt.f32.partialorder %v2464, 64.0
    %vm4764 = vcmp.lt.f32.partialorder %v2465, 64.0
    %vm4765 = vcmp.lt.f32.partialorder %v2466, 64.0
    %vm4766 = vcmp.lt.f32.partialorder %v2467, 64.0
    %vm4767 = vcmp.lt.f32.partialorder %v2468, 64.0
    %vm4768 = vcmp.lt.f32.partialorder %v2469, 64.0
    %vm4769 = vmand %vm4705, %vm4737
    %vm4770 = vmand %vm4706, %vm4738
    %vm4771 = vmand %vm4707, %vm4739
    %vm4772 = vmand %vm4708, %vm4740
    %vm4773 = vmand %vm4709, %vm4741
    %vm4774 = vmand %vm4710, %vm4742
    %vm4775 = vmand %vm4711, %vm4743
    %vm4776 = vmand %vm4712, %vm4744
    %vm4777 = vmand %vm4713, %vm4745
    %vm4778 = vmand %vm4714, %vm4746
    %vm4779 = vmand %vm4715, %vm4747
    %vm4780 = vmand %vm4716, %vm4748
    %vm4781 = vmand %vm4717, %vm4749
    %vm4782 = vmand %vm4718, %vm4750
    %vm4783 = vmand %vm4719, %vm4751
    %vm4784 = vmand %vm4720, %vm4752
    %vm4785 = vmand %vm4721, %vm4753
    %vm4786 = vmand %vm4722, %vm4754
    %vm4787 = vmand %vm4723, %vm4755
    %vm4788 = vmand %vm4724, %vm4756
    %vm4789 = vmand %vm4725, %vm4757
    %vm4790 = vmand %vm4726, %vm4758
    %vm4791 = vmand %vm4727, %vm4759
    %vm4792 = vmand %vm4728, %vm4760
    %vm4793 = vmand %vm4729, %vm4761
    %vm4794 = vmand %vm4730, %vm4762
    %vm4795 = vmand %vm4731, %vm4763
    %vm4796 = vmand %vm4732, %vm4764
    %vm4797 = vmand %vm4733, %vm4765
    %vm4798 = vmand %vm4734, %vm4766
    %vm4799 = vmand %vm4735, %vm4767
    %vm4800 = vmand %vm4736, %vm4768
    %v4801 = vmul.f32 %v2476, 0.3926991
    %v4802 = vmul.f32 %v2483, 0.3926991
    %v4803 = vmul.f32 %v2490, 0.3926991
    %v4804 = vmul.f32 %v2497, 0.3926991
    %v4805 = vmul.f32 %v2504, 0.3926991
    %v4806 = vmul.f32 %v2511, 0.3926991
    %v4807 = vmul.f32 %v2518, 0.3926991
    %v4808 = vmul.f32 %v2525, 0.3926991
    %v4809 = vmul.f32 %v2532, 0.3926991
    %v4810 = vmul.f32 %v2539, 0.3926991
    %v4811 = vmul.f32 %v2546, 0.3926991
    %v4812 = vmul.f32 %v2553, 0.3926991
    %v4813 = vmul.f32 %v2560, 0.3926991
    %v4814 = vmul.f32 %v2567, 0.3926991
    %v4815 = vmul.f32 %v2574, 0.3926991
    %v4816 = vmul.f32 %v2581, 0.3926991
    %v4817 = vmul.f32 %v2588, 0.3926991
    %v4818 = vmul.f32 %v2595, 0.3926991
    %v4819 = vmul.f32 %v2602, 0.3926991
    %v4820 = vmul.f32 %v2609, 0.3926991
    %v4821 = vmul.f32 %v2616, 0.3926991
    %v4822 = vmul.f32 %v2623, 0.3926991
    %v4823 = vmul.f32 %v2630, 0.3926991
    %v4824 = vmul.f32 %v2637, 0.3926991
    %v4825 = vmul.f32 %v2644, 0.3926991
    %v4826 = vmul.f32 %v2651, 0.3926991
    %v4827 = vmul.f32 %v2658, 0.3926991
    %v4828 = vmul.f32 %v2665, 0.3926991
    %v4829 = vmul.f32 %v2672, 0.3926991
    %v4830 = vmul.f32 %v2679, 0.3926991
    %v4831 = vmul.f32 %v2686, 0.3926991
    %v4832 = vmul.f32 %v2693, 0.3926991
    %v4833 = vand.u32 2147483647, %v4801
    %vm4834 = vcmp.le.f32.partialorder %v4833, 0.7853982
    %vm4835 = vcmp.lt.s32.totalorder %v4801, 0
    %v4836 = vand.u32 %v4801, 2139095040
    %v4837 = vshrl.u32 %v4836, 23
    %v4838 = vsub.s32 %v4837, 127
    %v4839 = vand.u32 2147483647, %v4801
    %v4840 = vand.u32 %v4839, 8388607
    %v4841 = vor.u32 %v4840, 8388608
    %v4842 = vsub.s32 0, %v4841
    %v4843 = vadd.s32 %v4838, 1
    %vm4844 = vcmp.gt.s32.totalorder %v4843, 0
    %v4845 = vsel %vm4844, %v4843, 0
    %v4846 = vshrl.u32 %v4845, 5
    %v4847 = vand.u32 %v4845, 31
    %v4848 = vsub.s32 32, %v4847
    %v4849 = vshrl.u32 683565275, %v4848
    %v4850 = vshll.u32 683565275, %v4847
    %v4851 = vshrl.u32 2475754826, %v4848
    %v4852 = vor.u32 %v4850, %v4851
    %v4853 = vshll.u32 2475754826, %v4847
    %v4854 = vshrl.u32 2131351028, %v4848
    %v4855 = vor.u32 %v4853, %v4854
    %v4856 = vshll.u32 2131351028, %v4847
    %v4857 = vshrl.u32 2102212464, %v4848
    %v4858 = vor.u32 %v4856, %v4857
    %v4859 = vshll.u32 2102212464, %v4847
    %v4860 = vshrl.u32 920167782, %v4848
    %v4861 = vor.u32 %v4859, %v4860
    %v4862 = vshll.u32 920167782, %v4847
    %v4863 = vshrl.u32 1326507024, %v4848
    %v4864 = vor.u32 %v4862, %v4863
    %vm4865 = vcmp.lt.s32.totalorder %v4846, 1
    %vm4866 = vcmp.lt.s32.totalorder %v4846, 2
    %vm4867 = vcmp.lt.s32.totalorder %v4846, 3
    %vm4868 = vcmp.lt.s32.totalorder %v4846, 4
    %v4869 = vsel %vm4865, %v4849, %v4852
    %v4870 = vsel %vm4868, %v4858, 2102212464
    %v4871 = vsel %vm4867, %v4855, %v4870
    %v4872 = vsel %vm4866, %v4869, %v4871
    %v4873 = vsel %vm4865, %v4852, %v4855
    %v4874 = vsel %vm4868, %v4861, 920167782
    %v4875 = vsel %vm4867, %v4858, %v4874
    %v4876 = vsel %vm4866, %v4873, %v4875
    %v4877 = vsel %vm4865, %v4855, %v4858
    %v4878 = vsel %vm4868, %v4864, 1326507024
    %v4879 = vsel %vm4867, %v4861, %v4878
    %v4880 = vsel %vm4866, %v4877, %v4879
    %v4881 = vshll.u32 %v4841, 8
    %v4882 = vmul.u32.u64.compose %v4881, %v4880
    %v4883 = vextract.low.u32 %v4882
    %v4884 = vextract.high.u32 %v4882
    %v4885 = vmul.u32.u64.compose %v4881, %v4876
    %v4886 = vextract.low.u32 %v4885
    %v4887 = vextract.high.u32 %v4885
    %v4888 = vmul.u32 %v4881, %v4872
    %v4889 = vadd.s32 %v4884, %v4886
    %vm4890 = vc.u32 %v4884, %v4886
    %v4891 = vadd.s32 %v4887, 1
    %v4892 = vsel %vm4890, %v4891, %v4887
    %v4893 = vadd.s32 %v4888, %v4892
    %v4894 = vadd.s32 %v4893, 536870912
    %v4895 = vshrl.u32 %v4894, 30
    %v4896 = vshll.u32 %v4895, 30
    %v4897 = vsub.s32 %v4893, %v4896
    %vm4898 = vcmp.lt.s32.totalorder %v4897, 0
    %v4899 = vsub.s32 0, %v4897
    %v4900 = vsel %vm4898, %v4899, %v4897
    %v4901 = vclz %v4900
    %v4902 = vsub.s32 %v4901, 2
    %vm4903 = vcmp.gt.s32.totalorder 0, %v4902
    %v4904 = vsel %vm4903, 0, %v4902
    %v4905 = vsub.s32 32, %v4904
    %v4906 = vshll.u32 %v4897, %v4904
    %v4907 = vshrl.u32 %v4889, %v4905
    %v4908 = vor.u32 %v4906, %v4907
    %v4909 = vsub.s32 4294967266, %v4904
    %v4910 = vadd.s32 %v4909, 127
    %v4911 = vshll.u32 %v4910, 23
    %v4912 = vor.u32 4788187, %v4911
    %v4913 = vand.u32 2147483647, %v4912
    %v4915 = vcvt.s32.f32 %v4908
    %v4916 = vmul.f32 %v4915, %v4913
    %v4917 = vxor.u32 %v4916, 2147483648
    %v4918 = vsel %vm4835, %v4917, %v4916
    %v4919 = vsub.s32 4, %v4895
    %v4920 = vsel %vm4835, %v4919, %v4895
    %v4921 = vsel %vm4834, %v4801, %v4918
    %v4922 = vsel %vm4834, 0, %v4920
    %v4923 = vcosq.f32.pop %v4921
    %v4924 = vsinq.f32.pop %v4921
    %vm4925 = vweird.f32 %v4801
    %v4926 = vand.u32 %v4922, 3
    %vm4927 = vcmp.lt.s32.totalorder %v4926, 2
    %vm4928 = vcmp.eq.s32.totalorder %v4926, 0
    %v4929 = vxor.u32 %v4924, 2147483648
    %v4930 = vsel %vm4928, %v4923, %v4929
    %vm4931 = vcmp.eq.s32.totalorder %v4926, 2
    %v4932 = vxor.u32 %v4923, 2147483648
    %v4933 = vsel %vm4931, %v4932, %v4924
    %v4934 = vsel %vm4927, %v4930, %v4933
    %v4935 = vsel %vm4925, nan, %v4934
    %v4936 = vand.u32 2147483647, %v4802
    %vm4937 = vcmp.le.f32.partialorder %v4936, 0.7853982
    %vm4938 = vcmp.lt.s32.totalorder %v4802, 0
    %v4939 = vand.u32 %v4802, 2139095040
    %v4940 = vshrl.u32 %v4939, 23
    %v4941 = vsub.s32 %v4940, 127
    %v4942 = vand.u32 2147483647, %v4802
    %v4943 = vand.u32 %v4942, 8388607
    %v4944 = vor.u32 %v4943, 8388608
    %v4945 = vsub.s32 0, %v4944
    %v4946 = vadd.s32 %v4941, 1
    %vm4947 = vcmp.gt.s32.totalorder %v4946, 0
    %v4948 = vsel %vm4947, %v4946, 0
    %v4949 = vshrl.u32 %v4948, 5
    %v4950 = vand.u32 %v4948, 31
    %v4951 = vsub.s32 32, %v4950
    %v4952 = vshrl.u32 683565275, %v4951
    %v4953 = vshll.u32 683565275, %v4950
    %v4954 = vshrl.u32 2475754826, %v4951
    %v4955 = vor.u32 %v4953, %v4954
    %v4956 = vshll.u32 2475754826, %v4950
    %v4957 = vshrl.u32 2131351028, %v4951
    %v4958 = vor.u32 %v4956, %v4957
    %v4959 = vshll.u32 2131351028, %v4950
    %v4960 = vshrl.u32 2102212464, %v4951
    %v4961 = vor.u32 %v4959, %v4960
    %v4962 = vshll.u32 2102212464, %v4950
    %v4963 = vshrl.u32 920167782, %v4951
    %v4964 = vor.u32 %v4962, %v4963
    %v4965 = vshll.u32 920167782, %v4950
    %v4966 = vshrl.u32 1326507024, %v4951
    %v4967 = vor.u32 %v4965, %v4966
    %vm4968 = vcmp.lt.s32.totalorder %v4949, 1
    %vm4969 = vcmp.lt.s32.totalorder %v4949, 2
    %vm4970 = vcmp.lt.s32.totalorder %v4949, 3
    %vm4971 = vcmp.lt.s32.totalorder %v4949, 4
    %v4972 = vsel %vm4968, %v4952, %v4955
    %v4973 = vsel %vm4971, %v4961, 2102212464
    %v4974 = vsel %vm4970, %v4958, %v4973
    %v4975 = vsel %vm4969, %v4972, %v4974
    %v4976 = vsel %vm4968, %v4955, %v4958
    %v4977 = vsel %vm4971, %v4964, 920167782
    %v4978 = vsel %vm4970, %v4961, %v4977
    %v4979 = vsel %vm4969, %v4976, %v4978
    %v4980 = vsel %vm4968, %v4958, %v4961
    %v4981 = vsel %vm4971, %v4967, 1326507024
    %v4982 = vsel %vm4970, %v4964, %v4981
    %v4983 = vsel %vm4969, %v4980, %v4982
    %v4984 = vshll.u32 %v4944, 8
    %v4985 = vmul.u32.u64.compose %v4984, %v4983
    %v4986 = vextract.low.u32 %v4985
    %v4987 = vextract.high.u32 %v4985
    %v4988 = vmul.u32.u64.compose %v4984, %v4979
    %v4989 = vextract.low.u32 %v4988
    %v4990 = vextract.high.u32 %v4988
    %v4991 = vmul.u32 %v4984, %v4975
    %v4992 = vadd.s32 %v4987, %v4989
    %vm4993 = vc.u32 %v4987, %v4989
    %v4994 = vadd.s32 %v4990, 1
    %v4995 = vsel %vm4993, %v4994, %v4990
    %v4996 = vadd.s32 %v4991, %v4995
    %v4997 = vadd.s32 %v4996, 536870912
    %v4998 = vshrl.u32 %v4997, 30
    %v4999 = vshll.u32 %v4998, 30
    %v5000 = vsub.s32 %v4996, %v4999
    %vm5001 = vcmp.lt.s32.totalorder %v5000, 0
    %v5002 = vsub.s32 0, %v5000
    %v5003 = vsel %vm5001, %v5002, %v5000
    %v5004 = vclz %v5003
    %v5005 = vsub.s32 %v5004, 2
    %vm5006 = vcmp.gt.s32.totalorder 0, %v5005
    %v5007 = vsel %vm5006, 0, %v5005
    %v5008 = vsub.s32 32, %v5007
    %v5009 = vshll.u32 %v5000, %v5007
    %v5010 = vshrl.u32 %v4992, %v5008
    %v5011 = vor.u32 %v5009, %v5010
    %v5012 = vsub.s32 4294967266, %v5007
    %v5013 = vadd.s32 %v5012, 127
    %v5014 = vshll.u32 %v5013, 23
    %v5015 = vor.u32 4788187, %v5014
    %v5016 = vand.u32 2147483647, %v5015
    %v5018 = vcvt.s32.f32 %v5011
    %v5019 = vmul.f32 %v5018, %v5016
    %v5020 = vxor.u32 %v5019, 2147483648
    %v5021 = vsel %vm4938, %v5020, %v5019
    %v5022 = vsub.s32 4, %v4998
    %v5023 = vsel %vm4938, %v5022, %v4998
    %v5024 = vsel %vm4937, %v4802, %v5021
    %v5025 = vsel %vm4937, 0, %v5023
    %v5026 = vcosq.f32.pop %v5024
    %v5027 = vsinq.f32.pop %v5024
    %vm5028 = vweird.f32 %v4802
    %v5029 = vand.u32 %v5025, 3
    %vm5030 = vcmp.lt.s32.totalorder %v5029, 2
    %vm5031 = vcmp.eq.s32.totalorder %v5029, 0
    %v5032 = vxor.u32 %v5027, 2147483648
    %v5033 = vsel %vm5031, %v5026, %v5032
    %vm5034 = vcmp.eq.s32.totalorder %v5029, 2
    %v5035 = vxor.u32 %v5026, 2147483648
    %v5036 = vsel %vm5034, %v5035, %v5027
    %v5037 = vsel %vm5030, %v5033, %v5036
    %v5038 = vsel %vm5028, nan, %v5037
    %v5039 = vand.u32 2147483647, %v4803
    %vm5040 = vcmp.le.f32.partialorder %v5039, 0.7853982
    %vm5041 = vcmp.lt.s32.totalorder %v4803, 0
    %v5042 = vand.u32 %v4803, 2139095040
    %v5043 = vshrl.u32 %v5042, 23
    %v5044 = vsub.s32 %v5043, 127
    %v5045 = vand.u32 2147483647, %v4803
    %v5046 = vand.u32 %v5045, 8388607
    %v5047 = vor.u32 %v5046, 8388608
    %v5048 = vsub.s32 0, %v5047
    %v5049 = vadd.s32 %v5044, 1
    %vm5050 = vcmp.gt.s32.totalorder %v5049, 0
    %v5051 = vsel %vm5050, %v5049, 0
    %v5052 = vshrl.u32 %v5051, 5
    %v5053 = vand.u32 %v5051, 31
    %v5054 = vsub.s32 32, %v5053
    %v5055 = vshrl.u32 683565275, %v5054
    %v5056 = vshll.u32 683565275, %v5053
    %v5057 = vshrl.u32 2475754826, %v5054
    %v5058 = vor.u32 %v5056, %v5057
    %v5059 = vshll.u32 2475754826, %v5053
    %v5060 = vshrl.u32 2131351028, %v5054
    %v5061 = vor.u32 %v5059, %v5060
    %v5062 = vshll.u32 2131351028, %v5053
    %v5063 = vshrl.u32 2102212464, %v5054
    %v5064 = vor.u32 %v5062, %v5063
    %v5065 = vshll.u32 2102212464, %v5053
    %v5066 = vshrl.u32 920167782, %v5054
    %v5067 = vor.u32 %v5065, %v5066
    %v5068 = vshll.u32 920167782, %v5053
    %v5069 = vshrl.u32 1326507024, %v5054
    %v5070 = vor.u32 %v5068, %v5069
    %vm5071 = vcmp.lt.s32.totalorder %v5052, 1
    %vm5072 = vcmp.lt.s32.totalorder %v5052, 2
    %vm5073 = vcmp.lt.s32.totalorder %v5052, 3
    %vm5074 = vcmp.lt.s32.totalorder %v5052, 4
    %v5075 = vsel %vm5071, %v5055, %v5058
    %v5076 = vsel %vm5074, %v5064, 2102212464
    %v5077 = vsel %vm5073, %v5061, %v5076
    %v5078 = vsel %vm5072, %v5075, %v5077
    %v5079 = vsel %vm5071, %v5058, %v5061
    %v5080 = vsel %vm5074, %v5067, 920167782
    %v5081 = vsel %vm5073, %v5064, %v5080
    %v5082 = vsel %vm5072, %v5079, %v5081
    %v5083 = vsel %vm5071, %v5061, %v5064
    %v5084 = vsel %vm5074, %v5070, 1326507024
    %v5085 = vsel %vm5073, %v5067, %v5084
    %v5086 = vsel %vm5072, %v5083, %v5085
    %v5087 = vshll.u32 %v5047, 8
    %v5088 = vmul.u32.u64.compose %v5087, %v5086
    %v5089 = vextract.low.u32 %v5088
    %v5090 = vextract.high.u32 %v5088
    %v5091 = vmul.u32.u64.compose %v5087, %v5082
    %v5092 = vextract.low.u32 %v5091
    %v5093 = vextract.high.u32 %v5091
    %v5094 = vmul.u32 %v5087, %v5078
    %v5095 = vadd.s32 %v5090, %v5092
    %vm5096 = vc.u32 %v5090, %v5092
    %v5097 = vadd.s32 %v5093, 1
    %v5098 = vsel %vm5096, %v5097, %v5093
    %v5099 = vadd.s32 %v5094, %v5098
    %v5100 = vadd.s32 %v5099, 536870912
    %v5101 = vshrl.u32 %v5100, 30
    %v5102 = vshll.u32 %v5101, 30
    %v5103 = vsub.s32 %v5099, %v5102
    %vm5104 = vcmp.lt.s32.totalorder %v5103, 0
    %v5105 = vsub.s32 0, %v5103
    %v5106 = vsel %vm5104, %v5105, %v5103
    %v5107 = vclz %v5106
    %v5108 = vsub.s32 %v5107, 2
    %vm5109 = vcmp.gt.s32.totalorder 0, %v5108
    %v5110 = vsel %vm5109, 0, %v5108
    %v5111 = vsub.s32 32, %v5110
    %v5112 = vshll.u32 %v5103, %v5110
    %v5113 = vshrl.u32 %v5095, %v5111
    %v5114 = vor.u32 %v5112, %v5113
    %v5115 = vsub.s32 4294967266, %v5110
    %v5116 = vadd.s32 %v5115, 127
    %v5117 = vshll.u32 %v5116, 23
    %v5118 = vor.u32 4788187, %v5117
    %v5119 = vand.u32 2147483647, %v5118
    %v5121 = vcvt.s32.f32 %v5114
    %v5122 = vmul.f32 %v5121, %v5119
    %v5123 = vxor.u32 %v5122, 2147483648
    %v5124 = vsel %vm5041, %v5123, %v5122
    %v5125 = vsub.s32 4, %v5101
    %v5126 = vsel %vm5041, %v5125, %v5101
    %v5127 = vsel %vm5040, %v4803, %v5124
    %v5128 = vsel %vm5040, 0, %v5126
    %v5129 = vcosq.f32.pop %v5127
    %v5130 = vsinq.f32.pop %v5127
    %vm5131 = vweird.f32 %v4803
    %v5132 = vand.u32 %v5128, 3
    %vm5133 = vcmp.lt.s32.totalorder %v5132, 2
    %vm5134 = vcmp.eq.s32.totalorder %v5132, 0
    %v5135 = vxor.u32 %v5130, 2147483648
    %v5136 = vsel %vm5134, %v5129, %v5135
    %vm5137 = vcmp.eq.s32.totalorder %v5132, 2
    %v5138 = vxor.u32 %v5129, 2147483648
    %v5139 = vsel %vm5137, %v5138, %v5130
    %v5140 = vsel %vm5133, %v5136, %v5139
    %v5141 = vsel %vm5131, nan, %v5140
    %v5142 = vand.u32 2147483647, %v4804
    %vm5143 = vcmp.le.f32.partialorder %v5142, 0.7853982
    %vm5144 = vcmp.lt.s32.totalorder %v4804, 0
    %v5145 = vand.u32 %v4804, 2139095040
    %v5146 = vshrl.u32 %v5145, 23
    %v5147 = vsub.s32 %v5146, 127
    %v5148 = vand.u32 2147483647, %v4804
    %v5149 = vand.u32 %v5148, 8388607
    %v5150 = vor.u32 %v5149, 8388608
    %v5151 = vsub.s32 0, %v5150
    %v5152 = vadd.s32 %v5147, 1
    %vm5153 = vcmp.gt.s32.totalorder %v5152, 0
    %v5154 = vsel %vm5153, %v5152, 0
    %v5155 = vshrl.u32 %v5154, 5
    %v5156 = vand.u32 %v5154, 31
    %v5157 = vsub.s32 32, %v5156
    %v5158 = vshrl.u32 683565275, %v5157
    %v5159 = vshll.u32 683565275, %v5156
    %v5160 = vshrl.u32 2475754826, %v5157
    %v5161 = vor.u32 %v5159, %v5160
    %v5162 = vshll.u32 2475754826, %v5156
    %v5163 = vshrl.u32 2131351028, %v5157
    %v5164 = vor.u32 %v5162, %v5163
    %v5165 = vshll.u32 2131351028, %v5156
    %v5166 = vshrl.u32 2102212464, %v5157
    %v5167 = vor.u32 %v5165, %v5166
    %v5168 = vshll.u32 2102212464, %v5156
    %v5169 = vshrl.u32 920167782, %v5157
    %v5170 = vor.u32 %v5168, %v5169
    %v5171 = vshll.u32 920167782, %v5156
    %v5172 = vshrl.u32 1326507024, %v5157
    %v5173 = vor.u32 %v5171, %v5172
    %vm5174 = vcmp.lt.s32.totalorder %v5155, 1
    %vm5175 = vcmp.lt.s32.totalorder %v5155, 2
    %vm5176 = vcmp.lt.s32.totalorder %v5155, 3
    %vm5177 = vcmp.lt.s32.totalorder %v5155, 4
    %v5178 = vsel %vm5174, %v5158, %v5161
    %v5179 = vsel %vm5177, %v5167, 2102212464
    %v5180 = vsel %vm5176, %v5164, %v5179
    %v5181 = vsel %vm5175, %v5178, %v5180
    %v5182 = vsel %vm5174, %v5161, %v5164
    %v5183 = vsel %vm5177, %v5170, 920167782
    %v5184 = vsel %vm5176, %v5167, %v5183
    %v5185 = vsel %vm5175, %v5182, %v5184
    %v5186 = vsel %vm5174, %v5164, %v5167
    %v5187 = vsel %vm5177, %v5173, 1326507024
    %v5188 = vsel %vm5176, %v5170, %v5187
    %v5189 = vsel %vm5175, %v5186, %v5188
    %v5190 = vshll.u32 %v5150, 8
    %v5191 = vmul.u32.u64.compose %v5190, %v5189
    %v5192 = vextract.low.u32 %v5191
    %v5193 = vextract.high.u32 %v5191
    %v5194 = vmul.u32.u64.compose %v5190, %v5185
    %v5195 = vextract.low.u32 %v5194
    %v5196 = vextract.high.u32 %v5194
    %v5197 = vmul.u32 %v5190, %v5181
    %v5198 = vadd.s32 %v5193, %v5195
    %vm5199 = vc.u32 %v5193, %v5195
    %v5200 = vadd.s32 %v5196, 1
    %v5201 = vsel %vm5199, %v5200, %v5196
    %v5202 = vadd.s32 %v5197, %v5201
    %v5203 = vadd.s32 %v5202, 536870912
    %v5204 = vshrl.u32 %v5203, 30
    %v5205 = vshll.u32 %v5204, 30
    %v5206 = vsub.s32 %v5202, %v5205
    %vm5207 = vcmp.lt.s32.totalorder %v5206, 0
    %v5208 = vsub.s32 0, %v5206
    %v5209 = vsel %vm5207, %v5208, %v5206
    %v5210 = vclz %v5209
    %v5211 = vsub.s32 %v5210, 2
    %vm5212 = vcmp.gt.s32.totalorder 0, %v5211
    %v5213 = vsel %vm5212, 0, %v5211
    %v5214 = vsub.s32 32, %v5213
    %v5215 = vshll.u32 %v5206, %v5213
    %v5216 = vshrl.u32 %v5198, %v5214
    %v5217 = vor.u32 %v5215, %v5216
    %v5218 = vsub.s32 4294967266, %v5213
    %v5219 = vadd.s32 %v5218, 127
    %v5220 = vshll.u32 %v5219, 23
    %v5221 = vor.u32 4788187, %v5220
    %v5222 = vand.u32 2147483647, %v5221
    %v5224 = vcvt.s32.f32 %v5217
    %v5225 = vmul.f32 %v5224, %v5222
    %v5226 = vxor.u32 %v5225, 2147483648
    %v5227 = vsel %vm5144, %v5226, %v5225
    %v5228 = vsub.s32 4, %v5204
    %v5229 = vsel %vm5144, %v5228, %v5204
    %v5230 = vsel %vm5143, %v4804, %v5227
    %v5231 = vsel %vm5143, 0, %v5229
    %v5232 = vcosq.f32.pop %v5230
    %v5233 = vsinq.f32.pop %v5230
    %vm5234 = vweird.f32 %v4804
    %v5235 = vand.u32 %v5231, 3
    %vm5236 = vcmp.lt.s32.totalorder %v5235, 2
    %vm5237 = vcmp.eq.s32.totalorder %v5235, 0
    %v5238 = vxor.u32 %v5233, 2147483648
    %v5239 = vsel %vm5237, %v5232, %v5238
    %vm5240 = vcmp.eq.s32.totalorder %v5235, 2
    %v5241 = vxor.u32 %v5232, 2147483648
    %v5242 = vsel %vm5240, %v5241, %v5233
    %v5243 = vsel %vm5236, %v5239, %v5242
    %v5244 = vsel %vm5234, nan, %v5243
    %v5245 = vand.u32 2147483647, %v4805
    %vm5246 = vcmp.le.f32.partialorder %v5245, 0.7853982
    %vm5247 = vcmp.lt.s32.totalorder %v4805, 0
    %v5248 = vand.u32 %v4805, 2139095040
    %v5249 = vshrl.u32 %v5248, 23
    %v5250 = vsub.s32 %v5249, 127
    %v5251 = vand.u32 2147483647, %v4805
    %v5252 = vand.u32 %v5251, 8388607
    %v5253 = vor.u32 %v5252, 8388608
    %v5254 = vsub.s32 0, %v5253
    %v5255 = vadd.s32 %v5250, 1
    %vm5256 = vcmp.gt.s32.totalorder %v5255, 0
    %v5257 = vsel %vm5256, %v5255, 0
    %v5258 = vshrl.u32 %v5257, 5
    %v5259 = vand.u32 %v5257, 31
    %v5260 = vsub.s32 32, %v5259
    %v5261 = vshrl.u32 683565275, %v5260
    %v5262 = vshll.u32 683565275, %v5259
    %v5263 = vshrl.u32 2475754826, %v5260
    %v5264 = vor.u32 %v5262, %v5263
    %v5265 = vshll.u32 2475754826, %v5259
    %v5266 = vshrl.u32 2131351028, %v5260
    %v5267 = vor.u32 %v5265, %v5266
    %v5268 = vshll.u32 2131351028, %v5259
    %v5269 = vshrl.u32 2102212464, %v5260
    %v5270 = vor.u32 %v5268, %v5269
    %v5271 = vshll.u32 2102212464, %v5259
    %v5272 = vshrl.u32 920167782, %v5260
    %v5273 = vor.u32 %v5271, %v5272
    %v5274 = vshll.u32 920167782, %v5259
    %v5275 = vshrl.u32 1326507024, %v5260
    %v5276 = vor.u32 %v5274, %v5275
    %vm5277 = vcmp.lt.s32.totalorder %v5258, 1
    %vm5278 = vcmp.lt.s32.totalorder %v5258, 2
    %vm5279 = vcmp.lt.s32.totalorder %v5258, 3
    %vm5280 = vcmp.lt.s32.totalorder %v5258, 4
    %v5281 = vsel %vm5277, %v5261, %v5264
    %v5282 = vsel %vm5280, %v5270, 2102212464
    %v5283 = vsel %vm5279, %v5267, %v5282
    %v5284 = vsel %vm5278, %v5281, %v5283
    %v5285 = vsel %vm5277, %v5264, %v5267
    %v5286 = vsel %vm5280, %v5273, 920167782
    %v5287 = vsel %vm5279, %v5270, %v5286
    %v5288 = vsel %vm5278, %v5285, %v5287
    %v5289 = vsel %vm5277, %v5267, %v5270
    %v5290 = vsel %vm5280, %v5276, 1326507024
    %v5291 = vsel %vm5279, %v5273, %v5290
    %v5292 = vsel %vm5278, %v5289, %v5291
    %v5293 = vshll.u32 %v5253, 8
    %v5294 = vmul.u32.u64.compose %v5293, %v5292
    %v5295 = vextract.low.u32 %v5294
    %v5296 = vextract.high.u32 %v5294
    %v5297 = vmul.u32.u64.compose %v5293, %v5288
    %v5298 = vextract.low.u32 %v5297
    %v5299 = vextract.high.u32 %v5297
    %v5300 = vmul.u32 %v5293, %v5284
    %v5301 = vadd.s32 %v5296, %v5298
    %vm5302 = vc.u32 %v5296, %v5298
    %v5303 = vadd.s32 %v5299, 1
    %v5304 = vsel %vm5302, %v5303, %v5299
    %v5305 = vadd.s32 %v5300, %v5304
    %v5306 = vadd.s32 %v5305, 536870912
    %v5307 = vshrl.u32 %v5306, 30
    %v5308 = vshll.u32 %v5307, 30
    %v5309 = vsub.s32 %v5305, %v5308
    %vm5310 = vcmp.lt.s32.totalorder %v5309, 0
    %v5311 = vsub.s32 0, %v5309
    %v5312 = vsel %vm5310, %v5311, %v5309
    %v5313 = vclz %v5312
    %v5314 = vsub.s32 %v5313, 2
    %vm5315 = vcmp.gt.s32.totalorder 0, %v5314
    %v5316 = vsel %vm5315, 0, %v5314
    %v5317 = vsub.s32 32, %v5316
    %v5318 = vshll.u32 %v5309, %v5316
    %v5319 = vshrl.u32 %v5301, %v5317
    %v5320 = vor.u32 %v5318, %v5319
    %v5321 = vsub.s32 4294967266, %v5316
    %v5322 = vadd.s32 %v5321, 127
    %v5323 = vshll.u32 %v5322, 23
    %v5324 = vor.u32 4788187, %v5323
    %v5325 = vand.u32 2147483647, %v5324
    %v5327 = vcvt.s32.f32 %v5320
    %v5328 = vmul.f32 %v5327, %v5325
    %v5329 = vxor.u32 %v5328, 2147483648
    %v5330 = vsel %vm5247, %v5329, %v5328
    %v5331 = vsub.s32 4, %v5307
    %v5332 = vsel %vm5247, %v5331, %v5307
    %v5333 = vsel %vm5246, %v4805, %v5330
    %v5334 = vsel %vm5246, 0, %v5332
    %v5335 = vcosq.f32.pop %v5333
    %v5336 = vsinq.f32.pop %v5333
    %vm5337 = vweird.f32 %v4805
    %v5338 = vand.u32 %v5334, 3
    %vm5339 = vcmp.lt.s32.totalorder %v5338, 2
    %vm5340 = vcmp.eq.s32.totalorder %v5338, 0
    %v5341 = vxor.u32 %v5336, 2147483648
    %v5342 = vsel %vm5340, %v5335, %v5341
    %vm5343 = vcmp.eq.s32.totalorder %v5338, 2
    %v5344 = vxor.u32 %v5335, 2147483648
    %v5345 = vsel %vm5343, %v5344, %v5336
    %v5346 = vsel %vm5339, %v5342, %v5345
    %v5347 = vsel %vm5337, nan, %v5346
    %v5348 = vand.u32 2147483647, %v4806
    %vm5349 = vcmp.le.f32.partialorder %v5348, 0.7853982
    %vm5350 = vcmp.lt.s32.totalorder %v4806, 0
    %v5351 = vand.u32 %v4806, 2139095040
    %v5352 = vshrl.u32 %v5351, 23
    %v5353 = vsub.s32 %v5352, 127
    %v5354 = vand.u32 2147483647, %v4806
    %v5355 = vand.u32 %v5354, 8388607
    %v5356 = vor.u32 %v5355, 8388608
    %v5357 = vsub.s32 0, %v5356
    %v5358 = vadd.s32 %v5353, 1
    %vm5359 = vcmp.gt.s32.totalorder %v5358, 0
    %v5360 = vsel %vm5359, %v5358, 0
    %v5361 = vshrl.u32 %v5360, 5
    %v5362 = vand.u32 %v5360, 31
    %v5363 = vsub.s32 32, %v5362
    %v5364 = vshrl.u32 683565275, %v5363
    %v5365 = vshll.u32 683565275, %v5362
    %v5366 = vshrl.u32 2475754826, %v5363
    %v5367 = vor.u32 %v5365, %v5366
    %v5368 = vshll.u32 2475754826, %v5362
    %v5369 = vshrl.u32 2131351028, %v5363
    %v5370 = vor.u32 %v5368, %v5369
    %v5371 = vshll.u32 2131351028, %v5362
    %v5372 = vshrl.u32 2102212464, %v5363
    %v5373 = vor.u32 %v5371, %v5372
    %v5374 = vshll.u32 2102212464, %v5362
    %v5375 = vshrl.u32 920167782, %v5363
    %v5376 = vor.u32 %v5374, %v5375
    %v5377 = vshll.u32 920167782, %v5362
    %v5378 = vshrl.u32 1326507024, %v5363
    %v5379 = vor.u32 %v5377, %v5378
    %vm5380 = vcmp.lt.s32.totalorder %v5361, 1
    %vm5381 = vcmp.lt.s32.totalorder %v5361, 2
    %vm5382 = vcmp.lt.s32.totalorder %v5361, 3
    %vm5383 = vcmp.lt.s32.totalorder %v5361, 4
    %v5384 = vsel %vm5380, %v5364, %v5367
    %v5385 = vsel %vm5383, %v5373, 2102212464
    %v5386 = vsel %vm5382, %v5370, %v5385
    %v5387 = vsel %vm5381, %v5384, %v5386
    %v5388 = vsel %vm5380, %v5367, %v5370
    %v5389 = vsel %vm5383, %v5376, 920167782
    %v5390 = vsel %vm5382, %v5373, %v5389
    %v5391 = vsel %vm5381, %v5388, %v5390
    %v5392 = vsel %vm5380, %v5370, %v5373
    %v5393 = vsel %vm5383, %v5379, 1326507024
    %v5394 = vsel %vm5382, %v5376, %v5393
    %v5395 = vsel %vm5381, %v5392, %v5394
    %v5396 = vshll.u32 %v5356, 8
    %v5397 = vmul.u32.u64.compose %v5396, %v5395
    %v5398 = vextract.low.u32 %v5397
    %v5399 = vextract.high.u32 %v5397
    %v5400 = vmul.u32.u64.compose %v5396, %v5391
    %v5401 = vextract.low.u32 %v5400
    %v5402 = vextract.high.u32 %v5400
    %v5403 = vmul.u32 %v5396, %v5387
    %v5404 = vadd.s32 %v5399, %v5401
    %vm5405 = vc.u32 %v5399, %v5401
    %v5406 = vadd.s32 %v5402, 1
    %v5407 = vsel %vm5405, %v5406, %v5402
    %v5408 = vadd.s32 %v5403, %v5407
    %v5409 = vadd.s32 %v5408, 536870912
    %v5410 = vshrl.u32 %v5409, 30
    %v5411 = vshll.u32 %v5410, 30
    %v5412 = vsub.s32 %v5408, %v5411
    %vm5413 = vcmp.lt.s32.totalorder %v5412, 0
    %v5414 = vsub.s32 0, %v5412
    %v5415 = vsel %vm5413, %v5414, %v5412
    %v5416 = vclz %v5415
    %v5417 = vsub.s32 %v5416, 2
    %vm5418 = vcmp.gt.s32.totalorder 0, %v5417
    %v5419 = vsel %vm5418, 0, %v5417
    %v5420 = vsub.s32 32, %v5419
    %v5421 = vshll.u32 %v5412, %v5419
    %v5422 = vshrl.u32 %v5404, %v5420
    %v5423 = vor.u32 %v5421, %v5422
    %v5424 = vsub.s32 4294967266, %v5419
    %v5425 = vadd.s32 %v5424, 127
    %v5426 = vshll.u32 %v5425, 23
    %v5427 = vor.u32 4788187, %v5426
    %v5428 = vand.u32 2147483647, %v5427
    %v5430 = vcvt.s32.f32 %v5423
    %v5431 = vmul.f32 %v5430, %v5428
    %v5432 = vxor.u32 %v5431, 2147483648
    %v5433 = vsel %vm5350, %v5432, %v5431
    %v5434 = vsub.s32 4, %v5410
    %v5435 = vsel %vm5350, %v5434, %v5410
    %v5436 = vsel %vm5349, %v4806, %v5433
    %v5437 = vsel %vm5349, 0, %v5435
    %v5438 = vcosq.f32.pop %v5436
    %v5439 = vsinq.f32.pop %v5436
    %vm5440 = vweird.f32 %v4806
    %v5441 = vand.u32 %v5437, 3
    %vm5442 = vcmp.lt.s32.totalorder %v5441, 2
    %vm5443 = vcmp.eq.s32.totalorder %v5441, 0
    %v5444 = vxor.u32 %v5439, 2147483648
    %v5445 = vsel %vm5443, %v5438, %v5444
    %vm5446 = vcmp.eq.s32.totalorder %v5441, 2
    %v5447 = vxor.u32 %v5438, 2147483648
    %v5448 = vsel %vm5446, %v5447, %v5439
    %v5449 = vsel %vm5442, %v5445, %v5448
    %v5450 = vsel %vm5440, nan, %v5449
    %v5451 = vand.u32 2147483647, %v4807
    %vm5452 = vcmp.le.f32.partialorder %v5451, 0.7853982
    %vm5453 = vcmp.lt.s32.totalorder %v4807, 0
    %v5454 = vand.u32 %v4807, 2139095040
    %v5455 = vshrl.u32 %v5454, 23
    %v5456 = vsub.s32 %v5455, 127
    %v5457 = vand.u32 2147483647, %v4807
    %v5458 = vand.u32 %v5457, 8388607
    %v5459 = vor.u32 %v5458, 8388608
    %v5460 = vsub.s32 0, %v5459
    %v5461 = vadd.s32 %v5456, 1
    %vm5462 = vcmp.gt.s32.totalorder %v5461, 0
    %v5463 = vsel %vm5462, %v5461, 0
    %v5464 = vshrl.u32 %v5463, 5
    %v5465 = vand.u32 %v5463, 31
    %v5466 = vsub.s32 32, %v5465
    %v5467 = vshrl.u32 683565275, %v5466
    %v5468 = vshll.u32 683565275, %v5465
    %v5469 = vshrl.u32 2475754826, %v5466
    %v5470 = vor.u32 %v5468, %v5469
    %v5471 = vshll.u32 2475754826, %v5465
    %v5472 = vshrl.u32 2131351028, %v5466
    %v5473 = vor.u32 %v5471, %v5472
    %v5474 = vshll.u32 2131351028, %v5465
    %v5475 = vshrl.u32 2102212464, %v5466
    %v5476 = vor.u32 %v5474, %v5475
    %v5477 = vshll.u32 2102212464, %v5465
    %v5478 = vshrl.u32 920167782, %v5466
    %v5479 = vor.u32 %v5477, %v5478
    %v5480 = vshll.u32 920167782, %v5465
    %v5481 = vshrl.u32 1326507024, %v5466
    %v5482 = vor.u32 %v5480, %v5481
    %vm5483 = vcmp.lt.s32.totalorder %v5464, 1
    %vm5484 = vcmp.lt.s32.totalorder %v5464, 2
    %vm5485 = vcmp.lt.s32.totalorder %v5464, 3
    %vm5486 = vcmp.lt.s32.totalorder %v5464, 4
    %v5487 = vsel %vm5483, %v5467, %v5470
    %v5488 = vsel %vm5486, %v5476, 2102212464
    %v5489 = vsel %vm5485, %v5473, %v5488
    %v5490 = vsel %vm5484, %v5487, %v5489
    %v5491 = vsel %vm5483, %v5470, %v5473
    %v5492 = vsel %vm5486, %v5479, 920167782
    %v5493 = vsel %vm5485, %v5476, %v5492
    %v5494 = vsel %vm5484, %v5491, %v5493
    %v5495 = vsel %vm5483, %v5473, %v5476
    %v5496 = vsel %vm5486, %v5482, 1326507024
    %v5497 = vsel %vm5485, %v5479, %v5496
    %v5498 = vsel %vm5484, %v5495, %v5497
    %v5499 = vshll.u32 %v5459, 8
    %v5500 = vmul.u32.u64.compose %v5499, %v5498
    %v5501 = vextract.low.u32 %v5500
    %v5502 = vextract.high.u32 %v5500
    %v5503 = vmul.u32.u64.compose %v5499, %v5494
    %v5504 = vextract.low.u32 %v5503
    %v5505 = vextract.high.u32 %v5503
    %v5506 = vmul.u32 %v5499, %v5490
    %v5507 = vadd.s32 %v5502, %v5504
    %vm5508 = vc.u32 %v5502, %v5504
    %v5509 = vadd.s32 %v5505, 1
    %v5510 = vsel %vm5508, %v5509, %v5505
    %v5511 = vadd.s32 %v5506, %v5510
    %v5512 = vadd.s32 %v5511, 536870912
    %v5513 = vshrl.u32 %v5512, 30
    %v5514 = vshll.u32 %v5513, 30
    %v5515 = vsub.s32 %v5511, %v5514
    %vm5516 = vcmp.lt.s32.totalorder %v5515, 0
    %v5517 = vsub.s32 0, %v5515
    %v5518 = vsel %vm5516, %v5517, %v5515
    %v5519 = vclz %v5518
    %v5520 = vsub.s32 %v5519, 2
    %vm5521 = vcmp.gt.s32.totalorder 0, %v5520
    %v5522 = vsel %vm5521, 0, %v5520
    %v5523 = vsub.s32 32, %v5522
    %v5524 = vshll.u32 %v5515, %v5522
    %v5525 = vshrl.u32 %v5507, %v5523
    %v5526 = vor.u32 %v5524, %v5525
    %v5527 = vsub.s32 4294967266, %v5522
    %v5528 = vadd.s32 %v5527, 127
    %v5529 = vshll.u32 %v5528, 23
    %v5530 = vor.u32 4788187, %v5529
    %v5531 = vand.u32 2147483647, %v5530
    %v5533 = vcvt.s32.f32 %v5526
    %v5534 = vmul.f32 %v5533, %v5531
    %v5535 = vxor.u32 %v5534, 2147483648
    %v5536 = vsel %vm5453, %v5535, %v5534
    %v5537 = vsub.s32 4, %v5513
    %v5538 = vsel %vm5453, %v5537, %v5513
    %v5539 = vsel %vm5452, %v4807, %v5536
    %v5540 = vsel %vm5452, 0, %v5538
    %v5541 = vcosq.f32.pop %v5539
    %v5542 = vsinq.f32.pop %v5539
    %vm5543 = vweird.f32 %v4807
    %v5544 = vand.u32 %v5540, 3
    %vm5545 = vcmp.lt.s32.totalorder %v5544, 2
    %vm5546 = vcmp.eq.s32.totalorder %v5544, 0
    %v5547 = vxor.u32 %v5542, 2147483648
    %v5548 = vsel %vm5546, %v5541, %v5547
    %vm5549 = vcmp.eq.s32.totalorder %v5544, 2
    %v5550 = vxor.u32 %v5541, 2147483648
    %v5551 = vsel %vm5549, %v5550, %v5542
    %v5552 = vsel %vm5545, %v5548, %v5551
    %v5553 = vsel %vm5543, nan, %v5552
    %v5554 = vand.u32 2147483647, %v4808
    %vm5555 = vcmp.le.f32.partialorder %v5554, 0.7853982
    %vm5556 = vcmp.lt.s32.totalorder %v4808, 0
    %v5557 = vand.u32 %v4808, 2139095040
    %v5558 = vshrl.u32 %v5557, 23
    %v5559 = vsub.s32 %v5558, 127
    %v5560 = vand.u32 2147483647, %v4808
    %v5561 = vand.u32 %v5560, 8388607
    %v5562 = vor.u32 %v5561, 8388608
    %v5563 = vsub.s32 0, %v5562
    %v5564 = vadd.s32 %v5559, 1
    %vm5565 = vcmp.gt.s32.totalorder %v5564, 0
    %v5566 = vsel %vm5565, %v5564, 0
    %v5567 = vshrl.u32 %v5566, 5
    %v5568 = vand.u32 %v5566, 31
    %v5569 = vsub.s32 32, %v5568
    %v5570 = vshrl.u32 683565275, %v5569
    %v5571 = vshll.u32 683565275, %v5568
    %v5572 = vshrl.u32 2475754826, %v5569
    %v5573 = vor.u32 %v5571, %v5572
    %v5574 = vshll.u32 2475754826, %v5568
    %v5575 = vshrl.u32 2131351028, %v5569
    %v5576 = vor.u32 %v5574, %v5575
    %v5577 = vshll.u32 2131351028, %v5568
    %v5578 = vshrl.u32 2102212464, %v5569
    %v5579 = vor.u32 %v5577, %v5578
    %v5580 = vshll.u32 2102212464, %v5568
    %v5581 = vshrl.u32 920167782, %v5569
    %v5582 = vor.u32 %v5580, %v5581
    %v5583 = vshll.u32 920167782, %v5568
    %v5584 = vshrl.u32 1326507024, %v5569
    %v5585 = vor.u32 %v5583, %v5584
    %vm5586 = vcmp.lt.s32.totalorder %v5567, 1
    %vm5587 = vcmp.lt.s32.totalorder %v5567, 2
    %vm5588 = vcmp.lt.s32.totalorder %v5567, 3
    %vm5589 = vcmp.lt.s32.totalorder %v5567, 4
    %v5590 = vsel %vm5586, %v5570, %v5573
    %v5591 = vsel %vm5589, %v5579, 2102212464
    %v5592 = vsel %vm5588, %v5576, %v5591
    %v5593 = vsel %vm5587, %v5590, %v5592
    %v5594 = vsel %vm5586, %v5573, %v5576
    %v5595 = vsel %vm5589, %v5582, 920167782
    %v5596 = vsel %vm5588, %v5579, %v5595
    %v5597 = vsel %vm5587, %v5594, %v5596
    %v5598 = vsel %vm5586, %v5576, %v5579
    %v5599 = vsel %vm5589, %v5585, 1326507024
    %v5600 = vsel %vm5588, %v5582, %v5599
    %v5601 = vsel %vm5587, %v5598, %v5600
    %v5602 = vshll.u32 %v5562, 8
    %v5603 = vmul.u32.u64.compose %v5602, %v5601
    %v5604 = vextract.low.u32 %v5603
    %v5605 = vextract.high.u32 %v5603
    %v5606 = vmul.u32.u64.compose %v5602, %v5597
    %v5607 = vextract.low.u32 %v5606
    %v5608 = vextract.high.u32 %v5606
    %v5609 = vmul.u32 %v5602, %v5593
    %v5610 = vadd.s32 %v5605, %v5607
    %vm5611 = vc.u32 %v5605, %v5607
    %v5612 = vadd.s32 %v5608, 1
    %v5613 = vsel %vm5611, %v5612, %v5608
    %v5614 = vadd.s32 %v5609, %v5613
    %v5615 = vadd.s32 %v5614, 536870912
    %v5616 = vshrl.u32 %v5615, 30
    %v5617 = vshll.u32 %v5616, 30
    %v5618 = vsub.s32 %v5614, %v5617
    %vm5619 = vcmp.lt.s32.totalorder %v5618, 0
    %v5620 = vsub.s32 0, %v5618
    %v5621 = vsel %vm5619, %v5620, %v5618
    %v5622 = vclz %v5621
    %v5623 = vsub.s32 %v5622, 2
    %vm5624 = vcmp.gt.s32.totalorder 0, %v5623
    %v5625 = vsel %vm5624, 0, %v5623
    %v5626 = vsub.s32 32, %v5625
    %v5627 = vshll.u32 %v5618, %v5625
    %v5628 = vshrl.u32 %v5610, %v5626
    %v5629 = vor.u32 %v5627, %v5628
    %v5630 = vsub.s32 4294967266, %v5625
    %v5631 = vadd.s32 %v5630, 127
    %v5632 = vshll.u32 %v5631, 23
    %v5633 = vor.u32 4788187, %v5632
    %v5634 = vand.u32 2147483647, %v5633
    %v5636 = vcvt.s32.f32 %v5629
    %v5637 = vmul.f32 %v5636, %v5634
    %v5638 = vxor.u32 %v5637, 2147483648
    %v5639 = vsel %vm5556, %v5638, %v5637
    %v5640 = vsub.s32 4, %v5616
    %v5641 = vsel %vm5556, %v5640, %v5616
    %v5642 = vsel %vm5555, %v4808, %v5639
    %v5643 = vsel %vm5555, 0, %v5641
    %v5644 = vcosq.f32.pop %v5642
    %v5645 = vsinq.f32.pop %v5642
    %vm5646 = vweird.f32 %v4808
    %v5647 = vand.u32 %v5643, 3
    %vm5648 = vcmp.lt.s32.totalorder %v5647, 2
    %vm5649 = vcmp.eq.s32.totalorder %v5647, 0
    %v5650 = vxor.u32 %v5645, 2147483648
    %v5651 = vsel %vm5649, %v5644, %v5650
    %vm5652 = vcmp.eq.s32.totalorder %v5647, 2
    %v5653 = vxor.u32 %v5644, 2147483648
    %v5654 = vsel %vm5652, %v5653, %v5645
    %v5655 = vsel %vm5648, %v5651, %v5654
    %v5656 = vsel %vm5646, nan, %v5655
    %v5657 = vand.u32 2147483647, %v4809
    %vm5658 = vcmp.le.f32.partialorder %v5657, 0.7853982
    %vm5659 = vcmp.lt.s32.totalorder %v4809, 0
    %v5660 = vand.u32 %v4809, 2139095040
    %v5661 = vshrl.u32 %v5660, 23
    %v5662 = vsub.s32 %v5661, 127
    %v5663 = vand.u32 2147483647, %v4809
    %v5664 = vand.u32 %v5663, 8388607
    %v5665 = vor.u32 %v5664, 8388608
    %v5666 = vsub.s32 0, %v5665
    %v5667 = vadd.s32 %v5662, 1
    %vm5668 = vcmp.gt.s32.totalorder %v5667, 0
    %v5669 = vsel %vm5668, %v5667, 0
    %v5670 = vshrl.u32 %v5669, 5
    %v5671 = vand.u32 %v5669, 31
    %v5672 = vsub.s32 32, %v5671
    %v5673 = vshrl.u32 683565275, %v5672
    %v5674 = vshll.u32 683565275, %v5671
    %v5675 = vshrl.u32 2475754826, %v5672
    %v5676 = vor.u32 %v5674, %v5675
    %v5677 = vshll.u32 2475754826, %v5671
    %v5678 = vshrl.u32 2131351028, %v5672
    %v5679 = vor.u32 %v5677, %v5678
    %v5680 = vshll.u32 2131351028, %v5671
    %v5681 = vshrl.u32 2102212464, %v5672
    %v5682 = vor.u32 %v5680, %v5681
    %v5683 = vshll.u32 2102212464, %v5671
    %v5684 = vshrl.u32 920167782, %v5672
    %v5685 = vor.u32 %v5683, %v5684
    %v5686 = vshll.u32 920167782, %v5671
    %v5687 = vshrl.u32 1326507024, %v5672
    %v5688 = vor.u32 %v5686, %v5687
    %vm5689 = vcmp.lt.s32.totalorder %v5670, 1
    %vm5690 = vcmp.lt.s32.totalorder %v5670, 2
    %vm5691 = vcmp.lt.s32.totalorder %v5670, 3
    %vm5692 = vcmp.lt.s32.totalorder %v5670, 4
    %v5693 = vsel %vm5689, %v5673, %v5676
    %v5694 = vsel %vm5692, %v5682, 2102212464
    %v5695 = vsel %vm5691, %v5679, %v5694
    %v5696 = vsel %vm5690, %v5693, %v5695
    %v5697 = vsel %vm5689, %v5676, %v5679
    %v5698 = vsel %vm5692, %v5685, 920167782
    %v5699 = vsel %vm5691, %v5682, %v5698
    %v5700 = vsel %vm5690, %v5697, %v5699
    %v5701 = vsel %vm5689, %v5679, %v5682
    %v5702 = vsel %vm5692, %v5688, 1326507024
    %v5703 = vsel %vm5691, %v5685, %v5702
    %v5704 = vsel %vm5690, %v5701, %v5703
    %v5705 = vshll.u32 %v5665, 8
    %v5706 = vmul.u32.u64.compose %v5705, %v5704
    %v5707 = vextract.low.u32 %v5706
    %v5708 = vextract.high.u32 %v5706
    %v5709 = vmul.u32.u64.compose %v5705, %v5700
    %v5710 = vextract.low.u32 %v5709
    %v5711 = vextract.high.u32 %v5709
    %v5712 = vmul.u32 %v5705, %v5696
    %v5713 = vadd.s32 %v5708, %v5710
    %vm5714 = vc.u32 %v5708, %v5710
    %v5715 = vadd.s32 %v5711, 1
    %v5716 = vsel %vm5714, %v5715, %v5711
    %v5717 = vadd.s32 %v5712, %v5716
    %v5718 = vadd.s32 %v5717, 536870912
    %v5719 = vshrl.u32 %v5718, 30
    %v5720 = vshll.u32 %v5719, 30
    %v5721 = vsub.s32 %v5717, %v5720
    %vm5722 = vcmp.lt.s32.totalorder %v5721, 0
    %v5723 = vsub.s32 0, %v5721
    %v5724 = vsel %vm5722, %v5723, %v5721
    %v5725 = vclz %v5724
    %v5726 = vsub.s32 %v5725, 2
    %vm5727 = vcmp.gt.s32.totalorder 0, %v5726
    %v5728 = vsel %vm5727, 0, %v5726
    %v5729 = vsub.s32 32, %v5728
    %v5730 = vshll.u32 %v5721, %v5728
    %v5731 = vshrl.u32 %v5713, %v5729
    %v5732 = vor.u32 %v5730, %v5731
    %v5733 = vsub.s32 4294967266, %v5728
    %v5734 = vadd.s32 %v5733, 127
    %v5735 = vshll.u32 %v5734, 23
    %v5736 = vor.u32 4788187, %v5735
    %v5737 = vand.u32 2147483647, %v5736
    %v5739 = vcvt.s32.f32 %v5732
    %v5740 = vmul.f32 %v5739, %v5737
    %v5741 = vxor.u32 %v5740, 2147483648
    %v5742 = vsel %vm5659, %v5741, %v5740
    %v5743 = vsub.s32 4, %v5719
    %v5744 = vsel %vm5659, %v5743, %v5719
    %v5745 = vsel %vm5658, %v4809, %v5742
    %v5746 = vsel %vm5658, 0, %v5744
    %v5747 = vcosq.f32.pop %v5745
    %v5748 = vsinq.f32.pop %v5745
    %vm5749 = vweird.f32 %v4809
    %v5750 = vand.u32 %v5746, 3
    %vm5751 = vcmp.lt.s32.totalorder %v5750, 2
    %vm5752 = vcmp.eq.s32.totalorder %v5750, 0
    %v5753 = vxor.u32 %v5748, 2147483648
    %v5754 = vsel %vm5752, %v5747, %v5753
    %vm5755 = vcmp.eq.s32.totalorder %v5750, 2
    %v5756 = vxor.u32 %v5747, 2147483648
    %v5757 = vsel %vm5755, %v5756, %v5748
    %v5758 = vsel %vm5751, %v5754, %v5757
    %v5759 = vsel %vm5749, nan, %v5758
    %v5760 = vand.u32 2147483647, %v4810
    %vm5761 = vcmp.le.f32.partialorder %v5760, 0.7853982
    %vm5762 = vcmp.lt.s32.totalorder %v4810, 0
    %v5763 = vand.u32 %v4810, 2139095040
    %v5764 = vshrl.u32 %v5763, 23
    %v5765 = vsub.s32 %v5764, 127
    %v5766 = vand.u32 2147483647, %v4810
    %v5767 = vand.u32 %v5766, 8388607
    %v5768 = vor.u32 %v5767, 8388608
    %v5769 = vsub.s32 0, %v5768
    %v5770 = vadd.s32 %v5765, 1
    %vm5771 = vcmp.gt.s32.totalorder %v5770, 0
    %v5772 = vsel %vm5771, %v5770, 0
    %v5773 = vshrl.u32 %v5772, 5
    %v5774 = vand.u32 %v5772, 31
    %v5775 = vsub.s32 32, %v5774
    %v5776 = vshrl.u32 683565275, %v5775
    %v5777 = vshll.u32 683565275, %v5774
    %v5778 = vshrl.u32 2475754826, %v5775
    %v5779 = vor.u32 %v5777, %v5778
    %v5780 = vshll.u32 2475754826, %v5774
    %v5781 = vshrl.u32 2131351028, %v5775
    %v5782 = vor.u32 %v5780, %v5781
    %v5783 = vshll.u32 2131351028, %v5774
    %v5784 = vshrl.u32 2102212464, %v5775
    %v5785 = vor.u32 %v5783, %v5784
    %v5786 = vshll.u32 2102212464, %v5774
    %v5787 = vshrl.u32 920167782, %v5775
    %v5788 = vor.u32 %v5786, %v5787
    %v5789 = vshll.u32 920167782, %v5774
    %v5790 = vshrl.u32 1326507024, %v5775
    %v5791 = vor.u32 %v5789, %v5790
    %vm5792 = vcmp.lt.s32.totalorder %v5773, 1
    %vm5793 = vcmp.lt.s32.totalorder %v5773, 2
    %vm5794 = vcmp.lt.s32.totalorder %v5773, 3
    %vm5795 = vcmp.lt.s32.totalorder %v5773, 4
    %v5796 = vsel %vm5792, %v5776, %v5779
    %v5797 = vsel %vm5795, %v5785, 2102212464
    %v5798 = vsel %vm5794, %v5782, %v5797
    %v5799 = vsel %vm5793, %v5796, %v5798
    %v5800 = vsel %vm5792, %v5779, %v5782
    %v5801 = vsel %vm5795, %v5788, 920167782
    %v5802 = vsel %vm5794, %v5785, %v5801
    %v5803 = vsel %vm5793, %v5800, %v5802
    %v5804 = vsel %vm5792, %v5782, %v5785
    %v5805 = vsel %vm5795, %v5791, 1326507024
    %v5806 = vsel %vm5794, %v5788, %v5805
    %v5807 = vsel %vm5793, %v5804, %v5806
    %v5808 = vshll.u32 %v5768, 8
    %v5809 = vmul.u32.u64.compose %v5808, %v5807
    %v5810 = vextract.low.u32 %v5809
    %v5811 = vextract.high.u32 %v5809
    %v5812 = vmul.u32.u64.compose %v5808, %v5803
    %v5813 = vextract.low.u32 %v5812
    %v5814 = vextract.high.u32 %v5812
    %v5815 = vmul.u32 %v5808, %v5799
    %v5816 = vadd.s32 %v5811, %v5813
    %vm5817 = vc.u32 %v5811, %v5813
    %v5818 = vadd.s32 %v5814, 1
    %v5819 = vsel %vm5817, %v5818, %v5814
    %v5820 = vadd.s32 %v5815, %v5819
    %v5821 = vadd.s32 %v5820, 536870912
    %v5822 = vshrl.u32 %v5821, 30
    %v5823 = vshll.u32 %v5822, 30
    %v5824 = vsub.s32 %v5820, %v5823
    %vm5825 = vcmp.lt.s32.totalorder %v5824, 0
    %v5826 = vsub.s32 0, %v5824
    %v5827 = vsel %vm5825, %v5826, %v5824
    %v5828 = vclz %v5827
    %v5829 = vsub.s32 %v5828, 2
    %vm5830 = vcmp.gt.s32.totalorder 0, %v5829
    %v5831 = vsel %vm5830, 0, %v5829
    %v5832 = vsub.s32 32, %v5831
    %v5833 = vshll.u32 %v5824, %v5831
    %v5834 = vshrl.u32 %v5816, %v5832
    %v5835 = vor.u32 %v5833, %v5834
    %v5836 = vsub.s32 4294967266, %v5831
    %v5837 = vadd.s32 %v5836, 127
    %v5838 = vshll.u32 %v5837, 23
    %v5839 = vor.u32 4788187, %v5838
    %v5840 = vand.u32 2147483647, %v5839
    %v5842 = vcvt.s32.f32 %v5835
    %v5843 = vmul.f32 %v5842, %v5840
    %v5844 = vxor.u32 %v5843, 2147483648
    %v5845 = vsel %vm5762, %v5844, %v5843
    %v5846 = vsub.s32 4, %v5822
    %v5847 = vsel %vm5762, %v5846, %v5822
    %v5848 = vsel %vm5761, %v4810, %v5845
    %v5849 = vsel %vm5761, 0, %v5847
    %v5850 = vcosq.f32.pop %v5848
    %v5851 = vsinq.f32.pop %v5848
    %vm5852 = vweird.f32 %v4810
    %v5853 = vand.u32 %v5849, 3
    %vm5854 = vcmp.lt.s32.totalorder %v5853, 2
    %vm5855 = vcmp.eq.s32.totalorder %v5853, 0
    %v5856 = vxor.u32 %v5851, 2147483648
    %v5857 = vsel %vm5855, %v5850, %v5856
    %vm5858 = vcmp.eq.s32.totalorder %v5853, 2
    %v5859 = vxor.u32 %v5850, 2147483648
    %v5860 = vsel %vm5858, %v5859, %v5851
    %v5861 = vsel %vm5854, %v5857, %v5860
    %v5862 = vsel %vm5852, nan, %v5861
    %v5863 = vand.u32 2147483647, %v4811
    %vm5864 = vcmp.le.f32.partialorder %v5863, 0.7853982
    %vm5865 = vcmp.lt.s32.totalorder %v4811, 0
    %v5866 = vand.u32 %v4811, 2139095040
    %v5867 = vshrl.u32 %v5866, 23
    %v5868 = vsub.s32 %v5867, 127
    %v5869 = vand.u32 2147483647, %v4811
    %v5870 = vand.u32 %v5869, 8388607
    %v5871 = vor.u32 %v5870, 8388608
    %v5872 = vsub.s32 0, %v5871
    %v5873 = vadd.s32 %v5868, 1
    %vm5874 = vcmp.gt.s32.totalorder %v5873, 0
    %v5875 = vsel %vm5874, %v5873, 0
    %v5876 = vshrl.u32 %v5875, 5
    %v5877 = vand.u32 %v5875, 31
    %v5878 = vsub.s32 32, %v5877
    %v5879 = vshrl.u32 683565275, %v5878
    %v5880 = vshll.u32 683565275, %v5877
    %v5881 = vshrl.u32 2475754826, %v5878
    %v5882 = vor.u32 %v5880, %v5881
    %v5883 = vshll.u32 2475754826, %v5877
    %v5884 = vshrl.u32 2131351028, %v5878
    %v5885 = vor.u32 %v5883, %v5884
    %v5886 = vshll.u32 2131351028, %v5877
    %v5887 = vshrl.u32 2102212464, %v5878
    %v5888 = vor.u32 %v5886, %v5887
    %v5889 = vshll.u32 2102212464, %v5877
    %v5890 = vshrl.u32 920167782, %v5878
    %v5891 = vor.u32 %v5889, %v5890
    %v5892 = vshll.u32 920167782, %v5877
    %v5893 = vshrl.u32 1326507024, %v5878
    %v5894 = vor.u32 %v5892, %v5893
    %vm5895 = vcmp.lt.s32.totalorder %v5876, 1
    %vm5896 = vcmp.lt.s32.totalorder %v5876, 2
    %vm5897 = vcmp.lt.s32.totalorder %v5876, 3
    %vm5898 = vcmp.lt.s32.totalorder %v5876, 4
    %v5899 = vsel %vm5895, %v5879, %v5882
    %v5900 = vsel %vm5898, %v5888, 2102212464
    %v5901 = vsel %vm5897, %v5885, %v5900
    %v5902 = vsel %vm5896, %v5899, %v5901
    %v5903 = vsel %vm5895, %v5882, %v5885
    %v5904 = vsel %vm5898, %v5891, 920167782
    %v5905 = vsel %vm5897, %v5888, %v5904
    %v5906 = vsel %vm5896, %v5903, %v5905
    %v5907 = vsel %vm5895, %v5885, %v5888
    %v5908 = vsel %vm5898, %v5894, 1326507024
    %v5909 = vsel %vm5897, %v5891, %v5908
    %v5910 = vsel %vm5896, %v5907, %v5909
    %v5911 = vshll.u32 %v5871, 8
    %v5912 = vmul.u32.u64.compose %v5911, %v5910
    %v5913 = vextract.low.u32 %v5912
    %v5914 = vextract.high.u32 %v5912
    %v5915 = vmul.u32.u64.compose %v5911, %v5906
    %v5916 = vextract.low.u32 %v5915
    %v5917 = vextract.high.u32 %v5915
    %v5918 = vmul.u32 %v5911, %v5902
    %v5919 = vadd.s32 %v5914, %v5916
    %vm5920 = vc.u32 %v5914, %v5916
    %v5921 = vadd.s32 %v5917, 1
    %v5922 = vsel %vm5920, %v5921, %v5917
    %v5923 = vadd.s32 %v5918, %v5922
    %v5924 = vadd.s32 %v5923, 536870912
    %v5925 = vshrl.u32 %v5924, 30
    %v5926 = vshll.u32 %v5925, 30
    %v5927 = vsub.s32 %v5923, %v5926
    %vm5928 = vcmp.lt.s32.totalorder %v5927, 0
    %v5929 = vsub.s32 0, %v5927
    %v5930 = vsel %vm5928, %v5929, %v5927
    %v5931 = vclz %v5930
    %v5932 = vsub.s32 %v5931, 2
    %vm5933 = vcmp.gt.s32.totalorder 0, %v5932
    %v5934 = vsel %vm5933, 0, %v5932
    %v5935 = vsub.s32 32, %v5934
    %v5936 = vshll.u32 %v5927, %v5934
    %v5937 = vshrl.u32 %v5919, %v5935
    %v5938 = vor.u32 %v5936, %v5937
    %v5939 = vsub.s32 4294967266, %v5934
    %v5940 = vadd.s32 %v5939, 127
    %v5941 = vshll.u32 %v5940, 23
    %v5942 = vor.u32 4788187, %v5941
    %v5943 = vand.u32 2147483647, %v5942
    %v5945 = vcvt.s32.f32 %v5938
    %v5946 = vmul.f32 %v5945, %v5943
    %v5947 = vxor.u32 %v5946, 2147483648
    %v5948 = vsel %vm5865, %v5947, %v5946
    %v5949 = vsub.s32 4, %v5925
    %v5950 = vsel %vm5865, %v5949, %v5925
    %v5951 = vsel %vm5864, %v4811, %v5948
    %v5952 = vsel %vm5864, 0, %v5950
    %v5953 = vcosq.f32.pop %v5951
    %v5954 = vsinq.f32.pop %v5951
    %vm5955 = vweird.f32 %v4811
    %v5956 = vand.u32 %v5952, 3
    %vm5957 = vcmp.lt.s32.totalorder %v5956, 2
    %vm5958 = vcmp.eq.s32.totalorder %v5956, 0
    %v5959 = vxor.u32 %v5954, 2147483648
    %v5960 = vsel %vm5958, %v5953, %v5959
    %vm5961 = vcmp.eq.s32.totalorder %v5956, 2
    %v5962 = vxor.u32 %v5953, 2147483648
    %v5963 = vsel %vm5961, %v5962, %v5954
    %v5964 = vsel %vm5957, %v5960, %v5963
    %v5965 = vsel %vm5955, nan, %v5964
    %v5966 = vand.u32 2147483647, %v4812
    %vm5967 = vcmp.le.f32.partialorder %v5966, 0.7853982
    %vm5968 = vcmp.lt.s32.totalorder %v4812, 0
    %v5969 = vand.u32 %v4812, 2139095040
    %v5970 = vshrl.u32 %v5969, 23
    %v5971 = vsub.s32 %v5970, 127
    %v5972 = vand.u32 2147483647, %v4812
    %v5973 = vand.u32 %v5972, 8388607
    %v5974 = vor.u32 %v5973, 8388608
    %v5975 = vsub.s32 0, %v5974
    %v5976 = vadd.s32 %v5971, 1
    %vm5977 = vcmp.gt.s32.totalorder %v5976, 0
    %v5978 = vsel %vm5977, %v5976, 0
    %v5979 = vshrl.u32 %v5978, 5
    %v5980 = vand.u32 %v5978, 31
    %v5981 = vsub.s32 32, %v5980
    %v5982 = vshrl.u32 683565275, %v5981
    %v5983 = vshll.u32 683565275, %v5980
    %v5984 = vshrl.u32 2475754826, %v5981
    %v5985 = vor.u32 %v5983, %v5984
    %v5986 = vshll.u32 2475754826, %v5980
    %v5987 = vshrl.u32 2131351028, %v5981
    %v5988 = vor.u32 %v5986, %v5987
    %v5989 = vshll.u32 2131351028, %v5980
    %v5990 = vshrl.u32 2102212464, %v5981
    %v5991 = vor.u32 %v5989, %v5990
    %v5992 = vshll.u32 2102212464, %v5980
    %v5993 = vshrl.u32 920167782, %v5981
    %v5994 = vor.u32 %v5992, %v5993
    %v5995 = vshll.u32 920167782, %v5980
    %v5996 = vshrl.u32 1326507024, %v5981
    %v5997 = vor.u32 %v5995, %v5996
    %vm5998 = vcmp.lt.s32.totalorder %v5979, 1
    %vm5999 = vcmp.lt.s32.totalorder %v5979, 2
    %vm6000 = vcmp.lt.s32.totalorder %v5979, 3
    %vm6001 = vcmp.lt.s32.totalorder %v5979, 4
    %v6002 = vsel %vm5998, %v5982, %v5985
    %v6003 = vsel %vm6001, %v5991, 2102212464
    %v6004 = vsel %vm6000, %v5988, %v6003
    %v6005 = vsel %vm5999, %v6002, %v6004
    %v6006 = vsel %vm5998, %v5985, %v5988
    %v6007 = vsel %vm6001, %v5994, 920167782
    %v6008 = vsel %vm6000, %v5991, %v6007
    %v6009 = vsel %vm5999, %v6006, %v6008
    %v6010 = vsel %vm5998, %v5988, %v5991
    %v6011 = vsel %vm6001, %v5997, 1326507024
    %v6012 = vsel %vm6000, %v5994, %v6011
    %v6013 = vsel %vm5999, %v6010, %v6012
    %v6014 = vshll.u32 %v5974, 8
    %v6015 = vmul.u32.u64.compose %v6014, %v6013
    %v6016 = vextract.low.u32 %v6015
    %v6017 = vextract.high.u32 %v6015
    %v6018 = vmul.u32.u64.compose %v6014, %v6009
    %v6019 = vextract.low.u32 %v6018
    %v6020 = vextract.high.u32 %v6018
    %v6021 = vmul.u32 %v6014, %v6005
    %v6022 = vadd.s32 %v6017, %v6019
    %vm6023 = vc.u32 %v6017, %v6019
    %v6024 = vadd.s32 %v6020, 1
    %v6025 = vsel %vm6023, %v6024, %v6020
    %v6026 = vadd.s32 %v6021, %v6025
    %v6027 = vadd.s32 %v6026, 536870912
    %v6028 = vshrl.u32 %v6027, 30
    %v6029 = vshll.u32 %v6028, 30
    %v6030 = vsub.s32 %v6026, %v6029
    %vm6031 = vcmp.lt.s32.totalorder %v6030, 0
    %v6032 = vsub.s32 0, %v6030
    %v6033 = vsel %vm6031, %v6032, %v6030
    %v6034 = vclz %v6033
    %v6035 = vsub.s32 %v6034, 2
    %vm6036 = vcmp.gt.s32.totalorder 0, %v6035
    %v6037 = vsel %vm6036, 0, %v6035
    %v6038 = vsub.s32 32, %v6037
    %v6039 = vshll.u32 %v6030, %v6037
    %v6040 = vshrl.u32 %v6022, %v6038
    %v6041 = vor.u32 %v6039, %v6040
    %v6042 = vsub.s32 4294967266, %v6037
    %v6043 = vadd.s32 %v6042, 127
    %v6044 = vshll.u32 %v6043, 23
    %v6045 = vor.u32 4788187, %v6044
    %v6046 = vand.u32 2147483647, %v6045
    %v6048 = vcvt.s32.f32 %v6041
    %v6049 = vmul.f32 %v6048, %v6046
    %v6050 = vxor.u32 %v6049, 2147483648
    %v6051 = vsel %vm5968, %v6050, %v6049
    %v6052 = vsub.s32 4, %v6028
    %v6053 = vsel %vm5968, %v6052, %v6028
    %v6054 = vsel %vm5967, %v4812, %v6051
    %v6055 = vsel %vm5967, 0, %v6053
    %v6056 = vcosq.f32.pop %v6054
    %v6057 = vsinq.f32.pop %v6054
    %vm6058 = vweird.f32 %v4812
    %v6059 = vand.u32 %v6055, 3
    %vm6060 = vcmp.lt.s32.totalorder %v6059, 2
    %vm6061 = vcmp.eq.s32.totalorder %v6059, 0
    %v6062 = vxor.u32 %v6057, 2147483648
    %v6063 = vsel %vm6061, %v6056, %v6062
    %vm6064 = vcmp.eq.s32.totalorder %v6059, 2
    %v6065 = vxor.u32 %v6056, 2147483648
    %v6066 = vsel %vm6064, %v6065, %v6057
    %v6067 = vsel %vm6060, %v6063, %v6066
    %v6068 = vsel %vm6058, nan, %v6067
    %v6069 = vand.u32 2147483647, %v4813
    %vm6070 = vcmp.le.f32.partialorder %v6069, 0.7853982
    %vm6071 = vcmp.lt.s32.totalorder %v4813, 0
    %v6072 = vand.u32 %v4813, 2139095040
    %v6073 = vshrl.u32 %v6072, 23
    %v6074 = vsub.s32 %v6073, 127
    %v6075 = vand.u32 2147483647, %v4813
    %v6076 = vand.u32 %v6075, 8388607
    %v6077 = vor.u32 %v6076, 8388608
    %v6078 = vsub.s32 0, %v6077
    %v6079 = vadd.s32 %v6074, 1
    %vm6080 = vcmp.gt.s32.totalorder %v6079, 0
    %v6081 = vsel %vm6080, %v6079, 0
    %v6082 = vshrl.u32 %v6081, 5
    %v6083 = vand.u32 %v6081, 31
    %v6084 = vsub.s32 32, %v6083
    %v6085 = vshrl.u32 683565275, %v6084
    %v6086 = vshll.u32 683565275, %v6083
    %v6087 = vshrl.u32 2475754826, %v6084
    %v6088 = vor.u32 %v6086, %v6087
    %v6089 = vshll.u32 2475754826, %v6083
    %v6090 = vshrl.u32 2131351028, %v6084
    %v6091 = vor.u32 %v6089, %v6090
    %v6092 = vshll.u32 2131351028, %v6083
    %v6093 = vshrl.u32 2102212464, %v6084
    %v6094 = vor.u32 %v6092, %v6093
    %v6095 = vshll.u32 2102212464, %v6083
    %v6096 = vshrl.u32 920167782, %v6084
    %v6097 = vor.u32 %v6095, %v6096
    %v6098 = vshll.u32 920167782, %v6083
    %v6099 = vshrl.u32 1326507024, %v6084
    %v6100 = vor.u32 %v6098, %v6099
    %vm6101 = vcmp.lt.s32.totalorder %v6082, 1
    %vm6102 = vcmp.lt.s32.totalorder %v6082, 2
    %vm6103 = vcmp.lt.s32.totalorder %v6082, 3
    %vm6104 = vcmp.lt.s32.totalorder %v6082, 4
    %v6105 = vsel %vm6101, %v6085, %v6088
    %v6106 = vsel %vm6104, %v6094, 2102212464
    %v6107 = vsel %vm6103, %v6091, %v6106
    %v6108 = vsel %vm6102, %v6105, %v6107
    %v6109 = vsel %vm6101, %v6088, %v6091
    %v6110 = vsel %vm6104, %v6097, 920167782
    %v6111 = vsel %vm6103, %v6094, %v6110
    %v6112 = vsel %vm6102, %v6109, %v6111
    %v6113 = vsel %vm6101, %v6091, %v6094
    %v6114 = vsel %vm6104, %v6100, 1326507024
    %v6115 = vsel %vm6103, %v6097, %v6114
    %v6116 = vsel %vm6102, %v6113, %v6115
    %v6117 = vshll.u32 %v6077, 8
    %v6118 = vmul.u32.u64.compose %v6117, %v6116
    %v6119 = vextract.low.u32 %v6118
    %v6120 = vextract.high.u32 %v6118
    %v6121 = vmul.u32.u64.compose %v6117, %v6112
    %v6122 = vextract.low.u32 %v6121
    %v6123 = vextract.high.u32 %v6121
    %v6124 = vmul.u32 %v6117, %v6108
    %v6125 = vadd.s32 %v6120, %v6122
    %vm6126 = vc.u32 %v6120, %v6122
    %v6127 = vadd.s32 %v6123, 1
    %v6128 = vsel %vm6126, %v6127, %v6123
    %v6129 = vadd.s32 %v6124, %v6128
    %v6130 = vadd.s32 %v6129, 536870912
    %v6131 = vshrl.u32 %v6130, 30
    %v6132 = vshll.u32 %v6131, 30
    %v6133 = vsub.s32 %v6129, %v6132
    %vm6134 = vcmp.lt.s32.totalorder %v6133, 0
    %v6135 = vsub.s32 0, %v6133
    %v6136 = vsel %vm6134, %v6135, %v6133
    %v6137 = vclz %v6136
    %v6138 = vsub.s32 %v6137, 2
    %vm6139 = vcmp.gt.s32.totalorder 0, %v6138
    %v6140 = vsel %vm6139, 0, %v6138
    %v6141 = vsub.s32 32, %v6140
    %v6142 = vshll.u32 %v6133, %v6140
    %v6143 = vshrl.u32 %v6125, %v6141
    %v6144 = vor.u32 %v6142, %v6143
    %v6145 = vsub.s32 4294967266, %v6140
    %v6146 = vadd.s32 %v6145, 127
    %v6147 = vshll.u32 %v6146, 23
    %v6148 = vor.u32 4788187, %v6147
    %v6149 = vand.u32 2147483647, %v6148
    %v6151 = vcvt.s32.f32 %v6144
    %v6152 = vmul.f32 %v6151, %v6149
    %v6153 = vxor.u32 %v6152, 2147483648
    %v6154 = vsel %vm6071, %v6153, %v6152
    %v6155 = vsub.s32 4, %v6131
    %v6156 = vsel %vm6071, %v6155, %v6131
    %v6157 = vsel %vm6070, %v4813, %v6154
    %v6158 = vsel %vm6070, 0, %v6156
    %v6159 = vcosq.f32.pop %v6157
    %v6160 = vsinq.f32.pop %v6157
    %vm6161 = vweird.f32 %v4813
    %v6162 = vand.u32 %v6158, 3
    %vm6163 = vcmp.lt.s32.totalorder %v6162, 2
    %vm6164 = vcmp.eq.s32.totalorder %v6162, 0
    %v6165 = vxor.u32 %v6160, 2147483648
    %v6166 = vsel %vm6164, %v6159, %v6165
    %vm6167 = vcmp.eq.s32.totalorder %v6162, 2
    %v6168 = vxor.u32 %v6159, 2147483648
    %v6169 = vsel %vm6167, %v6168, %v6160
    %v6170 = vsel %vm6163, %v6166, %v6169
    %v6171 = vsel %vm6161, nan, %v6170
    %v6172 = vand.u32 2147483647, %v4814
    %vm6173 = vcmp.le.f32.partialorder %v6172, 0.7853982
    %vm6174 = vcmp.lt.s32.totalorder %v4814, 0
    %v6175 = vand.u32 %v4814, 2139095040
    %v6176 = vshrl.u32 %v6175, 23
    %v6177 = vsub.s32 %v6176, 127
    %v6178 = vand.u32 2147483647, %v4814
    %v6179 = vand.u32 %v6178, 8388607
    %v6180 = vor.u32 %v6179, 8388608
    %v6181 = vsub.s32 0, %v6180
    %v6182 = vadd.s32 %v6177, 1
    %vm6183 = vcmp.gt.s32.totalorder %v6182, 0
    %v6184 = vsel %vm6183, %v6182, 0
    %v6185 = vshrl.u32 %v6184, 5
    %v6186 = vand.u32 %v6184, 31
    %v6187 = vsub.s32 32, %v6186
    %v6188 = vshrl.u32 683565275, %v6187
    %v6189 = vshll.u32 683565275, %v6186
    %v6190 = vshrl.u32 2475754826, %v6187
    %v6191 = vor.u32 %v6189, %v6190
    %v6192 = vshll.u32 2475754826, %v6186
    %v6193 = vshrl.u32 2131351028, %v6187
    %v6194 = vor.u32 %v6192, %v6193
    %v6195 = vshll.u32 2131351028, %v6186
    %v6196 = vshrl.u32 2102212464, %v6187
    %v6197 = vor.u32 %v6195, %v6196
    %v6198 = vshll.u32 2102212464, %v6186
    %v6199 = vshrl.u32 920167782, %v6187
    %v6200 = vor.u32 %v6198, %v6199
    %v6201 = vshll.u32 920167782, %v6186
    %v6202 = vshrl.u32 1326507024, %v6187
    %v6203 = vor.u32 %v6201, %v6202
    %vm6204 = vcmp.lt.s32.totalorder %v6185, 1
    %vm6205 = vcmp.lt.s32.totalorder %v6185, 2
    %vm6206 = vcmp.lt.s32.totalorder %v6185, 3
    %vm6207 = vcmp.lt.s32.totalorder %v6185, 4
    %v6208 = vsel %vm6204, %v6188, %v6191
    %v6209 = vsel %vm6207, %v6197, 2102212464
    %v6210 = vsel %vm6206, %v6194, %v6209
    %v6211 = vsel %vm6205, %v6208, %v6210
    %v6212 = vsel %vm6204, %v6191, %v6194
    %v6213 = vsel %vm6207, %v6200, 920167782
    %v6214 = vsel %vm6206, %v6197, %v6213
    %v6215 = vsel %vm6205, %v6212, %v6214
    %v6216 = vsel %vm6204, %v6194, %v6197
    %v6217 = vsel %vm6207, %v6203, 1326507024
    %v6218 = vsel %vm6206, %v6200, %v6217
    %v6219 = vsel %vm6205, %v6216, %v6218
    %v6220 = vshll.u32 %v6180, 8
    %v6221 = vmul.u32.u64.compose %v6220, %v6219
    %v6222 = vextract.low.u32 %v6221
    %v6223 = vextract.high.u32 %v6221
    %v6224 = vmul.u32.u64.compose %v6220, %v6215
    %v6225 = vextract.low.u32 %v6224
    %v6226 = vextract.high.u32 %v6224
    %v6227 = vmul.u32 %v6220, %v6211
    %v6228 = vadd.s32 %v6223, %v6225
    %vm6229 = vc.u32 %v6223, %v6225
    %v6230 = vadd.s32 %v6226, 1
    %v6231 = vsel %vm6229, %v6230, %v6226
    %v6232 = vadd.s32 %v6227, %v6231
    %v6233 = vadd.s32 %v6232, 536870912
    %v6234 = vshrl.u32 %v6233, 30
    %v6235 = vshll.u32 %v6234, 30
    %v6236 = vsub.s32 %v6232, %v6235
    %vm6237 = vcmp.lt.s32.totalorder %v6236, 0
    %v6238 = vsub.s32 0, %v6236
    %v6239 = vsel %vm6237, %v6238, %v6236
    %v6240 = vclz %v6239
    %v6241 = vsub.s32 %v6240, 2
    %vm6242 = vcmp.gt.s32.totalorder 0, %v6241
    %v6243 = vsel %vm6242, 0, %v6241
    %v6244 = vsub.s32 32, %v6243
    %v6245 = vshll.u32 %v6236, %v6243
    %v6246 = vshrl.u32 %v6228, %v6244
    %v6247 = vor.u32 %v6245, %v6246
    %v6248 = vsub.s32 4294967266, %v6243
    %v6249 = vadd.s32 %v6248, 127
    %v6250 = vshll.u32 %v6249, 23
    %v6251 = vor.u32 4788187, %v6250
    %v6252 = vand.u32 2147483647, %v6251
    %v6254 = vcvt.s32.f32 %v6247
    %v6255 = vmul.f32 %v6254, %v6252
    %v6256 = vxor.u32 %v6255, 2147483648
    %v6257 = vsel %vm6174, %v6256, %v6255
    %v6258 = vsub.s32 4, %v6234
    %v6259 = vsel %vm6174, %v6258, %v6234
    %v6260 = vsel %vm6173, %v4814, %v6257
    %v6261 = vsel %vm6173, 0, %v6259
    %v6262 = vcosq.f32.pop %v6260
    %v6263 = vsinq.f32.pop %v6260
    %vm6264 = vweird.f32 %v4814
    %v6265 = vand.u32 %v6261, 3
    %vm6266 = vcmp.lt.s32.totalorder %v6265, 2
    %vm6267 = vcmp.eq.s32.totalorder %v6265, 0
    %v6268 = vxor.u32 %v6263, 2147483648
    %v6269 = vsel %vm6267, %v6262, %v6268
    %vm6270 = vcmp.eq.s32.totalorder %v6265, 2
    %v6271 = vxor.u32 %v6262, 2147483648
    %v6272 = vsel %vm6270, %v6271, %v6263
    %v6273 = vsel %vm6266, %v6269, %v6272
    %v6274 = vsel %vm6264, nan, %v6273
    %v6275 = vand.u32 2147483647, %v4815
    %vm6276 = vcmp.le.f32.partialorder %v6275, 0.7853982
    %vm6277 = vcmp.lt.s32.totalorder %v4815, 0
    %v6278 = vand.u32 %v4815, 2139095040
    %v6279 = vshrl.u32 %v6278, 23
    %v6280 = vsub.s32 %v6279, 127
    %v6281 = vand.u32 2147483647, %v4815
    %v6282 = vand.u32 %v6281, 8388607
    %v6283 = vor.u32 %v6282, 8388608
    %v6284 = vsub.s32 0, %v6283
    %v6285 = vadd.s32 %v6280, 1
    %vm6286 = vcmp.gt.s32.totalorder %v6285, 0
    %v6287 = vsel %vm6286, %v6285, 0
    %v6288 = vshrl.u32 %v6287, 5
    %v6289 = vand.u32 %v6287, 31
    %v6290 = vsub.s32 32, %v6289
    %v6291 = vshrl.u32 683565275, %v6290
    %v6292 = vshll.u32 683565275, %v6289
    %v6293 = vshrl.u32 2475754826, %v6290
    %v6294 = vor.u32 %v6292, %v6293
    %v6295 = vshll.u32 2475754826, %v6289
    %v6296 = vshrl.u32 2131351028, %v6290
    %v6297 = vor.u32 %v6295, %v6296
    %v6298 = vshll.u32 2131351028, %v6289
    %v6299 = vshrl.u32 2102212464, %v6290
    %v6300 = vor.u32 %v6298, %v6299
    %v6301 = vshll.u32 2102212464, %v6289
    %v6302 = vshrl.u32 920167782, %v6290
    %v6303 = vor.u32 %v6301, %v6302
    %v6304 = vshll.u32 920167782, %v6289
    %v6305 = vshrl.u32 1326507024, %v6290
    %v6306 = vor.u32 %v6304, %v6305
    %vm6307 = vcmp.lt.s32.totalorder %v6288, 1
    %vm6308 = vcmp.lt.s32.totalorder %v6288, 2
    %vm6309 = vcmp.lt.s32.totalorder %v6288, 3
    %vm6310 = vcmp.lt.s32.totalorder %v6288, 4
    %v6311 = vsel %vm6307, %v6291, %v6294
    %v6312 = vsel %vm6310, %v6300, 2102212464
    %v6313 = vsel %vm6309, %v6297, %v6312
    %v6314 = vsel %vm6308, %v6311, %v6313
    %v6315 = vsel %vm6307, %v6294, %v6297
    %v6316 = vsel %vm6310, %v6303, 920167782
    %v6317 = vsel %vm6309, %v6300, %v6316
    %v6318 = vsel %vm6308, %v6315, %v6317
    %v6319 = vsel %vm6307, %v6297, %v6300
    %v6320 = vsel %vm6310, %v6306, 1326507024
    %v6321 = vsel %vm6309, %v6303, %v6320
    %v6322 = vsel %vm6308, %v6319, %v6321
    %v6323 = vshll.u32 %v6283, 8
    %v6324 = vmul.u32.u64.compose %v6323, %v6322
    %v6325 = vextract.low.u32 %v6324
    %v6326 = vextract.high.u32 %v6324
    %v6327 = vmul.u32.u64.compose %v6323, %v6318
    %v6328 = vextract.low.u32 %v6327
    %v6329 = vextract.high.u32 %v6327
    %v6330 = vmul.u32 %v6323, %v6314
    %v6331 = vadd.s32 %v6326, %v6328
    %vm6332 = vc.u32 %v6326, %v6328
    %v6333 = vadd.s32 %v6329, 1
    %v6334 = vsel %vm6332, %v6333, %v6329
    %v6335 = vadd.s32 %v6330, %v6334
    %v6336 = vadd.s32 %v6335, 536870912
    %v6337 = vshrl.u32 %v6336, 30
    %v6338 = vshll.u32 %v6337, 30
    %v6339 = vsub.s32 %v6335, %v6338
    %vm6340 = vcmp.lt.s32.totalorder %v6339, 0
    %v6341 = vsub.s32 0, %v6339
    %v6342 = vsel %vm6340, %v6341, %v6339
    %v6343 = vclz %v6342
    %v6344 = vsub.s32 %v6343, 2
    %vm6345 = vcmp.gt.s32.totalorder 0, %v6344
    %v6346 = vsel %vm6345, 0, %v6344
    %v6347 = vsub.s32 32, %v6346
    %v6348 = vshll.u32 %v6339, %v6346
    %v6349 = vshrl.u32 %v6331, %v6347
    %v6350 = vor.u32 %v6348, %v6349
    %v6351 = vsub.s32 4294967266, %v6346
    %v6352 = vadd.s32 %v6351, 127
    %v6353 = vshll.u32 %v6352, 23
    %v6354 = vor.u32 4788187, %v6353
    %v6355 = vand.u32 2147483647, %v6354
    %v6357 = vcvt.s32.f32 %v6350
    %v6358 = vmul.f32 %v6357, %v6355
    %v6359 = vxor.u32 %v6358, 2147483648
    %v6360 = vsel %vm6277, %v6359, %v6358
    %v6361 = vsub.s32 4, %v6337
    %v6362 = vsel %vm6277, %v6361, %v6337
    %v6363 = vsel %vm6276, %v4815, %v6360
    %v6364 = vsel %vm6276, 0, %v6362
    %v6365 = vcosq.f32.pop %v6363
    %v6366 = vsinq.f32.pop %v6363
    %vm6367 = vweird.f32 %v4815
    %v6368 = vand.u32 %v6364, 3
    %vm6369 = vcmp.lt.s32.totalorder %v6368, 2
    %vm6370 = vcmp.eq.s32.totalorder %v6368, 0
    %v6371 = vxor.u32 %v6366, 2147483648
    %v6372 = vsel %vm6370, %v6365, %v6371
    %vm6373 = vcmp.eq.s32.totalorder %v6368, 2
    %v6374 = vxor.u32 %v6365, 2147483648
    %v6375 = vsel %vm6373, %v6374, %v6366
    %v6376 = vsel %vm6369, %v6372, %v6375
    %v6377 = vsel %vm6367, nan, %v6376
    %v6378 = vand.u32 2147483647, %v4816
    %vm6379 = vcmp.le.f32.partialorder %v6378, 0.7853982
    %vm6380 = vcmp.lt.s32.totalorder %v4816, 0
    %v6381 = vand.u32 %v4816, 2139095040
    %v6382 = vshrl.u32 %v6381, 23
    %v6383 = vsub.s32 %v6382, 127
    %v6384 = vand.u32 2147483647, %v4816
    %v6385 = vand.u32 %v6384, 8388607
    %v6386 = vor.u32 %v6385, 8388608
    %v6387 = vsub.s32 0, %v6386
    %v6388 = vadd.s32 %v6383, 1
    %vm6389 = vcmp.gt.s32.totalorder %v6388, 0
    %v6390 = vsel %vm6389, %v6388, 0
    %v6391 = vshrl.u32 %v6390, 5
    %v6392 = vand.u32 %v6390, 31
    %v6393 = vsub.s32 32, %v6392
    %v6394 = vshrl.u32 683565275, %v6393
    %v6395 = vshll.u32 683565275, %v6392
    %v6396 = vshrl.u32 2475754826, %v6393
    %v6397 = vor.u32 %v6395, %v6396
    %v6398 = vshll.u32 2475754826, %v6392
    %v6399 = vshrl.u32 2131351028, %v6393
    %v6400 = vor.u32 %v6398, %v6399
    %v6401 = vshll.u32 2131351028, %v6392
    %v6402 = vshrl.u32 2102212464, %v6393
    %v6403 = vor.u32 %v6401, %v6402
    %v6404 = vshll.u32 2102212464, %v6392
    %v6405 = vshrl.u32 920167782, %v6393
    %v6406 = vor.u32 %v6404, %v6405
    %v6407 = vshll.u32 920167782, %v6392
    %v6408 = vshrl.u32 1326507024, %v6393
    %v6409 = vor.u32 %v6407, %v6408
    %vm6410 = vcmp.lt.s32.totalorder %v6391, 1
    %vm6411 = vcmp.lt.s32.totalorder %v6391, 2
    %vm6412 = vcmp.lt.s32.totalorder %v6391, 3
    %vm6413 = vcmp.lt.s32.totalorder %v6391, 4
    %v6414 = vsel %vm6410, %v6394, %v6397
    %v6415 = vsel %vm6413, %v6403, 2102212464
    %v6416 = vsel %vm6412, %v6400, %v6415
    %v6417 = vsel %vm6411, %v6414, %v6416
    %v6418 = vsel %vm6410, %v6397, %v6400
    %v6419 = vsel %vm6413, %v6406, 920167782
    %v6420 = vsel %vm6412, %v6403, %v6419
    %v6421 = vsel %vm6411, %v6418, %v6420
    %v6422 = vsel %vm6410, %v6400, %v6403
    %v6423 = vsel %vm6413, %v6409, 1326507024
    %v6424 = vsel %vm6412, %v6406, %v6423
    %v6425 = vsel %vm6411, %v6422, %v6424
    %v6426 = vshll.u32 %v6386, 8
    %v6427 = vmul.u32.u64.compose %v6426, %v6425
    %v6428 = vextract.low.u32 %v6427
    %v6429 = vextract.high.u32 %v6427
    %v6430 = vmul.u32.u64.compose %v6426, %v6421
    %v6431 = vextract.low.u32 %v6430
    %v6432 = vextract.high.u32 %v6430
    %v6433 = vmul.u32 %v6426, %v6417
    %v6434 = vadd.s32 %v6429, %v6431
    %vm6435 = vc.u32 %v6429, %v6431
    %v6436 = vadd.s32 %v6432, 1
    %v6437 = vsel %vm6435, %v6436, %v6432
    %v6438 = vadd.s32 %v6433, %v6437
    %v6439 = vadd.s32 %v6438, 536870912
    %v6440 = vshrl.u32 %v6439, 30
    %v6441 = vshll.u32 %v6440, 30
    %v6442 = vsub.s32 %v6438, %v6441
    %vm6443 = vcmp.lt.s32.totalorder %v6442, 0
    %v6444 = vsub.s32 0, %v6442
    %v6445 = vsel %vm6443, %v6444, %v6442
    %v6446 = vclz %v6445
    %v6447 = vsub.s32 %v6446, 2
    %vm6448 = vcmp.gt.s32.totalorder 0, %v6447
    %v6449 = vsel %vm6448, 0, %v6447
    %v6450 = vsub.s32 32, %v6449
    %v6451 = vshll.u32 %v6442, %v6449
    %v6452 = vshrl.u32 %v6434, %v6450
    %v6453 = vor.u32 %v6451, %v6452
    %v6454 = vsub.s32 4294967266, %v6449
    %v6455 = vadd.s32 %v6454, 127
    %v6456 = vshll.u32 %v6455, 23
    %v6457 = vor.u32 4788187, %v6456
    %v6458 = vand.u32 2147483647, %v6457
    %v6460 = vcvt.s32.f32 %v6453
    %v6461 = vmul.f32 %v6460, %v6458
    %v6462 = vxor.u32 %v6461, 2147483648
    %v6463 = vsel %vm6380, %v6462, %v6461
    %v6464 = vsub.s32 4, %v6440
    %v6465 = vsel %vm6380, %v6464, %v6440
    %v6466 = vsel %vm6379, %v4816, %v6463
    %v6467 = vsel %vm6379, 0, %v6465
    %v6468 = vcosq.f32.pop %v6466
    %v6469 = vsinq.f32.pop %v6466
    %vm6470 = vweird.f32 %v4816
    %v6471 = vand.u32 %v6467, 3
    %vm6472 = vcmp.lt.s32.totalorder %v6471, 2
    %vm6473 = vcmp.eq.s32.totalorder %v6471, 0
    %v6474 = vxor.u32 %v6469, 2147483648
    %v6475 = vsel %vm6473, %v6468, %v6474
    %vm6476 = vcmp.eq.s32.totalorder %v6471, 2
    %v6477 = vxor.u32 %v6468, 2147483648
    %v6478 = vsel %vm6476, %v6477, %v6469
    %v6479 = vsel %vm6472, %v6475, %v6478
    %v6480 = vsel %vm6470, nan, %v6479
    %v6481 = vand.u32 2147483647, %v4817
    %vm6482 = vcmp.le.f32.partialorder %v6481, 0.7853982
    %vm6483 = vcmp.lt.s32.totalorder %v4817, 0
    %v6484 = vand.u32 %v4817, 2139095040
    %v6485 = vshrl.u32 %v6484, 23
    %v6486 = vsub.s32 %v6485, 127
    %v6487 = vand.u32 2147483647, %v4817
    %v6488 = vand.u32 %v6487, 8388607
    %v6489 = vor.u32 %v6488, 8388608
    %v6490 = vsub.s32 0, %v6489
    %v6491 = vadd.s32 %v6486, 1
    %vm6492 = vcmp.gt.s32.totalorder %v6491, 0
    %v6493 = vsel %vm6492, %v6491, 0
    %v6494 = vshrl.u32 %v6493, 5
    %v6495 = vand.u32 %v6493, 31
    %v6496 = vsub.s32 32, %v6495
    %v6497 = vshrl.u32 683565275, %v6496
    %v6498 = vshll.u32 683565275, %v6495
    %v6499 = vshrl.u32 2475754826, %v6496
    %v6500 = vor.u32 %v6498, %v6499
    %v6501 = vshll.u32 2475754826, %v6495
    %v6502 = vshrl.u32 2131351028, %v6496
    %v6503 = vor.u32 %v6501, %v6502
    %v6504 = vshll.u32 2131351028, %v6495
    %v6505 = vshrl.u32 2102212464, %v6496
    %v6506 = vor.u32 %v6504, %v6505
    %v6507 = vshll.u32 2102212464, %v6495
    %v6508 = vshrl.u32 920167782, %v6496
    %v6509 = vor.u32 %v6507, %v6508
    %v6510 = vshll.u32 920167782, %v6495
    %v6511 = vshrl.u32 1326507024, %v6496
    %v6512 = vor.u32 %v6510, %v6511
    %vm6513 = vcmp.lt.s32.totalorder %v6494, 1
    %vm6514 = vcmp.lt.s32.totalorder %v6494, 2
    %vm6515 = vcmp.lt.s32.totalorder %v6494, 3
    %vm6516 = vcmp.lt.s32.totalorder %v6494, 4
    %v6517 = vsel %vm6513, %v6497, %v6500
    %v6518 = vsel %vm6516, %v6506, 2102212464
    %v6519 = vsel %vm6515, %v6503, %v6518
    %v6520 = vsel %vm6514, %v6517, %v6519
    %v6521 = vsel %vm6513, %v6500, %v6503
    %v6522 = vsel %vm6516, %v6509, 920167782
    %v6523 = vsel %vm6515, %v6506, %v6522
    %v6524 = vsel %vm6514, %v6521, %v6523
    %v6525 = vsel %vm6513, %v6503, %v6506
    %v6526 = vsel %vm6516, %v6512, 1326507024
    %v6527 = vsel %vm6515, %v6509, %v6526
    %v6528 = vsel %vm6514, %v6525, %v6527
    %v6529 = vshll.u32 %v6489, 8
    %v6530 = vmul.u32.u64.compose %v6529, %v6528
    %v6531 = vextract.low.u32 %v6530
    %v6532 = vextract.high.u32 %v6530
    %v6533 = vmul.u32.u64.compose %v6529, %v6524
    %v6534 = vextract.low.u32 %v6533
    %v6535 = vextract.high.u32 %v6533
    %v6536 = vmul.u32 %v6529, %v6520
    %v6537 = vadd.s32 %v6532, %v6534
    %vm6538 = vc.u32 %v6532, %v6534
    %v6539 = vadd.s32 %v6535, 1
    %v6540 = vsel %vm6538, %v6539, %v6535
    %v6541 = vadd.s32 %v6536, %v6540
    %v6542 = vadd.s32 %v6541, 536870912
    %v6543 = vshrl.u32 %v6542, 30
    %v6544 = vshll.u32 %v6543, 30
    %v6545 = vsub.s32 %v6541, %v6544
    %vm6546 = vcmp.lt.s32.totalorder %v6545, 0
    %v6547 = vsub.s32 0, %v6545
    %v6548 = vsel %vm6546, %v6547, %v6545
    %v6549 = vclz %v6548
    %v6550 = vsub.s32 %v6549, 2
    %vm6551 = vcmp.gt.s32.totalorder 0, %v6550
    %v6552 = vsel %vm6551, 0, %v6550
    %v6553 = vsub.s32 32, %v6552
    %v6554 = vshll.u32 %v6545, %v6552
    %v6555 = vshrl.u32 %v6537, %v6553
    %v6556 = vor.u32 %v6554, %v6555
    %v6557 = vsub.s32 4294967266, %v6552
    %v6558 = vadd.s32 %v6557, 127
    %v6559 = vshll.u32 %v6558, 23
    %v6560 = vor.u32 4788187, %v6559
    %v6561 = vand.u32 2147483647, %v6560
    %v6563 = vcvt.s32.f32 %v6556
    %v6564 = vmul.f32 %v6563, %v6561
    %v6565 = vxor.u32 %v6564, 2147483648
    %v6566 = vsel %vm6483, %v6565, %v6564
    %v6567 = vsub.s32 4, %v6543
    %v6568 = vsel %vm6483, %v6567, %v6543
    %v6569 = vsel %vm6482, %v4817, %v6566
    %v6570 = vsel %vm6482, 0, %v6568
    %v6571 = vcosq.f32.pop %v6569
    %v6572 = vsinq.f32.pop %v6569
    %vm6573 = vweird.f32 %v4817
    %v6574 = vand.u32 %v6570, 3
    %vm6575 = vcmp.lt.s32.totalorder %v6574, 2
    %vm6576 = vcmp.eq.s32.totalorder %v6574, 0
    %v6577 = vxor.u32 %v6572, 2147483648
    %v6578 = vsel %vm6576, %v6571, %v6577
    %vm6579 = vcmp.eq.s32.totalorder %v6574, 2
    %v6580 = vxor.u32 %v6571, 2147483648
    %v6581 = vsel %vm6579, %v6580, %v6572
    %v6582 = vsel %vm6575, %v6578, %v6581
    %v6583 = vsel %vm6573, nan, %v6582
    %v6584 = vand.u32 2147483647, %v4818
    %vm6585 = vcmp.le.f32.partialorder %v6584, 0.7853982
    %vm6586 = vcmp.lt.s32.totalorder %v4818, 0
    %v6587 = vand.u32 %v4818, 2139095040
    %v6588 = vshrl.u32 %v6587, 23
    %v6589 = vsub.s32 %v6588, 127
    %v6590 = vand.u32 2147483647, %v4818
    %v6591 = vand.u32 %v6590, 8388607
    %v6592 = vor.u32 %v6591, 8388608
    %v6593 = vsub.s32 0, %v6592
    %v6594 = vadd.s32 %v6589, 1
    %vm6595 = vcmp.gt.s32.totalorder %v6594, 0
    %v6596 = vsel %vm6595, %v6594, 0
    %v6597 = vshrl.u32 %v6596, 5
    %v6598 = vand.u32 %v6596, 31
    %v6599 = vsub.s32 32, %v6598
    %v6600 = vshrl.u32 683565275, %v6599
    %v6601 = vshll.u32 683565275, %v6598
    %v6602 = vshrl.u32 2475754826, %v6599
    %v6603 = vor.u32 %v6601, %v6602
    %v6604 = vshll.u32 2475754826, %v6598
    %v6605 = vshrl.u32 2131351028, %v6599
    %v6606 = vor.u32 %v6604, %v6605
    %v6607 = vshll.u32 2131351028, %v6598
    %v6608 = vshrl.u32 2102212464, %v6599
    %v6609 = vor.u32 %v6607, %v6608
    %v6610 = vshll.u32 2102212464, %v6598
    %v6611 = vshrl.u32 920167782, %v6599
    %v6612 = vor.u32 %v6610, %v6611
    %v6613 = vshll.u32 920167782, %v6598
    %v6614 = vshrl.u32 1326507024, %v6599
    %v6615 = vor.u32 %v6613, %v6614
    %vm6616 = vcmp.lt.s32.totalorder %v6597, 1
    %vm6617 = vcmp.lt.s32.totalorder %v6597, 2
    %vm6618 = vcmp.lt.s32.totalorder %v6597, 3
    %vm6619 = vcmp.lt.s32.totalorder %v6597, 4
    %v6620 = vsel %vm6616, %v6600, %v6603
    %v6621 = vsel %vm6619, %v6609, 2102212464
    %v6622 = vsel %vm6618, %v6606, %v6621
    %v6623 = vsel %vm6617, %v6620, %v6622
    %v6624 = vsel %vm6616, %v6603, %v6606
    %v6625 = vsel %vm6619, %v6612, 920167782
    %v6626 = vsel %vm6618, %v6609, %v6625
    %v6627 = vsel %vm6617, %v6624, %v6626
    %v6628 = vsel %vm6616, %v6606, %v6609
    %v6629 = vsel %vm6619, %v6615, 1326507024
    %v6630 = vsel %vm6618, %v6612, %v6629
    %v6631 = vsel %vm6617, %v6628, %v6630
    %v6632 = vshll.u32 %v6592, 8
    %v6633 = vmul.u32.u64.compose %v6632, %v6631
    %v6634 = vextract.low.u32 %v6633
    %v6635 = vextract.high.u32 %v6633
    %v6636 = vmul.u32.u64.compose %v6632, %v6627
    %v6637 = vextract.low.u32 %v6636
    %v6638 = vextract.high.u32 %v6636
    %v6639 = vmul.u32 %v6632, %v6623
    %v6640 = vadd.s32 %v6635, %v6637
    %vm6641 = vc.u32 %v6635, %v6637
    %v6642 = vadd.s32 %v6638, 1
    %v6643 = vsel %vm6641, %v6642, %v6638
    %v6644 = vadd.s32 %v6639, %v6643
    %v6645 = vadd.s32 %v6644, 536870912
    %v6646 = vshrl.u32 %v6645, 30
    %v6647 = vshll.u32 %v6646, 30
    %v6648 = vsub.s32 %v6644, %v6647
    %vm6649 = vcmp.lt.s32.totalorder %v6648, 0
    %v6650 = vsub.s32 0, %v6648
    %v6651 = vsel %vm6649, %v6650, %v6648
    %v6652 = vclz %v6651
    %v6653 = vsub.s32 %v6652, 2
    %vm6654 = vcmp.gt.s32.totalorder 0, %v6653
    %v6655 = vsel %vm6654, 0, %v6653
    %v6656 = vsub.s32 32, %v6655
    %v6657 = vshll.u32 %v6648, %v6655
    %v6658 = vshrl.u32 %v6640, %v6656
    %v6659 = vor.u32 %v6657, %v6658
    %v6660 = vsub.s32 4294967266, %v6655
    %v6661 = vadd.s32 %v6660, 127
    %v6662 = vshll.u32 %v6661, 23
    %v6663 = vor.u32 4788187, %v6662
    %v6664 = vand.u32 2147483647, %v6663
    %v6666 = vcvt.s32.f32 %v6659
    %v6667 = vmul.f32 %v6666, %v6664
    %v6668 = vxor.u32 %v6667, 2147483648
    %v6669 = vsel %vm6586, %v6668, %v6667
    %v6670 = vsub.s32 4, %v6646
    %v6671 = vsel %vm6586, %v6670, %v6646
    %v6672 = vsel %vm6585, %v4818, %v6669
    %v6673 = vsel %vm6585, 0, %v6671
    %v6674 = vcosq.f32.pop %v6672
    %v6675 = vsinq.f32.pop %v6672
    %vm6676 = vweird.f32 %v4818
    %v6677 = vand.u32 %v6673, 3
    %vm6678 = vcmp.lt.s32.totalorder %v6677, 2
    %vm6679 = vcmp.eq.s32.totalorder %v6677, 0
    %v6680 = vxor.u32 %v6675, 2147483648
    %v6681 = vsel %vm6679, %v6674, %v6680
    %vm6682 = vcmp.eq.s32.totalorder %v6677, 2
    %v6683 = vxor.u32 %v6674, 2147483648
    %v6684 = vsel %vm6682, %v6683, %v6675
    %v6685 = vsel %vm6678, %v6681, %v6684
    %v6686 = vsel %vm6676, nan, %v6685
    %v6687 = vand.u32 2147483647, %v4819
    %vm6688 = vcmp.le.f32.partialorder %v6687, 0.7853982
    %vm6689 = vcmp.lt.s32.totalorder %v4819, 0
    %v6690 = vand.u32 %v4819, 2139095040
    %v6691 = vshrl.u32 %v6690, 23
    %v6692 = vsub.s32 %v6691, 127
    %v6693 = vand.u32 2147483647, %v4819
    %v6694 = vand.u32 %v6693, 8388607
    %v6695 = vor.u32 %v6694, 8388608
    %v6696 = vsub.s32 0, %v6695
    %v6697 = vadd.s32 %v6692, 1
    %vm6698 = vcmp.gt.s32.totalorder %v6697, 0
    %v6699 = vsel %vm6698, %v6697, 0
    %v6700 = vshrl.u32 %v6699, 5
    %v6701 = vand.u32 %v6699, 31
    %v6702 = vsub.s32 32, %v6701
    %v6703 = vshrl.u32 683565275, %v6702
    %v6704 = vshll.u32 683565275, %v6701
    %v6705 = vshrl.u32 2475754826, %v6702
    %v6706 = vor.u32 %v6704, %v6705
    %v6707 = vshll.u32 2475754826, %v6701
    %v6708 = vshrl.u32 2131351028, %v6702
    %v6709 = vor.u32 %v6707, %v6708
    %v6710 = vshll.u32 2131351028, %v6701
    %v6711 = vshrl.u32 2102212464, %v6702
    %v6712 = vor.u32 %v6710, %v6711
    %v6713 = vshll.u32 2102212464, %v6701
    %v6714 = vshrl.u32 920167782, %v6702
    %v6715 = vor.u32 %v6713, %v6714
    %v6716 = vshll.u32 920167782, %v6701
    %v6717 = vshrl.u32 1326507024, %v6702
    %v6718 = vor.u32 %v6716, %v6717
    %vm6719 = vcmp.lt.s32.totalorder %v6700, 1
    %vm6720 = vcmp.lt.s32.totalorder %v6700, 2
    %vm6721 = vcmp.lt.s32.totalorder %v6700, 3
    %vm6722 = vcmp.lt.s32.totalorder %v6700, 4
    %v6723 = vsel %vm6719, %v6703, %v6706
    %v6724 = vsel %vm6722, %v6712, 2102212464
    %v6725 = vsel %vm6721, %v6709, %v6724
    %v6726 = vsel %vm6720, %v6723, %v6725
    %v6727 = vsel %vm6719, %v6706, %v6709
    %v6728 = vsel %vm6722, %v6715, 920167782
    %v6729 = vsel %vm6721, %v6712, %v6728
    %v6730 = vsel %vm6720, %v6727, %v6729
    %v6731 = vsel %vm6719, %v6709, %v6712
    %v6732 = vsel %vm6722, %v6718, 1326507024
    %v6733 = vsel %vm6721, %v6715, %v6732
    %v6734 = vsel %vm6720, %v6731, %v6733
    %v6735 = vshll.u32 %v6695, 8
    %v6736 = vmul.u32.u64.compose %v6735, %v6734
    %v6737 = vextract.low.u32 %v6736
    %v6738 = vextract.high.u32 %v6736
    %v6739 = vmul.u32.u64.compose %v6735, %v6730
    %v6740 = vextract.low.u32 %v6739
    %v6741 = vextract.high.u32 %v6739
    %v6742 = vmul.u32 %v6735, %v6726
    %v6743 = vadd.s32 %v6738, %v6740
    %vm6744 = vc.u32 %v6738, %v6740
    %v6745 = vadd.s32 %v6741, 1
    %v6746 = vsel %vm6744, %v6745, %v6741
    %v6747 = vadd.s32 %v6742, %v6746
    %v6748 = vadd.s32 %v6747, 536870912
    %v6749 = vshrl.u32 %v6748, 30
    %v6750 = vshll.u32 %v6749, 30
    %v6751 = vsub.s32 %v6747, %v6750
    %vm6752 = vcmp.lt.s32.totalorder %v6751, 0
    %v6753 = vsub.s32 0, %v6751
    %v6754 = vsel %vm6752, %v6753, %v6751
    %v6755 = vclz %v6754
    %v6756 = vsub.s32 %v6755, 2
    %vm6757 = vcmp.gt.s32.totalorder 0, %v6756
    %v6758 = vsel %vm6757, 0, %v6756
    %v6759 = vsub.s32 32, %v6758
    %v6760 = vshll.u32 %v6751, %v6758
    %v6761 = vshrl.u32 %v6743, %v6759
    %v6762 = vor.u32 %v6760, %v6761
    %v6763 = vsub.s32 4294967266, %v6758
    %v6764 = vadd.s32 %v6763, 127
    %v6765 = vshll.u32 %v6764, 23
    %v6766 = vor.u32 4788187, %v6765
    %v6767 = vand.u32 2147483647, %v6766
    %v6769 = vcvt.s32.f32 %v6762
    %v6770 = vmul.f32 %v6769, %v6767
    %v6771 = vxor.u32 %v6770, 2147483648
    %v6772 = vsel %vm6689, %v6771, %v6770
    %v6773 = vsub.s32 4, %v6749
    %v6774 = vsel %vm6689, %v6773, %v6749
    %v6775 = vsel %vm6688, %v4819, %v6772
    %v6776 = vsel %vm6688, 0, %v6774
    %v6777 = vcosq.f32.pop %v6775
    %v6778 = vsinq.f32.pop %v6775
    %vm6779 = vweird.f32 %v4819
    %v6780 = vand.u32 %v6776, 3
    %vm6781 = vcmp.lt.s32.totalorder %v6780, 2
    %vm6782 = vcmp.eq.s32.totalorder %v6780, 0
    %v6783 = vxor.u32 %v6778, 2147483648
    %v6784 = vsel %vm6782, %v6777, %v6783
    %vm6785 = vcmp.eq.s32.totalorder %v6780, 2
    %v6786 = vxor.u32 %v6777, 2147483648
    %v6787 = vsel %vm6785, %v6786, %v6778
    %v6788 = vsel %vm6781, %v6784, %v6787
    %v6789 = vsel %vm6779, nan, %v6788
    %v6790 = vand.u32 2147483647, %v4820
    %vm6791 = vcmp.le.f32.partialorder %v6790, 0.7853982
    %vm6792 = vcmp.lt.s32.totalorder %v4820, 0
    %v6793 = vand.u32 %v4820, 2139095040
    %v6794 = vshrl.u32 %v6793, 23
    %v6795 = vsub.s32 %v6794, 127
    %v6796 = vand.u32 2147483647, %v4820
    %v6797 = vand.u32 %v6796, 8388607
    %v6798 = vor.u32 %v6797, 8388608
    %v6799 = vsub.s32 0, %v6798
    %v6800 = vadd.s32 %v6795, 1
    %vm6801 = vcmp.gt.s32.totalorder %v6800, 0
    %v6802 = vsel %vm6801, %v6800, 0
    %v6803 = vshrl.u32 %v6802, 5
    %v6804 = vand.u32 %v6802, 31
    %v6805 = vsub.s32 32, %v6804
    %v6806 = vshrl.u32 683565275, %v6805
    %v6807 = vshll.u32 683565275, %v6804
    %v6808 = vshrl.u32 2475754826, %v6805
    %v6809 = vor.u32 %v6807, %v6808
    %v6810 = vshll.u32 2475754826, %v6804
    %v6811 = vshrl.u32 2131351028, %v6805
    %v6812 = vor.u32 %v6810, %v6811
    %v6813 = vshll.u32 2131351028, %v6804
    %v6814 = vshrl.u32 2102212464, %v6805
    %v6815 = vor.u32 %v6813, %v6814
    %v6816 = vshll.u32 2102212464, %v6804
    %v6817 = vshrl.u32 920167782, %v6805
    %v6818 = vor.u32 %v6816, %v6817
    %v6819 = vshll.u32 920167782, %v6804
    %v6820 = vshrl.u32 1326507024, %v6805
    %v6821 = vor.u32 %v6819, %v6820
    %vm6822 = vcmp.lt.s32.totalorder %v6803, 1
    %vm6823 = vcmp.lt.s32.totalorder %v6803, 2
    %vm6824 = vcmp.lt.s32.totalorder %v6803, 3
    %vm6825 = vcmp.lt.s32.totalorder %v6803, 4
    %v6826 = vsel %vm6822, %v6806, %v6809
    %v6827 = vsel %vm6825, %v6815, 2102212464
    %v6828 = vsel %vm6824, %v6812, %v6827
    %v6829 = vsel %vm6823, %v6826, %v6828
    %v6830 = vsel %vm6822, %v6809, %v6812
    %v6831 = vsel %vm6825, %v6818, 920167782
    %v6832 = vsel %vm6824, %v6815, %v6831
    %v6833 = vsel %vm6823, %v6830, %v6832
    %v6834 = vsel %vm6822, %v6812, %v6815
    %v6835 = vsel %vm6825, %v6821, 1326507024
    %v6836 = vsel %vm6824, %v6818, %v6835
    %v6837 = vsel %vm6823, %v6834, %v6836
    %v6838 = vshll.u32 %v6798, 8
    %v6839 = vmul.u32.u64.compose %v6838, %v6837
    %v6840 = vextract.low.u32 %v6839
    %v6841 = vextract.high.u32 %v6839
    %v6842 = vmul.u32.u64.compose %v6838, %v6833
    %v6843 = vextract.low.u32 %v6842
    %v6844 = vextract.high.u32 %v6842
    %v6845 = vmul.u32 %v6838, %v6829
    %v6846 = vadd.s32 %v6841, %v6843
    %vm6847 = vc.u32 %v6841, %v6843
    %v6848 = vadd.s32 %v6844, 1
    %v6849 = vsel %vm6847, %v6848, %v6844
    %v6850 = vadd.s32 %v6845, %v6849
    %v6851 = vadd.s32 %v6850, 536870912
    %v6852 = vshrl.u32 %v6851, 30
    %v6853 = vshll.u32 %v6852, 30
    %v6854 = vsub.s32 %v6850, %v6853
    %vm6855 = vcmp.lt.s32.totalorder %v6854, 0
    %v6856 = vsub.s32 0, %v6854
    %v6857 = vsel %vm6855, %v6856, %v6854
    %v6858 = vclz %v6857
    %v6859 = vsub.s32 %v6858, 2
    %vm6860 = vcmp.gt.s32.totalorder 0, %v6859
    %v6861 = vsel %vm6860, 0, %v6859
    %v6862 = vsub.s32 32, %v6861
    %v6863 = vshll.u32 %v6854, %v6861
    %v6864 = vshrl.u32 %v6846, %v6862
    %v6865 = vor.u32 %v6863, %v6864
    %v6866 = vsub.s32 4294967266, %v6861
    %v6867 = vadd.s32 %v6866, 127
    %v6868 = vshll.u32 %v6867, 23
    %v6869 = vor.u32 4788187, %v6868
    %v6870 = vand.u32 2147483647, %v6869
    %v6872 = vcvt.s32.f32 %v6865
    %v6873 = vmul.f32 %v6872, %v6870
    %v6874 = vxor.u32 %v6873, 2147483648
    %v6875 = vsel %vm6792, %v6874, %v6873
    %v6876 = vsub.s32 4, %v6852
    %v6877 = vsel %vm6792, %v6876, %v6852
    %v6878 = vsel %vm6791, %v4820, %v6875
    %v6879 = vsel %vm6791, 0, %v6877
    %v6880 = vcosq.f32.pop %v6878
    %v6881 = vsinq.f32.pop %v6878
    %vm6882 = vweird.f32 %v4820
    %v6883 = vand.u32 %v6879, 3
    %vm6884 = vcmp.lt.s32.totalorder %v6883, 2
    %vm6885 = vcmp.eq.s32.totalorder %v6883, 0
    %v6886 = vxor.u32 %v6881, 2147483648
    %v6887 = vsel %vm6885, %v6880, %v6886
    %vm6888 = vcmp.eq.s32.totalorder %v6883, 2
    %v6889 = vxor.u32 %v6880, 2147483648
    %v6890 = vsel %vm6888, %v6889, %v6881
    %v6891 = vsel %vm6884, %v6887, %v6890
    %v6892 = vsel %vm6882, nan, %v6891
    %v6893 = vand.u32 2147483647, %v4821
    %vm6894 = vcmp.le.f32.partialorder %v6893, 0.7853982
    %vm6895 = vcmp.lt.s32.totalorder %v4821, 0
    %v6896 = vand.u32 %v4821, 2139095040
    %v6897 = vshrl.u32 %v6896, 23
    %v6898 = vsub.s32 %v6897, 127
    %v6899 = vand.u32 2147483647, %v4821
    %v6900 = vand.u32 %v6899, 8388607
    %v6901 = vor.u32 %v6900, 8388608
    %v6902 = vsub.s32 0, %v6901
    %v6903 = vadd.s32 %v6898, 1
    %vm6904 = vcmp.gt.s32.totalorder %v6903, 0
    %v6905 = vsel %vm6904, %v6903, 0
    %v6906 = vshrl.u32 %v6905, 5
    %v6907 = vand.u32 %v6905, 31
    %v6908 = vsub.s32 32, %v6907
    %v6909 = vshrl.u32 683565275, %v6908
    %v6910 = vshll.u32 683565275, %v6907
    %v6911 = vshrl.u32 2475754826, %v6908
    %v6912 = vor.u32 %v6910, %v6911
    %v6913 = vshll.u32 2475754826, %v6907
    %v6914 = vshrl.u32 2131351028, %v6908
    %v6915 = vor.u32 %v6913, %v6914
    %v6916 = vshll.u32 2131351028, %v6907
    %v6917 = vshrl.u32 2102212464, %v6908
    %v6918 = vor.u32 %v6916, %v6917
    %v6919 = vshll.u32 2102212464, %v6907
    %v6920 = vshrl.u32 920167782, %v6908
    %v6921 = vor.u32 %v6919, %v6920
    %v6922 = vshll.u32 920167782, %v6907
    %v6923 = vshrl.u32 1326507024, %v6908
    %v6924 = vor.u32 %v6922, %v6923
    %vm6925 = vcmp.lt.s32.totalorder %v6906, 1
    %vm6926 = vcmp.lt.s32.totalorder %v6906, 2
    %vm6927 = vcmp.lt.s32.totalorder %v6906, 3
    %vm6928 = vcmp.lt.s32.totalorder %v6906, 4
    %v6929 = vsel %vm6925, %v6909, %v6912
    %v6930 = vsel %vm6928, %v6918, 2102212464
    %v6931 = vsel %vm6927, %v6915, %v6930
    %v6932 = vsel %vm6926, %v6929, %v6931
    %v6933 = vsel %vm6925, %v6912, %v6915
    %v6934 = vsel %vm6928, %v6921, 920167782
    %v6935 = vsel %vm6927, %v6918, %v6934
    %v6936 = vsel %vm6926, %v6933, %v6935
    %v6937 = vsel %vm6925, %v6915, %v6918
    %v6938 = vsel %vm6928, %v6924, 1326507024
    %v6939 = vsel %vm6927, %v6921, %v6938
    %v6940 = vsel %vm6926, %v6937, %v6939
    %v6941 = vshll.u32 %v6901, 8
    %v6942 = vmul.u32.u64.compose %v6941, %v6940
    %v6943 = vextract.low.u32 %v6942
    %v6944 = vextract.high.u32 %v6942
    %v6945 = vmul.u32.u64.compose %v6941, %v6936
    %v6946 = vextract.low.u32 %v6945
    %v6947 = vextract.high.u32 %v6945
    %v6948 = vmul.u32 %v6941, %v6932
    %v6949 = vadd.s32 %v6944, %v6946
    %vm6950 = vc.u32 %v6944, %v6946
    %v6951 = vadd.s32 %v6947, 1
    %v6952 = vsel %vm6950, %v6951, %v6947
    %v6953 = vadd.s32 %v6948, %v6952
    %v6954 = vadd.s32 %v6953, 536870912
    %v6955 = vshrl.u32 %v6954, 30
    %v6956 = vshll.u32 %v6955, 30
    %v6957 = vsub.s32 %v6953, %v6956
    %vm6958 = vcmp.lt.s32.totalorder %v6957, 0
    %v6959 = vsub.s32 0, %v6957
    %v6960 = vsel %vm6958, %v6959, %v6957
    %v6961 = vclz %v6960
    %v6962 = vsub.s32 %v6961, 2
    %vm6963 = vcmp.gt.s32.totalorder 0, %v6962
    %v6964 = vsel %vm6963, 0, %v6962
    %v6965 = vsub.s32 32, %v6964
    %v6966 = vshll.u32 %v6957, %v6964
    %v6967 = vshrl.u32 %v6949, %v6965
    %v6968 = vor.u32 %v6966, %v6967
    %v6969 = vsub.s32 4294967266, %v6964
    %v6970 = vadd.s32 %v6969, 127
    %v6971 = vshll.u32 %v6970, 23
    %v6972 = vor.u32 4788187, %v6971
    %v6973 = vand.u32 2147483647, %v6972
    %v6975 = vcvt.s32.f32 %v6968
    %v6976 = vmul.f32 %v6975, %v6973
    %v6977 = vxor.u32 %v6976, 2147483648
    %v6978 = vsel %vm6895, %v6977, %v6976
    %v6979 = vsub.s32 4, %v6955
    %v6980 = vsel %vm6895, %v6979, %v6955
    %v6981 = vsel %vm6894, %v4821, %v6978
    %v6982 = vsel %vm6894, 0, %v6980
    %v6983 = vcosq.f32.pop %v6981
    %v6984 = vsinq.f32.pop %v6981
    %vm6985 = vweird.f32 %v4821
    %v6986 = vand.u32 %v6982, 3
    %vm6987 = vcmp.lt.s32.totalorder %v6986, 2
    %vm6988 = vcmp.eq.s32.totalorder %v6986, 0
    %v6989 = vxor.u32 %v6984, 2147483648
    %v6990 = vsel %vm6988, %v6983, %v6989
    %vm6991 = vcmp.eq.s32.totalorder %v6986, 2
    %v6992 = vxor.u32 %v6983, 2147483648
    %v6993 = vsel %vm6991, %v6992, %v6984
    %v6994 = vsel %vm6987, %v6990, %v6993
    %v6995 = vsel %vm6985, nan, %v6994
    %v6996 = vand.u32 2147483647, %v4822
    %vm6997 = vcmp.le.f32.partialorder %v6996, 0.7853982
    %vm6998 = vcmp.lt.s32.totalorder %v4822, 0
    %v6999 = vand.u32 %v4822, 2139095040
    %v7000 = vshrl.u32 %v6999, 23
    %v7001 = vsub.s32 %v7000, 127
    %v7002 = vand.u32 2147483647, %v4822
    %v7003 = vand.u32 %v7002, 8388607
    %v7004 = vor.u32 %v7003, 8388608
    %v7005 = vsub.s32 0, %v7004
    %v7006 = vadd.s32 %v7001, 1
    %vm7007 = vcmp.gt.s32.totalorder %v7006, 0
    %v7008 = vsel %vm7007, %v7006, 0
    %v7009 = vshrl.u32 %v7008, 5
    %v7010 = vand.u32 %v7008, 31
    %v7011 = vsub.s32 32, %v7010
    %v7012 = vshrl.u32 683565275, %v7011
    %v7013 = vshll.u32 683565275, %v7010
    %v7014 = vshrl.u32 2475754826, %v7011
    %v7015 = vor.u32 %v7013, %v7014
    %v7016 = vshll.u32 2475754826, %v7010
    %v7017 = vshrl.u32 2131351028, %v7011
    %v7018 = vor.u32 %v7016, %v7017
    %v7019 = vshll.u32 2131351028, %v7010
    %v7020 = vshrl.u32 2102212464, %v7011
    %v7021 = vor.u32 %v7019, %v7020
    %v7022 = vshll.u32 2102212464, %v7010
    %v7023 = vshrl.u32 920167782, %v7011
    %v7024 = vor.u32 %v7022, %v7023
    %v7025 = vshll.u32 920167782, %v7010
    %v7026 = vshrl.u32 1326507024, %v7011
    %v7027 = vor.u32 %v7025, %v7026
    %vm7028 = vcmp.lt.s32.totalorder %v7009, 1
    %vm7029 = vcmp.lt.s32.totalorder %v7009, 2
    %vm7030 = vcmp.lt.s32.totalorder %v7009, 3
    %vm7031 = vcmp.lt.s32.totalorder %v7009, 4
    %v7032 = vsel %vm7028, %v7012, %v7015
    %v7033 = vsel %vm7031, %v7021, 2102212464
    %v7034 = vsel %vm7030, %v7018, %v7033
    %v7035 = vsel %vm7029, %v7032, %v7034
    %v7036 = vsel %vm7028, %v7015, %v7018
    %v7037 = vsel %vm7031, %v7024, 920167782
    %v7038 = vsel %vm7030, %v7021, %v7037
    %v7039 = vsel %vm7029, %v7036, %v7038
    %v7040 = vsel %vm7028, %v7018, %v7021
    %v7041 = vsel %vm7031, %v7027, 1326507024
    %v7042 = vsel %vm7030, %v7024, %v7041
    %v7043 = vsel %vm7029, %v7040, %v7042
    %v7044 = vshll.u32 %v7004, 8
    %v7045 = vmul.u32.u64.compose %v7044, %v7043
    %v7046 = vextract.low.u32 %v7045
    %v7047 = vextract.high.u32 %v7045
    %v7048 = vmul.u32.u64.compose %v7044, %v7039
    %v7049 = vextract.low.u32 %v7048
    %v7050 = vextract.high.u32 %v7048
    %v7051 = vmul.u32 %v7044, %v7035
    %v7052 = vadd.s32 %v7047, %v7049
    %vm7053 = vc.u32 %v7047, %v7049
    %v7054 = vadd.s32 %v7050, 1
    %v7055 = vsel %vm7053, %v7054, %v7050
    %v7056 = vadd.s32 %v7051, %v7055
    %v7057 = vadd.s32 %v7056, 536870912
    %v7058 = vshrl.u32 %v7057, 30
    %v7059 = vshll.u32 %v7058, 30
    %v7060 = vsub.s32 %v7056, %v7059
    %vm7061 = vcmp.lt.s32.totalorder %v7060, 0
    %v7062 = vsub.s32 0, %v7060
    %v7063 = vsel %vm7061, %v7062, %v7060
    %v7064 = vclz %v7063
    %v7065 = vsub.s32 %v7064, 2
    %vm7066 = vcmp.gt.s32.totalorder 0, %v7065
    %v7067 = vsel %vm7066, 0, %v7065
    %v7068 = vsub.s32 32, %v7067
    %v7069 = vshll.u32 %v7060, %v7067
    %v7070 = vshrl.u32 %v7052, %v7068
    %v7071 = vor.u32 %v7069, %v7070
    %v7072 = vsub.s32 4294967266, %v7067
    %v7073 = vadd.s32 %v7072, 127
    %v7074 = vshll.u32 %v7073, 23
    %v7075 = vor.u32 4788187, %v7074
    %v7076 = vand.u32 2147483647, %v7075
    %v7078 = vcvt.s32.f32 %v7071
    %v7079 = vmul.f32 %v7078, %v7076
    %v7080 = vxor.u32 %v7079, 2147483648
    %v7081 = vsel %vm6998, %v7080, %v7079
    %v7082 = vsub.s32 4, %v7058
    %v7083 = vsel %vm6998, %v7082, %v7058
    %v7084 = vsel %vm6997, %v4822, %v7081
    %v7085 = vsel %vm6997, 0, %v7083
    %v7086 = vcosq.f32.pop %v7084
    %v7087 = vsinq.f32.pop %v7084
    %vm7088 = vweird.f32 %v4822
    %v7089 = vand.u32 %v7085, 3
    %vm7090 = vcmp.lt.s32.totalorder %v7089, 2
    %vm7091 = vcmp.eq.s32.totalorder %v7089, 0
    %v7092 = vxor.u32 %v7087, 2147483648
    %v7093 = vsel %vm7091, %v7086, %v7092
    %vm7094 = vcmp.eq.s32.totalorder %v7089, 2
    %v7095 = vxor.u32 %v7086, 2147483648
    %v7096 = vsel %vm7094, %v7095, %v7087
    %v7097 = vsel %vm7090, %v7093, %v7096
    %v7098 = vsel %vm7088, nan, %v7097
    %v7099 = vand.u32 2147483647, %v4823
    %vm7100 = vcmp.le.f32.partialorder %v7099, 0.7853982
    %vm7101 = vcmp.lt.s32.totalorder %v4823, 0
    %v7102 = vand.u32 %v4823, 2139095040
    %v7103 = vshrl.u32 %v7102, 23
    %v7104 = vsub.s32 %v7103, 127
    %v7105 = vand.u32 2147483647, %v4823
    %v7106 = vand.u32 %v7105, 8388607
    %v7107 = vor.u32 %v7106, 8388608
    %v7108 = vsub.s32 0, %v7107
    %v7109 = vadd.s32 %v7104, 1
    %vm7110 = vcmp.gt.s32.totalorder %v7109, 0
    %v7111 = vsel %vm7110, %v7109, 0
    %v7112 = vshrl.u32 %v7111, 5
    %v7113 = vand.u32 %v7111, 31
    %v7114 = vsub.s32 32, %v7113
    %v7115 = vshrl.u32 683565275, %v7114
    %v7116 = vshll.u32 683565275, %v7113
    %v7117 = vshrl.u32 2475754826, %v7114
    %v7118 = vor.u32 %v7116, %v7117
    %v7119 = vshll.u32 2475754826, %v7113
    %v7120 = vshrl.u32 2131351028, %v7114
    %v7121 = vor.u32 %v7119, %v7120
    %v7122 = vshll.u32 2131351028, %v7113
    %v7123 = vshrl.u32 2102212464, %v7114
    %v7124 = vor.u32 %v7122, %v7123
    %v7125 = vshll.u32 2102212464, %v7113
    %v7126 = vshrl.u32 920167782, %v7114
    %v7127 = vor.u32 %v7125, %v7126
    %v7128 = vshll.u32 920167782, %v7113
    %v7129 = vshrl.u32 1326507024, %v7114
    %v7130 = vor.u32 %v7128, %v7129
    %vm7131 = vcmp.lt.s32.totalorder %v7112, 1
    %vm7132 = vcmp.lt.s32.totalorder %v7112, 2
    %vm7133 = vcmp.lt.s32.totalorder %v7112, 3
    %vm7134 = vcmp.lt.s32.totalorder %v7112, 4
    %v7135 = vsel %vm7131, %v7115, %v7118
    %v7136 = vsel %vm7134, %v7124, 2102212464
    %v7137 = vsel %vm7133, %v7121, %v7136
    %v7138 = vsel %vm7132, %v7135, %v7137
    %v7139 = vsel %vm7131, %v7118, %v7121
    %v7140 = vsel %vm7134, %v7127, 920167782
    %v7141 = vsel %vm7133, %v7124, %v7140
    %v7142 = vsel %vm7132, %v7139, %v7141
    %v7143 = vsel %vm7131, %v7121, %v7124
    %v7144 = vsel %vm7134, %v7130, 1326507024
    %v7145 = vsel %vm7133, %v7127, %v7144
    %v7146 = vsel %vm7132, %v7143, %v7145
    %v7147 = vshll.u32 %v7107, 8
    %v7148 = vmul.u32.u64.compose %v7147, %v7146
    %v7149 = vextract.low.u32 %v7148
    %v7150 = vextract.high.u32 %v7148
    %v7151 = vmul.u32.u64.compose %v7147, %v7142
    %v7152 = vextract.low.u32 %v7151
    %v7153 = vextract.high.u32 %v7151
    %v7154 = vmul.u32 %v7147, %v7138
    %v7155 = vadd.s32 %v7150, %v7152
    %vm7156 = vc.u32 %v7150, %v7152
    %v7157 = vadd.s32 %v7153, 1
    %v7158 = vsel %vm7156, %v7157, %v7153
    %v7159 = vadd.s32 %v7154, %v7158
    %v7160 = vadd.s32 %v7159, 536870912
    %v7161 = vshrl.u32 %v7160, 30
    %v7162 = vshll.u32 %v7161, 30
    %v7163 = vsub.s32 %v7159, %v7162
    %vm7164 = vcmp.lt.s32.totalorder %v7163, 0
    %v7165 = vsub.s32 0, %v7163
    %v7166 = vsel %vm7164, %v7165, %v7163
    %v7167 = vclz %v7166
    %v7168 = vsub.s32 %v7167, 2
    %vm7169 = vcmp.gt.s32.totalorder 0, %v7168
    %v7170 = vsel %vm7169, 0, %v7168
    %v7171 = vsub.s32 32, %v7170
    %v7172 = vshll.u32 %v7163, %v7170
    %v7173 = vshrl.u32 %v7155, %v7171
    %v7174 = vor.u32 %v7172, %v7173
    %v7175 = vsub.s32 4294967266, %v7170
    %v7176 = vadd.s32 %v7175, 127
    %v7177 = vshll.u32 %v7176, 23
    %v7178 = vor.u32 4788187, %v7177
    %v7179 = vand.u32 2147483647, %v7178
    %v7181 = vcvt.s32.f32 %v7174
    %v7182 = vmul.f32 %v7181, %v7179
    %v7183 = vxor.u32 %v7182, 2147483648
    %v7184 = vsel %vm7101, %v7183, %v7182
    %v7185 = vsub.s32 4, %v7161
    %v7186 = vsel %vm7101, %v7185, %v7161
    %v7187 = vsel %vm7100, %v4823, %v7184
    %v7188 = vsel %vm7100, 0, %v7186
    %v7189 = vcosq.f32.pop %v7187
    %v7190 = vsinq.f32.pop %v7187
    %vm7191 = vweird.f32 %v4823
    %v7192 = vand.u32 %v7188, 3
    %vm7193 = vcmp.lt.s32.totalorder %v7192, 2
    %vm7194 = vcmp.eq.s32.totalorder %v7192, 0
    %v7195 = vxor.u32 %v7190, 2147483648
    %v7196 = vsel %vm7194, %v7189, %v7195
    %vm7197 = vcmp.eq.s32.totalorder %v7192, 2
    %v7198 = vxor.u32 %v7189, 2147483648
    %v7199 = vsel %vm7197, %v7198, %v7190
    %v7200 = vsel %vm7193, %v7196, %v7199
    %v7201 = vsel %vm7191, nan, %v7200
    %v7202 = vand.u32 2147483647, %v4824
    %vm7203 = vcmp.le.f32.partialorder %v7202, 0.7853982
    %vm7204 = vcmp.lt.s32.totalorder %v4824, 0
    %v7205 = vand.u32 %v4824, 2139095040
    %v7206 = vshrl.u32 %v7205, 23
    %v7207 = vsub.s32 %v7206, 127
    %v7208 = vand.u32 2147483647, %v4824
    %v7209 = vand.u32 %v7208, 8388607
    %v7210 = vor.u32 %v7209, 8388608
    %v7211 = vsub.s32 0, %v7210
    %v7212 = vadd.s32 %v7207, 1
    %vm7213 = vcmp.gt.s32.totalorder %v7212, 0
    %v7214 = vsel %vm7213, %v7212, 0
    %v7215 = vshrl.u32 %v7214, 5
    %v7216 = vand.u32 %v7214, 31
    %v7217 = vsub.s32 32, %v7216
    %v7218 = vshrl.u32 683565275, %v7217
    %v7219 = vshll.u32 683565275, %v7216
    %v7220 = vshrl.u32 2475754826, %v7217
    %v7221 = vor.u32 %v7219, %v7220
    %v7222 = vshll.u32 2475754826, %v7216
    %v7223 = vshrl.u32 2131351028, %v7217
    %v7224 = vor.u32 %v7222, %v7223
    %v7225 = vshll.u32 2131351028, %v7216
    %v7226 = vshrl.u32 2102212464, %v7217
    %v7227 = vor.u32 %v7225, %v7226
    %v7228 = vshll.u32 2102212464, %v7216
    %v7229 = vshrl.u32 920167782, %v7217
    %v7230 = vor.u32 %v7228, %v7229
    %v7231 = vshll.u32 920167782, %v7216
    %v7232 = vshrl.u32 1326507024, %v7217
    %v7233 = vor.u32 %v7231, %v7232
    %vm7234 = vcmp.lt.s32.totalorder %v7215, 1
    %vm7235 = vcmp.lt.s32.totalorder %v7215, 2
    %vm7236 = vcmp.lt.s32.totalorder %v7215, 3
    %vm7237 = vcmp.lt.s32.totalorder %v7215, 4
    %v7238 = vsel %vm7234, %v7218, %v7221
    %v7239 = vsel %vm7237, %v7227, 2102212464
    %v7240 = vsel %vm7236, %v7224, %v7239
    %v7241 = vsel %vm7235, %v7238, %v7240
    %v7242 = vsel %vm7234, %v7221, %v7224
    %v7243 = vsel %vm7237, %v7230, 920167782
    %v7244 = vsel %vm7236, %v7227, %v7243
    %v7245 = vsel %vm7235, %v7242, %v7244
    %v7246 = vsel %vm7234, %v7224, %v7227
    %v7247 = vsel %vm7237, %v7233, 1326507024
    %v7248 = vsel %vm7236, %v7230, %v7247
    %v7249 = vsel %vm7235, %v7246, %v7248
    %v7250 = vshll.u32 %v7210, 8
    %v7251 = vmul.u32.u64.compose %v7250, %v7249
    %v7252 = vextract.low.u32 %v7251
    %v7253 = vextract.high.u32 %v7251
    %v7254 = vmul.u32.u64.compose %v7250, %v7245
    %v7255 = vextract.low.u32 %v7254
    %v7256 = vextract.high.u32 %v7254
    %v7257 = vmul.u32 %v7250, %v7241
    %v7258 = vadd.s32 %v7253, %v7255
    %vm7259 = vc.u32 %v7253, %v7255
    %v7260 = vadd.s32 %v7256, 1
    %v7261 = vsel %vm7259, %v7260, %v7256
    %v7262 = vadd.s32 %v7257, %v7261
    %v7263 = vadd.s32 %v7262, 536870912
    %v7264 = vshrl.u32 %v7263, 30
    %v7265 = vshll.u32 %v7264, 30
    %v7266 = vsub.s32 %v7262, %v7265
    %vm7267 = vcmp.lt.s32.totalorder %v7266, 0
    %v7268 = vsub.s32 0, %v7266
    %v7269 = vsel %vm7267, %v7268, %v7266
    %v7270 = vclz %v7269
    %v7271 = vsub.s32 %v7270, 2
    %vm7272 = vcmp.gt.s32.totalorder 0, %v7271
    %v7273 = vsel %vm7272, 0, %v7271
    %v7274 = vsub.s32 32, %v7273
    %v7275 = vshll.u32 %v7266, %v7273
    %v7276 = vshrl.u32 %v7258, %v7274
    %v7277 = vor.u32 %v7275, %v7276
    %v7278 = vsub.s32 4294967266, %v7273
    %v7279 = vadd.s32 %v7278, 127
    %v7280 = vshll.u32 %v7279, 23
    %v7281 = vor.u32 4788187, %v7280
    %v7282 = vand.u32 2147483647, %v7281
    %v7284 = vcvt.s32.f32 %v7277
    %v7285 = vmul.f32 %v7284, %v7282
    %v7286 = vxor.u32 %v7285, 2147483648
    %v7287 = vsel %vm7204, %v7286, %v7285
    %v7288 = vsub.s32 4, %v7264
    %v7289 = vsel %vm7204, %v7288, %v7264
    %v7290 = vsel %vm7203, %v4824, %v7287
    %v7291 = vsel %vm7203, 0, %v7289
    %v7292 = vcosq.f32.pop %v7290
    %v7293 = vsinq.f32.pop %v7290
    %vm7294 = vweird.f32 %v4824
    %v7295 = vand.u32 %v7291, 3
    %vm7296 = vcmp.lt.s32.totalorder %v7295, 2
    %vm7297 = vcmp.eq.s32.totalorder %v7295, 0
    %v7298 = vxor.u32 %v7293, 2147483648
    %v7299 = vsel %vm7297, %v7292, %v7298
    %vm7300 = vcmp.eq.s32.totalorder %v7295, 2
    %v7301 = vxor.u32 %v7292, 2147483648
    %v7302 = vsel %vm7300, %v7301, %v7293
    %v7303 = vsel %vm7296, %v7299, %v7302
    %v7304 = vsel %vm7294, nan, %v7303
    %v7305 = vand.u32 2147483647, %v4825
    %vm7306 = vcmp.le.f32.partialorder %v7305, 0.7853982
    %vm7307 = vcmp.lt.s32.totalorder %v4825, 0
    %v7308 = vand.u32 %v4825, 2139095040
    %v7309 = vshrl.u32 %v7308, 23
    %v7310 = vsub.s32 %v7309, 127
    %v7311 = vand.u32 2147483647, %v4825
    %v7312 = vand.u32 %v7311, 8388607
    %v7313 = vor.u32 %v7312, 8388608
    %v7314 = vsub.s32 0, %v7313
    %v7315 = vadd.s32 %v7310, 1
    %vm7316 = vcmp.gt.s32.totalorder %v7315, 0
    %v7317 = vsel %vm7316, %v7315, 0
    %v7318 = vshrl.u32 %v7317, 5
    %v7319 = vand.u32 %v7317, 31
    %v7320 = vsub.s32 32, %v7319
    %v7321 = vshrl.u32 683565275, %v7320
    %v7322 = vshll.u32 683565275, %v7319
    %v7323 = vshrl.u32 2475754826, %v7320
    %v7324 = vor.u32 %v7322, %v7323
    %v7325 = vshll.u32 2475754826, %v7319
    %v7326 = vshrl.u32 2131351028, %v7320
    %v7327 = vor.u32 %v7325, %v7326
    %v7328 = vshll.u32 2131351028, %v7319
    %v7329 = vshrl.u32 2102212464, %v7320
    %v7330 = vor.u32 %v7328, %v7329
    %v7331 = vshll.u32 2102212464, %v7319
    %v7332 = vshrl.u32 920167782, %v7320
    %v7333 = vor.u32 %v7331, %v7332
    %v7334 = vshll.u32 920167782, %v7319
    %v7335 = vshrl.u32 1326507024, %v7320
    %v7336 = vor.u32 %v7334, %v7335
    %vm7337 = vcmp.lt.s32.totalorder %v7318, 1
    %vm7338 = vcmp.lt.s32.totalorder %v7318, 2
    %vm7339 = vcmp.lt.s32.totalorder %v7318, 3
    %vm7340 = vcmp.lt.s32.totalorder %v7318, 4
    %v7341 = vsel %vm7337, %v7321, %v7324
    %v7342 = vsel %vm7340, %v7330, 2102212464
    %v7343 = vsel %vm7339, %v7327, %v7342
    %v7344 = vsel %vm7338, %v7341, %v7343
    %v7345 = vsel %vm7337, %v7324, %v7327
    %v7346 = vsel %vm7340, %v7333, 920167782
    %v7347 = vsel %vm7339, %v7330, %v7346
    %v7348 = vsel %vm7338, %v7345, %v7347
    %v7349 = vsel %vm7337, %v7327, %v7330
    %v7350 = vsel %vm7340, %v7336, 1326507024
    %v7351 = vsel %vm7339, %v7333, %v7350
    %v7352 = vsel %vm7338, %v7349, %v7351
    %v7353 = vshll.u32 %v7313, 8
    %v7354 = vmul.u32.u64.compose %v7353, %v7352
    %v7355 = vextract.low.u32 %v7354
    %v7356 = vextract.high.u32 %v7354
    %v7357 = vmul.u32.u64.compose %v7353, %v7348
    %v7358 = vextract.low.u32 %v7357
    %v7359 = vextract.high.u32 %v7357
    %v7360 = vmul.u32 %v7353, %v7344
    %v7361 = vadd.s32 %v7356, %v7358
    %vm7362 = vc.u32 %v7356, %v7358
    %v7363 = vadd.s32 %v7359, 1
    %v7364 = vsel %vm7362, %v7363, %v7359
    %v7365 = vadd.s32 %v7360, %v7364
    %v7366 = vadd.s32 %v7365, 536870912
    %v7367 = vshrl.u32 %v7366, 30
    %v7368 = vshll.u32 %v7367, 30
    %v7369 = vsub.s32 %v7365, %v7368
    %vm7370 = vcmp.lt.s32.totalorder %v7369, 0
    %v7371 = vsub.s32 0, %v7369
    %v7372 = vsel %vm7370, %v7371, %v7369
    %v7373 = vclz %v7372
    %v7374 = vsub.s32 %v7373, 2
    %vm7375 = vcmp.gt.s32.totalorder 0, %v7374
    %v7376 = vsel %vm7375, 0, %v7374
    %v7377 = vsub.s32 32, %v7376
    %v7378 = vshll.u32 %v7369, %v7376
    %v7379 = vshrl.u32 %v7361, %v7377
    %v7380 = vor.u32 %v7378, %v7379
    %v7381 = vsub.s32 4294967266, %v7376
    %v7382 = vadd.s32 %v7381, 127
    %v7383 = vshll.u32 %v7382, 23
    %v7384 = vor.u32 4788187, %v7383
    %v7385 = vand.u32 2147483647, %v7384
    %v7387 = vcvt.s32.f32 %v7380
    %v7388 = vmul.f32 %v7387, %v7385
    %v7389 = vxor.u32 %v7388, 2147483648
    %v7390 = vsel %vm7307, %v7389, %v7388
    %v7391 = vsub.s32 4, %v7367
    %v7392 = vsel %vm7307, %v7391, %v7367
    %v7393 = vsel %vm7306, %v4825, %v7390
    %v7394 = vsel %vm7306, 0, %v7392
    %v7395 = vcosq.f32.pop %v7393
    %v7396 = vsinq.f32.pop %v7393
    %vm7397 = vweird.f32 %v4825
    %v7398 = vand.u32 %v7394, 3
    %vm7399 = vcmp.lt.s32.totalorder %v7398, 2
    %vm7400 = vcmp.eq.s32.totalorder %v7398, 0
    %v7401 = vxor.u32 %v7396, 2147483648
    %v7402 = vsel %vm7400, %v7395, %v7401
    %vm7403 = vcmp.eq.s32.totalorder %v7398, 2
    %v7404 = vxor.u32 %v7395, 2147483648
    %v7405 = vsel %vm7403, %v7404, %v7396
    %v7406 = vsel %vm7399, %v7402, %v7405
    %v7407 = vsel %vm7397, nan, %v7406
    %v7408 = vand.u32 2147483647, %v4826
    %vm7409 = vcmp.le.f32.partialorder %v7408, 0.7853982
    %vm7410 = vcmp.lt.s32.totalorder %v4826, 0
    %v7411 = vand.u32 %v4826, 2139095040
    %v7412 = vshrl.u32 %v7411, 23
    %v7413 = vsub.s32 %v7412, 127
    %v7414 = vand.u32 2147483647, %v4826
    %v7415 = vand.u32 %v7414, 8388607
    %v7416 = vor.u32 %v7415, 8388608
    %v7417 = vsub.s32 0, %v7416
    %v7418 = vadd.s32 %v7413, 1
    %vm7419 = vcmp.gt.s32.totalorder %v7418, 0
    %v7420 = vsel %vm7419, %v7418, 0
    %v7421 = vshrl.u32 %v7420, 5
    %v7422 = vand.u32 %v7420, 31
    %v7423 = vsub.s32 32, %v7422
    %v7424 = vshrl.u32 683565275, %v7423
    %v7425 = vshll.u32 683565275, %v7422
    %v7426 = vshrl.u32 2475754826, %v7423
    %v7427 = vor.u32 %v7425, %v7426
    %v7428 = vshll.u32 2475754826, %v7422
    %v7429 = vshrl.u32 2131351028, %v7423
    %v7430 = vor.u32 %v7428, %v7429
    %v7431 = vshll.u32 2131351028, %v7422
    %v7432 = vshrl.u32 2102212464, %v7423
    %v7433 = vor.u32 %v7431, %v7432
    %v7434 = vshll.u32 2102212464, %v7422
    %v7435 = vshrl.u32 920167782, %v7423
    %v7436 = vor.u32 %v7434, %v7435
    %v7437 = vshll.u32 920167782, %v7422
    %v7438 = vshrl.u32 1326507024, %v7423
    %v7439 = vor.u32 %v7437, %v7438
    %vm7440 = vcmp.lt.s32.totalorder %v7421, 1
    %vm7441 = vcmp.lt.s32.totalorder %v7421, 2
    %vm7442 = vcmp.lt.s32.totalorder %v7421, 3
    %vm7443 = vcmp.lt.s32.totalorder %v7421, 4
    %v7444 = vsel %vm7440, %v7424, %v7427
    %v7445 = vsel %vm7443, %v7433, 2102212464
    %v7446 = vsel %vm7442, %v7430, %v7445
    %v7447 = vsel %vm7441, %v7444, %v7446
    %v7448 = vsel %vm7440, %v7427, %v7430
    %v7449 = vsel %vm7443, %v7436, 920167782
    %v7450 = vsel %vm7442, %v7433, %v7449
    %v7451 = vsel %vm7441, %v7448, %v7450
    %v7452 = vsel %vm7440, %v7430, %v7433
    %v7453 = vsel %vm7443, %v7439, 1326507024
    %v7454 = vsel %vm7442, %v7436, %v7453
    %v7455 = vsel %vm7441, %v7452, %v7454
    %v7456 = vshll.u32 %v7416, 8
    %v7457 = vmul.u32.u64.compose %v7456, %v7455
    %v7458 = vextract.low.u32 %v7457
    %v7459 = vextract.high.u32 %v7457
    %v7460 = vmul.u32.u64.compose %v7456, %v7451
    %v7461 = vextract.low.u32 %v7460
    %v7462 = vextract.high.u32 %v7460
    %v7463 = vmul.u32 %v7456, %v7447
    %v7464 = vadd.s32 %v7459, %v7461
    %vm7465 = vc.u32 %v7459, %v7461
    %v7466 = vadd.s32 %v7462, 1
    %v7467 = vsel %vm7465, %v7466, %v7462
    %v7468 = vadd.s32 %v7463, %v7467
    %v7469 = vadd.s32 %v7468, 536870912
    %v7470 = vshrl.u32 %v7469, 30
    %v7471 = vshll.u32 %v7470, 30
    %v7472 = vsub.s32 %v7468, %v7471
    %vm7473 = vcmp.lt.s32.totalorder %v7472, 0
    %v7474 = vsub.s32 0, %v7472
    %v7475 = vsel %vm7473, %v7474, %v7472
    %v7476 = vclz %v7475
    %v7477 = vsub.s32 %v7476, 2
    %vm7478 = vcmp.gt.s32.totalorder 0, %v7477
    %v7479 = vsel %vm7478, 0, %v7477
    %v7480 = vsub.s32 32, %v7479
    %v7481 = vshll.u32 %v7472, %v7479
    %v7482 = vshrl.u32 %v7464, %v7480
    %v7483 = vor.u32 %v7481, %v7482
    %v7484 = vsub.s32 4294967266, %v7479
    %v7485 = vadd.s32 %v7484, 127
    %v7486 = vshll.u32 %v7485, 23
    %v7487 = vor.u32 4788187, %v7486
    %v7488 = vand.u32 2147483647, %v7487
    %v7490 = vcvt.s32.f32 %v7483
    %v7491 = vmul.f32 %v7490, %v7488
    %v7492 = vxor.u32 %v7491, 2147483648
    %v7493 = vsel %vm7410, %v7492, %v7491
    %v7494 = vsub.s32 4, %v7470
    %v7495 = vsel %vm7410, %v7494, %v7470
    %v7496 = vsel %vm7409, %v4826, %v7493
    %v7497 = vsel %vm7409, 0, %v7495
    %v7498 = vcosq.f32.pop %v7496
    %v7499 = vsinq.f32.pop %v7496
    %vm7500 = vweird.f32 %v4826
    %v7501 = vand.u32 %v7497, 3
    %vm7502 = vcmp.lt.s32.totalorder %v7501, 2
    %vm7503 = vcmp.eq.s32.totalorder %v7501, 0
    %v7504 = vxor.u32 %v7499, 2147483648
    %v7505 = vsel %vm7503, %v7498, %v7504
    %vm7506 = vcmp.eq.s32.totalorder %v7501, 2
    %v7507 = vxor.u32 %v7498, 2147483648
    %v7508 = vsel %vm7506, %v7507, %v7499
    %v7509 = vsel %vm7502, %v7505, %v7508
    %v7510 = vsel %vm7500, nan, %v7509
    %v7511 = vand.u32 2147483647, %v4827
    %vm7512 = vcmp.le.f32.partialorder %v7511, 0.7853982
    %vm7513 = vcmp.lt.s32.totalorder %v4827, 0
    %v7514 = vand.u32 %v4827, 2139095040
    %v7515 = vshrl.u32 %v7514, 23
    %v7516 = vsub.s32 %v7515, 127
    %v7517 = vand.u32 2147483647, %v4827
    %v7518 = vand.u32 %v7517, 8388607
    %v7519 = vor.u32 %v7518, 8388608
    %v7520 = vsub.s32 0, %v7519
    %v7521 = vadd.s32 %v7516, 1
    %vm7522 = vcmp.gt.s32.totalorder %v7521, 0
    %v7523 = vsel %vm7522, %v7521, 0
    %v7524 = vshrl.u32 %v7523, 5
    %v7525 = vand.u32 %v7523, 31
    %v7526 = vsub.s32 32, %v7525
    %v7527 = vshrl.u32 683565275, %v7526
    %v7528 = vshll.u32 683565275, %v7525
    %v7529 = vshrl.u32 2475754826, %v7526
    %v7530 = vor.u32 %v7528, %v7529
    %v7531 = vshll.u32 2475754826, %v7525
    %v7532 = vshrl.u32 2131351028, %v7526
    %v7533 = vor.u32 %v7531, %v7532
    %v7534 = vshll.u32 2131351028, %v7525
    %v7535 = vshrl.u32 2102212464, %v7526
    %v7536 = vor.u32 %v7534, %v7535
    %v7537 = vshll.u32 2102212464, %v7525
    %v7538 = vshrl.u32 920167782, %v7526
    %v7539 = vor.u32 %v7537, %v7538
    %v7540 = vshll.u32 920167782, %v7525
    %v7541 = vshrl.u32 1326507024, %v7526
    %v7542 = vor.u32 %v7540, %v7541
    %vm7543 = vcmp.lt.s32.totalorder %v7524, 1
    %vm7544 = vcmp.lt.s32.totalorder %v7524, 2
    %vm7545 = vcmp.lt.s32.totalorder %v7524, 3
    %vm7546 = vcmp.lt.s32.totalorder %v7524, 4
    %v7547 = vsel %vm7543, %v7527, %v7530
    %v7548 = vsel %vm7546, %v7536, 2102212464
    %v7549 = vsel %vm7545, %v7533, %v7548
    %v7550 = vsel %vm7544, %v7547, %v7549
    %v7551 = vsel %vm7543, %v7530, %v7533
    %v7552 = vsel %vm7546, %v7539, 920167782
    %v7553 = vsel %vm7545, %v7536, %v7552
    %v7554 = vsel %vm7544, %v7551, %v7553
    %v7555 = vsel %vm7543, %v7533, %v7536
    %v7556 = vsel %vm7546, %v7542, 1326507024
    %v7557 = vsel %vm7545, %v7539, %v7556
    %v7558 = vsel %vm7544, %v7555, %v7557
    %v7559 = vshll.u32 %v7519, 8
    %v7560 = vmul.u32.u64.compose %v7559, %v7558
    %v7561 = vextract.low.u32 %v7560
    %v7562 = vextract.high.u32 %v7560
    %v7563 = vmul.u32.u64.compose %v7559, %v7554
    %v7564 = vextract.low.u32 %v7563
    %v7565 = vextract.high.u32 %v7563
    %v7566 = vmul.u32 %v7559, %v7550
    %v7567 = vadd.s32 %v7562, %v7564
    %vm7568 = vc.u32 %v7562, %v7564
    %v7569 = vadd.s32 %v7565, 1
    %v7570 = vsel %vm7568, %v7569, %v7565
    %v7571 = vadd.s32 %v7566, %v7570
    %v7572 = vadd.s32 %v7571, 536870912
    %v7573 = vshrl.u32 %v7572, 30
    %v7574 = vshll.u32 %v7573, 30
    %v7575 = vsub.s32 %v7571, %v7574
    %vm7576 = vcmp.lt.s32.totalorder %v7575, 0
    %v7577 = vsub.s32 0, %v7575
    %v7578 = vsel %vm7576, %v7577, %v7575
    %v7579 = vclz %v7578
    %v7580 = vsub.s32 %v7579, 2
    %vm7581 = vcmp.gt.s32.totalorder 0, %v7580
    %v7582 = vsel %vm7581, 0, %v7580
    %v7583 = vsub.s32 32, %v7582
    %v7584 = vshll.u32 %v7575, %v7582
    %v7585 = vshrl.u32 %v7567, %v7583
    %v7586 = vor.u32 %v7584, %v7585
    %v7587 = vsub.s32 4294967266, %v7582
    %v7588 = vadd.s32 %v7587, 127
    %v7589 = vshll.u32 %v7588, 23
    %v7590 = vor.u32 4788187, %v7589
    %v7591 = vand.u32 2147483647, %v7590
    %v7593 = vcvt.s32.f32 %v7586
    %v7594 = vmul.f32 %v7593, %v7591
    %v7595 = vxor.u32 %v7594, 2147483648
    %v7596 = vsel %vm7513, %v7595, %v7594
    %v7597 = vsub.s32 4, %v7573
    %v7598 = vsel %vm7513, %v7597, %v7573
    %v7599 = vsel %vm7512, %v4827, %v7596
    %v7600 = vsel %vm7512, 0, %v7598
    %v7601 = vcosq.f32.pop %v7599
    %v7602 = vsinq.f32.pop %v7599
    %vm7603 = vweird.f32 %v4827
    %v7604 = vand.u32 %v7600, 3
    %vm7605 = vcmp.lt.s32.totalorder %v7604, 2
    %vm7606 = vcmp.eq.s32.totalorder %v7604, 0
    %v7607 = vxor.u32 %v7602, 2147483648
    %v7608 = vsel %vm7606, %v7601, %v7607
    %vm7609 = vcmp.eq.s32.totalorder %v7604, 2
    %v7610 = vxor.u32 %v7601, 2147483648
    %v7611 = vsel %vm7609, %v7610, %v7602
    %v7612 = vsel %vm7605, %v7608, %v7611
    %v7613 = vsel %vm7603, nan, %v7612
    %v7614 = vand.u32 2147483647, %v4828
    %vm7615 = vcmp.le.f32.partialorder %v7614, 0.7853982
    %vm7616 = vcmp.lt.s32.totalorder %v4828, 0
    %v7617 = vand.u32 %v4828, 2139095040
    %v7618 = vshrl.u32 %v7617, 23
    %v7619 = vsub.s32 %v7618, 127
    %v7620 = vand.u32 2147483647, %v4828
    %v7621 = vand.u32 %v7620, 8388607
    %v7622 = vor.u32 %v7621, 8388608
    %v7623 = vsub.s32 0, %v7622
    %v7624 = vadd.s32 %v7619, 1
    %vm7625 = vcmp.gt.s32.totalorder %v7624, 0
    %v7626 = vsel %vm7625, %v7624, 0
    %v7627 = vshrl.u32 %v7626, 5
    %v7628 = vand.u32 %v7626, 31
    %v7629 = vsub.s32 32, %v7628
    %v7630 = vshrl.u32 683565275, %v7629
    %v7631 = vshll.u32 683565275, %v7628
    %v7632 = vshrl.u32 2475754826, %v7629
    %v7633 = vor.u32 %v7631, %v7632
    %v7634 = vshll.u32 2475754826, %v7628
    %v7635 = vshrl.u32 2131351028, %v7629
    %v7636 = vor.u32 %v7634, %v7635
    %v7637 = vshll.u32 2131351028, %v7628
    %v7638 = vshrl.u32 2102212464, %v7629
    %v7639 = vor.u32 %v7637, %v7638
    %v7640 = vshll.u32 2102212464, %v7628
    %v7641 = vshrl.u32 920167782, %v7629
    %v7642 = vor.u32 %v7640, %v7641
    %v7643 = vshll.u32 920167782, %v7628
    %v7644 = vshrl.u32 1326507024, %v7629
    %v7645 = vor.u32 %v7643, %v7644
    %vm7646 = vcmp.lt.s32.totalorder %v7627, 1
    %vm7647 = vcmp.lt.s32.totalorder %v7627, 2
    %vm7648 = vcmp.lt.s32.totalorder %v7627, 3
    %vm7649 = vcmp.lt.s32.totalorder %v7627, 4
    %v7650 = vsel %vm7646, %v7630, %v7633
    %v7651 = vsel %vm7649, %v7639, 2102212464
    %v7652 = vsel %vm7648, %v7636, %v7651
    %v7653 = vsel %vm7647, %v7650, %v7652
    %v7654 = vsel %vm7646, %v7633, %v7636
    %v7655 = vsel %vm7649, %v7642, 920167782
    %v7656 = vsel %vm7648, %v7639, %v7655
    %v7657 = vsel %vm7647, %v7654, %v7656
    %v7658 = vsel %vm7646, %v7636, %v7639
    %v7659 = vsel %vm7649, %v7645, 1326507024
    %v7660 = vsel %vm7648, %v7642, %v7659
    %v7661 = vsel %vm7647, %v7658, %v7660
    %v7662 = vshll.u32 %v7622, 8
    %v7663 = vmul.u32.u64.compose %v7662, %v7661
    %v7664 = vextract.low.u32 %v7663
    %v7665 = vextract.high.u32 %v7663
    %v7666 = vmul.u32.u64.compose %v7662, %v7657
    %v7667 = vextract.low.u32 %v7666
    %v7668 = vextract.high.u32 %v7666
    %v7669 = vmul.u32 %v7662, %v7653
    %v7670 = vadd.s32 %v7665, %v7667
    %vm7671 = vc.u32 %v7665, %v7667
    %v7672 = vadd.s32 %v7668, 1
    %v7673 = vsel %vm7671, %v7672, %v7668
    %v7674 = vadd.s32 %v7669, %v7673
    %v7675 = vadd.s32 %v7674, 536870912
    %v7676 = vshrl.u32 %v7675, 30
    %v7677 = vshll.u32 %v7676, 30
    %v7678 = vsub.s32 %v7674, %v7677
    %vm7679 = vcmp.lt.s32.totalorder %v7678, 0
    %v7680 = vsub.s32 0, %v7678
    %v7681 = vsel %vm7679, %v7680, %v7678
    %v7682 = vclz %v7681
    %v7683 = vsub.s32 %v7682, 2
    %vm7684 = vcmp.gt.s32.totalorder 0, %v7683
    %v7685 = vsel %vm7684, 0, %v7683
    %v7686 = vsub.s32 32, %v7685
    %v7687 = vshll.u32 %v7678, %v7685
    %v7688 = vshrl.u32 %v7670, %v7686
    %v7689 = vor.u32 %v7687, %v7688
    %v7690 = vsub.s32 4294967266, %v7685
    %v7691 = vadd.s32 %v7690, 127
    %v7692 = vshll.u32 %v7691, 23
    %v7693 = vor.u32 4788187, %v7692
    %v7694 = vand.u32 2147483647, %v7693
    %v7696 = vcvt.s32.f32 %v7689
    %v7697 = vmul.f32 %v7696, %v7694
    %v7698 = vxor.u32 %v7697, 2147483648
    %v7699 = vsel %vm7616, %v7698, %v7697
    %v7700 = vsub.s32 4, %v7676
    %v7701 = vsel %vm7616, %v7700, %v7676
    %v7702 = vsel %vm7615, %v4828, %v7699
    %v7703 = vsel %vm7615, 0, %v7701
    %v7704 = vcosq.f32.pop %v7702
    %v7705 = vsinq.f32.pop %v7702
    %vm7706 = vweird.f32 %v4828
    %v7707 = vand.u32 %v7703, 3
    %vm7708 = vcmp.lt.s32.totalorder %v7707, 2
    %vm7709 = vcmp.eq.s32.totalorder %v7707, 0
    %v7710 = vxor.u32 %v7705, 2147483648
    %v7711 = vsel %vm7709, %v7704, %v7710
    %vm7712 = vcmp.eq.s32.totalorder %v7707, 2
    %v7713 = vxor.u32 %v7704, 2147483648
    %v7714 = vsel %vm7712, %v7713, %v7705
    %v7715 = vsel %vm7708, %v7711, %v7714
    %v7716 = vsel %vm7706, nan, %v7715
    %v7717 = vand.u32 2147483647, %v4829
    %vm7718 = vcmp.le.f32.partialorder %v7717, 0.7853982
    %vm7719 = vcmp.lt.s32.totalorder %v4829, 0
    %v7720 = vand.u32 %v4829, 2139095040
    %v7721 = vshrl.u32 %v7720, 23
    %v7722 = vsub.s32 %v7721, 127
    %v7723 = vand.u32 2147483647, %v4829
    %v7724 = vand.u32 %v7723, 8388607
    %v7725 = vor.u32 %v7724, 8388608
    %v7726 = vsub.s32 0, %v7725
    %v7727 = vadd.s32 %v7722, 1
    %vm7728 = vcmp.gt.s32.totalorder %v7727, 0
    %v7729 = vsel %vm7728, %v7727, 0
    %v7730 = vshrl.u32 %v7729, 5
    %v7731 = vand.u32 %v7729, 31
    %v7732 = vsub.s32 32, %v7731
    %v7733 = vshrl.u32 683565275, %v7732
    %v7734 = vshll.u32 683565275, %v7731
    %v7735 = vshrl.u32 2475754826, %v7732
    %v7736 = vor.u32 %v7734, %v7735
    %v7737 = vshll.u32 2475754826, %v7731
    %v7738 = vshrl.u32 2131351028, %v7732
    %v7739 = vor.u32 %v7737, %v7738
    %v7740 = vshll.u32 2131351028, %v7731
    %v7741 = vshrl.u32 2102212464, %v7732
    %v7742 = vor.u32 %v7740, %v7741
    %v7743 = vshll.u32 2102212464, %v7731
    %v7744 = vshrl.u32 920167782, %v7732
    %v7745 = vor.u32 %v7743, %v7744
    %v7746 = vshll.u32 920167782, %v7731
    %v7747 = vshrl.u32 1326507024, %v7732
    %v7748 = vor.u32 %v7746, %v7747
    %vm7749 = vcmp.lt.s32.totalorder %v7730, 1
    %vm7750 = vcmp.lt.s32.totalorder %v7730, 2
    %vm7751 = vcmp.lt.s32.totalorder %v7730, 3
    %vm7752 = vcmp.lt.s32.totalorder %v7730, 4
    %v7753 = vsel %vm7749, %v7733, %v7736
    %v7754 = vsel %vm7752, %v7742, 2102212464
    %v7755 = vsel %vm7751, %v7739, %v7754
    %v7756 = vsel %vm7750, %v7753, %v7755
    %v7757 = vsel %vm7749, %v7736, %v7739
    %v7758 = vsel %vm7752, %v7745, 920167782
    %v7759 = vsel %vm7751, %v7742, %v7758
    %v7760 = vsel %vm7750, %v7757, %v7759
    %v7761 = vsel %vm7749, %v7739, %v7742
    %v7762 = vsel %vm7752, %v7748, 1326507024
    %v7763 = vsel %vm7751, %v7745, %v7762
    %v7764 = vsel %vm7750, %v7761, %v7763
    %v7765 = vshll.u32 %v7725, 8
    %v7766 = vmul.u32.u64.compose %v7765, %v7764
    %v7767 = vextract.low.u32 %v7766
    %v7768 = vextract.high.u32 %v7766
    %v7769 = vmul.u32.u64.compose %v7765, %v7760
    %v7770 = vextract.low.u32 %v7769
    %v7771 = vextract.high.u32 %v7769
    %v7772 = vmul.u32 %v7765, %v7756
    %v7773 = vadd.s32 %v7768, %v7770
    %vm7774 = vc.u32 %v7768, %v7770
    %v7775 = vadd.s32 %v7771, 1
    %v7776 = vsel %vm7774, %v7775, %v7771
    %v7777 = vadd.s32 %v7772, %v7776
    %v7778 = vadd.s32 %v7777, 536870912
    %v7779 = vshrl.u32 %v7778, 30
    %v7780 = vshll.u32 %v7779, 30
    %v7781 = vsub.s32 %v7777, %v7780
    %vm7782 = vcmp.lt.s32.totalorder %v7781, 0
    %v7783 = vsub.s32 0, %v7781
    %v7784 = vsel %vm7782, %v7783, %v7781
    %v7785 = vclz %v7784
    %v7786 = vsub.s32 %v7785, 2
    %vm7787 = vcmp.gt.s32.totalorder 0, %v7786
    %v7788 = vsel %vm7787, 0, %v7786
    %v7789 = vsub.s32 32, %v7788
    %v7790 = vshll.u32 %v7781, %v7788
    %v7791 = vshrl.u32 %v7773, %v7789
    %v7792 = vor.u32 %v7790, %v7791
    %v7793 = vsub.s32 4294967266, %v7788
    %v7794 = vadd.s32 %v7793, 127
    %v7795 = vshll.u32 %v7794, 23
    %v7796 = vor.u32 4788187, %v7795
    %v7797 = vand.u32 2147483647, %v7796
    %v7799 = vcvt.s32.f32 %v7792
    %v7800 = vmul.f32 %v7799, %v7797
    %v7801 = vxor.u32 %v7800, 2147483648
    %v7802 = vsel %vm7719, %v7801, %v7800
    %v7803 = vsub.s32 4, %v7779
    %v7804 = vsel %vm7719, %v7803, %v7779
    %v7805 = vsel %vm7718, %v4829, %v7802
    %v7806 = vsel %vm7718, 0, %v7804
    %v7807 = vcosq.f32.pop %v7805
    %v7808 = vsinq.f32.pop %v7805
    %vm7809 = vweird.f32 %v4829
    %v7810 = vand.u32 %v7806, 3
    %vm7811 = vcmp.lt.s32.totalorder %v7810, 2
    %vm7812 = vcmp.eq.s32.totalorder %v7810, 0
    %v7813 = vxor.u32 %v7808, 2147483648
    %v7814 = vsel %vm7812, %v7807, %v7813
    %vm7815 = vcmp.eq.s32.totalorder %v7810, 2
    %v7816 = vxor.u32 %v7807, 2147483648
    %v7817 = vsel %vm7815, %v7816, %v7808
    %v7818 = vsel %vm7811, %v7814, %v7817
    %v7819 = vsel %vm7809, nan, %v7818
    %v7820 = vand.u32 2147483647, %v4830
    %vm7821 = vcmp.le.f32.partialorder %v7820, 0.7853982
    %vm7822 = vcmp.lt.s32.totalorder %v4830, 0
    %v7823 = vand.u32 %v4830, 2139095040
    %v7824 = vshrl.u32 %v7823, 23
    %v7825 = vsub.s32 %v7824, 127
    %v7826 = vand.u32 2147483647, %v4830
    %v7827 = vand.u32 %v7826, 8388607
    %v7828 = vor.u32 %v7827, 8388608
    %v7829 = vsub.s32 0, %v7828
    %v7830 = vadd.s32 %v7825, 1
    %vm7831 = vcmp.gt.s32.totalorder %v7830, 0
    %v7832 = vsel %vm7831, %v7830, 0
    %v7833 = vshrl.u32 %v7832, 5
    %v7834 = vand.u32 %v7832, 31
    %v7835 = vsub.s32 32, %v7834
    %v7836 = vshrl.u32 683565275, %v7835
    %v7837 = vshll.u32 683565275, %v7834
    %v7838 = vshrl.u32 2475754826, %v7835
    %v7839 = vor.u32 %v7837, %v7838
    %v7840 = vshll.u32 2475754826, %v7834
    %v7841 = vshrl.u32 2131351028, %v7835
    %v7842 = vor.u32 %v7840, %v7841
    %v7843 = vshll.u32 2131351028, %v7834
    %v7844 = vshrl.u32 2102212464, %v7835
    %v7845 = vor.u32 %v7843, %v7844
    %v7846 = vshll.u32 2102212464, %v7834
    %v7847 = vshrl.u32 920167782, %v7835
    %v7848 = vor.u32 %v7846, %v7847
    %v7849 = vshll.u32 920167782, %v7834
    %v7850 = vshrl.u32 1326507024, %v7835
    %v7851 = vor.u32 %v7849, %v7850
    %vm7852 = vcmp.lt.s32.totalorder %v7833, 1
    %vm7853 = vcmp.lt.s32.totalorder %v7833, 2
    %vm7854 = vcmp.lt.s32.totalorder %v7833, 3
    %vm7855 = vcmp.lt.s32.totalorder %v7833, 4
    %v7856 = vsel %vm7852, %v7836, %v7839
    %v7857 = vsel %vm7855, %v7845, 2102212464
    %v7858 = vsel %vm7854, %v7842, %v7857
    %v7859 = vsel %vm7853, %v7856, %v7858
    %v7860 = vsel %vm7852, %v7839, %v7842
    %v7861 = vsel %vm7855, %v7848, 920167782
    %v7862 = vsel %vm7854, %v7845, %v7861
    %v7863 = vsel %vm7853, %v7860, %v7862
    %v7864 = vsel %vm7852, %v7842, %v7845
    %v7865 = vsel %vm7855, %v7851, 1326507024
    %v7866 = vsel %vm7854, %v7848, %v7865
    %v7867 = vsel %vm7853, %v7864, %v7866
    %v7868 = vshll.u32 %v7828, 8
    %v7869 = vmul.u32.u64.compose %v7868, %v7867
    %v7870 = vextract.low.u32 %v7869
    %v7871 = vextract.high.u32 %v7869
    %v7872 = vmul.u32.u64.compose %v7868, %v7863
    %v7873 = vextract.low.u32 %v7872
    %v7874 = vextract.high.u32 %v7872
    %v7875 = vmul.u32 %v7868, %v7859
    %v7876 = vadd.s32 %v7871, %v7873
    %vm7877 = vc.u32 %v7871, %v7873
    %v7878 = vadd.s32 %v7874, 1
    %v7879 = vsel %vm7877, %v7878, %v7874
    %v7880 = vadd.s32 %v7875, %v7879
    %v7881 = vadd.s32 %v7880, 536870912
    %v7882 = vshrl.u32 %v7881, 30
    %v7883 = vshll.u32 %v7882, 30
    %v7884 = vsub.s32 %v7880, %v7883
    %vm7885 = vcmp.lt.s32.totalorder %v7884, 0
    %v7886 = vsub.s32 0, %v7884
    %v7887 = vsel %vm7885, %v7886, %v7884
    %v7888 = vclz %v7887
    %v7889 = vsub.s32 %v7888, 2
    %vm7890 = vcmp.gt.s32.totalorder 0, %v7889
    %v7891 = vsel %vm7890, 0, %v7889
    %v7892 = vsub.s32 32, %v7891
    %v7893 = vshll.u32 %v7884, %v7891
    %v7894 = vshrl.u32 %v7876, %v7892
    %v7895 = vor.u32 %v7893, %v7894
    %v7896 = vsub.s32 4294967266, %v7891
    %v7897 = vadd.s32 %v7896, 127
    %v7898 = vshll.u32 %v7897, 23
    %v7899 = vor.u32 4788187, %v7898
    %v7900 = vand.u32 2147483647, %v7899
    %v7902 = vcvt.s32.f32 %v7895
    %v7903 = vmul.f32 %v7902, %v7900
    %v7904 = vxor.u32 %v7903, 2147483648
    %v7905 = vsel %vm7822, %v7904, %v7903
    %v7906 = vsub.s32 4, %v7882
    %v7907 = vsel %vm7822, %v7906, %v7882
    %v7908 = vsel %vm7821, %v4830, %v7905
    %v7909 = vsel %vm7821, 0, %v7907
    %v7910 = vcosq.f32.pop %v7908
    %v7911 = vsinq.f32.pop %v7908
    %vm7912 = vweird.f32 %v4830
    %v7913 = vand.u32 %v7909, 3
    %vm7914 = vcmp.lt.s32.totalorder %v7913, 2
    %vm7915 = vcmp.eq.s32.totalorder %v7913, 0
    %v7916 = vxor.u32 %v7911, 2147483648
    %v7917 = vsel %vm7915, %v7910, %v7916
    %vm7918 = vcmp.eq.s32.totalorder %v7913, 2
    %v7919 = vxor.u32 %v7910, 2147483648
    %v7920 = vsel %vm7918, %v7919, %v7911
    %v7921 = vsel %vm7914, %v7917, %v7920
    %v7922 = vsel %vm7912, nan, %v7921
    %v7923 = vand.u32 2147483647, %v4831
    %vm7924 = vcmp.le.f32.partialorder %v7923, 0.7853982
    %vm7925 = vcmp.lt.s32.totalorder %v4831, 0
    %v7926 = vand.u32 %v4831, 2139095040
    %v7927 = vshrl.u32 %v7926, 23
    %v7928 = vsub.s32 %v7927, 127
    %v7929 = vand.u32 2147483647, %v4831
    %v7930 = vand.u32 %v7929, 8388607
    %v7931 = vor.u32 %v7930, 8388608
    %v7932 = vsub.s32 0, %v7931
    %v7933 = vadd.s32 %v7928, 1
    %vm7934 = vcmp.gt.s32.totalorder %v7933, 0
    %v7935 = vsel %vm7934, %v7933, 0
    %v7936 = vshrl.u32 %v7935, 5
    %v7937 = vand.u32 %v7935, 31
    %v7938 = vsub.s32 32, %v7937
    %v7939 = vshrl.u32 683565275, %v7938
    %v7940 = vshll.u32 683565275, %v7937
    %v7941 = vshrl.u32 2475754826, %v7938
    %v7942 = vor.u32 %v7940, %v7941
    %v7943 = vshll.u32 2475754826, %v7937
    %v7944 = vshrl.u32 2131351028, %v7938
    %v7945 = vor.u32 %v7943, %v7944
    %v7946 = vshll.u32 2131351028, %v7937
    %v7947 = vshrl.u32 2102212464, %v7938
    %v7948 = vor.u32 %v7946, %v7947
    %v7949 = vshll.u32 2102212464, %v7937
    %v7950 = vshrl.u32 920167782, %v7938
    %v7951 = vor.u32 %v7949, %v7950
    %v7952 = vshll.u32 920167782, %v7937
    %v7953 = vshrl.u32 1326507024, %v7938
    %v7954 = vor.u32 %v7952, %v7953
    %vm7955 = vcmp.lt.s32.totalorder %v7936, 1
    %vm7956 = vcmp.lt.s32.totalorder %v7936, 2
    %vm7957 = vcmp.lt.s32.totalorder %v7936, 3
    %vm7958 = vcmp.lt.s32.totalorder %v7936, 4
    %v7959 = vsel %vm7955, %v7939, %v7942
    %v7960 = vsel %vm7958, %v7948, 2102212464
    %v7961 = vsel %vm7957, %v7945, %v7960
    %v7962 = vsel %vm7956, %v7959, %v7961
    %v7963 = vsel %vm7955, %v7942, %v7945
    %v7964 = vsel %vm7958, %v7951, 920167782
    %v7965 = vsel %vm7957, %v7948, %v7964
    %v7966 = vsel %vm7956, %v7963, %v7965
    %v7967 = vsel %vm7955, %v7945, %v7948
    %v7968 = vsel %vm7958, %v7954, 1326507024
    %v7969 = vsel %vm7957, %v7951, %v7968
    %v7970 = vsel %vm7956, %v7967, %v7969
    %v7971 = vshll.u32 %v7931, 8
    %v7972 = vmul.u32.u64.compose %v7971, %v7970
    %v7973 = vextract.low.u32 %v7972
    %v7974 = vextract.high.u32 %v7972
    %v7975 = vmul.u32.u64.compose %v7971, %v7966
    %v7976 = vextract.low.u32 %v7975
    %v7977 = vextract.high.u32 %v7975
    %v7978 = vmul.u32 %v7971, %v7962
    %v7979 = vadd.s32 %v7974, %v7976
    %vm7980 = vc.u32 %v7974, %v7976
    %v7981 = vadd.s32 %v7977, 1
    %v7982 = vsel %vm7980, %v7981, %v7977
    %v7983 = vadd.s32 %v7978, %v7982
    %v7984 = vadd.s32 %v7983, 536870912
    %v7985 = vshrl.u32 %v7984, 30
    %v7986 = vshll.u32 %v7985, 30
    %v7987 = vsub.s32 %v7983, %v7986
    %vm7988 = vcmp.lt.s32.totalorder %v7987, 0
    %v7989 = vsub.s32 0, %v7987
    %v7990 = vsel %vm7988, %v7989, %v7987
    %v7991 = vclz %v7990
    %v7992 = vsub.s32 %v7991, 2
    %vm7993 = vcmp.gt.s32.totalorder 0, %v7992
    %v7994 = vsel %vm7993, 0, %v7992
    %v7995 = vsub.s32 32, %v7994
    %v7996 = vshll.u32 %v7987, %v7994
    %v7997 = vshrl.u32 %v7979, %v7995
    %v7998 = vor.u32 %v7996, %v7997
    %v7999 = vsub.s32 4294967266, %v7994
    %v8000 = vadd.s32 %v7999, 127
    %v8001 = vshll.u32 %v8000, 23
    %v8002 = vor.u32 4788187, %v8001
    %v8003 = vand.u32 2147483647, %v8002
    %v8005 = vcvt.s32.f32 %v7998
    %v8006 = vmul.f32 %v8005, %v8003
    %v8007 = vxor.u32 %v8006, 2147483648
    %v8008 = vsel %vm7925, %v8007, %v8006
    %v8009 = vsub.s32 4, %v7985
    %v8010 = vsel %vm7925, %v8009, %v7985
    %v8011 = vsel %vm7924, %v4831, %v8008
    %v8012 = vsel %vm7924, 0, %v8010
    %v8013 = vcosq.f32.pop %v8011
    %v8014 = vsinq.f32.pop %v8011
    %vm8015 = vweird.f32 %v4831
    %v8016 = vand.u32 %v8012, 3
    %vm8017 = vcmp.lt.s32.totalorder %v8016, 2
    %vm8018 = vcmp.eq.s32.totalorder %v8016, 0
    %v8019 = vxor.u32 %v8014, 2147483648
    %v8020 = vsel %vm8018, %v8013, %v8019
    %vm8021 = vcmp.eq.s32.totalorder %v8016, 2
    %v8022 = vxor.u32 %v8013, 2147483648
    %v8023 = vsel %vm8021, %v8022, %v8014
    %v8024 = vsel %vm8017, %v8020, %v8023
    %v8025 = vsel %vm8015, nan, %v8024
    %v8026 = vand.u32 2147483647, %v4832
    %vm8027 = vcmp.le.f32.partialorder %v8026, 0.7853982
    %vm8028 = vcmp.lt.s32.totalorder %v4832, 0
    %v8029 = vand.u32 %v4832, 2139095040
    %v8030 = vshrl.u32 %v8029, 23
    %v8031 = vsub.s32 %v8030, 127
    %v8032 = vand.u32 2147483647, %v4832
    %v8033 = vand.u32 %v8032, 8388607
    %v8034 = vor.u32 %v8033, 8388608
    %v8035 = vsub.s32 0, %v8034
    %v8036 = vadd.s32 %v8031, 1
    %vm8037 = vcmp.gt.s32.totalorder %v8036, 0
    %v8038 = vsel %vm8037, %v8036, 0
    %v8039 = vshrl.u32 %v8038, 5
    %v8040 = vand.u32 %v8038, 31
    %v8041 = vsub.s32 32, %v8040
    %v8042 = vshrl.u32 683565275, %v8041
    %v8043 = vshll.u32 683565275, %v8040
    %v8044 = vshrl.u32 2475754826, %v8041
    %v8045 = vor.u32 %v8043, %v8044
    %v8046 = vshll.u32 2475754826, %v8040
    %v8047 = vshrl.u32 2131351028, %v8041
    %v8048 = vor.u32 %v8046, %v8047
    %v8049 = vshll.u32 2131351028, %v8040
    %v8050 = vshrl.u32 2102212464, %v8041
    %v8051 = vor.u32 %v8049, %v8050
    %v8052 = vshll.u32 2102212464, %v8040
    %v8053 = vshrl.u32 920167782, %v8041
    %v8054 = vor.u32 %v8052, %v8053
    %v8055 = vshll.u32 920167782, %v8040
    %v8056 = vshrl.u32 1326507024, %v8041
    %v8057 = vor.u32 %v8055, %v8056
    %vm8058 = vcmp.lt.s32.totalorder %v8039, 1
    %vm8059 = vcmp.lt.s32.totalorder %v8039, 2
    %vm8060 = vcmp.lt.s32.totalorder %v8039, 3
    %vm8061 = vcmp.lt.s32.totalorder %v8039, 4
    %v8062 = vsel %vm8058, %v8042, %v8045
    %v8063 = vsel %vm8061, %v8051, 2102212464
    %v8064 = vsel %vm8060, %v8048, %v8063
    %v8065 = vsel %vm8059, %v8062, %v8064
    %v8066 = vsel %vm8058, %v8045, %v8048
    %v8067 = vsel %vm8061, %v8054, 920167782
    %v8068 = vsel %vm8060, %v8051, %v8067
    %v8069 = vsel %vm8059, %v8066, %v8068
    %v8070 = vsel %vm8058, %v8048, %v8051
    %v8071 = vsel %vm8061, %v8057, 1326507024
    %v8072 = vsel %vm8060, %v8054, %v8071
    %v8073 = vsel %vm8059, %v8070, %v8072
    %v8074 = vshll.u32 %v8034, 8
    %v8075 = vmul.u32.u64.compose %v8074, %v8073
    %v8076 = vextract.low.u32 %v8075
    %v8077 = vextract.high.u32 %v8075
    %v8078 = vmul.u32.u64.compose %v8074, %v8069
    %v8079 = vextract.low.u32 %v8078
    %v8080 = vextract.high.u32 %v8078
    %v8081 = vmul.u32 %v8074, %v8065
    %v8082 = vadd.s32 %v8077, %v8079
    %vm8083 = vc.u32 %v8077, %v8079
    %v8084 = vadd.s32 %v8080, 1
    %v8085 = vsel %vm8083, %v8084, %v8080
    %v8086 = vadd.s32 %v8081, %v8085
    %v8087 = vadd.s32 %v8086, 536870912
    %v8088 = vshrl.u32 %v8087, 30
    %v8089 = vshll.u32 %v8088, 30
    %v8090 = vsub.s32 %v8086, %v8089
    %vm8091 = vcmp.lt.s32.totalorder %v8090, 0
    %v8092 = vsub.s32 0, %v8090
    %v8093 = vsel %vm8091, %v8092, %v8090
    %v8094 = vclz %v8093
    %v8095 = vsub.s32 %v8094, 2
    %vm8096 = vcmp.gt.s32.totalorder 0, %v8095
    %v8097 = vsel %vm8096, 0, %v8095
    %v8098 = vsub.s32 32, %v8097
    %v8099 = vshll.u32 %v8090, %v8097
    %v8100 = vshrl.u32 %v8082, %v8098
    %v8101 = vor.u32 %v8099, %v8100
    %v8102 = vsub.s32 4294967266, %v8097
    %v8103 = vadd.s32 %v8102, 127
    %v8104 = vshll.u32 %v8103, 23
    %v8105 = vor.u32 4788187, %v8104
    %v8106 = vand.u32 2147483647, %v8105
    %v8108 = vcvt.s32.f32 %v8101
    %v8109 = vmul.f32 %v8108, %v8106
    %v8110 = vxor.u32 %v8109, 2147483648
    %v8111 = vsel %vm8028, %v8110, %v8109
    %v8112 = vsub.s32 4, %v8088
    %v8113 = vsel %vm8028, %v8112, %v8088
    %v8114 = vsel %vm8027, %v4832, %v8111
    %v8115 = vsel %vm8027, 0, %v8113
    %v8116 = vcosq.f32.pop %v8114
    %v8117 = vsinq.f32.pop %v8114
    %vm8118 = vweird.f32 %v4832
    %v8119 = vand.u32 %v8115, 3
    %vm8120 = vcmp.lt.s32.totalorder %v8119, 2
    %vm8121 = vcmp.eq.s32.totalorder %v8119, 0
    %v8122 = vxor.u32 %v8117, 2147483648
    %v8123 = vsel %vm8121, %v8116, %v8122
    %vm8124 = vcmp.eq.s32.totalorder %v8119, 2
    %v8125 = vxor.u32 %v8116, 2147483648
    %v8126 = vsel %vm8124, %v8125, %v8117
    %v8127 = vsel %vm8120, %v8123, %v8126
    %v8128 = vsel %vm8118, nan, %v8127
    %v8129 = vmul.f32 %v4935, 0.5
    %v8130 = vmul.f32 %v5038, 0.5
    %v8131 = vmul.f32 %v5141, 0.5
    %v8132 = vmul.f32 %v5244, 0.5
    %v8133 = vmul.f32 %v5347, 0.5
    %v8134 = vmul.f32 %v5450, 0.5
    %v8135 = vmul.f32 %v5553, 0.5
    %v8136 = vmul.f32 %v5656, 0.5
    %v8137 = vmul.f32 %v5759, 0.5
    %v8138 = vmul.f32 %v5862, 0.5
    %v8139 = vmul.f32 %v5965, 0.5
    %v8140 = vmul.f32 %v6068, 0.5
    %v8141 = vmul.f32 %v6171, 0.5
    %v8142 = vmul.f32 %v6274, 0.5
    %v8143 = vmul.f32 %v6377, 0.5
    %v8144 = vmul.f32 %v6480, 0.5
    %v8145 = vmul.f32 %v6583, 0.5
    %v8146 = vmul.f32 %v6686, 0.5
    %v8147 = vmul.f32 %v6789, 0.5
    %v8148 = vmul.f32 %v6892, 0.5
    %v8149 = vmul.f32 %v6995, 0.5
    %v8150 = vmul.f32 %v7098, 0.5
    %v8151 = vmul.f32 %v7201, 0.5
    %v8152 = vmul.f32 %v7304, 0.5
    %v8153 = vmul.f32 %v7407, 0.5
    %v8154 = vmul.f32 %v7510, 0.5
    %v8155 = vmul.f32 %v7613, 0.5
    %v8156 = vmul.f32 %v7716, 0.5
    %v8157 = vmul.f32 %v7819, 0.5
    %v8158 = vmul.f32 %v7922, 0.5
    %v8159 = vmul.f32 %v8025, 0.5
    %v8160 = vmul.f32 %v8128, 0.5
    %v8161 = vadd.f32 %v8129, 0.5
    %v8162 = vadd.f32 %v8130, 0.5
    %v8163 = vadd.f32 %v8131, 0.5
    %v8164 = vadd.f32 %v8132, 0.5
    %v8165 = vadd.f32 %v8133, 0.5
    %v8166 = vadd.f32 %v8134, 0.5
    %v8167 = vadd.f32 %v8135, 0.5
    %v8168 = vadd.f32 %v8136, 0.5
    %v8169 = vadd.f32 %v8137, 0.5
    %v8170 = vadd.f32 %v8138, 0.5
    %v8171 = vadd.f32 %v8139, 0.5
    %v8172 = vadd.f32 %v8140, 0.5
    %v8173 = vadd.f32 %v8141, 0.5
    %v8174 = vadd.f32 %v8142, 0.5
    %v8175 = vadd.f32 %v8143, 0.5
    %v8176 = vadd.f32 %v8144, 0.5
    %v8177 = vadd.f32 %v8145, 0.5
    %v8178 = vadd.f32 %v8146, 0.5
    %v8179 = vadd.f32 %v8147, 0.5
    %v8180 = vadd.f32 %v8148, 0.5
    %v8181 = vadd.f32 %v8149, 0.5
    %v8182 = vadd.f32 %v8150, 0.5
    %v8183 = vadd.f32 %v8151, 0.5
    %v8184 = vadd.f32 %v8152, 0.5
    %v8185 = vadd.f32 %v8153, 0.5
    %v8186 = vadd.f32 %v8154, 0.5
    %v8187 = vadd.f32 %v8155, 0.5
    %v8188 = vadd.f32 %v8156, 0.5
    %v8189 = vadd.f32 %v8157, 0.5
    %v8190 = vadd.f32 %v8158, 0.5
    %v8191 = vadd.f32 %v8159, 0.5
    %v8192 = vadd.f32 %v8160, 0.5
    %v8193 = vsel %vm4769, %v8161, 0.0
    %v8194 = vsel %vm4770, %v8162, 0.0
    %v8195 = vsel %vm4771, %v8163, 0.0
    %v8196 = vsel %vm4772, %v8164, 0.0
    %v8197 = vsel %vm4773, %v8165, 0.0
    %v8198 = vsel %vm4774, %v8166, 0.0
    %v8199 = vsel %vm4775, %v8167, 0.0
    %v8200 = vsel %vm4776, %v8168, 0.0
    %v8201 = vsel %vm4777, %v8169, 0.0
    %v8202 = vsel %vm4778, %v8170, 0.0
    %v8203 = vsel %vm4779, %v8171, 0.0
    %v8204 = vsel %vm4780, %v8172, 0.0
    %v8205 = vsel %vm4781, %v8173, 0.0
    %v8206 = vsel %vm4782, %v8174, 0.0
    %v8207 = vsel %vm4783, %v8175, 0.0
    %v8208 = vsel %vm4784, %v8176, 0.0
    %v8209 = vsel %vm4785, %v8177, 0.0
    %v8210 = vsel %vm4786, %v8178, 0.0
    %v8211 = vsel %vm4787, %v8179, 0.0
    %v8212 = vsel %vm4788, %v8180, 0.0
    %v8213 = vsel %vm4789, %v8181, 0.0
    %v8214 = vsel %vm4790, %v8182, 0.0
    %v8215 = vsel %vm4791, %v8183, 0.0
    %v8216 = vsel %vm4792, %v8184, 0.0
    %v8217 = vsel %vm4793, %v8185, 0.0
    %v8218 = vsel %vm4794, %v8186, 0.0
    %v8219 = vsel %vm4795, %v8187, 0.0
    %v8220 = vsel %vm4796, %v8188, 0.0
    %v8221 = vsel %vm4797, %v8189, 0.0
    %v8222 = vsel %vm4798, %v8190, 0.0
    %v8223 = vsel %vm4799, %v8191, 0.0
    %v8224 = vsel %vm4800, %v8192, 0.0
    %v8225 = vmul.f32 %v4670, %v8193
    %v8226 = vmul.f32 %v4671, %v8194
    %v8227 = vmul.f32 %v4672, %v8195
    %v8228 = vmul.f32 %v4673, %v8196
    %v8229 = vmul.f32 %v4674, %v8197
    %v8230 = vmul.f32 %v4675, %v8198
    %v8231 = vmul.f32 %v4676, %v8199
    %v8232 = vmul.f32 %v4677, %v8200
    %v8233 = vmul.f32 %v4678, %v8201
    %v8234 = vmul.f32 %v4679, %v8202
    %v8235 = vmul.f32 %v4680, %v8203
    %v8236 = vmul.f32 %v4681, %v8204
    %v8237 = vmul.f32 %v4682, %v8205
    %v8238 = vmul.f32 %v4683, %v8206
    %v8239 = vmul.f32 %v4684, %v8207
    %v8240 = vmul.f32 %v4685, %v8208
    %v8241 = vmul.f32 %v4686, %v8209
    %v8242 = vmul.f32 %v4687, %v8210
    %v8243 = vmul.f32 %v4688, %v8211
    %v8244 = vmul.f32 %v4689, %v8212
    %v8245 = vmul.f32 %v4690, %v8213
    %v8246 = vmul.f32 %v4691, %v8214
    %v8247 = vmul.f32 %v4692, %v8215
    %v8248 = vmul.f32 %v4693, %v8216
    %v8249 = vmul.f32 %v4694, %v8217
    %v8250 = vmul.f32 %v4695, %v8218
    %v8251 = vmul.f32 %v4696, %v8219
    %v8252 = vmul.f32 %v4697, %v8220
    %v8253 = vmul.f32 %v4698, %v8221
    %v8254 = vmul.f32 %v4699, %v8222
    %v8255 = vmul.f32 %v4700, %v8223
    %v8256 = vmul.f32 %v4701, %v8224
    %v8257 = vadd.f32 %v8225, %v8227
    %v8258 = vadd.f32 %v8257, %v8229
    %v8259 = vadd.f32 %v8258, %v8231
    %v8260 = vadd.f32 %v8259, %v8233
    %v8261 = vadd.f32 %v8260, %v8235
    %v8262 = vadd.f32 %v8261, %v8237
    %v8263 = vadd.f32 %v8262, %v8239
    %v8264 = vadd.f32 %v8263, %v8241
    %v8265 = vadd.f32 %v8264, %v8243
    %v8266 = vadd.f32 %v8265, %v8245
    %v8267 = vadd.f32 %v8266, %v8247
    %v8268 = vadd.f32 %v8267, %v8249
    %v8269 = vadd.f32 %v8268, %v8251
    %v8270 = vadd.f32 %v8269, %v8253
    %v8271 = vadd.f32 %v8270, %v8255
    %v8272 = vadd.f32 %v8226, %v8228
    %v8273 = vadd.f32 %v8272, %v8230
    %v8274 = vadd.f32 %v8273, %v8232
    %v8275 = vadd.f32 %v8274, %v8234
    %v8276 = vadd.f32 %v8275, %v8236
    %v8277 = vadd.f32 %v8276, %v8238
    %v8278 = vadd.f32 %v8277, %v8240
    %v8279 = vadd.f32 %v8278, %v8242
    %v8280 = vadd.f32 %v8279, %v8244
    %v8281 = vadd.f32 %v8280, %v8246
    %v8282 = vadd.f32 %v8281, %v8248
    %v8283 = vadd.f32 %v8282, %v8250
    %v8284 = vadd.f32 %v8283, %v8252
    %v8285 = vadd.f32 %v8284, %v8254
    %v8286 = vadd.f32 %v8285, %v8256
    %v8287 = vadd.f32 %v8271, %v8286
    %v8288 = vrot.slane %v8287, 4
    %v8289 = vadd.f32 %v8287, %v8288
    %v8290 = vrot.slane %v8289, 2
    %v8291 = vadd.f32 %v8289, %v8290
    %v8292 = vrot.slane %v8291, 1
    %v8293 = vadd.f32 %v8291, %v8292
    %v8294 = vsub.f32 0.0, %v8293
    %8295 = vst [vmem:[#allocation12] sm:$0x1] %v8294
    // Predicated region
    $region42: #{tpu_custom_call.1} parent=1 // pred_check
      _
    $region43: #{tpu_custom_call.1} parent=1 // pred_check_branch
      %8297 = sbr.rel (0) target = $region45
    $region44: #{tpu_custom_call.1} parent=1 // pred_region
      %s8299 = ssub.s32 16, 16
      %8300 = vsyncadd [#allocation4], %s8299
      %s8302 = sshll.u32 [#allocation12], 4
      %s8303 = int_to_ptr.vmem [resolvable:$true] %s8302
      %8305 = dma.vmem_to_hbm [thread:$0]  %s8303, 16, %s5, [#allocation4]
    $region45: #{tpu_custom_call.1} parent=1 // pred_fallthru
      _
    // Predicated region
    $region46: #{tpu_custom_call.1} parent=1 // pred_check
      _
    $region47: #{tpu_custom_call.1} parent=1 // pred_check_branch
      %8307 = sbr.rel (0) target = $region49
    $region48: #{tpu_custom_call.1} parent=1 // pred_region
      %8308 = dma.done [#allocation4], 16
    $region49: #{tpu_custom_call.1} parent=1 // pred_fallthru
      _
    %8309 = vsyncpa [#allocation3], 1
    %8310 = vsyncpa [#allocation10], 1
    %8311 = vsyncpa [#allocation4], 1
    %8312 = vsyncpa [#allocation5], 1
    %8313 = vsyncpa [#allocation6], 1

</llo_original>
